<compile_context>
chip_gen: v5e
topology: v5e:2x2
jax: 0.10.0
libtpu: 0.0.40
codegen_flags: <defaults>
</compile_context>

<pallas_src>
import functools

import jax
import jax.numpy as jnp
from jax.experimental import pallas as pl
from jax.experimental.pallas import tpu as pltpu

BN_EPS = 1e-5


def _round_up(x, m):
    return ((x + m - 1) // m) * m


def _vmem_limit_bytes():
    """Per-generation VMEM budget: ~3/4 of physical VMEM (v7x 64MiB, v5e/v6e 128MiB)."""
    try:
        cap = int(pltpu.get_tpu_info().vmem_capacity_bytes)
    except Exception:
        cap = 64 * 1024 * 1024          # conservative (v7x-sized) fallback
    return max(32 * 1024 * 1024, min((cap * 3) // 4, 100 * 1024 * 1024))


def _pick_row_tile(n_rows, target):
    """Largest multiple of 8 that divides n_rows and is <= target."""
    t = min(int(target), n_rows)
    t -= t % 8
    while t >= 8:
        if n_rows % t == 0:
            return t
        t -= 8
    return n_rows   # no multiple-of-8 divisor <= target: single full block


def _scale_shift(gamma, beta, mean, var, eps=BN_EPS):
    var = jnp.maximum(var, 0.0)         # guard E[x^2]-E[x]^2 cancellation
    scale = gamma / jnp.sqrt(var + eps)
    shift = beta - mean * scale
    return scale.astype(jnp.float32), shift.astype(jnp.float32)


# ---------------------------------------------------------------------------
# kernel 1: fused BN1 + ReLU + 1x1 conv over the dense-connection pieces with a
#           single fat-K matmul (pieces lane-concatenated in VMEM), plus fused
#           per-tile batch stats of out1 (needed by BN2).
# ---------------------------------------------------------------------------
def _bn_relu_conv1x1_kernel(*refs, n_pieces):
    acts = refs[0:n_pieces]
    s_ref, b_ref, w_ref, out_ref, st_ref = refs[n_pieces:]

    # Concatenate the bf16-stored pieces along lanes -> one (tr, C_in) operand.
    if n_pieces == 1:
        x = acts[0][...]
    else:
        x = jnp.concatenate([a[...] for a in acts], axis=-1)

    # BN1 + ReLU in f32 (VPU), then bf16 for the MXU.
    a = jnp.maximum(x.astype(jnp.float32) * s_ref[...] + b_ref[...], 0.0)
    acc = jnp.dot(a.astype(jnp.bfloat16), w_ref[...],
                  preferred_element_type=jnp.float32)      # one fat-K dot

    out_ref[...] = acc
    # per-tile partial stats of out1; reduced across tiles in the wrapper
    st_ref[0:1, :] = jnp.sum(acc, axis=0, keepdims=True)
    st_ref[1:2, :] = jnp.sum(acc * acc, axis=0, keepdims=True)


def bn_relu_conv1x1(pieces, scale, shift, w1, c4, vmem_limit):
    n_rows = pieces[0].shape[0]
    n_pieces = len(pieces)
    c_in = w1.shape[0]

    # Big row tiles for this HBM-read-bound kernel, capped so double-buffered
    # bf16 inputs + f32 output + accumulator stay well inside the VMEM budget.
    bytes_per_row = 2 * 2 * c_in + 3 * 4 * c4
    max_rows = max(8, (vmem_limit // 4) // max(bytes_per_row, 1))
    tr = _pick_row_tile(n_rows, min(512, max_rows))
    ntiles = n_rows // tr

    in_specs = (
        [pl.BlockSpec((tr, p.shape[1]), lambda i: (i, 0)) for p in pieces]
        + [pl.BlockSpec((1, c_in), lambda i: (0, 0)),
           pl.BlockSpec((1, c_in), lambda i: (0, 0)),
           pl.BlockSpec((c_in, c4), lambda i: (0, 0))]
    )
    # TODO(synk): when c4 < 128, out1 stores are lane-masked; a lane-dense slab
    #             layout would need an in-kernel cross-lane relayout.
    out_shape = (jax.ShapeDtypeStruct((n_rows, c4), jnp.float32),
                 jax.ShapeDtypeStruct((ntiles, 2, c4), jnp.float32))
    out_specs = (pl.BlockSpec((tr, c4), lambda i: (i, 0)),
                 pl.BlockSpec((None, 2, c4), lambda i: (i, 0, 0)))

    return pl.pallas_call(
        functools.partial(_bn_relu_conv1x1_kernel, n_pieces=n_pieces),
        out_shape=out_shape,
        grid=(ntiles,),
        in_specs=in_specs,
        out_specs=out_specs,
        compiler_params=pltpu.CompilerParams(
            dimension_semantics=("parallel",),
            vmem_limit_bytes=vmem_limit),
    )(*pieces, *scale_shift_tuple(scale, shift), w1)


def scale_shift_tuple(scale, shift):
    return (scale, shift)


# ---------------------------------------------------------------------------
# kernel 2: fused BN2 + ReLU + 3x3 conv (padding=1).  Zero-padded image lives in
#           a persistent bf16 VMEM scratch (pad border re-zeroed each step, the
#           interior overwritten); crop fused; per-image stats of the new
#           channels emitted for the next layer's BN1.
#
# Padded layout (per image, scratch shape (H+4, Wp, C4), Wp = round_up(W+2, 16)):
# data in pad[2:H+2, 0:W, :], zeros elsewhere.  In the flattened ((H+4)*Wp, C4)
# view, tap (ky, kx) of output pixel q = h*Wp + w is flat[(h+ky+1)*Wp + w+kx-1];
# the zero columns >= W double as left/right conv padding.  Per kx one window of
# (H+2)*Wp rows is sliced (aligned for kx==1); the three ky taps are either
# lane-concatenated into one K=3*C4 dot (C4 % 128 == 0) or issued as 3 K=C4 dots.
# ---------------------------------------------------------------------------
def _bn_relu_conv3x3_kernel(x_ref, s_ref, b_ref, w_ref, y_ref, st_ref, pad_ref,
                            *, H, W, Wp, fat_k):
    c4 = x_ref.shape[-1]
    g = y_ref.shape[-1]

    # BN2 + ReLU in f32 (VPU); MXU operands in bf16.
    a = jnp.maximum(x_ref[...] * s_ref[...] + b_ref[...], 0.0).astype(jnp.bfloat16)

    # Assemble the zero-padded image in the persistent bf16 scratch.  The pad
    # border is re-zeroed every step (cheap, and safe under megacore splitting
    # where program_id==0 may never run on a given core); no concatenate chain.
    pad_ref[0:2, :, :] = jnp.zeros((2, Wp, c4), jnp.bfloat16)
    pad_ref[H + 2:H + 4, :, :] = jnp.zeros((2, Wp, c4), jnp.bfloat16)
    pad_ref[2:H + 2, W:Wp, :] = jnp.zeros((H, Wp - W, c4), jnp.bfloat16)
    pad_ref[2:H + 2, 0:W, :] = a.reshape(H, W, c4)

    f = pad_ref[...].reshape((H + 4) * Wp, c4)
    pc = H * Wp                       # output rows (Wp wide; cols >= W cropped)
    lw = (H + 2) * Wp                 # window covering the three ky taps
    acc = jnp.zeros((pc, g), jnp.float32)
    for kx in range(3):
        # kx != 1 slices are sublane-misaligned (one realignment copy each);
        # pltpu.roll along the sublane axis could move that to the XLU slot.
        win = f[Wp + kx - 1:Wp + kx - 1 + lw, :]
        if fat_k:
            cat = jnp.concatenate(
                [win[0:pc, :], win[Wp:Wp + pc, :], win[2 * Wp:2 * Wp + pc, :]],
                axis=-1)
            acc = acc + jnp.dot(cat, w_ref[kx].reshape(3 * c4, g),
                                preferred_element_type=jnp.float32)
        else:
            for ky in range(3):
                acc = acc + jnp.dot(win[ky * Wp:ky * Wp + pc, :], w_ref[kx, ky],
                                    preferred_element_type=jnp.float32)

    y = acc.reshape(H, Wp, g)[:, :W, :].reshape(H * W, g)   # crop fused
    yb = y.astype(jnp.bfloat16)                              # bf16 piece storage
    y_ref[...] = yb
    # per-image stats of the exactly-stored (bf16-rounded) new channels
    yf = yb.astype(jnp.float32)
    st_ref[0:1, :] = jnp.sum(yf, axis=0, keepdims=True)
    st_ref[1:2, :] = jnp.sum(yf * yf, axis=0, keepdims=True)


def bn_relu_conv3x3(out1, scale2, shift2, w2k, N, H, W, vmem_limit):
    c4 = out1.shape[-1]
    g = w2k.shape[-1]
    hw = H * W
    wp = _round_up(W + 2, 16)          # multiple of 16: bf16 sublane alignment
    fat_k = (c4 % 128 == 0)
    # TODO(synk): for large H*W add a row-tiled grid axis with a +/-1-row halo
    #             (manual DMA) so DMA pipelines within an image and v7x's two
    #             TensorCores get more than N parallel steps.
    # TODO(synk): when g < 128, the y store is lane-masked; a lane-dense slab
    #             output would require an in-kernel cross-lane relayout.
    return pl.pallas_call(
        functools.partial(_bn_relu_conv3x3_kernel, H=H, W=W, Wp=wp, fat_k=fat_k),
        out_shape=(jax.ShapeDtypeStruct((N * hw, g), jnp.bfloat16),
                   jax.ShapeDtypeStruct((N, 2, g), jnp.float32)),
        grid=(N,),
        in_specs=[
            pl.BlockSpec((hw, c4), lambda n: (n, 0)),
            pl.BlockSpec((1, c4), lambda n: (0, 0)),
            pl.BlockSpec((1, c4), lambda n: (0, 0)),
            pl.BlockSpec((3, 3, c4, g), lambda n: (0, 0, 0, 0)),
        ],
        out_specs=(pl.BlockSpec((hw, g), lambda n: (n, 0)),
                   pl.BlockSpec((None, 2, g), lambda n: (n, 0, 0))),
        scratch_shapes=[pltpu.VMEM((H + 4, wp, c4), jnp.bfloat16)],
        compiler_params=pltpu.CompilerParams(
            dimension_semantics=("parallel",),
            vmem_limit_bytes=vmem_limit),
    )(out1, scale2, shift2, w2k)


# ---------------------------------------------------------------------------
# parameters (deterministic, synthetic; PyTorch layouts) and forward pass
# ---------------------------------------------------------------------------
def init_params(key, in_channels, num_layers, growth):
    params = []
    c = in_channels
    c4 = 4 * growth
    for _ in range(num_layers):
        key, k0, k1, k2, k3, k4, k5 = jax.random.split(key, 7)
        params.append(dict(
            bn1_gamma=jax.random.uniform(k0, (c,), jnp.float32, 0.5, 1.5),
            bn1_beta=0.1 * jax.random.normal(k1, (c,), jnp.float32),
            w1=0.1 * jax.random.normal(k2, (c4, c), jnp.float32),             # Conv2d 1x1 (out,in)
            bn2_gamma=jax.random.uniform(k3, (c4,), jnp.float32, 0.5, 1.5),
            bn2_beta=0.1 * jax.random.normal(k4, (c4,), jnp.float32),
            w2=0.1 * jax.random.normal(k5, (growth, c4, 3, 3), jnp.float32),  # Conv2d 3x3 (o,i,kh,kw)
        ))
        c += growth
    return params


def dense_block_forward(x_nchw, params, H, W):
    N = x_nchw.shape[0]
    R = N * H * W
    vmem_limit = _vmem_limit_bytes()

    # NCHW -> (N*H*W, C) once; dense-connection pieces stored in bf16.
    x0 = jnp.transpose(x_nchw, (0, 2, 3, 1)).reshape(R, -1).astype(jnp.bfloat16)
    x0f = x0.astype(jnp.float32)

    # Dense connection as channel "pieces" (each written to HBM exactly once).
    pieces = [x0]
    piece_sums = [jnp.sum(x0f, axis=0)]       # cached per-channel batch sums for BN1
    piece_sqs = [jnp.sum(x0f * x0f, axis=0)]

    for p in params:
        c4 = p["w1"].shape[0]

        # BN1 scale/shift over the full concatenated channel range from cached stats.
        mean = jnp.concatenate(piece_sums) / R
        var = jnp.concatenate(piece_sqs) / R - mean * mean
        sc, sh = _scale_shift(p["bn1_gamma"], p["bn1_beta"], mean, var)

        w1_t = jnp.transpose(p["w1"]).astype(jnp.bfloat16)   # (C_in, C4)

        out1, st1 = bn_relu_conv1x1(pieces, sc[None, :], sh[None, :], w1_t, c4,
                                    vmem_limit)

        # BN2 scale/shift from kernel-1's fused partial stats (no extra pass).
        mean1 = jnp.sum(st1[:, 0, :], axis=0) / R
        var1 = jnp.sum(st1[:, 1, :], axis=0) / R - mean1 * mean1
        sc2, sh2 = _scale_shift(p["bn2_gamma"], p["bn2_beta"], mean1, var1)

        # 3x3 taps as (kx, ky, C4, G) bf16 for kernel 2.
        w2k = jnp.transpose(p["w2"], (3, 2, 1, 0)).astype(jnp.bfloat16)

        y, st2 = bn_relu_conv3x3(out1, sc2[None, :], sh2[None, :], w2k, N, H, W,
                                 vmem_limit)

        pieces.append(y)
        piece_sums.append(jnp.sum(st2[:, 0, :], axis=0))
        piece_sqs.append(jnp.sum(st2[:, 1, :], axis=0))

    # One-time assembly back to NCHW (channel order == torch.cat order).
    outs = [jnp.transpose(piece.astype(jnp.float32).reshape(N, H, W, piece.shape[-1]),
                          (0, 3, 1, 2)) for piece in pieces]
    return jnp.concatenate(outs, axis=1)


# ---------------------------------------------------------------------------
# pure-JAX reference (NCHW), mirroring the PyTorch module in train() mode with
# the kernels' precision policy (bf16 matmul inputs + f32 accumulation, bf16
# storage of the dense connection between layers; BN/ReLU math in f32).
# ---------------------------------------------------------------------------
def ref_dense_block(x, params, eps=BN_EPS):
    x = x.astype(jnp.bfloat16).astype(jnp.float32)
    for p in params:
        mean = jnp.mean(x, axis=(0, 2, 3))
        var = jnp.var(x, axis=(0, 2, 3))
        sc, sh = _scale_shift(p["bn1_gamma"], p["bn1_beta"], mean, var, eps)
        a = jnp.maximum(x * sc[None, :, None, None] + sh[None, :, None, None], 0.0)
        out1 = jax.lax.conv_general_dilated(
            a.astype(jnp.bfloat16),
            p["w1"][:, :, None, None].astype(jnp.bfloat16),
            window_strides=(1, 1), padding="VALID",
            dimension_numbers=("NCHW", "OIHW", "NCHW"),
            preferred_element_type=jnp.float32)
        mean2 = jnp.mean(out1, axis=(0, 2, 3))
        var2 = jnp.var(out1, axis=(0, 2, 3))
        sc2, sh2 = _scale_shift(p["bn2_gamma"], p["bn2_beta"], mean2, var2, eps)
        a2 = jnp.maximum(out1 * sc2[None, :, None, None] + sh2[None, :, None, None], 0.0)
        y = jax.lax.conv_general_dilated(
            a2.astype(jnp.bfloat16), p["w2"].astype(jnp.bfloat16),
            window_strides=(1, 1), padding=((1, 1), (1, 1)),
            dimension_numbers=("NCHW", "OIHW", "NCHW"),
            preferred_element_type=jnp.float32)
        y = y.astype(jnp.bfloat16).astype(jnp.float32)   # mirror bf16 piece storage
        x = jnp.concatenate([x, y], axis=1)
    return x


if __name__ == "__main__":
    key = jax.random.PRNGKey(0)
    k_x, k_p = jax.random.split(key)

    N, Cin, H, W = 2, 4, 16, 16
    num_layers, growth = 3, 4

    x = jax.random.normal(k_x, (N, Cin, H, W), jnp.float32)
    params = init_params(k_p, Cin, num_layers, growth)

    fwd = jax.jit(lambda inp: dense_block_forward(inp, params, H, W))
    out = jax.block_until_ready(fwd(x))

    expected_channels = Cin + num_layers * growth
    assert out.shape == (N, expected_channels, H, W), out.shape
    assert bool(jnp.all(jnp.isfinite(out)))

    ref = ref_dense_block(x, params)
    err = float(jnp.max(jnp.abs(out - ref)))
    assert err < 2e-2, f"max |kernel - reference| = {err}"

    print("KERNEL_OK")
</pallas_src>

<mosaic_0001>
module attributes {stable_mosaic.version = 11 : i64} {
  func.func @_bn_relu_conv1x1_kernel(%arg0: i32, %arg1: memref<512x4xbf16, #tpu.memory_space<vmem>>, %arg2: memref<1x4xf32, #tpu.memory_space<vmem>>, %arg3: memref<1x4xf32, #tpu.memory_space<vmem>>, %arg4: memref<4x16xbf16, #tpu.memory_space<vmem>>, %arg5: memref<512x16xf32, #tpu.memory_space<vmem>>, %arg6: memref<1x2x16xf32, #tpu.memory_space<vmem>>) attributes {dimension_semantics = [#tpu.dimension_semantics<parallel>], iteration_bounds = array<i64: 1>, scalar_prefetch = 0 : i64, scratch_operands = 0 : i64, tpu.core_type = #tpu.core_type<tc>, window_params = [{transform_indices = @transform_0, window_bounds = array<i64: 512, 4>}, {pipeline_mode = #tpu.pipeline_mode<synchronous>, transform_indices = @transform_1, window_bounds = array<i64: 1, 4>}, {pipeline_mode = #tpu.pipeline_mode<synchronous>, transform_indices = @transform_2, window_bounds = array<i64: 1, 4>}, {pipeline_mode = #tpu.pipeline_mode<synchronous>, transform_indices = @transform_3, window_bounds = array<i64: 4, 16>}, {transform_indices = @transform_4, window_bounds = array<i64: 512, 16>}, {transform_indices = @transform_5, window_bounds = array<i64: 1, 2, 16>}]} {
    %c0 = arith.constant 0 : index
    %c0_0 = arith.constant 0 : index
    %0 = vector.load %arg1[%c0, %c0_0] : memref<512x4xbf16, #tpu.memory_space<vmem>>, vector<512x4xbf16>
    %1 = arith.extf %0 : vector<512x4xbf16> to vector<512x4xf32>
    %c0_1 = arith.constant 0 : index
    %c0_2 = arith.constant 0 : index
    %2 = vector.load %arg2[%c0_1, %c0_2] : memref<1x4xf32, #tpu.memory_space<vmem>>, vector<1x4xf32>
    %3 = vector.broadcast %2 : vector<1x4xf32> to vector<512x4xf32>
    %4 = arith.mulf %1, %3 : vector<512x4xf32>
    %c0_3 = arith.constant 0 : index
    %c0_4 = arith.constant 0 : index
    %5 = vector.load %arg3[%c0_3, %c0_4] : memref<1x4xf32, #tpu.memory_space<vmem>>, vector<1x4xf32>
    %6 = vector.broadcast %5 : vector<1x4xf32> to vector<512x4xf32>
    %7 = arith.addf %4, %6 : vector<512x4xf32>
    %cst = arith.constant 0.000000e+00 : f32
    %8 = vector.broadcast %cst : f32 to vector<512x4xf32>
    %9 = arith.maximumf %7, %8 : vector<512x4xf32>
    %10 = arith.truncf %9 : vector<512x4xf32> to vector<512x4xbf16>
    %c0_5 = arith.constant 0 : index
    %c0_6 = arith.constant 0 : index
    %11 = vector.load %arg4[%c0_5, %c0_6] : memref<4x16xbf16, #tpu.memory_space<vmem>>, vector<4x16xbf16>
    %cst_7 = arith.constant dense<0.000000e+00> : vector<512x16xf32>
    %12 = tpu.matmul %10, %11, %cst_7 {dimension_numbers = #tpu.dot_dimension_numbers<[1], [0], [0], [1], [0, 0, 1, 1], [], []>} : vector<512x4xbf16>, vector<4x16xbf16>, vector<512x16xf32> -> vector<512x16xf32>
    %c0_8 = arith.constant 0 : index
    %c0_9 = arith.constant 0 : index
    %13 = vector.load %arg5[%c0_8, %c0_9] : memref<512x16xf32, #tpu.memory_space<vmem>>, vector<512x16xf32>
    tpu.vector_store %arg5[%c0_8, %c0_9], %12 {strides = array<i32>} : memref<512x16xf32, #tpu.memory_space<vmem>>, vector<512x16xf32>,
    %cst_10 = arith.constant dense<0.000000e+00> : vector<16xf32>
    %14 = vector.multi_reduction <add>, %12, %cst_10 [0] : vector<512x16xf32> to vector<16xf32>
    %15 = vector.shape_cast %14 : vector<16xf32> to vector<1x16xf32>
    %c0_11 = arith.constant 0 : index
    %c0_12 = arith.constant 0 : index
    %c0_13 = arith.constant 0 : index
    %16 = vector.load %arg6[%c0_11, %c0_12, %c0_13] : memref<1x2x16xf32, #tpu.memory_space<vmem>>, vector<1x1x16xf32>
    %17 = vector.shape_cast %16 : vector<1x1x16xf32> to vector<1x16xf32>
    %18 = vector.shape_cast %15 : vector<1x16xf32> to vector<1x1x16xf32>
    tpu.vector_store %arg6[%c0_11, %c0_12, %c0_13], %18 {strides = array<i32>} : memref<1x2x16xf32, #tpu.memory_space<vmem>>, vector<1x1x16xf32>,
    %19 = arith.mulf %12, %12 : vector<512x16xf32>
    %cst_14 = arith.constant dense<0.000000e+00> : vector<16xf32>
    %20 = vector.multi_reduction <add>, %19, %cst_14 [0] : vector<512x16xf32> to vector<16xf32>
    %21 = vector.shape_cast %20 : vector<16xf32> to vector<1x16xf32>
    %c0_15 = arith.constant 0 : index
    %c1 = arith.constant 1 : index
    %c0_16 = arith.constant 0 : index
    %22 = vector.load %arg6[%c0_15, %c1, %c0_16] : memref<1x2x16xf32, #tpu.memory_space<vmem>>, vector<1x1x16xf32>
    %23 = vector.shape_cast %22 : vector<1x1x16xf32> to vector<1x16xf32>
    %24 = vector.shape_cast %21 : vector<1x16xf32> to vector<1x1x16xf32>
    tpu.vector_store %arg6[%c0_15, %c1, %c0_16], %24 {strides = array<i32>} : memref<1x2x16xf32, #tpu.memory_space<vmem>>, vector<1x1x16xf32>,
    return
  }
  func.func @transform_0(%arg0: i32) -> (i32, i32) {
    %c0_i32 = arith.constant 0 : i32
    %c0_i32_0 = arith.constant 0 : i32
    return %arg0, %c0_i32 : i32, i32
  }
  func.func @transform_1(%arg0: i32) -> (i32, i32) {
    %c0_i32 = arith.constant 0 : i32
    %c0_i32_0 = arith.constant 0 : i32
    %c0_i32_1 = arith.constant 0 : i32
    return %c0_i32, %c0_i32_0 : i32, i32
  }
  func.func @transform_2(%arg0: i32) -> (i32, i32) {
    %c0_i32 = arith.constant 0 : i32
    %c0_i32_0 = arith.constant 0 : i32
    %c0_i32_1 = arith.constant 0 : i32
    return %c0_i32, %c0_i32_0 : i32, i32
  }
  func.func @transform_3(%arg0: i32) -> (i32, i32) {
    %c0_i32 = arith.constant 0 : i32
    %c0_i32_0 = arith.constant 0 : i32
    %c0_i32_1 = arith.constant 0 : i32
    return %c0_i32, %c0_i32_0 : i32, i32
  }
  func.func @transform_4(%arg0: i32) -> (i32, i32) {
    %c0_i32 = arith.constant 0 : i32
    %c0_i32_0 = arith.constant 0 : i32
    return %arg0, %c0_i32 : i32, i32
  }
  func.func @transform_5(%arg0: i32) -> (i32, i32, i32) {
    %c0_i32 = arith.constant 0 : i32
    %c0_i32_0 = arith.constant 0 : i32
    %c0_i32_1 = arith.constant 0 : i32
    return %arg0, %c0_i32, %c0_i32_0 : i32, i32, i32
  }
}

module attributes {stable_mosaic.version = 11 : i64} {
  func.func @_bn_relu_conv3x3_kernel(%arg0: i32, %arg1: memref<256x16xf32, #tpu.memory_space<vmem>>, %arg2: memref<1x16xf32, #tpu.memory_space<vmem>>, %arg3: memref<1x16xf32, #tpu.memory_space<vmem>>, %arg4: memref<3x3x16x4xbf16, #tpu.memory_space<vmem>>, %arg5: memref<256x4xbf16, #tpu.memory_space<vmem>>, %arg6: memref<1x2x4xf32, #tpu.memory_space<vmem>>, %arg7: memref<20x32x16xbf16, #tpu.memory_space<vmem>>) attributes {dimension_semantics = [#tpu.dimension_semantics<parallel>], iteration_bounds = array<i64: 2>, scalar_prefetch = 0 : i64, scratch_operands = 1 : i64, tpu.core_type = #tpu.core_type<tc>, window_params = [{transform_indices = @transform_0, window_bounds = array<i64: 256, 16>}, {pipeline_mode = #tpu.pipeline_mode<synchronous>, transform_indices = @transform_1, window_bounds = array<i64: 1, 16>}, {pipeline_mode = #tpu.pipeline_mode<synchronous>, transform_indices = @transform_2, window_bounds = array<i64: 1, 16>}, {pipeline_mode = #tpu.pipeline_mode<synchronous>, transform_indices = @transform_3, window_bounds = array<i64: 3, 3, 16, 4>}, {transform_indices = @transform_4, window_bounds = array<i64: 256, 4>}, {transform_indices = @transform_5, window_bounds = array<i64: 1, 2, 4>}]} {
    %c0 = arith.constant 0 : index
    %c0_0 = arith.constant 0 : index
    %0 = vector.load %arg1[%c0, %c0_0] : memref<256x16xf32, #tpu.memory_space<vmem>>, vector<256x16xf32>
    %c0_1 = arith.constant 0 : index
    %c0_2 = arith.constant 0 : index
    %1 = vector.load %arg2[%c0_1, %c0_2] : memref<1x16xf32, #tpu.memory_space<vmem>>, vector<1x16xf32>
    %2 = vector.broadcast %1 : vector<1x16xf32> to vector<256x16xf32>
    %3 = arith.mulf %0, %2 : vector<256x16xf32>
    %c0_3 = arith.constant 0 : index
    %c0_4 = arith.constant 0 : index
    %4 = vector.load %arg3[%c0_3, %c0_4] : memref<1x16xf32, #tpu.memory_space<vmem>>, vector<1x16xf32>
    %5 = vector.broadcast %4 : vector<1x16xf32> to vector<256x16xf32>
    %6 = arith.addf %3, %5 : vector<256x16xf32>
    %cst = arith.constant 0.000000e+00 : f32
    %7 = vector.broadcast %cst : f32 to vector<256x16xf32>
    %8 = arith.maximumf %6, %7 : vector<256x16xf32>
    %9 = arith.truncf %8 : vector<256x16xf32> to vector<256x16xbf16>
    %cst_5 = arith.constant 0.000000e+00 : bf16
    %10 = vector.broadcast %cst_5 : bf16 to vector<2x32x16xbf16>
    %c0_6 = arith.constant 0 : index
    %c0_7 = arith.constant 0 : index
    %c0_8 = arith.constant 0 : index
    %11 = vector.load %arg7[%c0_6, %c0_7, %c0_8] : memref<20x32x16xbf16, #tpu.memory_space<vmem>>, vector<2x32x16xbf16>
    tpu.vector_store %arg7[%c0_6, %c0_7, %c0_8], %10 {strides = array<i32>} : memref<20x32x16xbf16, #tpu.memory_space<vmem>>, vector<2x32x16xbf16>,
    %cst_9 = arith.constant 0.000000e+00 : bf16
    %12 = vector.broadcast %cst_9 : bf16 to vector<2x32x16xbf16>
    %c18 = arith.constant 18 : index
    %c0_10 = arith.constant 0 : index
    %c0_11 = arith.constant 0 : index
    %13 = vector.load %arg7[%c18, %c0_10, %c0_11] : memref<20x32x16xbf16, #tpu.memory_space<vmem>>, vector<2x32x16xbf16>
    tpu.vector_store %arg7[%c18, %c0_10, %c0_11], %12 {strides = array<i32>} : memref<20x32x16xbf16, #tpu.memory_space<vmem>>, vector<2x32x16xbf16>,
    %cst_12 = arith.constant 0.000000e+00 : bf16
    %14 = vector.broadcast %cst_12 : bf16 to vector<16x16x16xbf16>
    %c2 = arith.constant 2 : index
    %c16 = arith.constant 16 : index
    %c0_13 = arith.constant 0 : index
    %15 = vector.load %arg7[%c2, %c16, %c0_13] : memref<20x32x16xbf16, #tpu.memory_space<vmem>>, vector<16x16x16xbf16>
    tpu.vector_store %arg7[%c2, %c16, %c0_13], %14 {strides = array<i32>} : memref<20x32x16xbf16, #tpu.memory_space<vmem>>, vector<16x16x16xbf16>,
    %16 = vector.shape_cast %9 : vector<256x16xbf16> to vector<16x16x16xbf16>
    %c2_14 = arith.constant 2 : index
    %c0_15 = arith.constant 0 : index
    %c0_16 = arith.constant 0 : index
    %17 = vector.load %arg7[%c2_14, %c0_15, %c0_16] : memref<20x32x16xbf16, #tpu.memory_space<vmem>>, vector<16x16x16xbf16>
    tpu.vector_store %arg7[%c2_14, %c0_15, %c0_16], %16 {strides = array<i32>} : memref<20x32x16xbf16, #tpu.memory_space<vmem>>, vector<16x16x16xbf16>,
    %c0_17 = arith.constant 0 : index
    %c0_18 = arith.constant 0 : index
    %c0_19 = arith.constant 0 : index
    %18 = vector.load %arg7[%c0_17, %c0_18, %c0_19] : memref<20x32x16xbf16, #tpu.memory_space<vmem>>, vector<20x32x16xbf16>
    %19 = vector.shape_cast %18 : vector<20x32x16xbf16> to vector<640x16xbf16>
    %cst_20 = arith.constant 0.000000e+00 : f32
    %20 = vector.broadcast %cst_20 : f32 to vector<512x4xf32>
    %21 = vector.extract_strided_slice %19 {offsets = [31, 0], sizes = [576, 16], strides = [1, 1]} : vector<640x16xbf16> to vector<576x16xbf16>
    %22 = vector.extract_strided_slice %21 {offsets = [0, 0], sizes = [512, 16], strides = [1, 1]} : vector<576x16xbf16> to vector<512x16xbf16>
    %c0_21 = arith.constant 0 : index
    %c0_22 = arith.constant 0 : index
    %c0_23 = arith.constant 0 : index
    %c0_24 = arith.constant 0 : index
    %23 = vector.load %arg4[%c0_21, %c0_22, %c0_23, %c0_24] : memref<3x3x16x4xbf16, #tpu.memory_space<vmem>>, vector<1x1x16x4xbf16>
    %24 = vector.shape_cast %23 : vector<1x1x16x4xbf16> to vector<16x4xbf16>
    %cst_25 = arith.constant dense<0.000000e+00> : vector<512x4xf32>
    %25 = tpu.matmul %22, %24, %cst_25 {dimension_numbers = #tpu.dot_dimension_numbers<[1], [0], [0], [1], [0, 0, 1, 1], [], []>} : vector<512x16xbf16>, vector<16x4xbf16>, vector<512x4xf32> -> vector<512x4xf32>
    %26 = arith.addf %20, %25 : vector<512x4xf32>
    %27 = vector.extract_strided_slice %21 {offsets = [32, 0], sizes = [512, 16], strides = [1, 1]} : vector<576x16xbf16> to vector<512x16xbf16>
    %c0_26 = arith.constant 0 : index
    %c1 = arith.constant 1 : index
    %c0_27 = arith.constant 0 : index
    %c0_28 = arith.constant 0 : index
    %28 = vector.load %arg4[%c0_26, %c1, %c0_27, %c0_28] : memref<3x3x16x4xbf16, #tpu.memory_space<vmem>>, vector<1x1x16x4xbf16>
    %29 = vector.shape_cast %28 : vector<1x1x16x4xbf16> to vector<16x4xbf16>
    %cst_29 = arith.constant dense<0.000000e+00> : vector<512x4xf32>
    %30 = tpu.matmul %27, %29, %cst_29 {dimension_numbers = #tpu.dot_dimension_numbers<[1], [0], [0], [1], [0, 0, 1, 1], [], []>} : vector<512x16xbf16>, vector<16x4xbf16>, vector<512x4xf32> -> vector<512x4xf32>
    %31 = arith.addf %26, %30 : vector<512x4xf32>
    %32 = vector.extract_strided_slice %21 {offsets = [64, 0], sizes = [512, 16], strides = [1, 1]} : vector<576x16xbf16> to vector<512x16xbf16>
    %c0_30 = arith.constant 0 : index
    %c2_31 = arith.constant 2 : index
    %c0_32 = arith.constant 0 : index
    %c0_33 = arith.constant 0 : index
    %33 = vector.load %arg4[%c0_30, %c2_31, %c0_32, %c0_33] : memref<3x3x16x4xbf16, #tpu.memory_space<vmem>>, vector<1x1x16x4xbf16>
    %34 = vector.shape_cast %33 : vector<1x1x16x4xbf16> to vector<16x4xbf16>
    %cst_34 = arith.constant dense<0.000000e+00> : vector<512x4xf32>
    %35 = tpu.matmul %32, %34, %cst_34 {dimension_numbers = #tpu.dot_dimension_numbers<[1], [0], [0], [1], [0, 0, 1, 1], [], []>} : vector<512x16xbf16>, vector<16x4xbf16>, vector<512x4xf32> -> vector<512x4xf32>
    %36 = arith.addf %31, %35 : vector<512x4xf32>
    %37 = vector.extract_strided_slice %19 {offsets = [32, 0], sizes = [576, 16], strides = [1, 1]} : vector<640x16xbf16> to vector<576x16xbf16>
    %38 = vector.extract_strided_slice %37 {offsets = [0, 0], sizes = [512, 16], strides = [1, 1]} : vector<576x16xbf16> to vector<512x16xbf16>
    %c1_35 = arith.constant 1 : index
    %c0_36 = arith.constant 0 : index
    %c0_37 = arith.constant 0 : index
    %c0_38 = arith.constant 0 : index
    %39 = vector.load %arg4[%c1_35, %c0_36, %c0_37, %c0_38] : memref<3x3x16x4xbf16, #tpu.memory_space<vmem>>, vector<1x1x16x4xbf16>
    %40 = vector.shape_cast %39 : vector<1x1x16x4xbf16> to vector<16x4xbf16>
    %cst_39 = arith.constant dense<0.000000e+00> : vector<512x4xf32>
    %41 = tpu.matmul %38, %40, %cst_39 {dimension_numbers = #tpu.dot_dimension_numbers<[1], [0], [0], [1], [0, 0, 1, 1], [], []>} : vector<512x16xbf16>, vector<16x4xbf16>, vector<512x4xf32> -> vector<512x4xf32>
    %42 = arith.addf %36, %41 : vector<512x4xf32>
    %43 = vector.extract_strided_slice %37 {offsets = [32, 0], sizes = [512, 16], strides = [1, 1]} : vector<576x16xbf16> to vector<512x16xbf16>
    %c1_40 = arith.constant 1 : index
    %c1_41 = arith.constant 1 : index
    %c0_42 = arith.constant 0 : index
    %c0_43 = arith.constant 0 : index
    %44 = vector.load %arg4[%c1_40, %c1_41, %c0_42, %c0_43] : memref<3x3x16x4xbf16, #tpu.memory_space<vmem>>, vector<1x1x16x4xbf16>
    %45 = vector.shape_cast %44 : vector<1x1x16x4xbf16> to vector<16x4xbf16>
    %cst_44 = arith.constant dense<0.000000e+00> : vector<512x4xf32>
    %46 = tpu.matmul %43, %45, %cst_44 {dimension_numbers = #tpu.dot_dimension_numbers<[1], [0], [0], [1], [0, 0, 1, 1], [], []>} : vector<512x16xbf16>, vector<16x4xbf16>, vector<512x4xf32> -> vector<512x4xf32>
    %47 = arith.addf %42, %46 : vector<512x4xf32>
    %48 = vector.extract_strided_slice %37 {offsets = [64, 0], sizes = [512, 16], strides = [1, 1]} : vector<576x16xbf16> to vector<512x16xbf16>
    %c1_45 = arith.constant 1 : index
    %c2_46 = arith.constant 2 : index
    %c0_47 = arith.constant 0 : index
    %c0_48 = arith.constant 0 : index
    %49 = vector.load %arg4[%c1_45, %c2_46, %c0_47, %c0_48] : memref<3x3x16x4xbf16, #tpu.memory_space<vmem>>, vector<1x1x16x4xbf16>
    %50 = vector.shape_cast %49 : vector<1x1x16x4xbf16> to vector<16x4xbf16>
    %cst_49 = arith.constant dense<0.000000e+00> : vector<512x4xf32>
    %51 = tpu.matmul %48, %50, %cst_49 {dimension_numbers = #tpu.dot_dimension_numbers<[1], [0], [0], [1], [0, 0, 1, 1], [], []>} : vector<512x16xbf16>, vector<16x4xbf16>, vector<512x4xf32> -> vector<512x4xf32>
    %52 = arith.addf %47, %51 : vector<512x4xf32>
    %53 = vector.extract_strided_slice %19 {offsets = [33, 0], sizes = [576, 16], strides = [1, 1]} : vector<640x16xbf16> to vector<576x16xbf16>
    %54 = vector.extract_strided_slice %53 {offsets = [0, 0], sizes = [512, 16], strides = [1, 1]} : vector<576x16xbf16> to vector<512x16xbf16>
    %c2_50 = arith.constant 2 : index
    %c0_51 = arith.constant 0 : index
    %c0_52 = arith.constant 0 : index
    %c0_53 = arith.constant 0 : index
    %55 = vector.load %arg4[%c2_50, %c0_51, %c0_52, %c0_53] : memref<3x3x16x4xbf16, #tpu.memory_space<vmem>>, vector<1x1x16x4xbf16>
    %56 = vector.shape_cast %55 : vector<1x1x16x4xbf16> to vector<16x4xbf16>
    %cst_54 = arith.constant dense<0.000000e+00> : vector<512x4xf32>
    %57 = tpu.matmul %54, %56, %cst_54 {dimension_numbers = #tpu.dot_dimension_numbers<[1], [0], [0], [1], [0, 0, 1, 1], [], []>} : vector<512x16xbf16>, vector<16x4xbf16>, vector<512x4xf32> -> vector<512x4xf32>
    %58 = arith.addf %52, %57 : vector<512x4xf32>
    %59 = vector.extract_strided_slice %53 {offsets = [32, 0], sizes = [512, 16], strides = [1, 1]} : vector<576x16xbf16> to vector<512x16xbf16>
    %c2_55 = arith.constant 2 : index
    %c1_56 = arith.constant 1 : index
    %c0_57 = arith.constant 0 : index
    %c0_58 = arith.constant 0 : index
    %60 = vector.load %arg4[%c2_55, %c1_56, %c0_57, %c0_58] : memref<3x3x16x4xbf16, #tpu.memory_space<vmem>>, vector<1x1x16x4xbf16>
    %61 = vector.shape_cast %60 : vector<1x1x16x4xbf16> to vector<16x4xbf16>
    %cst_59 = arith.constant dense<0.000000e+00> : vector<512x4xf32>
    %62 = tpu.matmul %59, %61, %cst_59 {dimension_numbers = #tpu.dot_dimension_numbers<[1], [0], [0], [1], [0, 0, 1, 1], [], []>} : vector<512x16xbf16>, vector<16x4xbf16>, vector<512x4xf32> -> vector<512x4xf32>
    %63 = arith.addf %58, %62 : vector<512x4xf32>
    %64 = vector.extract_strided_slice %53 {offsets = [64, 0], sizes = [512, 16], strides = [1, 1]} : vector<576x16xbf16> to vector<512x16xbf16>
    %c2_60 = arith.constant 2 : index
    %c2_61 = arith.constant 2 : index
    %c0_62 = arith.constant 0 : index
    %c0_63 = arith.constant 0 : index
    %65 = vector.load %arg4[%c2_60, %c2_61, %c0_62, %c0_63] : memref<3x3x16x4xbf16, #tpu.memory_space<vmem>>, vector<1x1x16x4xbf16>
    %66 = vector.shape_cast %65 : vector<1x1x16x4xbf16> to vector<16x4xbf16>
    %cst_64 = arith.constant dense<0.000000e+00> : vector<512x4xf32>
    %67 = tpu.matmul %64, %66, %cst_64 {dimension_numbers = #tpu.dot_dimension_numbers<[1], [0], [0], [1], [0, 0, 1, 1], [], []>} : vector<512x16xbf16>, vector<16x4xbf16>, vector<512x4xf32> -> vector<512x4xf32>
    %68 = arith.addf %63, %67 : vector<512x4xf32>
    %69 = vector.shape_cast %68 : vector<512x4xf32> to vector<16x32x4xf32>
    %70 = vector.extract_strided_slice %69 {offsets = [0, 0, 0], sizes = [16, 16, 4], strides = [1, 1, 1]} : vector<16x32x4xf32> to vector<16x16x4xf32>
    %71 = vector.shape_cast %70 : vector<16x16x4xf32> to vector<256x4xf32>
    %72 = arith.truncf %71 : vector<256x4xf32> to vector<256x4xbf16>
    %c0_65 = arith.constant 0 : index
    %c0_66 = arith.constant 0 : index
    %73 = vector.load %arg5[%c0_65, %c0_66] : memref<256x4xbf16, #tpu.memory_space<vmem>>, vector<256x4xbf16>
    tpu.vector_store %arg5[%c0_65, %c0_66], %72 {strides = array<i32>} : memref<256x4xbf16, #tpu.memory_space<vmem>>, vector<256x4xbf16>,
    %74 = arith.extf %72 : vector<256x4xbf16> to vector<256x4xf32>
    %cst_67 = arith.constant dense<0.000000e+00> : vector<4xf32>
    %75 = vector.multi_reduction <add>, %74, %cst_67 [0] : vector<256x4xf32> to vector<4xf32>
    %76 = vector.shape_cast %75 : vector<4xf32> to vector<1x4xf32>
    %c0_68 = arith.constant 0 : index
    %c0_69 = arith.constant 0 : index
    %c0_70 = arith.constant 0 : index
    %77 = vector.load %arg6[%c0_68, %c0_69, %c0_70] : memref<1x2x4xf32, #tpu.memory_space<vmem>>, vector<1x1x4xf32>
    %78 = vector.shape_cast %77 : vector<1x1x4xf32> to vector<1x4xf32>
    %79 = vector.shape_cast %76 : vector<1x4xf32> to vector<1x1x4xf32>
    tpu.vector_store %arg6[%c0_68, %c0_69, %c0_70], %79 {strides = array<i32>} : memref<1x2x4xf32, #tpu.memory_space<vmem>>, vector<1x1x4xf32>,
    %80 = arith.mulf %74, %74 : vector<256x4xf32>
    %cst_71 = arith.constant dense<0.000000e+00> : vector<4xf32>
    %81 = vector.multi_reduction <add>, %80, %cst_71 [0] : vector<256x4xf32> to vector<4xf32>
    %82 = vector.shape_cast %81 : vector<4xf32> to vector<1x4xf32>
    %c0_72 = arith.constant 0 : index
    %c1_73 = arith.constant 1 : index
    %c0_74 = arith.constant 0 : index
    %83 = vector.load %arg6[%c0_72, %c1_73, %c0_74] : memref<1x2x4xf32, #tpu.memory_space<vmem>>, vector<1x1x4xf32>
    %84 = vector.shape_cast %83 : vector<1x1x4xf32> to vector<1x4xf32>
    %85 = vector.shape_cast %82 : vector<1x4xf32> to vector<1x1x4xf32>
    tpu.vector_store %arg6[%c0_72, %c1_73, %c0_74], %85 {strides = array<i32>} : memref<1x2x4xf32, #tpu.memory_space<vmem>>, vector<1x1x4xf32>,
    return
  }
  func.func @transform_0(%arg0: i32) -> (i32, i32) {
    %c0_i32 = arith.constant 0 : i32
    %c0_i32_0 = arith.constant 0 : i32
    return %arg0, %c0_i32 : i32, i32
  }
  func.func @transform_1(%arg0: i32) -> (i32, i32) {
    %c0_i32 = arith.constant 0 : i32
    %c0_i32_0 = arith.constant 0 : i32
    %c0_i32_1 = arith.constant 0 : i32
    return %c0_i32, %c0_i32_0 : i32, i32
  }
  func.func @transform_2(%arg0: i32) -> (i32, i32) {
    %c0_i32 = arith.constant 0 : i32
    %c0_i32_0 = arith.constant 0 : i32
    %c0_i32_1 = arith.constant 0 : i32
    return %c0_i32, %c0_i32_0 : i32, i32
  }
  func.func @transform_3(%arg0: i32) -> (i32, i32, i32, i32) {
    %c0_i32 = arith.constant 0 : i32
    %c0_i32_0 = arith.constant 0 : i32
    %c0_i32_1 = arith.constant 0 : i32
    %c0_i32_2 = arith.constant 0 : i32
    %c0_i32_3 = arith.constant 0 : i32
    return %c0_i32, %c0_i32_0, %c0_i32_1, %c0_i32_2 : i32, i32, i32, i32
  }
  func.func @transform_4(%arg0: i32) -> (i32, i32) {
    %c0_i32 = arith.constant 0 : i32
    %c0_i32_0 = arith.constant 0 : i32
    return %arg0, %c0_i32 : i32, i32
  }
  func.func @transform_5(%arg0: i32) -> (i32, i32, i32) {
    %c0_i32 = arith.constant 0 : i32
    %c0_i32_0 = arith.constant 0 : i32
    %c0_i32_1 = arith.constant 0 : i32
    return %arg0, %c0_i32, %c0_i32_0 : i32, i32, i32
  }
}

module attributes {stable_mosaic.version = 11 : i64} {
  func.func @_bn_relu_conv1x1_kernel(%arg0: i32, %arg1: memref<512x4xbf16, #tpu.memory_space<vmem>>, %arg2: memref<512x4xbf16, #tpu.memory_space<vmem>>, %arg3: memref<1x8xf32, #tpu.memory_space<vmem>>, %arg4: memref<1x8xf32, #tpu.memory_space<vmem>>, %arg5: memref<8x16xbf16, #tpu.memory_space<vmem>>, %arg6: memref<512x16xf32, #tpu.memory_space<vmem>>, %arg7: memref<1x2x16xf32, #tpu.memory_space<vmem>>) attributes {dimension_semantics = [#tpu.dimension_semantics<parallel>], iteration_bounds = array<i64: 1>, scalar_prefetch = 0 : i64, scratch_operands = 0 : i64, tpu.core_type = #tpu.core_type<tc>, window_params = [{transform_indices = @transform_0, window_bounds = array<i64: 512, 4>}, {transform_indices = @transform_1, window_bounds = array<i64: 512, 4>}, {pipeline_mode = #tpu.pipeline_mode<synchronous>, transform_indices = @transform_2, window_bounds = array<i64: 1, 8>}, {pipeline_mode = #tpu.pipeline_mode<synchronous>, transform_indices = @transform_3, window_bounds = array<i64: 1, 8>}, {pipeline_mode = #tpu.pipeline_mode<synchronous>, transform_indices = @transform_4, window_bounds = array<i64: 8, 16>}, {transform_indices = @transform_5, window_bounds = array<i64: 512, 16>}, {transform_indices = @transform_6, window_bounds = array<i64: 1, 2, 16>}]} {
    %c0 = arith.constant 0 : index
    %c0_0 = arith.constant 0 : index
    %0 = vector.load %arg1[%c0, %c0_0] : memref<512x4xbf16, #tpu.memory_space<vmem>>, vector<512x4xbf16>
    %c0_1 = arith.constant 0 : index
    %c0_2 = arith.constant 0 : index
    %1 = vector.load %arg2[%c0_1, %c0_2] : memref<512x4xbf16, #tpu.memory_space<vmem>>, vector<512x4xbf16>
    %2 = tpu.concatenate %0, %1 in 1 : vector<512x4xbf16>, vector<512x4xbf16> -> vector<512x8xbf16>
    %3 = arith.extf %2 : vector<512x8xbf16> to vector<512x8xf32>
    %c0_3 = arith.constant 0 : index
    %c0_4 = arith.constant 0 : index
    %4 = vector.load %arg3[%c0_3, %c0_4] : memref<1x8xf32, #tpu.memory_space<vmem>>, vector<1x8xf32>
    %5 = vector.broadcast %4 : vector<1x8xf32> to vector<512x8xf32>
    %6 = arith.mulf %3, %5 : vector<512x8xf32>
    %c0_5 = arith.constant 0 : index
    %c0_6 = arith.constant 0 : index
    %7 = vector.load %arg4[%c0_5, %c0_6] : memref<1x8xf32, #tpu.memory_space<vmem>>, vector<1x8xf32>
    %8 = vector.broadcast %7 : vector<1x8xf32> to vector<512x8xf32>
    %9 = arith.addf %6, %8 : vector<512x8xf32>
    %cst = arith.constant 0.000000e+00 : f32
    %10 = vector.broadcast %cst : f32 to vector<512x8xf32>
    %11 = arith.maximumf %9, %10 : vector<512x8xf32>
    %12 = arith.truncf %11 : vector<512x8xf32> to vector<512x8xbf16>
    %c0_7 = arith.constant 0 : index
    %c0_8 = arith.constant 0 : index
    %13 = vector.load %arg5[%c0_7, %c0_8] : memref<8x16xbf16, #tpu.memory_space<vmem>>, vector<8x16xbf16>
    %cst_9 = arith.constant dense<0.000000e+00> : vector<512x16xf32>
    %14 = tpu.matmul %12, %13, %cst_9 {dimension_numbers = #tpu.dot_dimension_numbers<[1], [0], [0], [1], [0, 0, 1, 1], [], []>} : vector<512x8xbf16>, vector<8x16xbf16>, vector<512x16xf32> -> vector<512x16xf32>
    %c0_10 = arith.constant 0 : index
    %c0_11 = arith.constant 0 : index
    %15 = vector.load %arg6[%c0_10, %c0_11] : memref<512x16xf32, #tpu.memory_space<vmem>>, vector<512x16xf32>
    tpu.vector_store %arg6[%c0_10, %c0_11], %14 {strides = array<i32>} : memref<512x16xf32, #tpu.memory_space<vmem>>, vector<512x16xf32>,
    %cst_12 = arith.constant dense<0.000000e+00> : vector<16xf32>
    %16 = vector.multi_reduction <add>, %14, %cst_12 [0] : vector<512x16xf32> to vector<16xf32>
    %17 = vector.shape_cast %16 : vector<16xf32> to vector<1x16xf32>
    %c0_13 = arith.constant 0 : index
    %c0_14 = arith.constant 0 : index
    %c0_15 = arith.constant 0 : index
    %18 = vector.load %arg7[%c0_13, %c0_14, %c0_15] : memref<1x2x16xf32, #tpu.memory_space<vmem>>, vector<1x1x16xf32>
    %19 = vector.shape_cast %18 : vector<1x1x16xf32> to vector<1x16xf32>
    %20 = vector.shape_cast %17 : vector<1x16xf32> to vector<1x1x16xf32>
    tpu.vector_store %arg7[%c0_13, %c0_14, %c0_15], %20 {strides = array<i32>} : memref<1x2x16xf32, #tpu.memory_space<vmem>>, vector<1x1x16xf32>,
    %21 = arith.mulf %14, %14 : vector<512x16xf32>
    %cst_16 = arith.constant dense<0.000000e+00> : vector<16xf32>
    %22 = vector.multi_reduction <add>, %21, %cst_16 [0] : vector<512x16xf32> to vector<16xf32>
    %23 = vector.shape_cast %22 : vector<16xf32> to vector<1x16xf32>
    %c0_17 = arith.constant 0 : index
    %c1 = arith.constant 1 : index
    %c0_18 = arith.constant 0 : index
    %24 = vector.load %arg7[%c0_17, %c1, %c0_18] : memref<1x2x16xf32, #tpu.memory_space<vmem>>, vector<1x1x16xf32>
    %25 = vector.shape_cast %24 : vector<1x1x16xf32> to vector<1x16xf32>
    %26 = vector.shape_cast %23 : vector<1x16xf32> to vector<1x1x16xf32>
    tpu.vector_store %arg7[%c0_17, %c1, %c0_18], %26 {strides = array<i32>} : memref<1x2x16xf32, #tpu.memory_space<vmem>>, vector<1x1x16xf32>,
    return
  }
  func.func @transform_0(%arg0: i32) -> (i32, i32) {
    %c0_i32 = arith.constant 0 : i32
    %c0_i32_0 = arith.constant 0 : i32
    return %arg0, %c0_i32 : i32, i32
  }
  func.func @transform_1(%arg0: i32) -> (i32, i32) {
    %c0_i32 = arith.constant 0 : i32
    %c0_i32_0 = arith.constant 0 : i32
    return %arg0, %c0_i32 : i32, i32
  }
  func.func @transform_2(%arg0: i32) -> (i32, i32) {
    %c0_i32 = arith.constant 0 : i32
    %c0_i32_0 = arith.constant 0 : i32
    %c0_i32_1 = arith.constant 0 : i32
    return %c0_i32, %c0_i32_0 : i32, i32
  }
  func.func @transform_3(%arg0: i32) -> (i32, i32) {
    %c0_i32 = arith.constant 0 : i32
    %c0_i32_0 = arith.constant 0 : i32
    %c0_i32_1 = arith.constant 0 : i32
    return %c0_i32, %c0_i32_0 : i32, i32
  }
  func.func @transform_4(%arg0: i32) -> (i32, i32) {
    %c0_i32 = arith.constant 0 : i32
    %c0_i32_0 = arith.constant 0 : i32
    %c0_i32_1 = arith.constant 0 : i32
    return %c0_i32, %c0_i32_0 : i32, i32
  }
  func.func @transform_5(%arg0: i32) -> (i32, i32) {
    %c0_i32 = arith.constant 0 : i32
    %c0_i32_0 = arith.constant 0 : i32
    return %arg0, %c0_i32 : i32, i32
  }
  func.func @transform_6(%arg0: i32) -> (i32, i32, i32) {
    %c0_i32 = arith.constant 0 : i32
    %c0_i32_0 = arith.constant 0 : i32
    %c0_i32_1 = arith.constant 0 : i32
    return %arg0, %c0_i32, %c0_i32_0 : i32, i32, i32
  }
}

module attributes {stable_mosaic.version = 11 : i64} {
  func.func @_bn_relu_conv1x1_kernel(%arg0: i32, %arg1: memref<512x4xbf16, #tpu.memory_space<vmem>>, %arg2: memref<512x4xbf16, #tpu.memory_space<vmem>>, %arg3: memref<512x4xbf16, #tpu.memory_space<vmem>>, %arg4: memref<1x12xf32, #tpu.memory_space<vmem>>, %arg5: memref<1x12xf32, #tpu.memory_space<vmem>>, %arg6: memref<12x16xbf16, #tpu.memory_space<vmem>>, %arg7: memref<512x16xf32, #tpu.memory_space<vmem>>, %arg8: memref<1x2x16xf32, #tpu.memory_space<vmem>>) attributes {dimension_semantics = [#tpu.dimension_semantics<parallel>], iteration_bounds = array<i64: 1>, scalar_prefetch = 0 : i64, scratch_operands = 0 : i64, tpu.core_type = #tpu.core_type<tc>, window_params = [{transform_indices = @transform_0, window_bounds = array<i64: 512, 4>}, {transform_indices = @transform_1, window_bounds = array<i64: 512, 4>}, {transform_indices = @transform_2, window_bounds = array<i64: 512, 4>}, {pipeline_mode = #tpu.pipeline_mode<synchronous>, transform_indices = @transform_3, window_bounds = array<i64: 1, 12>}, {pipeline_mode = #tpu.pipeline_mode<synchronous>, transform_indices = @transform_4, window_bounds = array<i64: 1, 12>}, {pipeline_mode = #tpu.pipeline_mode<synchronous>, transform_indices = @transform_5, window_bounds = array<i64: 12, 16>}, {transform_indices = @transform_6, window_bounds = array<i64: 512, 16>}, {transform_indices = @transform_7, window_bounds = array<i64: 1, 2, 16>}]} {
    %c0 = arith.constant 0 : index
    %c0_0 = arith.constant 0 : index
    %0 = vector.load %arg1[%c0, %c0_0] : memref<512x4xbf16, #tpu.memory_space<vmem>>, vector<512x4xbf16>
    %c0_1 = arith.constant 0 : index
    %c0_2 = arith.constant 0 : index
    %1 = vector.load %arg2[%c0_1, %c0_2] : memref<512x4xbf16, #tpu.memory_space<vmem>>, vector<512x4xbf16>
    %c0_3 = arith.constant 0 : index
    %c0_4 = arith.constant 0 : index
    %2 = vector.load %arg3[%c0_3, %c0_4] : memref<512x4xbf16, #tpu.memory_space<vmem>>, vector<512x4xbf16>
    %3 = tpu.concatenate %0, %1, %2 in 1 : vector<512x4xbf16>, vector<512x4xbf16>, vector<512x4xbf16> -> vector<512x12xbf16>
    %4 = arith.extf %3 : vector<512x12xbf16> to vector<512x12xf32>
    %c0_5 = arith.constant 0 : index
    %c0_6 = arith.constant 0 : index
    %5 = vector.load %arg4[%c0_5, %c0_6] : memref<1x12xf32, #tpu.memory_space<vmem>>, vector<1x12xf32>
    %6 = vector.broadcast %5 : vector<1x12xf32> to vector<512x12xf32>
    %7 = arith.mulf %4, %6 : vector<512x12xf32>
    %c0_7 = arith.constant 0 : index
    %c0_8 = arith.constant 0 : index
    %8 = vector.load %arg5[%c0_7, %c0_8] : memref<1x12xf32, #tpu.memory_space<vmem>>, vector<1x12xf32>
    %9 = vector.broadcast %8 : vector<1x12xf32> to vector<512x12xf32>
    %10 = arith.addf %7, %9 : vector<512x12xf32>
    %cst = arith.constant 0.000000e+00 : f32
    %11 = vector.broadcast %cst : f32 to vector<512x12xf32>
    %12 = arith.maximumf %10, %11 : vector<512x12xf32>
    %13 = arith.truncf %12 : vector<512x12xf32> to vector<512x12xbf16>
    %c0_9 = arith.constant 0 : index
    %c0_10 = arith.constant 0 : index
    %14 = vector.load %arg6[%c0_9, %c0_10] : memref<12x16xbf16, #tpu.memory_space<vmem>>, vector<12x16xbf16>
    %cst_11 = arith.constant dense<0.000000e+00> : vector<512x16xf32>
    %15 = tpu.matmul %13, %14, %cst_11 {dimension_numbers = #tpu.dot_dimension_numbers<[1], [0], [0], [1], [0, 0, 1, 1], [], []>} : vector<512x12xbf16>, vector<12x16xbf16>, vector<512x16xf32> -> vector<512x16xf32>
    %c0_12 = arith.constant 0 : index
    %c0_13 = arith.constant 0 : index
    %16 = vector.load %arg7[%c0_12, %c0_13] : memref<512x16xf32, #tpu.memory_space<vmem>>, vector<512x16xf32>
    tpu.vector_store %arg7[%c0_12, %c0_13], %15 {strides = array<i32>} : memref<512x16xf32, #tpu.memory_space<vmem>>, vector<512x16xf32>,
    %cst_14 = arith.constant dense<0.000000e+00> : vector<16xf32>
    %17 = vector.multi_reduction <add>, %15, %cst_14 [0] : vector<512x16xf32> to vector<16xf32>
    %18 = vector.shape_cast %17 : vector<16xf32> to vector<1x16xf32>
    %c0_15 = arith.constant 0 : index
    %c0_16 = arith.constant 0 : index
    %c0_17 = arith.constant 0 : index
    %19 = vector.load %arg8[%c0_15, %c0_16, %c0_17] : memref<1x2x16xf32, #tpu.memory_space<vmem>>, vector<1x1x16xf32>
    %20 = vector.shape_cast %19 : vector<1x1x16xf32> to vector<1x16xf32>
    %21 = vector.shape_cast %18 : vector<1x16xf32> to vector<1x1x16xf32>
    tpu.vector_store %arg8[%c0_15, %c0_16, %c0_17], %21 {strides = array<i32>} : memref<1x2x16xf32, #tpu.memory_space<vmem>>, vector<1x1x16xf32>,
    %22 = arith.mulf %15, %15 : vector<512x16xf32>
    %cst_18 = arith.constant dense<0.000000e+00> : vector<16xf32>
    %23 = vector.multi_reduction <add>, %22, %cst_18 [0] : vector<512x16xf32> to vector<16xf32>
    %24 = vector.shape_cast %23 : vector<16xf32> to vector<1x16xf32>
    %c0_19 = arith.constant 0 : index
    %c1 = arith.constant 1 : index
    %c0_20 = arith.constant 0 : index
    %25 = vector.load %arg8[%c0_19, %c1, %c0_20] : memref<1x2x16xf32, #tpu.memory_space<vmem>>, vector<1x1x16xf32>
    %26 = vector.shape_cast %25 : vector<1x1x16xf32> to vector<1x16xf32>
    %27 = vector.shape_cast %24 : vector<1x16xf32> to vector<1x1x16xf32>
    tpu.vector_store %arg8[%c0_19, %c1, %c0_20], %27 {strides = array<i32>} : memref<1x2x16xf32, #tpu.memory_space<vmem>>, vector<1x1x16xf32>,
    return
  }
  func.func @transform_0(%arg0: i32) -> (i32, i32) {
    %c0_i32 = arith.constant 0 : i32
    %c0_i32_0 = arith.constant 0 : i32
    return %arg0, %c0_i32 : i32, i32
  }
  func.func @transform_1(%arg0: i32) -> (i32, i32) {
    %c0_i32 = arith.constant 0 : i32
    %c0_i32_0 = arith.constant 0 : i32
    return %arg0, %c0_i32 : i32, i32
  }
  func.func @transform_2(%arg0: i32) -> (i32, i32) {
    %c0_i32 = arith.constant 0 : i32
    %c0_i32_0 = arith.constant 0 : i32
    return %arg0, %c0_i32 : i32, i32
  }
  func.func @transform_3(%arg0: i32) -> (i32, i32) {
    %c0_i32 = arith.constant 0 : i32
    %c0_i32_0 = arith.constant 0 : i32
    %c0_i32_1 = arith.constant 0 : i32
    return %c0_i32, %c0_i32_0 : i32, i32
  }
  func.func @transform_4(%arg0: i32) -> (i32, i32) {
    %c0_i32 = arith.constant 0 : i32
    %c0_i32_0 = arith.constant 0 : i32
    %c0_i32_1 = arith.constant 0 : i32
    return %c0_i32, %c0_i32_0 : i32, i32
  }
  func.func @transform_5(%arg0: i32) -> (i32, i32) {
    %c0_i32 = arith.constant 0 : i32
    %c0_i32_0 = arith.constant 0 : i32
    %c0_i32_1 = arith.constant 0 : i32
    return %c0_i32, %c0_i32_0 : i32, i32
  }
  func.func @transform_6(%arg0: i32) -> (i32, i32) {
    %c0_i32 = arith.constant 0 : i32
    %c0_i32_0 = arith.constant 0 : i32
    return %arg0, %c0_i32 : i32, i32
  }
  func.func @transform_7(%arg0: i32) -> (i32, i32, i32) {
    %c0_i32 = arith.constant 0 : i32
    %c0_i32_0 = arith.constant 0 : i32
    %c0_i32_1 = arith.constant 0 : i32
    return %arg0, %c0_i32, %c0_i32_0 : i32, i32, i32
  }
}

module attributes {stable_mosaic.version = 11 : i64} {
  func.func @_bn_relu_conv3x3_kernel(%arg0: i32, %arg1: memref<256x16xf32, #tpu.memory_space<vmem>>, %arg2: memref<1x16xf32, #tpu.memory_space<vmem>>, %arg3: memref<1x16xf32, #tpu.memory_space<vmem>>, %arg4: memref<3x3x16x4xbf16, #tpu.memory_space<vmem>>, %arg5: memref<256x4xbf16, #tpu.memory_space<vmem>>, %arg6: memref<1x2x4xf32, #tpu.memory_space<vmem>>, %arg7: memref<20x32x16xbf16, #tpu.memory_space<vmem>>) attributes {dimension_semantics = [#tpu.dimension_semantics<parallel>], iteration_bounds = array<i64: 2>, scalar_prefetch = 0 : i64, scratch_operands = 1 : i64, tpu.core_type = #tpu.core_type<tc>, window_params = [{transform_indices = @transform_0, window_bounds = array<i64: 256, 16>}, {pipeline_mode = #tpu.pipeline_mode<synchronous>, transform_indices = @transform_1, window_bounds = array<i64: 1, 16>}, {pipeline_mode = #tpu.pipeline_mode<synchronous>, transform_indices = @transform_2, window_bounds = array<i64: 1, 16>}, {pipeline_mode = #tpu.pipeline_mode<synchronous>, transform_indices = @transform_3, window_bounds = array<i64: 3, 3, 16, 4>}, {transform_indices = @transform_4, window_bounds = array<i64: 256, 4>}, {transform_indices = @transform_5, window_bounds = array<i64: 1, 2, 4>}]} {
    %c0 = arith.constant 0 : index
    %c0_0 = arith.constant 0 : index
    %0 = vector.load %arg1[%c0, %c0_0] : memref<256x16xf32, #tpu.memory_space<vmem>>, vector<256x16xf32>
    %c0_1 = arith.constant 0 : index
    %c0_2 = arith.constant 0 : index
    %1 = vector.load %arg2[%c0_1, %c0_2] : memref<1x16xf32, #tpu.memory_space<vmem>>, vector<1x16xf32>
    %2 = vector.broadcast %1 : vector<1x16xf32> to vector<256x16xf32>
    %3 = arith.mulf %0, %2 : vector<256x16xf32>
    %c0_3 = arith.constant 0 : index
    %c0_4 = arith.constant 0 : index
    %4 = vector.load %arg3[%c0_3, %c0_4] : memref<1x16xf32, #tpu.memory_space<vmem>>, vector<1x16xf32>
    %5 = vector.broadcast %4 : vector<1x16xf32> to vector<256x16xf32>
    %6 = arith.addf %3, %5 : vector<256x16xf32>
    %cst = arith.constant 0.000000e+00 : f32
    %7 = vector.broadcast %cst : f32 to vector<256x16xf32>
    %8 = arith.maximumf %6, %7 : vector<256x16xf32>
    %9 = arith.truncf %8 : vector<256x16xf32> to vector<256x16xbf16>
    %cst_5 = arith.constant 0.000000e+00 : bf16
    %10 = vector.broadcast %cst_5 : bf16 to vector<2x32x16xbf16>
    %c0_6 = arith.constant 0 : index
    %c0_7 = arith.constant 0 : index
    %c0_8 = arith.constant 0 : index
    %11 = vector.load %arg7[%c0_6, %c0_7, %c0_8] : memref<20x32x16xbf16, #tpu.memory_space<vmem>>, vector<2x32x16xbf16>
    tpu.vector_store %arg7[%c0_6, %c0_7, %c0_8], %10 {strides = array<i32>} : memref<20x32x16xbf16, #tpu.memory_space<vmem>>, vector<2x32x16xbf16>,
    %cst_9 = arith.constant 0.000000e+00 : bf16
    %12 = vector.broadcast %cst_9 : bf16 to vector<2x32x16xbf16>
    %c18 = arith.constant 18 : index
    %c0_10 = arith.constant 0 : index
    %c0_11 = arith.constant 0 : index
    %13 = vector.load %arg7[%c18, %c0_10, %c0_11] : memref<20x32x16xbf16, #tpu.memory_space<vmem>>, vector<2x32x16xbf16>
    tpu.vector_store %arg7[%c18, %c0_10, %c0_11], %12 {strides = array<i32>} : memref<20x32x16xbf16, #tpu.memory_space<vmem>>, vector<2x32x16xbf16>,
    %cst_12 = arith.constant 0.000000e+00 : bf16
    %14 = vector.broadcast %cst_12 : bf16 to vector<16x16x16xbf16>
    %c2 = arith.constant 2 : index
    %c16 = arith.constant 16 : index
    %c0_13 = arith.constant 0 : index
    %15 = vector.load %arg7[%c2, %c16, %c0_13] : memref<20x32x16xbf16, #tpu.memory_space<vmem>>, vector<16x16x16xbf16>
    tpu.vector_store %arg7[%c2, %c16, %c0_13], %14 {strides = array<i32>} : memref<20x32x16xbf16, #tpu.memory_space<vmem>>, vector<16x16x16xbf16>,
    %16 = vector.shape_cast %9 : vector<256x16xbf16> to vector<16x16x16xbf16>
    %c2_14 = arith.constant 2 : index
    %c0_15 = arith.constant 0 : index
    %c0_16 = arith.constant 0 : index
    %17 = vector.load %arg7[%c2_14, %c0_15, %c0_16] : memref<20x32x16xbf16, #tpu.memory_space<vmem>>, vector<16x16x16xbf16>
    tpu.vector_store %arg7[%c2_14, %c0_15, %c0_16], %16 {strides = array<i32>} : memref<20x32x16xbf16, #tpu.memory_space<vmem>>, vector<16x16x16xbf16>,
    %c0_17 = arith.constant 0 : index
    %c0_18 = arith.constant 0 : index
    %c0_19 = arith.constant 0 : index
    %18 = vector.load %arg7[%c0_17, %c0_18, %c0_19] : memref<20x32x16xbf16, #tpu.memory_space<vmem>>, vector<20x32x16xbf16>
    %19 = vector.shape_cast %18 : vector<20x32x16xbf16> to vector<640x16xbf16>
    %cst_20 = arith.constant 0.000000e+00 : f32
    %20 = vector.broadcast %cst_20 : f32 to vector<512x4xf32>
    %21 = vector.extract_strided_slice %19 {offsets = [31, 0], sizes = [576, 16], strides = [1, 1]} : vector<640x16xbf16> to vector<576x16xbf16>
    %22 = vector.extract_strided_slice %21 {offsets = [0, 0], sizes = [512, 16], strides = [1, 1]} : vector<576x16xbf16> to vector<512x16xbf16>
    %c0_21 = arith.constant 0 : index
    %c0_22 = arith.constant 0 : index
    %c0_23 = arith.constant 0 : index
    %c0_24 = arith.constant 0 : index
    %23 = vector.load %arg4[%c0_21, %c0_22, %c0_23, %c0_24] : memref<3x3x16x4xbf16, #tpu.memory_space<vmem>>, vector<1x1x16x4xbf16>
    %24 = vector.shape_cast %23 : vector<1x1x16x4xbf16> to vector<16x4xbf16>
    %cst_25 = arith.constant dense<0.000000e+00> : vector<512x4xf32>
    %25 = tpu.matmul %22, %24, %cst_25 {dimension_numbers = #tpu.dot_dimension_numbers<[1], [0], [0], [1], [0, 0, 1, 1], [], []>} : vector<512x16xbf16>, vector<16x4xbf16>, vector<512x4xf32> -> vector<512x4xf32>
    %26 = arith.addf %20, %25 : vector<512x4xf32>
    %27 = vector.extract_strided_slice %21 {offsets = [32, 0], sizes = [512, 16], strides = [1, 1]} : vector<576x16xbf16> to vector<512x16xbf16>
    %c0_26 = arith.constant 0 : index
    %c1 = arith.constant 1 : index
    %c0_27 = arith.constant 0 : index
    %c0_28 = arith.constant 0 : index
    %28 = vector.load %arg4[%c0_26, %c1, %c0_27, %c0_28] : memref<3x3x16x4xbf16, #tpu.memory_space<vmem>>, vector<1x1x16x4xbf16>
    %29 = vector.shape_cast %28 : vector<1x1x16x4xbf16> to vector<16x4xbf16>
    %cst_29 = arith.constant dense<0.000000e+00> : vector<512x4xf32>
    %30 = tpu.matmul %27, %29, %cst_29 {dimension_numbers = #tpu.dot_dimension_numbers<[1], [0], [0], [1], [0, 0, 1, 1], [], []>} : vector<512x16xbf16>, vector<16x4xbf16>, vector<512x4xf32> -> vector<512x4xf32>
    %31 = arith.addf %26, %30 : vector<512x4xf32>
    %32 = vector.extract_strided_slice %21 {offsets = [64, 0], sizes = [512, 16], strides = [1, 1]} : vector<576x16xbf16> to vector<512x16xbf16>
    %c0_30 = arith.constant 0 : index
    %c2_31 = arith.constant 2 : index
    %c0_32 = arith.constant 0 : index
    %c0_33 = arith.constant 0 : index
    %33 = vector.load %arg4[%c0_30, %c2_31, %c0_32, %c0_33] : memref<3x3x16x4xbf16, #tpu.memory_space<vmem>>, vector<1x1x16x4xbf16>
    %34 = vector.shape_cast %33 : vector<1x1x16x4xbf16> to vector<16x4xbf16>
    %cst_34 = arith.constant dense<0.000000e+00> : vector<512x4xf32>
    %35 = tpu.matmul %32, %34, %cst_34 {dimension_numbers = #tpu.dot_dimension_numbers<[1], [0], [0], [1], [0, 0, 1, 1], [], []>} : vector<512x16xbf16>, vector<16x4xbf16>, vector<512x4xf32> -> vector<512x4xf32>
    %36 = arith.addf %31, %35 : vector<512x4xf32>
    %37 = vector.extract_strided_slice %19 {offsets = [32, 0], sizes = [576, 16], strides = [1, 1]} : vector<640x16xbf16> to vector<576x16xbf16>
    %38 = vector.extract_strided_slice %37 {offsets = [0, 0], sizes = [512, 16], strides = [1, 1]} : vector<576x16xbf16> to vector<512x16xbf16>
    %c1_35 = arith.constant 1 : index
    %c0_36 = arith.constant 0 : index
    %c0_37 = arith.constant 0 : index
    %c0_38 = arith.constant 0 : index
    %39 = vector.load %arg4[%c1_35, %c0_36, %c0_37, %c0_38] : memref<3x3x16x4xbf16, #tpu.memory_space<vmem>>, vector<1x1x16x4xbf16>
    %40 = vector.shape_cast %39 : vector<1x1x16x4xbf16> to vector<16x4xbf16>
    %cst_39 = arith.constant dense<0.000000e+00> : vector<512x4xf32>
    %41 = tpu.matmul %38, %40, %cst_39 {dimension_numbers = #tpu.dot_dimension_numbers<[1], [0], [0], [1], [0, 0, 1, 1], [], []>} : vector<512x16xbf16>, vector<16x4xbf16>, vector<512x4xf32> -> vector<512x4xf32>
    %42 = arith.addf %36, %41 : vector<512x4xf32>
    %43 = vector.extract_strided_slice %37 {offsets = [32, 0], sizes = [512, 16], strides = [1, 1]} : vector<576x16xbf16> to vector<512x16xbf16>
    %c1_40 = arith.constant 1 : index
    %c1_41 = arith.constant 1 : index
    %c0_42 = arith.constant 0 : index
    %c0_43 = arith.constant 0 : index
    %44 = vector.load %arg4[%c1_40, %c1_41, %c0_42, %c0_43] : memref<3x3x16x4xbf16, #tpu.memory_space<vmem>>, vector<1x1x16x4xbf16>
    %45 = vector.shape_cast %44 : vector<1x1x16x4xbf16> to vector<16x4xbf16>
    %cst_44 = arith.constant dense<0.000000e+00> : vector<512x4xf32>
    %46 = tpu.matmul %43, %45, %cst_44 {dimension_numbers = #tpu.dot_dimension_numbers<[1], [0], [0], [1], [0, 0, 1, 1], [], []>} : vector<512x16xbf16>, vector<16x4xbf16>, vector<512x4xf32> -> vector<512x4xf32>
    %47 = arith.addf %42, %46 : vector<512x4xf32>
    %48 = vector.extract_strided_slice %37 {offsets = [64, 0], sizes = [512, 16], strides = [1, 1]} : vector<576x16xbf16> to vector<512x16xbf16>
    %c1_45 = arith.constant 1 : index
    %c2_46 = arith.constant 2 : index
    %c0_47 = arith.constant 0 : index
    %c0_48 = arith.constant 0 : index
    %49 = vector.load %arg4[%c1_45, %c2_46, %c0_47, %c0_48] : memref<3x3x16x4xbf16, #tpu.memory_space<vmem>>, vector<1x1x16x4xbf16>
    %50 = vector.shape_cast %49 : vector<1x1x16x4xbf16> to vector<16x4xbf16>
    %cst_49 = arith.constant dense<0.000000e+00> : vector<512x4xf32>
    %51 = tpu.matmul %48, %50, %cst_49 {dimension_numbers = #tpu.dot_dimension_numbers<[1], [0], [0], [1], [0, 0, 1, 1], [], []>} : vector<512x16xbf16>, vector<16x4xbf16>, vector<512x4xf32> -> vector<512x4xf32>
    %52 = arith.addf %47, %51 : vector<512x4xf32>
    %53 = vector.extract_strided_slice %19 {offsets = [33, 0], sizes = [576, 16], strides = [1, 1]} : vector<640x16xbf16> to vector<576x16xbf16>
    %54 = vector.extract_strided_slice %53 {offsets = [0, 0], sizes = [512, 16], strides = [1, 1]} : vector<576x16xbf16> to vector<512x16xbf16>
    %c2_50 = arith.constant 2 : index
    %c0_51 = arith.constant 0 : index
    %c0_52 = arith.constant 0 : index
    %c0_53 = arith.constant 0 : index
    %55 = vector.load %arg4[%c2_50, %c0_51, %c0_52, %c0_53] : memref<3x3x16x4xbf16, #tpu.memory_space<vmem>>, vector<1x1x16x4xbf16>
    %56 = vector.shape_cast %55 : vector<1x1x16x4xbf16> to vector<16x4xbf16>
    %cst_54 = arith.constant dense<0.000000e+00> : vector<512x4xf32>
    %57 = tpu.matmul %54, %56, %cst_54 {dimension_numbers = #tpu.dot_dimension_numbers<[1], [0], [0], [1], [0, 0, 1, 1], [], []>} : vector<512x16xbf16>, vector<16x4xbf16>, vector<512x4xf32> -> vector<512x4xf32>
    %58 = arith.addf %52, %57 : vector<512x4xf32>
    %59 = vector.extract_strided_slice %53 {offsets = [32, 0], sizes = [512, 16], strides = [1, 1]} : vector<576x16xbf16> to vector<512x16xbf16>
    %c2_55 = arith.constant 2 : index
    %c1_56 = arith.constant 1 : index
    %c0_57 = arith.constant 0 : index
    %c0_58 = arith.constant 0 : index
    %60 = vector.load %arg4[%c2_55, %c1_56, %c0_57, %c0_58] : memref<3x3x16x4xbf16, #tpu.memory_space<vmem>>, vector<1x1x16x4xbf16>
    %61 = vector.shape_cast %60 : vector<1x1x16x4xbf16> to vector<16x4xbf16>
    %cst_59 = arith.constant dense<0.000000e+00> : vector<512x4xf32>
    %62 = tpu.matmul %59, %61, %cst_59 {dimension_numbers = #tpu.dot_dimension_numbers<[1], [0], [0], [1], [0, 0, 1, 1], [], []>} : vector<512x16xbf16>, vector<16x4xbf16>, vector<512x4xf32> -> vector<512x4xf32>
    %63 = arith.addf %58, %62 : vector<512x4xf32>
    %64 = vector.extract_strided_slice %53 {offsets = [64, 0], sizes = [512, 16], strides = [1, 1]} : vector<576x16xbf16> to vector<512x16xbf16>
    %c2_60 = arith.constant 2 : index
    %c2_61 = arith.constant 2 : index
    %c0_62 = arith.constant 0 : index
    %c0_63 = arith.constant 0 : index
    %65 = vector.load %arg4[%c2_60, %c2_61, %c0_62, %c0_63] : memref<3x3x16x4xbf16, #tpu.memory_space<vmem>>, vector<1x1x16x4xbf16>
    %66 = vector.shape_cast %65 : vector<1x1x16x4xbf16> to vector<16x4xbf16>
    %cst_64 = arith.constant dense<0.000000e+00> : vector<512x4xf32>
    %67 = tpu.matmul %64, %66, %cst_64 {dimension_numbers = #tpu.dot_dimension_numbers<[1], [0], [0], [1], [0, 0, 1, 1], [], []>} : vector<512x16xbf16>, vector<16x4xbf16>, vector<512x4xf32> -> vector<512x4xf32>
    %68 = arith.addf %63, %67 : vector<512x4xf32>
    %69 = vector.shape_cast %68 : vector<512x4xf32> to vector<16x32x4xf32>
    %70 = vector.extract_strided_slice %69 {offsets = [0, 0, 0], sizes = [16, 16, 4], strides = [1, 1, 1]} : vector<16x32x4xf32> to vector<16x16x4xf32>
    %71 = vector.shape_cast %70 : vector<16x16x4xf32> to vector<256x4xf32>
    %72 = arith.truncf %71 : vector<256x4xf32> to vector<256x4xbf16>
    %c0_65 = arith.constant 0 : index
    %c0_66 = arith.constant 0 : index
    %73 = vector.load %arg5[%c0_65, %c0_66] : memref<256x4xbf16, #tpu.memory_space<vmem>>, vector<256x4xbf16>
    tpu.vector_store %arg5[%c0_65, %c0_66], %72 {strides = array<i32>} : memref<256x4xbf16, #tpu.memory_space<vmem>>, vector<256x4xbf16>,
    %74 = arith.extf %72 : vector<256x4xbf16> to vector<256x4xf32>
    %cst_67 = arith.constant dense<0.000000e+00> : vector<4xf32>
    %75 = vector.multi_reduction <add>, %74, %cst_67 [0] : vector<256x4xf32> to vector<4xf32>
    %76 = vector.shape_cast %75 : vector<4xf32> to vector<1x4xf32>
    %c0_68 = arith.constant 0 : index
    %c0_69 = arith.constant 0 : index
    %c0_70 = arith.constant 0 : index
    %77 = vector.load %arg6[%c0_68, %c0_69, %c0_70] : memref<1x2x4xf32, #tpu.memory_space<vmem>>, vector<1x1x4xf32>
    %78 = vector.shape_cast %77 : vector<1x1x4xf32> to vector<1x4xf32>
    %79 = vector.shape_cast %76 : vector<1x4xf32> to vector<1x1x4xf32>
    tpu.vector_store %arg6[%c0_68, %c0_69, %c0_70], %79 {strides = array<i32>} : memref<1x2x4xf32, #tpu.memory_space<vmem>>, vector<1x1x4xf32>,
    %80 = arith.mulf %74, %74 : vector<256x4xf32>
    %cst_71 = arith.constant dense<0.000000e+00> : vector<4xf32>
    %81 = vector.multi_reduction <add>, %80, %cst_71 [0] : vector<256x4xf32> to vector<4xf32>
    %82 = vector.shape_cast %81 : vector<4xf32> to vector<1x4xf32>
    %c0_72 = arith.constant 0 : index
    %c1_73 = arith.constant 1 : index
    %c0_74 = arith.constant 0 : index
    %83 = vector.load %arg6[%c0_72, %c1_73, %c0_74] : memref<1x2x4xf32, #tpu.memory_space<vmem>>, vector<1x1x4xf32>
    %84 = vector.shape_cast %83 : vector<1x1x4xf32> to vector<1x4xf32>
    %85 = vector.shape_cast %82 : vector<1x4xf32> to vector<1x1x4xf32>
    tpu.vector_store %arg6[%c0_72, %c1_73, %c0_74], %85 {strides = array<i32>} : memref<1x2x4xf32, #tpu.memory_space<vmem>>, vector<1x1x4xf32>,
    return
  }
  func.func @transform_0(%arg0: i32) -> (i32, i32) {
    %c0_i32 = arith.constant 0 : i32
    %c0_i32_0 = arith.constant 0 : i32
    return %arg0, %c0_i32 : i32, i32
  }
  func.func @transform_1(%arg0: i32) -> (i32, i32) {
    %c0_i32 = arith.constant 0 : i32
    %c0_i32_0 = arith.constant 0 : i32
    %c0_i32_1 = arith.constant 0 : i32
    return %c0_i32, %c0_i32_0 : i32, i32
  }
  func.func @transform_2(%arg0: i32) -> (i32, i32) {
    %c0_i32 = arith.constant 0 : i32
    %c0_i32_0 = arith.constant 0 : i32
    %c0_i32_1 = arith.constant 0 : i32
    return %c0_i32, %c0_i32_0 : i32, i32
  }
  func.func @transform_3(%arg0: i32) -> (i32, i32, i32, i32) {
    %c0_i32 = arith.constant 0 : i32
    %c0_i32_0 = arith.constant 0 : i32
    %c0_i32_1 = arith.constant 0 : i32
    %c0_i32_2 = arith.constant 0 : i32
    %c0_i32_3 = arith.constant 0 : i32
    return %c0_i32, %c0_i32_0, %c0_i32_1, %c0_i32_2 : i32, i32, i32, i32
  }
  func.func @transform_4(%arg0: i32) -> (i32, i32) {
    %c0_i32 = arith.constant 0 : i32
    %c0_i32_0 = arith.constant 0 : i32
    return %arg0, %c0_i32 : i32, i32
  }
  func.func @transform_5(%arg0: i32) -> (i32, i32, i32) {
    %c0_i32 = arith.constant 0 : i32
    %c0_i32_0 = arith.constant 0 : i32
    %c0_i32_1 = arith.constant 0 : i32
    return %arg0, %c0_i32, %c0_i32_0 : i32, i32, i32
  }
}

</mosaic_0001>

<llo_original>
// kernel: _lambda_.6
$region0: #{_lambda_.6}
  #allocation0 [shape = 'u32[]', space=smem, size = 0x4, offset = 0x4, fixed_abs, tag = 'smem constant byte address 0x4 - core index']
  #allocation1 [shape = 'u32[72,128]{1,0:T(1,128)}', space=vmem, size = 0x9000, scoped, tag = 'internal scratch']
  %s0 = inlined_call_operand.vmem [shape: bf16[512,4], index: 0, kind: input, shape index: {}]
  %s1 = inlined_call_operand.vmem [shape: f32[1,4], index: 1, kind: input, shape index: {}]
  %s2 = inlined_call_operand.vmem [shape: f32[1,4], index: 2, kind: input, shape index: {}]
  %s3 = inlined_call_operand.vmem [shape: bf16[4,16], index: 3, kind: input, shape index: {}]
  %s4 = inlined_call_operand.vmem [shape: f32[512,16], index: 4, kind: output, shape index: {0}]
  %s5 = inlined_call_operand.vmem [shape: f32[1,2,16], index: 5, kind: output, shape index: {1}]
  %6 = xla_tuple %s4, %s5
  %s7 = sld [smem:[#allocation0]]
  $region34: #{_lambda_.6} parent=0
    _
  %s9 = ssub.s32 1, %s7
  %s10 = scalar_select 0, %s9, %s7
  // Predicated region
  $region2: #{_lambda_.6} parent=0 // pred_check
    _
  $region3: #{_lambda_.6} parent=0 // pred_check_branch
    %12 = sbr.rel (0) target = $region5
  $region4: #{_lambda_.6} parent=0 // pred_region
    _
  $region5: #{_lambda_.6} parent=0 // pred_fallthru
    _
  // Predicated region
  $region6: #{_lambda_.6} parent=0 // pred_check
    _
  $region7: #{_lambda_.6} parent=0 // pred_check_branch
    %14 = sbr.rel (0) target = $region9
  $region8: #{_lambda_.6} parent=0 // pred_region
    _
  $region9: #{_lambda_.6} parent=0 // pred_fallthru
    _
  // Predicated region
  $region10: #{_lambda_.6} parent=0 // pred_check
    _
  $region11: #{_lambda_.6} parent=0 // pred_check_branch
    %16 = sbr.rel (0) target = $region13
  $region12: #{_lambda_.6} parent=0 // pred_region
    _
  $region13: #{_lambda_.6} parent=0 // pred_fallthru
    _
  // Predicated region
  $region14: #{_lambda_.6} parent=0 // pred_check
    _
  $region15: #{_lambda_.6} parent=0 // pred_check_branch
    %18 = sbr.rel (0) target = $region17
  $region16: #{_lambda_.6} parent=0 // pred_region
    _
  $region17: #{_lambda_.6} parent=0 // pred_fallthru
    _
  %v20 = vld [vmem:[%s0] sm:$0xf]
  %v21 = vld [vmem:[%s0 + $0x4] sm:$0xf]
  %v22 = vld [vmem:[%s0 + $0x8] sm:$0xf]
  %v23 = vld [vmem:[%s0 + $0xc] sm:$0xf]
  %v24 = vld [vmem:[%s0 + $0x10] sm:$0xf]
  %v25 = vld [vmem:[%s0 + $0x14] sm:$0xf]
  %v26 = vld [vmem:[%s0 + $0x18] sm:$0xf]
  %v27 = vld [vmem:[%s0 + $0x1c] sm:$0xf]
  %v28 = vld [vmem:[%s0 + $0x20] sm:$0xf]
  %v29 = vld [vmem:[%s0 + $0x24] sm:$0xf]
  %v30 = vld [vmem:[%s0 + $0x28] sm:$0xf]
  %v31 = vld [vmem:[%s0 + $0x2c] sm:$0xf]
  %v32 = vld [vmem:[%s0 + $0x30] sm:$0xf]
  %v33 = vld [vmem:[%s0 + $0x34] sm:$0xf]
  %v34 = vld [vmem:[%s0 + $0x38] sm:$0xf]
  %v35 = vld [vmem:[%s0 + $0x3c] sm:$0xf]
  %v36 = vld [vmem:[%s0 + $0x40] sm:$0xf]
  %v37 = vld [vmem:[%s0 + $0x44] sm:$0xf]
  %v38 = vld [vmem:[%s0 + $0x48] sm:$0xf]
  %v39 = vld [vmem:[%s0 + $0x4c] sm:$0xf]
  %v40 = vld [vmem:[%s0 + $0x50] sm:$0xf]
  %v41 = vld [vmem:[%s0 + $0x54] sm:$0xf]
  %v42 = vld [vmem:[%s0 + $0x58] sm:$0xf]
  %v43 = vld [vmem:[%s0 + $0x5c] sm:$0xf]
  %v44 = vld [vmem:[%s0 + $0x60] sm:$0xf]
  %v45 = vld [vmem:[%s0 + $0x64] sm:$0xf]
  %v46 = vld [vmem:[%s0 + $0x68] sm:$0xf]
  %v47 = vld [vmem:[%s0 + $0x6c] sm:$0xf]
  %v48 = vld [vmem:[%s0 + $0x70] sm:$0xf]
  %v49 = vld [vmem:[%s0 + $0x74] sm:$0xf]
  %v50 = vld [vmem:[%s0 + $0x78] sm:$0xf]
  %v51 = vld [vmem:[%s0 + $0x7c] sm:$0xf]
  %v52 = vld [vmem:[%s0 + $0x80] sm:$0xf]
  %v53 = vld [vmem:[%s0 + $0x84] sm:$0xf]
  %v54 = vld [vmem:[%s0 + $0x88] sm:$0xf]
  %v55 = vld [vmem:[%s0 + $0x8c] sm:$0xf]
  %v56 = vld [vmem:[%s0 + $0x90] sm:$0xf]
  %v57 = vld [vmem:[%s0 + $0x94] sm:$0xf]
  %v58 = vld [vmem:[%s0 + $0x98] sm:$0xf]
  %v59 = vld [vmem:[%s0 + $0x9c] sm:$0xf]
  %v60 = vld [vmem:[%s0 + $0xa0] sm:$0xf]
  %v61 = vld [vmem:[%s0 + $0xa4] sm:$0xf]
  %v62 = vld [vmem:[%s0 + $0xa8] sm:$0xf]
  %v63 = vld [vmem:[%s0 + $0xac] sm:$0xf]
  %v64 = vld [vmem:[%s0 + $0xb0] sm:$0xf]
  %v65 = vld [vmem:[%s0 + $0xb4] sm:$0xf]
  %v66 = vld [vmem:[%s0 + $0xb8] sm:$0xf]
  %v67 = vld [vmem:[%s0 + $0xbc] sm:$0xf]
  %v68 = vld [vmem:[%s0 + $0xc0] sm:$0xf]
  %v69 = vld [vmem:[%s0 + $0xc4] sm:$0xf]
  %v70 = vld [vmem:[%s0 + $0xc8] sm:$0xf]
  %v71 = vld [vmem:[%s0 + $0xcc] sm:$0xf]
  %v72 = vld [vmem:[%s0 + $0xd0] sm:$0xf]
  %v73 = vld [vmem:[%s0 + $0xd4] sm:$0xf]
  %v74 = vld [vmem:[%s0 + $0xd8] sm:$0xf]
  %v75 = vld [vmem:[%s0 + $0xdc] sm:$0xf]
  %v76 = vld [vmem:[%s0 + $0xe0] sm:$0xf]
  %v77 = vld [vmem:[%s0 + $0xe4] sm:$0xf]
  %v78 = vld [vmem:[%s0 + $0xe8] sm:$0xf]
  %v79 = vld [vmem:[%s0 + $0xec] sm:$0xf]
  %v80 = vld [vmem:[%s0 + $0xf0] sm:$0xf]
  %v81 = vld [vmem:[%s0 + $0xf4] sm:$0xf]
  %v82 = vld [vmem:[%s0 + $0xf8] sm:$0xf]
  %v83 = vld [vmem:[%s0 + $0xfc] sm:$0xf]
  %v84 = vunpack.c.l.bf16 %v20
  %v85 = vunpack.c.l.bf16 %v21
  %v86 = vunpack.c.l.bf16 %v22
  %v87 = vunpack.c.l.bf16 %v23
  %v88 = vunpack.c.l.bf16 %v24
  %v89 = vunpack.c.l.bf16 %v25
  %v90 = vunpack.c.l.bf16 %v26
  %v91 = vunpack.c.l.bf16 %v27
  %v92 = vunpack.c.l.bf16 %v28
  %v93 = vunpack.c.l.bf16 %v29
  %v94 = vunpack.c.l.bf16 %v30
  %v95 = vunpack.c.l.bf16 %v31
  %v96 = vunpack.c.l.bf16 %v32
  %v97 = vunpack.c.l.bf16 %v33
  %v98 = vunpack.c.l.bf16 %v34
  %v99 = vunpack.c.l.bf16 %v35
  %v100 = vunpack.c.l.bf16 %v36
  %v101 = vunpack.c.l.bf16 %v37
  %v102 = vunpack.c.l.bf16 %v38
  %v103 = vunpack.c.l.bf16 %v39
  %v104 = vunpack.c.l.bf16 %v40
  %v105 = vunpack.c.l.bf16 %v41
  %v106 = vunpack.c.l.bf16 %v42
  %v107 = vunpack.c.l.bf16 %v43
  %v108 = vunpack.c.l.bf16 %v44
  %v109 = vunpack.c.l.bf16 %v45
  %v110 = vunpack.c.l.bf16 %v46
  %v111 = vunpack.c.l.bf16 %v47
  %v112 = vunpack.c.l.bf16 %v48
  %v113 = vunpack.c.l.bf16 %v49
  %v114 = vunpack.c.l.bf16 %v50
  %v115 = vunpack.c.l.bf16 %v51
  %v116 = vunpack.c.l.bf16 %v52
  %v117 = vunpack.c.l.bf16 %v53
  %v118 = vunpack.c.l.bf16 %v54
  %v119 = vunpack.c.l.bf16 %v55
  %v120 = vunpack.c.l.bf16 %v56
  %v121 = vunpack.c.l.bf16 %v57
  %v122 = vunpack.c.l.bf16 %v58
  %v123 = vunpack.c.l.bf16 %v59
  %v124 = vunpack.c.l.bf16 %v60
  %v125 = vunpack.c.l.bf16 %v61
  %v126 = vunpack.c.l.bf16 %v62
  %v127 = vunpack.c.l.bf16 %v63
  %v128 = vunpack.c.l.bf16 %v64
  %v129 = vunpack.c.l.bf16 %v65
  %v130 = vunpack.c.l.bf16 %v66
  %v131 = vunpack.c.l.bf16 %v67
  %v132 = vunpack.c.l.bf16 %v68
  %v133 = vunpack.c.l.bf16 %v69
  %v134 = vunpack.c.l.bf16 %v70
  %v135 = vunpack.c.l.bf16 %v71
  %v136 = vunpack.c.l.bf16 %v72
  %v137 = vunpack.c.l.bf16 %v73
  %v138 = vunpack.c.l.bf16 %v74
  %v139 = vunpack.c.l.bf16 %v75
  %v140 = vunpack.c.l.bf16 %v76
  %v141 = vunpack.c.l.bf16 %v77
  %v142 = vunpack.c.l.bf16 %v78
  %v143 = vunpack.c.l.bf16 %v79
  %v144 = vunpack.c.l.bf16 %v80
  %v145 = vunpack.c.l.bf16 %v81
  %v146 = vunpack.c.l.bf16 %v82
  %v147 = vunpack.c.l.bf16 %v83
  %v148 = vld [vmem:[%s1] sm:$0x1]
  %v150 = vperm.slane %v148, 0
  %v152 = vmul.f32 %v84, %v150
  %v153 = vmul.f32 %v85, %v150
  %v154 = vmul.f32 %v86, %v150
  %v155 = vmul.f32 %v87, %v150
  %v156 = vmul.f32 %v88, %v150
  %v157 = vmul.f32 %v89, %v150
  %v158 = vmul.f32 %v90, %v150
  %v159 = vmul.f32 %v91, %v150
  %v160 = vmul.f32 %v92, %v150
  %v161 = vmul.f32 %v93, %v150
  %v162 = vmul.f32 %v94, %v150
  %v163 = vmul.f32 %v95, %v150
  %v164 = vmul.f32 %v96, %v150
  %v165 = vmul.f32 %v97, %v150
  %v166 = vmul.f32 %v98, %v150
  %v167 = vmul.f32 %v99, %v150
  %v168 = vmul.f32 %v100, %v150
  %v169 = vmul.f32 %v101, %v150
  %v170 = vmul.f32 %v102, %v150
  %v171 = vmul.f32 %v103, %v150
  %v172 = vmul.f32 %v104, %v150
  %v173 = vmul.f32 %v105, %v150
  %v174 = vmul.f32 %v106, %v150
  %v175 = vmul.f32 %v107, %v150
  %v176 = vmul.f32 %v108, %v150
  %v177 = vmul.f32 %v109, %v150
  %v178 = vmul.f32 %v110, %v150
  %v179 = vmul.f32 %v111, %v150
  %v180 = vmul.f32 %v112, %v150
  %v181 = vmul.f32 %v113, %v150
  %v182 = vmul.f32 %v114, %v150
  %v183 = vmul.f32 %v115, %v150
  %v184 = vmul.f32 %v116, %v150
  %v185 = vmul.f32 %v117, %v150
  %v186 = vmul.f32 %v118, %v150
  %v187 = vmul.f32 %v119, %v150
  %v188 = vmul.f32 %v120, %v150
  %v189 = vmul.f32 %v121, %v150
  %v190 = vmul.f32 %v122, %v150
  %v191 = vmul.f32 %v123, %v150
  %v192 = vmul.f32 %v124, %v150
  %v193 = vmul.f32 %v125, %v150
  %v194 = vmul.f32 %v126, %v150
  %v195 = vmul.f32 %v127, %v150
  %v196 = vmul.f32 %v128, %v150
  %v197 = vmul.f32 %v129, %v150
  %v198 = vmul.f32 %v130, %v150
  %v199 = vmul.f32 %v131, %v150
  %v200 = vmul.f32 %v132, %v150
  %v201 = vmul.f32 %v133, %v150
  %v202 = vmul.f32 %v134, %v150
  %v203 = vmul.f32 %v135, %v150
  %v204 = vmul.f32 %v136, %v150
  %v205 = vmul.f32 %v137, %v150
  %v206 = vmul.f32 %v138, %v150
  %v207 = vmul.f32 %v139, %v150
  %v208 = vmul.f32 %v140, %v150
  %v209 = vmul.f32 %v141, %v150
  %v210 = vmul.f32 %v142, %v150
  %v211 = vmul.f32 %v143, %v150
  %v212 = vmul.f32 %v144, %v150
  %v213 = vmul.f32 %v145, %v150
  %v214 = vmul.f32 %v146, %v150
  %v215 = vmul.f32 %v147, %v150
  %v216 = vld [vmem:[%s2] sm:$0x1]
  %v218 = vperm.slane %v216, 0
  %v220 = vadd.f32 %v152, %v218
  %v221 = vadd.f32 %v153, %v218
  %v222 = vadd.f32 %v154, %v218
  %v223 = vadd.f32 %v155, %v218
  %v224 = vadd.f32 %v156, %v218
  %v225 = vadd.f32 %v157, %v218
  %v226 = vadd.f32 %v158, %v218
  %v227 = vadd.f32 %v159, %v218
  %v228 = vadd.f32 %v160, %v218
  %v229 = vadd.f32 %v161, %v218
  %v230 = vadd.f32 %v162, %v218
  %v231 = vadd.f32 %v163, %v218
  %v232 = vadd.f32 %v164, %v218
  %v233 = vadd.f32 %v165, %v218
  %v234 = vadd.f32 %v166, %v218
  %v235 = vadd.f32 %v167, %v218
  %v236 = vadd.f32 %v168, %v218
  %v237 = vadd.f32 %v169, %v218
  %v238 = vadd.f32 %v170, %v218
  %v239 = vadd.f32 %v171, %v218
  %v240 = vadd.f32 %v172, %v218
  %v241 = vadd.f32 %v173, %v218
  %v242 = vadd.f32 %v174, %v218
  %v243 = vadd.f32 %v175, %v218
  %v244 = vadd.f32 %v176, %v218
  %v245 = vadd.f32 %v177, %v218
  %v246 = vadd.f32 %v178, %v218
  %v247 = vadd.f32 %v179, %v218
  %v248 = vadd.f32 %v180, %v218
  %v249 = vadd.f32 %v181, %v218
  %v250 = vadd.f32 %v182, %v218
  %v251 = vadd.f32 %v183, %v218
  %v252 = vadd.f32 %v184, %v218
  %v253 = vadd.f32 %v185, %v218
  %v254 = vadd.f32 %v186, %v218
  %v255 = vadd.f32 %v187, %v218
  %v256 = vadd.f32 %v188, %v218
  %v257 = vadd.f32 %v189, %v218
  %v258 = vadd.f32 %v190, %v218
  %v259 = vadd.f32 %v191, %v218
  %v260 = vadd.f32 %v192, %v218
  %v261 = vadd.f32 %v193, %v218
  %v262 = vadd.f32 %v194, %v218
  %v263 = vadd.f32 %v195, %v218
  %v264 = vadd.f32 %v196, %v218
  %v265 = vadd.f32 %v197, %v218
  %v266 = vadd.f32 %v198, %v218
  %v267 = vadd.f32 %v199, %v218
  %v268 = vadd.f32 %v200, %v218
  %v269 = vadd.f32 %v201, %v218
  %v270 = vadd.f32 %v202, %v218
  %v271 = vadd.f32 %v203, %v218
  %v272 = vadd.f32 %v204, %v218
  %v273 = vadd.f32 %v205, %v218
  %v274 = vadd.f32 %v206, %v218
  %v275 = vadd.f32 %v207, %v218
  %v276 = vadd.f32 %v208, %v218
  %v277 = vadd.f32 %v209, %v218
  %v278 = vadd.f32 %v210, %v218
  %v279 = vadd.f32 %v211, %v218
  %v280 = vadd.f32 %v212, %v218
  %v281 = vadd.f32 %v213, %v218
  %v282 = vadd.f32 %v214, %v218
  %v283 = vadd.f32 %v215, %v218
  %v284 = vmax.f32 %v220, 0.0
  %v285 = vmax.f32 %v221, 0.0
  %v286 = vmax.f32 %v222, 0.0
  %v287 = vmax.f32 %v223, 0.0
  %v288 = vmax.f32 %v224, 0.0
  %v289 = vmax.f32 %v225, 0.0
  %v290 = vmax.f32 %v226, 0.0
  %v291 = vmax.f32 %v227, 0.0
  %v292 = vmax.f32 %v228, 0.0
  %v293 = vmax.f32 %v229, 0.0
  %v294 = vmax.f32 %v230, 0.0
  %v295 = vmax.f32 %v231, 0.0
  %v296 = vmax.f32 %v232, 0.0
  %v297 = vmax.f32 %v233, 0.0
  %v298 = vmax.f32 %v234, 0.0
  %v299 = vmax.f32 %v235, 0.0
  %v300 = vmax.f32 %v236, 0.0
  %v301 = vmax.f32 %v237, 0.0
  %v302 = vmax.f32 %v238, 0.0
  %v303 = vmax.f32 %v239, 0.0
  %v304 = vmax.f32 %v240, 0.0
  %v305 = vmax.f32 %v241, 0.0
  %v306 = vmax.f32 %v242, 0.0
  %v307 = vmax.f32 %v243, 0.0
  %v308 = vmax.f32 %v244, 0.0
  %v309 = vmax.f32 %v245, 0.0
  %v310 = vmax.f32 %v246, 0.0
  %v311 = vmax.f32 %v247, 0.0
  %v312 = vmax.f32 %v248, 0.0
  %v313 = vmax.f32 %v249, 0.0
  %v314 = vmax.f32 %v250, 0.0
  %v315 = vmax.f32 %v251, 0.0
  %v316 = vmax.f32 %v252, 0.0
  %v317 = vmax.f32 %v253, 0.0
  %v318 = vmax.f32 %v254, 0.0
  %v319 = vmax.f32 %v255, 0.0
  %v320 = vmax.f32 %v256, 0.0
  %v321 = vmax.f32 %v257, 0.0
  %v322 = vmax.f32 %v258, 0.0
  %v323 = vmax.f32 %v259, 0.0
  %v324 = vmax.f32 %v260, 0.0
  %v325 = vmax.f32 %v261, 0.0
  %v326 = vmax.f32 %v262, 0.0
  %v327 = vmax.f32 %v263, 0.0
  %v328 = vmax.f32 %v264, 0.0
  %v329 = vmax.f32 %v265, 0.0
  %v330 = vmax.f32 %v266, 0.0
  %v331 = vmax.f32 %v267, 0.0
  %v332 = vmax.f32 %v268, 0.0
  %v333 = vmax.f32 %v269, 0.0
  %v334 = vmax.f32 %v270, 0.0
  %v335 = vmax.f32 %v271, 0.0
  %v336 = vmax.f32 %v272, 0.0
  %v337 = vmax.f32 %v273, 0.0
  %v338 = vmax.f32 %v274, 0.0
  %v339 = vmax.f32 %v275, 0.0
  %v340 = vmax.f32 %v276, 0.0
  %v341 = vmax.f32 %v277, 0.0
  %v342 = vmax.f32 %v278, 0.0
  %v343 = vmax.f32 %v279, 0.0
  %v344 = vmax.f32 %v280, 0.0
  %v345 = vmax.f32 %v281, 0.0
  %v346 = vmax.f32 %v282, 0.0
  %v347 = vmax.f32 %v283, 0.0
  %v348 = vpack.c.bf16 %v285, %v284
  %v349 = vpack.c.bf16 %v287, %v286
  %v350 = vpack.c.bf16 %v289, %v288
  %v351 = vpack.c.bf16 %v291, %v290
  %v352 = vpack.c.bf16 %v293, %v292
  %v353 = vpack.c.bf16 %v295, %v294
  %v354 = vpack.c.bf16 %v297, %v296
  %v355 = vpack.c.bf16 %v299, %v298
  %v356 = vpack.c.bf16 %v301, %v300
  %v357 = vpack.c.bf16 %v303, %v302
  %v358 = vpack.c.bf16 %v305, %v304
  %v359 = vpack.c.bf16 %v307, %v306
  %v360 = vpack.c.bf16 %v309, %v308
  %v361 = vpack.c.bf16 %v311, %v310
  %v362 = vpack.c.bf16 %v313, %v312
  %v363 = vpack.c.bf16 %v315, %v314
  %v364 = vpack.c.bf16 %v317, %v316
  %v365 = vpack.c.bf16 %v319, %v318
  %v366 = vpack.c.bf16 %v321, %v320
  %v367 = vpack.c.bf16 %v323, %v322
  %v368 = vpack.c.bf16 %v325, %v324
  %v369 = vpack.c.bf16 %v327, %v326
  %v370 = vpack.c.bf16 %v329, %v328
  %v371 = vpack.c.bf16 %v331, %v330
  %v372 = vpack.c.bf16 %v333, %v332
  %v373 = vpack.c.bf16 %v335, %v334
  %v374 = vpack.c.bf16 %v337, %v336
  %v375 = vpack.c.bf16 %v339, %v338
  %v376 = vpack.c.bf16 %v341, %v340
  %v377 = vpack.c.bf16 %v343, %v342
  %v378 = vpack.c.bf16 %v345, %v344
  %v379 = vpack.c.bf16 %v347, %v346
  %v380 = vld [vmem:[%s3] sm:$0x3]
  %vm381 = vcmask 31744
  %v383 = vsel %vm381, %v348, 0
  %v386 = vsel %vm381, %v349, 0
  %v389 = vsel %vm381, %v350, 0
  %v392 = vsel %vm381, %v351, 0
  %v395 = vsel %vm381, %v352, 0
  %v398 = vsel %vm381, %v353, 0
  %v401 = vsel %vm381, %v354, 0
  %v404 = vsel %vm381, %v355, 0
  %v407 = vsel %vm381, %v356, 0
  %v410 = vsel %vm381, %v357, 0
  %v413 = vsel %vm381, %v358, 0
  %v416 = vsel %vm381, %v359, 0
  %v419 = vsel %vm381, %v360, 0
  %v422 = vsel %vm381, %v361, 0
  %v425 = vsel %vm381, %v362, 0
  %v428 = vsel %vm381, %v363, 0
  %v431 = vsel %vm381, %v364, 0
  %v434 = vsel %vm381, %v365, 0
  %v437 = vsel %vm381, %v366, 0
  %v440 = vsel %vm381, %v367, 0
  %v443 = vsel %vm381, %v368, 0
  %v446 = vsel %vm381, %v369, 0
  %v449 = vsel %vm381, %v370, 0
  %v452 = vsel %vm381, %v371, 0
  %v455 = vsel %vm381, %v372, 0
  %v458 = vsel %vm381, %v373, 0
  %v461 = vsel %vm381, %v374, 0
  %v464 = vsel %vm381, %v375, 0
  %v467 = vsel %vm381, %v376, 0
  %v470 = vsel %vm381, %v377, 0
  %v473 = vsel %vm381, %v378, 0
  %v476 = vsel %vm381, %v379, 0
  %vm478 = vcmask 1041408
  %v480 = vsel %vm478, %v380, 0
  %482 = vmatpush.bf16.msra.mxu0 0
  %483 = vmatpush.bf16.msra.mxu0 0
  %484 = vmatpush.bf16.msra.mxu0 0
  %485 = vmatpush.bf16.msra.mxu0 0
  %486 = vmatpush.bf16.msra.mxu0 0
  %487 = vmatpush.bf16.msra.mxu0 0
  %488 = vmatpush.bf16.msra.mxu0 0
  %489 = vmatpush.bf16.msra.mxu0 %v480
  %490 = vmatmul.bf16.gmra.mxu0 %v383
  %v491 = vpop.f32.mrf.mxu0
  %v492 = vadd.f32 0.0, %v491
  %v493 = vpop.f32.mrf.mxu0
  %v494 = vadd.f32 0.0, %v493
  %495 = vmatmul.bf16.gmra.mxu0 %v386
  %v496 = vpop.f32.mrf.mxu0
  %v497 = vadd.f32 0.0, %v496
  %v498 = vpop.f32.mrf.mxu0
  %v499 = vadd.f32 0.0, %v498
  %500 = vmatmul.bf16.gmra.mxu0 %v389
  %v501 = vpop.f32.mrf.mxu0
  %v502 = vadd.f32 0.0, %v501
  %v503 = vpop.f32.mrf.mxu0
  %v504 = vadd.f32 0.0, %v503
  %505 = vmatmul.bf16.gmra.mxu0 %v392
  %v506 = vpop.f32.mrf.mxu0
  %v507 = vadd.f32 0.0, %v506
  %v508 = vpop.f32.mrf.mxu0
  %v509 = vadd.f32 0.0, %v508
  %510 = vmatmul.bf16.gmra.mxu0 %v395
  %v511 = vpop.f32.mrf.mxu0
  %v512 = vadd.f32 0.0, %v511
  %v513 = vpop.f32.mrf.mxu0
  %v514 = vadd.f32 0.0, %v513
  %515 = vmatmul.bf16.gmra.mxu0 %v398
  %v516 = vpop.f32.mrf.mxu0
  %v517 = vadd.f32 0.0, %v516
  %v518 = vpop.f32.mrf.mxu0
  %v519 = vadd.f32 0.0, %v518
  %520 = vmatmul.bf16.gmra.mxu0 %v401
  %v521 = vpop.f32.mrf.mxu0
  %v522 = vadd.f32 0.0, %v521
  %v523 = vpop.f32.mrf.mxu0
  %v524 = vadd.f32 0.0, %v523
  %525 = vmatmul.bf16.gmra.mxu0 %v404
  %v526 = vpop.f32.mrf.mxu0
  %v527 = vadd.f32 0.0, %v526
  %v528 = vpop.f32.mrf.mxu0
  %v529 = vadd.f32 0.0, %v528
  %530 = vmatmul.bf16.gmra.mxu0 %v407
  %v531 = vpop.f32.mrf.mxu0
  %v532 = vadd.f32 0.0, %v531
  %v533 = vpop.f32.mrf.mxu0
  %v534 = vadd.f32 0.0, %v533
  %535 = vmatmul.bf16.gmra.mxu0 %v410
  %v536 = vpop.f32.mrf.mxu0
  %v537 = vadd.f32 0.0, %v536
  %v538 = vpop.f32.mrf.mxu0
  %v539 = vadd.f32 0.0, %v538
  %540 = vmatmul.bf16.gmra.mxu0 %v413
  %v541 = vpop.f32.mrf.mxu0
  %v542 = vadd.f32 0.0, %v541
  %v543 = vpop.f32.mrf.mxu0
  %v544 = vadd.f32 0.0, %v543
  %545 = vmatmul.bf16.gmra.mxu0 %v416
  %v546 = vpop.f32.mrf.mxu0
  %v547 = vadd.f32 0.0, %v546
  %v548 = vpop.f32.mrf.mxu0
  %v549 = vadd.f32 0.0, %v548
  %550 = vmatmul.bf16.gmra.mxu0 %v419
  %v551 = vpop.f32.mrf.mxu0
  %v552 = vadd.f32 0.0, %v551
  %v553 = vpop.f32.mrf.mxu0
  %v554 = vadd.f32 0.0, %v553
  %555 = vmatmul.bf16.gmra.mxu0 %v422
  %v556 = vpop.f32.mrf.mxu0
  %v557 = vadd.f32 0.0, %v556
  %v558 = vpop.f32.mrf.mxu0
  %v559 = vadd.f32 0.0, %v558
  %560 = vmatmul.bf16.gmra.mxu0 %v425
  %v561 = vpop.f32.mrf.mxu0
  %v562 = vadd.f32 0.0, %v561
  %v563 = vpop.f32.mrf.mxu0
  %v564 = vadd.f32 0.0, %v563
  %565 = vmatmul.bf16.gmra.mxu0 %v428
  %v566 = vpop.f32.mrf.mxu0
  %v567 = vadd.f32 0.0, %v566
  %v568 = vpop.f32.mrf.mxu0
  %v569 = vadd.f32 0.0, %v568
  %570 = vmatmul.bf16.gmra.mxu0 %v431
  %v571 = vpop.f32.mrf.mxu0
  %v572 = vadd.f32 0.0, %v571
  %v573 = vpop.f32.mrf.mxu0
  %v574 = vadd.f32 0.0, %v573
  %575 = vmatmul.bf16.gmra.mxu0 %v434
  %v576 = vpop.f32.mrf.mxu0
  %v577 = vadd.f32 0.0, %v576
  %v578 = vpop.f32.mrf.mxu0
  %v579 = vadd.f32 0.0, %v578
  %580 = vmatmul.bf16.gmra.mxu0 %v437
  %v581 = vpop.f32.mrf.mxu0
  %v582 = vadd.f32 0.0, %v581
  %v583 = vpop.f32.mrf.mxu0
  %v584 = vadd.f32 0.0, %v583
  %585 = vmatmul.bf16.gmra.mxu0 %v440
  %v586 = vpop.f32.mrf.mxu0
  %v587 = vadd.f32 0.0, %v586
  %v588 = vpop.f32.mrf.mxu0
  %v589 = vadd.f32 0.0, %v588
  %590 = vmatmul.bf16.gmra.mxu0 %v443
  %v591 = vpop.f32.mrf.mxu0
  %v592 = vadd.f32 0.0, %v591
  %v593 = vpop.f32.mrf.mxu0
  %v594 = vadd.f32 0.0, %v593
  %595 = vmatmul.bf16.gmra.mxu0 %v446
  %v596 = vpop.f32.mrf.mxu0
  %v597 = vadd.f32 0.0, %v596
  %v598 = vpop.f32.mrf.mxu0
  %v599 = vadd.f32 0.0, %v598
  %600 = vmatmul.bf16.gmra.mxu0 %v449
  %v601 = vpop.f32.mrf.mxu0
  %v602 = vadd.f32 0.0, %v601
  %v603 = vpop.f32.mrf.mxu0
  %v604 = vadd.f32 0.0, %v603
  %605 = vmatmul.bf16.gmra.mxu0 %v452
  %v606 = vpop.f32.mrf.mxu0
  %v607 = vadd.f32 0.0, %v606
  %v608 = vpop.f32.mrf.mxu0
  %v609 = vadd.f32 0.0, %v608
  %610 = vmatmul.bf16.gmra.mxu0 %v455
  %v611 = vpop.f32.mrf.mxu0
  %v612 = vadd.f32 0.0, %v611
  %v613 = vpop.f32.mrf.mxu0
  %v614 = vadd.f32 0.0, %v613
  %615 = vmatmul.bf16.gmra.mxu0 %v458
  %v616 = vpop.f32.mrf.mxu0
  %v617 = vadd.f32 0.0, %v616
  %v618 = vpop.f32.mrf.mxu0
  %v619 = vadd.f32 0.0, %v618
  %620 = vmatmul.bf16.gmra.mxu0 %v461
  %v621 = vpop.f32.mrf.mxu0
  %v622 = vadd.f32 0.0, %v621
  %v623 = vpop.f32.mrf.mxu0
  %v624 = vadd.f32 0.0, %v623
  %625 = vmatmul.bf16.gmra.mxu0 %v464
  %v626 = vpop.f32.mrf.mxu0
  %v627 = vadd.f32 0.0, %v626
  %v628 = vpop.f32.mrf.mxu0
  %v629 = vadd.f32 0.0, %v628
  %630 = vmatmul.bf16.gmra.mxu0 %v467
  %v631 = vpop.f32.mrf.mxu0
  %v632 = vadd.f32 0.0, %v631
  %v633 = vpop.f32.mrf.mxu0
  %v634 = vadd.f32 0.0, %v633
  %635 = vmatmul.bf16.gmra.mxu0 %v470
  %v636 = vpop.f32.mrf.mxu0
  %v637 = vadd.f32 0.0, %v636
  %v638 = vpop.f32.mrf.mxu0
  %v639 = vadd.f32 0.0, %v638
  %640 = vmatmul.bf16.gmra.mxu0 %v473
  %v641 = vpop.f32.mrf.mxu0
  %v642 = vadd.f32 0.0, %v641
  %v643 = vpop.f32.mrf.mxu0
  %v644 = vadd.f32 0.0, %v643
  %645 = vmatmul.bf16.gmra.mxu0 %v476
  %v646 = vpop.f32.mrf.mxu0
  %v647 = vadd.f32 0.0, %v646
  %v648 = vpop.f32.mrf.mxu0
  %v649 = vadd.f32 0.0, %v648
  %650 = vdwg.mxu0
  %vm651 = vcmask 130048
  %652 = vst.msk [vmem:[%s4] sm:$0xff] %vm651, %v492
  %653 = vst.msk [vmem:[%s4 + $0x8] sm:$0xff] %vm651, %v494
  %654 = vst.msk [vmem:[%s4 + $0x10] sm:$0xff] %vm651, %v497
  %655 = vst.msk [vmem:[%s4 + $0x18] sm:$0xff] %vm651, %v499
  %656 = vst.msk [vmem:[%s4 + $0x20] sm:$0xff] %vm651, %v502
  %657 = vst.msk [vmem:[%s4 + $0x28] sm:$0xff] %vm651, %v504
  %658 = vst.msk [vmem:[%s4 + $0x30] sm:$0xff] %vm651, %v507
  %659 = vst.msk [vmem:[%s4 + $0x38] sm:$0xff] %vm651, %v509
  %660 = vst.msk [vmem:[%s4 + $0x40] sm:$0xff] %vm651, %v512
  %661 = vst.msk [vmem:[%s4 + $0x48] sm:$0xff] %vm651, %v514
  %662 = vst.msk [vmem:[%s4 + $0x50] sm:$0xff] %vm651, %v517
  %663 = vst.msk [vmem:[%s4 + $0x58] sm:$0xff] %vm651, %v519
  %664 = vst.msk [vmem:[%s4 + $0x60] sm:$0xff] %vm651, %v522
  %665 = vst.msk [vmem:[%s4 + $0x68] sm:$0xff] %vm651, %v524
  %666 = vst.msk [vmem:[%s4 + $0x70] sm:$0xff] %vm651, %v527
  %667 = vst.msk [vmem:[%s4 + $0x78] sm:$0xff] %vm651, %v529
  %668 = vst.msk [vmem:[%s4 + $0x80] sm:$0xff] %vm651, %v532
  %669 = vst.msk [vmem:[%s4 + $0x88] sm:$0xff] %vm651, %v534
  %670 = vst.msk [vmem:[%s4 + $0x90] sm:$0xff] %vm651, %v537
  %671 = vst.msk [vmem:[%s4 + $0x98] sm:$0xff] %vm651, %v539
  %672 = vst.msk [vmem:[%s4 + $0xa0] sm:$0xff] %vm651, %v542
  %673 = vst.msk [vmem:[%s4 + $0xa8] sm:$0xff] %vm651, %v544
  %674 = vst.msk [vmem:[%s4 + $0xb0] sm:$0xff] %vm651, %v547
  %675 = vst.msk [vmem:[%s4 + $0xb8] sm:$0xff] %vm651, %v549
  %676 = vst.msk [vmem:[%s4 + $0xc0] sm:$0xff] %vm651, %v552
  %677 = vst.msk [vmem:[%s4 + $0xc8] sm:$0xff] %vm651, %v554
  %678 = vst.msk [vmem:[%s4 + $0xd0] sm:$0xff] %vm651, %v557
  %679 = vst.msk [vmem:[%s4 + $0xd8] sm:$0xff] %vm651, %v559
  %680 = vst.msk [vmem:[%s4 + $0xe0] sm:$0xff] %vm651, %v562
  %681 = vst.msk [vmem:[%s4 + $0xe8] sm:$0xff] %vm651, %v564
  %682 = vst.msk [vmem:[%s4 + $0xf0] sm:$0xff] %vm651, %v567
  %683 = vst.msk [vmem:[%s4 + $0xf8] sm:$0xff] %vm651, %v569
  %684 = vst.msk [vmem:[%s4 + $0x100] sm:$0xff] %vm651, %v572
  %685 = vst.msk [vmem:[%s4 + $0x108] sm:$0xff] %vm651, %v574
  %686 = vst.msk [vmem:[%s4 + $0x110] sm:$0xff] %vm651, %v577
  %687 = vst.msk [vmem:[%s4 + $0x118] sm:$0xff] %vm651, %v579
  %688 = vst.msk [vmem:[%s4 + $0x120] sm:$0xff] %vm651, %v582
  %689 = vst.msk [vmem:[%s4 + $0x128] sm:$0xff] %vm651, %v584
  %690 = vst.msk [vmem:[%s4 + $0x130] sm:$0xff] %vm651, %v587
  %691 = vst.msk [vmem:[%s4 + $0x138] sm:$0xff] %vm651, %v589
  %692 = vst.msk [vmem:[%s4 + $0x140] sm:$0xff] %vm651, %v592
  %693 = vst.msk [vmem:[%s4 + $0x148] sm:$0xff] %vm651, %v594
  %694 = vst.msk [vmem:[%s4 + $0x150] sm:$0xff] %vm651, %v597
  %695 = vst.msk [vmem:[%s4 + $0x158] sm:$0xff] %vm651, %v599
  %696 = vst.msk [vmem:[%s4 + $0x160] sm:$0xff] %vm651, %v602
  %697 = vst.msk [vmem:[%s4 + $0x168] sm:$0xff] %vm651, %v604
  %698 = vst.msk [vmem:[%s4 + $0x170] sm:$0xff] %vm651, %v607
  %699 = vst.msk [vmem:[%s4 + $0x178] sm:$0xff] %vm651, %v609
  %700 = vst.msk [vmem:[%s4 + $0x180] sm:$0xff] %vm651, %v612
  %701 = vst.msk [vmem:[%s4 + $0x188] sm:$0xff] %vm651, %v614
  %702 = vst.msk [vmem:[%s4 + $0x190] sm:$0xff] %vm651, %v617
  %703 = vst.msk [vmem:[%s4 + $0x198] sm:$0xff] %vm651, %v619
  %704 = vst.msk [vmem:[%s4 + $0x1a0] sm:$0xff] %vm651, %v622
  %705 = vst.msk [vmem:[%s4 + $0x1a8] sm:$0xff] %vm651, %v624
  %706 = vst.msk [vmem:[%s4 + $0x1b0] sm:$0xff] %vm651, %v627
  %707 = vst.msk [vmem:[%s4 + $0x1b8] sm:$0xff] %vm651, %v629
  %708 = vst.msk [vmem:[%s4 + $0x1c0] sm:$0xff] %vm651, %v632
  %709 = vst.msk [vmem:[%s4 + $0x1c8] sm:$0xff] %vm651, %v634
  %710 = vst.msk [vmem:[%s4 + $0x1d0] sm:$0xff] %vm651, %v637
  %711 = vst.msk [vmem:[%s4 + $0x1d8] sm:$0xff] %vm651, %v639
  %712 = vst.msk [vmem:[%s4 + $0x1e0] sm:$0xff] %vm651, %v642
  %713 = vst.msk [vmem:[%s4 + $0x1e8] sm:$0xff] %vm651, %v644
  %714 = vst.msk [vmem:[%s4 + $0x1f0] sm:$0xff] %vm651, %v647
  %715 = vst.msk [vmem:[%s4 + $0x1f8] sm:$0xff] %vm651, %v649
  %v716 = vsel %vm651, %v492, 0.0
  %v717 = vsel %vm651, %v494, 0.0
  %v718 = vadd.f32 %v716, %v717
  %v719 = vsel %vm651, %v497, 0.0
  %v720 = vadd.f32 %v718, %v719
  %v721 = vsel %vm651, %v499, 0.0
  %v722 = vadd.f32 %v720, %v721
  %v723 = vsel %vm651, %v502, 0.0
  %v724 = vadd.f32 %v722, %v723
  %v725 = vsel %vm651, %v504, 0.0
  %v726 = vadd.f32 %v724, %v725
  %v727 = vsel %vm651, %v507, 0.0
  %v728 = vadd.f32 %v726, %v727
  %v729 = vsel %vm651, %v509, 0.0
  %v730 = vadd.f32 %v728, %v729
  %v731 = vsel %vm651, %v512, 0.0
  %v732 = vadd.f32 %v730, %v731
  %v733 = vsel %vm651, %v514, 0.0
  %v734 = vadd.f32 %v732, %v733
  %v735 = vsel %vm651, %v517, 0.0
  %v736 = vadd.f32 %v734, %v735
  %v737 = vsel %vm651, %v519, 0.0
  %v738 = vadd.f32 %v736, %v737
  %v739 = vsel %vm651, %v522, 0.0
  %v740 = vadd.f32 %v738, %v739
  %v741 = vsel %vm651, %v524, 0.0
  %v742 = vadd.f32 %v740, %v741
  %v743 = vsel %vm651, %v527, 0.0
  %v744 = vadd.f32 %v742, %v743
  %v745 = vsel %vm651, %v529, 0.0
  %v746 = vadd.f32 %v744, %v745
  %v747 = vsel %vm651, %v532, 0.0
  %v748 = vadd.f32 %v746, %v747
  %v749 = vsel %vm651, %v534, 0.0
  %v750 = vadd.f32 %v748, %v749
  %v751 = vsel %vm651, %v537, 0.0
  %v752 = vadd.f32 %v750, %v751
  %v753 = vsel %vm651, %v539, 0.0
  %v754 = vadd.f32 %v752, %v753
  %v755 = vsel %vm651, %v542, 0.0
  %v756 = vadd.f32 %v754, %v755
  %v757 = vsel %vm651, %v544, 0.0
  %v758 = vadd.f32 %v756, %v757
  %v759 = vsel %vm651, %v547, 0.0
  %v760 = vadd.f32 %v758, %v759
  %v761 = vsel %vm651, %v549, 0.0
  %v762 = vadd.f32 %v760, %v761
  %v763 = vsel %vm651, %v552, 0.0
  %v764 = vadd.f32 %v762, %v763
  %v765 = vsel %vm651, %v554, 0.0
  %v766 = vadd.f32 %v764, %v765
  %v767 = vsel %vm651, %v557, 0.0
  %v768 = vadd.f32 %v766, %v767
  %v769 = vsel %vm651, %v559, 0.0
  %v770 = vadd.f32 %v768, %v769
  %v771 = vsel %vm651, %v562, 0.0
  %v772 = vadd.f32 %v770, %v771
  %v773 = vsel %vm651, %v564, 0.0
  %v774 = vadd.f32 %v772, %v773
  %v775 = vsel %vm651, %v567, 0.0
  %v776 = vadd.f32 %v774, %v775
  %v777 = vsel %vm651, %v569, 0.0
  %v778 = vadd.f32 %v776, %v777
  %v779 = vsel %vm651, %v572, 0.0
  %v780 = vadd.f32 %v778, %v779
  %v781 = vsel %vm651, %v574, 0.0
  %v782 = vadd.f32 %v780, %v781
  %v783 = vsel %vm651, %v577, 0.0
  %v784 = vadd.f32 %v782, %v783
  %v785 = vsel %vm651, %v579, 0.0
  %v786 = vadd.f32 %v784, %v785
  %v787 = vsel %vm651, %v582, 0.0
  %v788 = vadd.f32 %v786, %v787
  %v789 = vsel %vm651, %v584, 0.0
  %v790 = vadd.f32 %v788, %v789
  %v791 = vsel %vm651, %v587, 0.0
  %v792 = vadd.f32 %v790, %v791
  %v793 = vsel %vm651, %v589, 0.0
  %v794 = vadd.f32 %v792, %v793
  %v795 = vsel %vm651, %v592, 0.0
  %v796 = vadd.f32 %v794, %v795
  %v797 = vsel %vm651, %v594, 0.0
  %v798 = vadd.f32 %v796, %v797
  %v799 = vsel %vm651, %v597, 0.0
  %v800 = vadd.f32 %v798, %v799
  %v801 = vsel %vm651, %v599, 0.0
  %v802 = vadd.f32 %v800, %v801
  %v803 = vsel %vm651, %v602, 0.0
  %v804 = vadd.f32 %v802, %v803
  %v805 = vsel %vm651, %v604, 0.0
  %v806 = vadd.f32 %v804, %v805
  %v807 = vsel %vm651, %v607, 0.0
  %v808 = vadd.f32 %v806, %v807
  %v809 = vsel %vm651, %v609, 0.0
  %v810 = vadd.f32 %v808, %v809
  %v811 = vsel %vm651, %v612, 0.0
  %v812 = vadd.f32 %v810, %v811
  %v813 = vsel %vm651, %v614, 0.0
  %v814 = vadd.f32 %v812, %v813
  %v815 = vsel %vm651, %v617, 0.0
  %v816 = vadd.f32 %v814, %v815
  %v817 = vsel %vm651, %v619, 0.0
  %v818 = vadd.f32 %v816, %v817
  %v819 = vsel %vm651, %v622, 0.0
  %v820 = vadd.f32 %v818, %v819
  %v821 = vsel %vm651, %v624, 0.0
  %v822 = vadd.f32 %v820, %v821
  %v823 = vsel %vm651, %v627, 0.0
  %v824 = vadd.f32 %v822, %v823
  %v825 = vsel %vm651, %v629, 0.0
  %v826 = vadd.f32 %v824, %v825
  %v827 = vsel %vm651, %v632, 0.0
  %v828 = vadd.f32 %v826, %v827
  %v829 = vsel %vm651, %v634, 0.0
  %v830 = vadd.f32 %v828, %v829
  %v831 = vsel %vm651, %v637, 0.0
  %v832 = vadd.f32 %v830, %v831
  %v833 = vsel %vm651, %v639, 0.0
  %v834 = vadd.f32 %v832, %v833
  %v835 = vsel %vm651, %v642, 0.0
  %v836 = vadd.f32 %v834, %v835
  %v837 = vsel %vm651, %v644, 0.0
  %v838 = vadd.f32 %v836, %v837
  %v839 = vsel %vm651, %v647, 0.0
  %v840 = vadd.f32 %v838, %v839
  %v841 = vsel %vm651, %v649, 0.0
  %v842 = vadd.f32 %v840, %v841
  %v843 = vrot.slane %v842, 4
  %v844 = vadd.f32 %v842, %v843
  %v845 = vrot.slane %v844, 2
  %v846 = vadd.f32 %v844, %v845
  %v847 = vrot.slane %v846, 1
  %v848 = vadd.f32 %v846, %v847
  %vm849 = vcmask 122880
  %850 = vst.msk [vmem:[%s5] sm:$0x1] %vm849, %v848
  %v851 = vmul.f32 %v492, %v492
  %v852 = vmul.f32 %v494, %v494
  %v853 = vmul.f32 %v497, %v497
  %v854 = vmul.f32 %v499, %v499
  %v855 = vmul.f32 %v502, %v502
  %v856 = vmul.f32 %v504, %v504
  %v857 = vmul.f32 %v507, %v507
  %v858 = vmul.f32 %v509, %v509
  %v859 = vmul.f32 %v512, %v512
  %v860 = vmul.f32 %v514, %v514
  %v861 = vmul.f32 %v517, %v517
  %v862 = vmul.f32 %v519, %v519
  %v863 = vmul.f32 %v522, %v522
  %v864 = vmul.f32 %v524, %v524
  %v865 = vmul.f32 %v527, %v527
  %v866 = vmul.f32 %v529, %v529
  %v867 = vmul.f32 %v532, %v532
  %v868 = vmul.f32 %v534, %v534
  %v869 = vmul.f32 %v537, %v537
  %v870 = vmul.f32 %v539, %v539
  %v871 = vmul.f32 %v542, %v542
  %v872 = vmul.f32 %v544, %v544
  %v873 = vmul.f32 %v547, %v547
  %v874 = vmul.f32 %v549, %v549
  %v875 = vmul.f32 %v552, %v552
  %v876 = vmul.f32 %v554, %v554
  %v877 = vmul.f32 %v557, %v557
  %v878 = vmul.f32 %v559, %v559
  %v879 = vmul.f32 %v562, %v562
  %v880 = vmul.f32 %v564, %v564
  %v881 = vmul.f32 %v567, %v567
  %v882 = vmul.f32 %v569, %v569
  %v883 = vmul.f32 %v572, %v572
  %v884 = vmul.f32 %v574, %v574
  %v885 = vmul.f32 %v577, %v577
  %v886 = vmul.f32 %v579, %v579
  %v887 = vmul.f32 %v582, %v582
  %v888 = vmul.f32 %v584, %v584
  %v889 = vmul.f32 %v587, %v587
  %v890 = vmul.f32 %v589, %v589
  %v891 = vmul.f32 %v592, %v592
  %v892 = vmul.f32 %v594, %v594
  %v893 = vmul.f32 %v597, %v597
  %v894 = vmul.f32 %v599, %v599
  %v895 = vmul.f32 %v602, %v602
  %v896 = vmul.f32 %v604, %v604
  %v897 = vmul.f32 %v607, %v607
  %v898 = vmul.f32 %v609, %v609
  %v899 = vmul.f32 %v612, %v612
  %v900 = vmul.f32 %v614, %v614
  %v901 = vmul.f32 %v617, %v617
  %v902 = vmul.f32 %v619, %v619
  %v903 = vmul.f32 %v622, %v622
  %v904 = vmul.f32 %v624, %v624
  %v905 = vmul.f32 %v627, %v627
  %v906 = vmul.f32 %v629, %v629
  %v907 = vmul.f32 %v632, %v632
  %v908 = vmul.f32 %v634, %v634
  %v909 = vmul.f32 %v637, %v637
  %v910 = vmul.f32 %v639, %v639
  %v911 = vmul.f32 %v642, %v642
  %v912 = vmul.f32 %v644, %v644
  %v913 = vmul.f32 %v647, %v647
  %v914 = vmul.f32 %v649, %v649
  %v915 = vsel %vm651, %v851, 0.0
  %v916 = vsel %vm651, %v852, 0.0
  %v917 = vadd.f32 %v915, %v916
  %v918 = vsel %vm651, %v853, 0.0
  %v919 = vadd.f32 %v917, %v918
  %v920 = vsel %vm651, %v854, 0.0
  %v921 = vadd.f32 %v919, %v920
  %v922 = vsel %vm651, %v855, 0.0
  %v923 = vadd.f32 %v921, %v922
  %v924 = vsel %vm651, %v856, 0.0
  %v925 = vadd.f32 %v923, %v924
  %v926 = vsel %vm651, %v857, 0.0
  %v927 = vadd.f32 %v925, %v926
  %v928 = vsel %vm651, %v858, 0.0
  %v929 = vadd.f32 %v927, %v928
  %v930 = vsel %vm651, %v859, 0.0
  %v931 = vadd.f32 %v929, %v930
  %v932 = vsel %vm651, %v860, 0.0
  %v933 = vadd.f32 %v931, %v932
  %v934 = vsel %vm651, %v861, 0.0
  %v935 = vadd.f32 %v933, %v934
  %v936 = vsel %vm651, %v862, 0.0
  %v937 = vadd.f32 %v935, %v936
  %v938 = vsel %vm651, %v863, 0.0
  %v939 = vadd.f32 %v937, %v938
  %v940 = vsel %vm651, %v864, 0.0
  %v941 = vadd.f32 %v939, %v940
  %v942 = vsel %vm651, %v865, 0.0
  %v943 = vadd.f32 %v941, %v942
  %v944 = vsel %vm651, %v866, 0.0
  %v945 = vadd.f32 %v943, %v944
  %v946 = vsel %vm651, %v867, 0.0
  %v947 = vadd.f32 %v945, %v946
  %v948 = vsel %vm651, %v868, 0.0
  %v949 = vadd.f32 %v947, %v948
  %v950 = vsel %vm651, %v869, 0.0
  %v951 = vadd.f32 %v949, %v950
  %v952 = vsel %vm651, %v870, 0.0
  %v953 = vadd.f32 %v951, %v952
  %v954 = vsel %vm651, %v871, 0.0
  %v955 = vadd.f32 %v953, %v954
  %v956 = vsel %vm651, %v872, 0.0
  %v957 = vadd.f32 %v955, %v956
  %v958 = vsel %vm651, %v873, 0.0
  %v959 = vadd.f32 %v957, %v958
  %v960 = vsel %vm651, %v874, 0.0
  %v961 = vadd.f32 %v959, %v960
  %v962 = vsel %vm651, %v875, 0.0
  %v963 = vadd.f32 %v961, %v962
  %v964 = vsel %vm651, %v876, 0.0
  %v965 = vadd.f32 %v963, %v964
  %v966 = vsel %vm651, %v877, 0.0
  %v967 = vadd.f32 %v965, %v966
  %v968 = vsel %vm651, %v878, 0.0
  %v969 = vadd.f32 %v967, %v968
  %v970 = vsel %vm651, %v879, 0.0
  %v971 = vadd.f32 %v969, %v970
  %v972 = vsel %vm651, %v880, 0.0
  %v973 = vadd.f32 %v971, %v972
  %v974 = vsel %vm651, %v881, 0.0
  %v975 = vadd.f32 %v973, %v974
  %v976 = vsel %vm651, %v882, 0.0
  %v977 = vadd.f32 %v975, %v976
  %v978 = vsel %vm651, %v883, 0.0
  %v979 = vadd.f32 %v977, %v978
  %v980 = vsel %vm651, %v884, 0.0
  %v981 = vadd.f32 %v979, %v980
  %v982 = vsel %vm651, %v885, 0.0
  %v983 = vadd.f32 %v981, %v982
  %v984 = vsel %vm651, %v886, 0.0
  %v985 = vadd.f32 %v983, %v984
  %v986 = vsel %vm651, %v887, 0.0
  %v987 = vadd.f32 %v985, %v986
  %v988 = vsel %vm651, %v888, 0.0
  %v989 = vadd.f32 %v987, %v988
  %v990 = vsel %vm651, %v889, 0.0
  %v991 = vadd.f32 %v989, %v990
  %v992 = vsel %vm651, %v890, 0.0
  %v993 = vadd.f32 %v991, %v992
  %v994 = vsel %vm651, %v891, 0.0
  %v995 = vadd.f32 %v993, %v994
  %v996 = vsel %vm651, %v892, 0.0
  %v997 = vadd.f32 %v995, %v996
  %v998 = vsel %vm651, %v893, 0.0
  %v999 = vadd.f32 %v997, %v998
  %v1000 = vsel %vm651, %v894, 0.0
  %v1001 = vadd.f32 %v999, %v1000
  %v1002 = vsel %vm651, %v895, 0.0
  %v1003 = vadd.f32 %v1001, %v1002
  %v1004 = vsel %vm651, %v896, 0.0
  %v1005 = vadd.f32 %v1003, %v1004
  %v1006 = vsel %vm651, %v897, 0.0
  %v1007 = vadd.f32 %v1005, %v1006
  %v1008 = vsel %vm651, %v898, 0.0
  %v1009 = vadd.f32 %v1007, %v1008
  %v1010 = vsel %vm651, %v899, 0.0
  %v1011 = vadd.f32 %v1009, %v1010
  %v1012 = vsel %vm651, %v900, 0.0
  %v1013 = vadd.f32 %v1011, %v1012
  %v1014 = vsel %vm651, %v901, 0.0
  %v1015 = vadd.f32 %v1013, %v1014
  %v1016 = vsel %vm651, %v902, 0.0
  %v1017 = vadd.f32 %v1015, %v1016
  %v1018 = vsel %vm651, %v903, 0.0
  %v1019 = vadd.f32 %v1017, %v1018
  %v1020 = vsel %vm651, %v904, 0.0
  %v1021 = vadd.f32 %v1019, %v1020
  %v1022 = vsel %vm651, %v905, 0.0
  %v1023 = vadd.f32 %v1021, %v1022
  %v1024 = vsel %vm651, %v906, 0.0
  %v1025 = vadd.f32 %v1023, %v1024
  %v1026 = vsel %vm651, %v907, 0.0
  %v1027 = vadd.f32 %v1025, %v1026
  %v1028 = vsel %vm651, %v908, 0.0
  %v1029 = vadd.f32 %v1027, %v1028
  %v1030 = vsel %vm651, %v909, 0.0
  %v1031 = vadd.f32 %v1029, %v1030
  %v1032 = vsel %vm651, %v910, 0.0
  %v1033 = vadd.f32 %v1031, %v1032
  %v1034 = vsel %vm651, %v911, 0.0
  %v1035 = vadd.f32 %v1033, %v1034
  %v1036 = vsel %vm651, %v912, 0.0
  %v1037 = vadd.f32 %v1035, %v1036
  %v1038 = vsel %vm651, %v913, 0.0
  %v1039 = vadd.f32 %v1037, %v1038
  %v1040 = vsel %vm651, %v914, 0.0
  %v1041 = vadd.f32 %v1039, %v1040
  %v1042 = vrot.slane %v1041, 4
  %v1043 = vadd.f32 %v1041, %v1042
  %v1044 = vrot.slane %v1043, 2
  %v1045 = vadd.f32 %v1043, %v1044
  %v1046 = vrot.slane %v1045, 1
  %v1047 = vadd.f32 %v1045, %v1046
  %1048 = vst.msk [vmem:[%s5 + $0x1] sm:$0x1] %vm849, %v1047
  // Predicated region
  $region18: #{_lambda_.6} parent=0 // pred_check
    _
  $region19: #{_lambda_.6} parent=0 // pred_check_branch
    %1050 = sbr.rel (0) target = $region21
  $region20: #{_lambda_.6} parent=0 // pred_region
    _
  $region21: #{_lambda_.6} parent=0 // pred_fallthru
    _
  // Predicated region
  $region22: #{_lambda_.6} parent=0 // pred_check
    _
  $region23: #{_lambda_.6} parent=0 // pred_check_branch
    %1052 = sbr.rel (0) target = $region25
  $region24: #{_lambda_.6} parent=0 // pred_region
    _
  $region25: #{_lambda_.6} parent=0 // pred_fallthru
    _
  // Predicated region
  $region26: #{_lambda_.6} parent=0 // pred_check
    _
  $region27: #{_lambda_.6} parent=0 // pred_check_branch
    %1054 = sbr.rel (0) target = $region29
  $region28: #{_lambda_.6} parent=0 // pred_region
    _
  $region29: #{_lambda_.6} parent=0 // pred_fallthru
    _
  // Predicated region
  $region30: #{_lambda_.6} parent=0 // pred_check
    _
  $region31: #{_lambda_.6} parent=0 // pred_check_branch
    %1056 = sbr.rel (0) target = $region33
  $region32: #{_lambda_.6} parent=0 // pred_region
    _
  $region33: #{_lambda_.6} parent=0 // pred_fallthru
    _

// kernel: _lambda_.8
$region0: #{_lambda_.8}
  #allocation0 [shape = 'u32[]', space=smem, size = 0x4, offset = 0x4, fixed_abs, tag = 'smem constant byte address 0x4 - core index']
  #allocation1 [shape = 'u32[72,128]{1,0:T(1,128)}', space=vmem, size = 0x9000, scoped, tag = 'internal scratch']
  %s0 = inlined_call_operand.vmem [shape: bf16[512,4], index: 0, kind: input, shape index: {}]
  %s1 = inlined_call_operand.vmem [shape: bf16[512,4], index: 1, kind: input, shape index: {}]
  %s2 = inlined_call_operand.vmem [shape: f32[1,8], index: 2, kind: input, shape index: {}]
  %s3 = inlined_call_operand.vmem [shape: f32[1,8], index: 3, kind: input, shape index: {}]
  %s4 = inlined_call_operand.vmem [shape: bf16[8,16], index: 4, kind: input, shape index: {}]
  %s5 = inlined_call_operand.vmem [shape: f32[512,16], index: 5, kind: output, shape index: {0}]
  %s6 = inlined_call_operand.vmem [shape: f32[1,2,16], index: 6, kind: output, shape index: {1}]
  %7 = xla_tuple %s5, %s6
  %s8 = sld [smem:[#allocation0]]
  $region38: #{_lambda_.8} parent=0
    _
  %s10 = ssub.s32 1, %s8
  %s11 = scalar_select 0, %s10, %s8
  // Predicated region
  $region2: #{_lambda_.8} parent=0 // pred_check
    _
  $region3: #{_lambda_.8} parent=0 // pred_check_branch
    %13 = sbr.rel (0) target = $region5
  $region4: #{_lambda_.8} parent=0 // pred_region
    _
  $region5: #{_lambda_.8} parent=0 // pred_fallthru
    _
  // Predicated region
  $region6: #{_lambda_.8} parent=0 // pred_check
    _
  $region7: #{_lambda_.8} parent=0 // pred_check_branch
    %15 = sbr.rel (0) target = $region9
  $region8: #{_lambda_.8} parent=0 // pred_region
    _
  $region9: #{_lambda_.8} parent=0 // pred_fallthru
    _
  // Predicated region
  $region10: #{_lambda_.8} parent=0 // pred_check
    _
  $region11: #{_lambda_.8} parent=0 // pred_check_branch
    %17 = sbr.rel (0) target = $region13
  $region12: #{_lambda_.8} parent=0 // pred_region
    _
  $region13: #{_lambda_.8} parent=0 // pred_fallthru
    _
  // Predicated region
  $region14: #{_lambda_.8} parent=0 // pred_check
    _
  $region15: #{_lambda_.8} parent=0 // pred_check_branch
    %19 = sbr.rel (0) target = $region17
  $region16: #{_lambda_.8} parent=0 // pred_region
    _
  $region17: #{_lambda_.8} parent=0 // pred_fallthru
    _
  // Predicated region
  $region18: #{_lambda_.8} parent=0 // pred_check
    _
  $region19: #{_lambda_.8} parent=0 // pred_check_branch
    %21 = sbr.rel (0) target = $region21
  $region20: #{_lambda_.8} parent=0 // pred_region
    _
  $region21: #{_lambda_.8} parent=0 // pred_fallthru
    _
  %v23 = vld [vmem:[%s0] sm:$0xf]
  %v24 = vld [vmem:[%s0 + $0x4] sm:$0xf]
  %v25 = vld [vmem:[%s0 + $0x8] sm:$0xf]
  %v26 = vld [vmem:[%s0 + $0xc] sm:$0xf]
  %v27 = vld [vmem:[%s0 + $0x10] sm:$0xf]
  %v28 = vld [vmem:[%s0 + $0x14] sm:$0xf]
  %v29 = vld [vmem:[%s0 + $0x18] sm:$0xf]
  %v30 = vld [vmem:[%s0 + $0x1c] sm:$0xf]
  %v31 = vld [vmem:[%s0 + $0x20] sm:$0xf]
  %v32 = vld [vmem:[%s0 + $0x24] sm:$0xf]
  %v33 = vld [vmem:[%s0 + $0x28] sm:$0xf]
  %v34 = vld [vmem:[%s0 + $0x2c] sm:$0xf]
  %v35 = vld [vmem:[%s0 + $0x30] sm:$0xf]
  %v36 = vld [vmem:[%s0 + $0x34] sm:$0xf]
  %v37 = vld [vmem:[%s0 + $0x38] sm:$0xf]
  %v38 = vld [vmem:[%s0 + $0x3c] sm:$0xf]
  %v39 = vld [vmem:[%s0 + $0x40] sm:$0xf]
  %v40 = vld [vmem:[%s0 + $0x44] sm:$0xf]
  %v41 = vld [vmem:[%s0 + $0x48] sm:$0xf]
  %v42 = vld [vmem:[%s0 + $0x4c] sm:$0xf]
  %v43 = vld [vmem:[%s0 + $0x50] sm:$0xf]
  %v44 = vld [vmem:[%s0 + $0x54] sm:$0xf]
  %v45 = vld [vmem:[%s0 + $0x58] sm:$0xf]
  %v46 = vld [vmem:[%s0 + $0x5c] sm:$0xf]
  %v47 = vld [vmem:[%s0 + $0x60] sm:$0xf]
  %v48 = vld [vmem:[%s0 + $0x64] sm:$0xf]
  %v49 = vld [vmem:[%s0 + $0x68] sm:$0xf]
  %v50 = vld [vmem:[%s0 + $0x6c] sm:$0xf]
  %v51 = vld [vmem:[%s0 + $0x70] sm:$0xf]
  %v52 = vld [vmem:[%s0 + $0x74] sm:$0xf]
  %v53 = vld [vmem:[%s0 + $0x78] sm:$0xf]
  %v54 = vld [vmem:[%s0 + $0x7c] sm:$0xf]
  %v55 = vld [vmem:[%s0 + $0x80] sm:$0xf]
  %v56 = vld [vmem:[%s0 + $0x84] sm:$0xf]
  %v57 = vld [vmem:[%s0 + $0x88] sm:$0xf]
  %v58 = vld [vmem:[%s0 + $0x8c] sm:$0xf]
  %v59 = vld [vmem:[%s0 + $0x90] sm:$0xf]
  %v60 = vld [vmem:[%s0 + $0x94] sm:$0xf]
  %v61 = vld [vmem:[%s0 + $0x98] sm:$0xf]
  %v62 = vld [vmem:[%s0 + $0x9c] sm:$0xf]
  %v63 = vld [vmem:[%s0 + $0xa0] sm:$0xf]
  %v64 = vld [vmem:[%s0 + $0xa4] sm:$0xf]
  %v65 = vld [vmem:[%s0 + $0xa8] sm:$0xf]
  %v66 = vld [vmem:[%s0 + $0xac] sm:$0xf]
  %v67 = vld [vmem:[%s0 + $0xb0] sm:$0xf]
  %v68 = vld [vmem:[%s0 + $0xb4] sm:$0xf]
  %v69 = vld [vmem:[%s0 + $0xb8] sm:$0xf]
  %v70 = vld [vmem:[%s0 + $0xbc] sm:$0xf]
  %v71 = vld [vmem:[%s0 + $0xc0] sm:$0xf]
  %v72 = vld [vmem:[%s0 + $0xc4] sm:$0xf]
  %v73 = vld [vmem:[%s0 + $0xc8] sm:$0xf]
  %v74 = vld [vmem:[%s0 + $0xcc] sm:$0xf]
  %v75 = vld [vmem:[%s0 + $0xd0] sm:$0xf]
  %v76 = vld [vmem:[%s0 + $0xd4] sm:$0xf]
  %v77 = vld [vmem:[%s0 + $0xd8] sm:$0xf]
  %v78 = vld [vmem:[%s0 + $0xdc] sm:$0xf]
  %v79 = vld [vmem:[%s0 + $0xe0] sm:$0xf]
  %v80 = vld [vmem:[%s0 + $0xe4] sm:$0xf]
  %v81 = vld [vmem:[%s0 + $0xe8] sm:$0xf]
  %v82 = vld [vmem:[%s0 + $0xec] sm:$0xf]
  %v83 = vld [vmem:[%s0 + $0xf0] sm:$0xf]
  %v84 = vld [vmem:[%s0 + $0xf4] sm:$0xf]
  %v85 = vld [vmem:[%s0 + $0xf8] sm:$0xf]
  %v86 = vld [vmem:[%s0 + $0xfc] sm:$0xf]
  %v87 = vld [vmem:[%s1] sm:$0xf]
  %v88 = vld [vmem:[%s1 + $0x4] sm:$0xf]
  %v89 = vld [vmem:[%s1 + $0x8] sm:$0xf]
  %v90 = vld [vmem:[%s1 + $0xc] sm:$0xf]
  %v91 = vld [vmem:[%s1 + $0x10] sm:$0xf]
  %v92 = vld [vmem:[%s1 + $0x14] sm:$0xf]
  %v93 = vld [vmem:[%s1 + $0x18] sm:$0xf]
  %v94 = vld [vmem:[%s1 + $0x1c] sm:$0xf]
  %v95 = vld [vmem:[%s1 + $0x20] sm:$0xf]
  %v96 = vld [vmem:[%s1 + $0x24] sm:$0xf]
  %v97 = vld [vmem:[%s1 + $0x28] sm:$0xf]
  %v98 = vld [vmem:[%s1 + $0x2c] sm:$0xf]
  %v99 = vld [vmem:[%s1 + $0x30] sm:$0xf]
  %v100 = vld [vmem:[%s1 + $0x34] sm:$0xf]
  %v101 = vld [vmem:[%s1 + $0x38] sm:$0xf]
  %v102 = vld [vmem:[%s1 + $0x3c] sm:$0xf]
  %v103 = vld [vmem:[%s1 + $0x40] sm:$0xf]
  %v104 = vld [vmem:[%s1 + $0x44] sm:$0xf]
  %v105 = vld [vmem:[%s1 + $0x48] sm:$0xf]
  %v106 = vld [vmem:[%s1 + $0x4c] sm:$0xf]
  %v107 = vld [vmem:[%s1 + $0x50] sm:$0xf]
  %v108 = vld [vmem:[%s1 + $0x54] sm:$0xf]
  %v109 = vld [vmem:[%s1 + $0x58] sm:$0xf]
  %v110 = vld [vmem:[%s1 + $0x5c] sm:$0xf]
  %v111 = vld [vmem:[%s1 + $0x60] sm:$0xf]
  %v112 = vld [vmem:[%s1 + $0x64] sm:$0xf]
  %v113 = vld [vmem:[%s1 + $0x68] sm:$0xf]
  %v114 = vld [vmem:[%s1 + $0x6c] sm:$0xf]
  %v115 = vld [vmem:[%s1 + $0x70] sm:$0xf]
  %v116 = vld [vmem:[%s1 + $0x74] sm:$0xf]
  %v117 = vld [vmem:[%s1 + $0x78] sm:$0xf]
  %v118 = vld [vmem:[%s1 + $0x7c] sm:$0xf]
  %v119 = vld [vmem:[%s1 + $0x80] sm:$0xf]
  %v120 = vld [vmem:[%s1 + $0x84] sm:$0xf]
  %v121 = vld [vmem:[%s1 + $0x88] sm:$0xf]
  %v122 = vld [vmem:[%s1 + $0x8c] sm:$0xf]
  %v123 = vld [vmem:[%s1 + $0x90] sm:$0xf]
  %v124 = vld [vmem:[%s1 + $0x94] sm:$0xf]
  %v125 = vld [vmem:[%s1 + $0x98] sm:$0xf]
  %v126 = vld [vmem:[%s1 + $0x9c] sm:$0xf]
  %v127 = vld [vmem:[%s1 + $0xa0] sm:$0xf]
  %v128 = vld [vmem:[%s1 + $0xa4] sm:$0xf]
  %v129 = vld [vmem:[%s1 + $0xa8] sm:$0xf]
  %v130 = vld [vmem:[%s1 + $0xac] sm:$0xf]
  %v131 = vld [vmem:[%s1 + $0xb0] sm:$0xf]
  %v132 = vld [vmem:[%s1 + $0xb4] sm:$0xf]
  %v133 = vld [vmem:[%s1 + $0xb8] sm:$0xf]
  %v134 = vld [vmem:[%s1 + $0xbc] sm:$0xf]
  %v135 = vld [vmem:[%s1 + $0xc0] sm:$0xf]
  %v136 = vld [vmem:[%s1 + $0xc4] sm:$0xf]
  %v137 = vld [vmem:[%s1 + $0xc8] sm:$0xf]
  %v138 = vld [vmem:[%s1 + $0xcc] sm:$0xf]
  %v139 = vld [vmem:[%s1 + $0xd0] sm:$0xf]
  %v140 = vld [vmem:[%s1 + $0xd4] sm:$0xf]
  %v141 = vld [vmem:[%s1 + $0xd8] sm:$0xf]
  %v142 = vld [vmem:[%s1 + $0xdc] sm:$0xf]
  %v143 = vld [vmem:[%s1 + $0xe0] sm:$0xf]
  %v144 = vld [vmem:[%s1 + $0xe4] sm:$0xf]
  %v145 = vld [vmem:[%s1 + $0xe8] sm:$0xf]
  %v146 = vld [vmem:[%s1 + $0xec] sm:$0xf]
  %v147 = vld [vmem:[%s1 + $0xf0] sm:$0xf]
  %v148 = vld [vmem:[%s1 + $0xf4] sm:$0xf]
  %v149 = vld [vmem:[%s1 + $0xf8] sm:$0xf]
  %v150 = vld [vmem:[%s1 + $0xfc] sm:$0xf]
  %v215 = vunpack.c.l.b16 %v23
  %v216 = vunpack.c.l.b16 %v24
  %v217 = vunpack.c.l.b16 %v25
  %v218 = vunpack.c.l.b16 %v26
  %v219 = vunpack.c.l.b16 %v27
  %v220 = vunpack.c.l.b16 %v28
  %v221 = vunpack.c.l.b16 %v29
  %v222 = vunpack.c.l.b16 %v30
  %v223 = vunpack.c.l.b16 %v31
  %v224 = vunpack.c.l.b16 %v32
  %v225 = vunpack.c.l.b16 %v33
  %v226 = vunpack.c.l.b16 %v34
  %v227 = vunpack.c.l.b16 %v35
  %v228 = vunpack.c.l.b16 %v36
  %v229 = vunpack.c.l.b16 %v37
  %v230 = vunpack.c.l.b16 %v38
  %v231 = vunpack.c.l.b16 %v39
  %v232 = vunpack.c.l.b16 %v40
  %v233 = vunpack.c.l.b16 %v41
  %v234 = vunpack.c.l.b16 %v42
  %v235 = vunpack.c.l.b16 %v43
  %v236 = vunpack.c.l.b16 %v44
  %v237 = vunpack.c.l.b16 %v45
  %v238 = vunpack.c.l.b16 %v46
  %v239 = vunpack.c.l.b16 %v47
  %v240 = vunpack.c.l.b16 %v48
  %v241 = vunpack.c.l.b16 %v49
  %v242 = vunpack.c.l.b16 %v50
  %v243 = vunpack.c.l.b16 %v51
  %v244 = vunpack.c.l.b16 %v52
  %v245 = vunpack.c.l.b16 %v53
  %v246 = vunpack.c.l.b16 %v54
  %v247 = vunpack.c.l.b16 %v55
  %v248 = vunpack.c.l.b16 %v56
  %v249 = vunpack.c.l.b16 %v57
  %v250 = vunpack.c.l.b16 %v58
  %v251 = vunpack.c.l.b16 %v59
  %v252 = vunpack.c.l.b16 %v60
  %v253 = vunpack.c.l.b16 %v61
  %v254 = vunpack.c.l.b16 %v62
  %v255 = vunpack.c.l.b16 %v63
  %v256 = vunpack.c.l.b16 %v64
  %v257 = vunpack.c.l.b16 %v65
  %v258 = vunpack.c.l.b16 %v66
  %v259 = vunpack.c.l.b16 %v67
  %v260 = vunpack.c.l.b16 %v68
  %v261 = vunpack.c.l.b16 %v69
  %v262 = vunpack.c.l.b16 %v70
  %v263 = vunpack.c.l.b16 %v71
  %v264 = vunpack.c.l.b16 %v72
  %v265 = vunpack.c.l.b16 %v73
  %v266 = vunpack.c.l.b16 %v74
  %v267 = vunpack.c.l.b16 %v75
  %v268 = vunpack.c.l.b16 %v76
  %v269 = vunpack.c.l.b16 %v77
  %v270 = vunpack.c.l.b16 %v78
  %v271 = vunpack.c.l.b16 %v79
  %v272 = vunpack.c.l.b16 %v80
  %v273 = vunpack.c.l.b16 %v81
  %v274 = vunpack.c.l.b16 %v82
  %v275 = vunpack.c.l.b16 %v83
  %v276 = vunpack.c.l.b16 %v84
  %v277 = vunpack.c.l.b16 %v85
  %v278 = vunpack.c.l.b16 %v86
  %v279 = vpack.c.b16 %v216, %v215
  %v280 = vpack.c.b16 %v218, %v217
  %v281 = vpack.c.b16 %v220, %v219
  %v282 = vpack.c.b16 %v222, %v221
  %v283 = vpack.c.b16 %v224, %v223
  %v284 = vpack.c.b16 %v226, %v225
  %v285 = vpack.c.b16 %v228, %v227
  %v286 = vpack.c.b16 %v230, %v229
  %v287 = vpack.c.b16 %v232, %v231
  %v288 = vpack.c.b16 %v234, %v233
  %v289 = vpack.c.b16 %v236, %v235
  %v290 = vpack.c.b16 %v238, %v237
  %v291 = vpack.c.b16 %v240, %v239
  %v292 = vpack.c.b16 %v242, %v241
  %v293 = vpack.c.b16 %v244, %v243
  %v294 = vpack.c.b16 %v246, %v245
  %v295 = vpack.c.b16 %v248, %v247
  %v296 = vpack.c.b16 %v250, %v249
  %v297 = vpack.c.b16 %v252, %v251
  %v298 = vpack.c.b16 %v254, %v253
  %v299 = vpack.c.b16 %v256, %v255
  %v300 = vpack.c.b16 %v258, %v257
  %v301 = vpack.c.b16 %v260, %v259
  %v302 = vpack.c.b16 %v262, %v261
  %v303 = vpack.c.b16 %v264, %v263
  %v304 = vpack.c.b16 %v266, %v265
  %v305 = vpack.c.b16 %v268, %v267
  %v306 = vpack.c.b16 %v270, %v269
  %v307 = vpack.c.b16 %v272, %v271
  %v308 = vpack.c.b16 %v274, %v273
  %v309 = vpack.c.b16 %v276, %v275
  %v310 = vpack.c.b16 %v278, %v277
  %v375 = vunpack.c.l.b16 %v87
  %v376 = vunpack.c.l.b16 %v88
  %v377 = vunpack.c.l.b16 %v89
  %v378 = vunpack.c.l.b16 %v90
  %v379 = vunpack.c.l.b16 %v91
  %v380 = vunpack.c.l.b16 %v92
  %v381 = vunpack.c.l.b16 %v93
  %v382 = vunpack.c.l.b16 %v94
  %v383 = vunpack.c.l.b16 %v95
  %v384 = vunpack.c.l.b16 %v96
  %v385 = vunpack.c.l.b16 %v97
  %v386 = vunpack.c.l.b16 %v98
  %v387 = vunpack.c.l.b16 %v99
  %v388 = vunpack.c.l.b16 %v100
  %v389 = vunpack.c.l.b16 %v101
  %v390 = vunpack.c.l.b16 %v102
  %v391 = vunpack.c.l.b16 %v103
  %v392 = vunpack.c.l.b16 %v104
  %v393 = vunpack.c.l.b16 %v105
  %v394 = vunpack.c.l.b16 %v106
  %v395 = vunpack.c.l.b16 %v107
  %v396 = vunpack.c.l.b16 %v108
  %v397 = vunpack.c.l.b16 %v109
  %v398 = vunpack.c.l.b16 %v110
  %v399 = vunpack.c.l.b16 %v111
  %v400 = vunpack.c.l.b16 %v112
  %v401 = vunpack.c.l.b16 %v113
  %v402 = vunpack.c.l.b16 %v114
  %v403 = vunpack.c.l.b16 %v115
  %v404 = vunpack.c.l.b16 %v116
  %v405 = vunpack.c.l.b16 %v117
  %v406 = vunpack.c.l.b16 %v118
  %v407 = vunpack.c.l.b16 %v119
  %v408 = vunpack.c.l.b16 %v120
  %v409 = vunpack.c.l.b16 %v121
  %v410 = vunpack.c.l.b16 %v122
  %v411 = vunpack.c.l.b16 %v123
  %v412 = vunpack.c.l.b16 %v124
  %v413 = vunpack.c.l.b16 %v125
  %v414 = vunpack.c.l.b16 %v126
  %v415 = vunpack.c.l.b16 %v127
  %v416 = vunpack.c.l.b16 %v128
  %v417 = vunpack.c.l.b16 %v129
  %v418 = vunpack.c.l.b16 %v130
  %v419 = vunpack.c.l.b16 %v131
  %v420 = vunpack.c.l.b16 %v132
  %v421 = vunpack.c.l.b16 %v133
  %v422 = vunpack.c.l.b16 %v134
  %v423 = vunpack.c.l.b16 %v135
  %v424 = vunpack.c.l.b16 %v136
  %v425 = vunpack.c.l.b16 %v137
  %v426 = vunpack.c.l.b16 %v138
  %v427 = vunpack.c.l.b16 %v139
  %v428 = vunpack.c.l.b16 %v140
  %v429 = vunpack.c.l.b16 %v141
  %v430 = vunpack.c.l.b16 %v142
  %v431 = vunpack.c.l.b16 %v143
  %v432 = vunpack.c.l.b16 %v144
  %v433 = vunpack.c.l.b16 %v145
  %v434 = vunpack.c.l.b16 %v146
  %v435 = vunpack.c.l.b16 %v147
  %v436 = vunpack.c.l.b16 %v148
  %v437 = vunpack.c.l.b16 %v149
  %v438 = vunpack.c.l.b16 %v150
  %v439 = vpack.c.b16 %v376, %v375
  %v440 = vpack.c.b16 %v378, %v377
  %v441 = vpack.c.b16 %v380, %v379
  %v442 = vpack.c.b16 %v382, %v381
  %v443 = vpack.c.b16 %v384, %v383
  %v444 = vpack.c.b16 %v386, %v385
  %v445 = vpack.c.b16 %v388, %v387
  %v446 = vpack.c.b16 %v390, %v389
  %v447 = vpack.c.b16 %v392, %v391
  %v448 = vpack.c.b16 %v394, %v393
  %v449 = vpack.c.b16 %v396, %v395
  %v450 = vpack.c.b16 %v398, %v397
  %v451 = vpack.c.b16 %v400, %v399
  %v452 = vpack.c.b16 %v402, %v401
  %v453 = vpack.c.b16 %v404, %v403
  %v454 = vpack.c.b16 %v406, %v405
  %v455 = vpack.c.b16 %v408, %v407
  %v456 = vpack.c.b16 %v410, %v409
  %v457 = vpack.c.b16 %v412, %v411
  %v458 = vpack.c.b16 %v414, %v413
  %v459 = vpack.c.b16 %v416, %v415
  %v460 = vpack.c.b16 %v418, %v417
  %v461 = vpack.c.b16 %v420, %v419
  %v462 = vpack.c.b16 %v422, %v421
  %v463 = vpack.c.b16 %v424, %v423
  %v464 = vpack.c.b16 %v426, %v425
  %v465 = vpack.c.b16 %v428, %v427
  %v466 = vpack.c.b16 %v430, %v429
  %v467 = vpack.c.b16 %v432, %v431
  %v468 = vpack.c.b16 %v434, %v433
  %v469 = vpack.c.b16 %v436, %v435
  %v470 = vpack.c.b16 %v438, %v437
  %471 = vrot.lane.b32.xlu0 %v439, 4
  %v472 = vpop.permute.xlu0 %471
  %473 = vrot.lane.b32.xlu0 %v440, 4
  %v474 = vpop.permute.xlu0 %473
  %475 = vrot.lane.b32.xlu0 %v441, 4
  %v476 = vpop.permute.xlu0 %475
  %477 = vrot.lane.b32.xlu0 %v442, 4
  %v478 = vpop.permute.xlu0 %477
  %479 = vrot.lane.b32.xlu0 %v443, 4
  %v480 = vpop.permute.xlu0 %479
  %481 = vrot.lane.b32.xlu0 %v444, 4
  %v482 = vpop.permute.xlu0 %481
  %483 = vrot.lane.b32.xlu0 %v445, 4
  %v484 = vpop.permute.xlu0 %483
  %485 = vrot.lane.b32.xlu0 %v446, 4
  %v486 = vpop.permute.xlu0 %485
  %487 = vrot.lane.b32.xlu0 %v447, 4
  %v488 = vpop.permute.xlu0 %487
  %489 = vrot.lane.b32.xlu0 %v448, 4
  %v490 = vpop.permute.xlu0 %489
  %491 = vrot.lane.b32.xlu0 %v449, 4
  %v492 = vpop.permute.xlu0 %491
  %493 = vrot.lane.b32.xlu0 %v450, 4
  %v494 = vpop.permute.xlu0 %493
  %495 = vrot.lane.b32.xlu0 %v451, 4
  %v496 = vpop.permute.xlu0 %495
  %497 = vrot.lane.b32.xlu0 %v452, 4
  %v498 = vpop.permute.xlu0 %497
  %499 = vrot.lane.b32.xlu0 %v453, 4
  %v500 = vpop.permute.xlu0 %499
  %501 = vrot.lane.b32.xlu0 %v454, 4
  %v502 = vpop.permute.xlu0 %501
  %503 = vrot.lane.b32.xlu0 %v455, 4
  %v504 = vpop.permute.xlu0 %503
  %505 = vrot.lane.b32.xlu0 %v456, 4
  %v506 = vpop.permute.xlu0 %505
  %507 = vrot.lane.b32.xlu0 %v457, 4
  %v508 = vpop.permute.xlu0 %507
  %509 = vrot.lane.b32.xlu0 %v458, 4
  %v510 = vpop.permute.xlu0 %509
  %511 = vrot.lane.b32.xlu0 %v459, 4
  %v512 = vpop.permute.xlu0 %511
  %513 = vrot.lane.b32.xlu0 %v460, 4
  %v514 = vpop.permute.xlu0 %513
  %515 = vrot.lane.b32.xlu0 %v461, 4
  %v516 = vpop.permute.xlu0 %515
  %517 = vrot.lane.b32.xlu0 %v462, 4
  %v518 = vpop.permute.xlu0 %517
  %519 = vrot.lane.b32.xlu0 %v463, 4
  %v520 = vpop.permute.xlu0 %519
  %521 = vrot.lane.b32.xlu0 %v464, 4
  %v522 = vpop.permute.xlu0 %521
  %523 = vrot.lane.b32.xlu0 %v465, 4
  %v524 = vpop.permute.xlu0 %523
  %525 = vrot.lane.b32.xlu0 %v466, 4
  %v526 = vpop.permute.xlu0 %525
  %527 = vrot.lane.b32.xlu0 %v467, 4
  %v528 = vpop.permute.xlu0 %527
  %529 = vrot.lane.b32.xlu0 %v468, 4
  %v530 = vpop.permute.xlu0 %529
  %531 = vrot.lane.b32.xlu0 %v469, 4
  %v532 = vpop.permute.xlu0 %531
  %533 = vrot.lane.b32.xlu0 %v470, 4
  %v534 = vpop.permute.xlu0 %533
  %vm535 = vcmask 31744
  %v538 = vsel %vm535, %v279, %v472
  %v542 = vsel %vm535, %v280, %v474
  %v546 = vsel %vm535, %v281, %v476
  %v550 = vsel %vm535, %v282, %v478
  %v554 = vsel %vm535, %v283, %v480
  %v558 = vsel %vm535, %v284, %v482
  %v562 = vsel %vm535, %v285, %v484
  %v566 = vsel %vm535, %v286, %v486
  %v570 = vsel %vm535, %v287, %v488
  %v574 = vsel %vm535, %v288, %v490
  %v578 = vsel %vm535, %v289, %v492
  %v582 = vsel %vm535, %v290, %v494
  %v586 = vsel %vm535, %v291, %v496
  %v590 = vsel %vm535, %v292, %v498
  %v594 = vsel %vm535, %v293, %v500
  %v598 = vsel %vm535, %v294, %v502
  %v602 = vsel %vm535, %v295, %v504
  %v606 = vsel %vm535, %v296, %v506
  %v610 = vsel %vm535, %v297, %v508
  %v614 = vsel %vm535, %v298, %v510
  %v618 = vsel %vm535, %v299, %v512
  %v622 = vsel %vm535, %v300, %v514
  %v626 = vsel %vm535, %v301, %v516
  %v630 = vsel %vm535, %v302, %v518
  %v634 = vsel %vm535, %v303, %v520
  %v638 = vsel %vm535, %v304, %v522
  %v642 = vsel %vm535, %v305, %v524
  %v646 = vsel %vm535, %v306, %v526
  %v650 = vsel %vm535, %v307, %v528
  %v654 = vsel %vm535, %v308, %v530
  %v658 = vsel %vm535, %v309, %v532
  %v662 = vsel %vm535, %v310, %v534
  %v664 = vunpack.c.l.bf16 %v538
  %v665 = vunpack.c.h.bf16 %v538
  %v666 = vunpack.c.l.bf16 %v542
  %v667 = vunpack.c.h.bf16 %v542
  %v668 = vunpack.c.l.bf16 %v546
  %v669 = vunpack.c.h.bf16 %v546
  %v670 = vunpack.c.l.bf16 %v550
  %v671 = vunpack.c.h.bf16 %v550
  %v672 = vunpack.c.l.bf16 %v554
  %v673 = vunpack.c.h.bf16 %v554
  %v674 = vunpack.c.l.bf16 %v558
  %v675 = vunpack.c.h.bf16 %v558
  %v676 = vunpack.c.l.bf16 %v562
  %v677 = vunpack.c.h.bf16 %v562
  %v678 = vunpack.c.l.bf16 %v566
  %v679 = vunpack.c.h.bf16 %v566
  %v680 = vunpack.c.l.bf16 %v570
  %v681 = vunpack.c.h.bf16 %v570
  %v682 = vunpack.c.l.bf16 %v574
  %v683 = vunpack.c.h.bf16 %v574
  %v684 = vunpack.c.l.bf16 %v578
  %v685 = vunpack.c.h.bf16 %v578
  %v686 = vunpack.c.l.bf16 %v582
  %v687 = vunpack.c.h.bf16 %v582
  %v688 = vunpack.c.l.bf16 %v586
  %v689 = vunpack.c.h.bf16 %v586
  %v690 = vunpack.c.l.bf16 %v590
  %v691 = vunpack.c.h.bf16 %v590
  %v692 = vunpack.c.l.bf16 %v594
  %v693 = vunpack.c.h.bf16 %v594
  %v694 = vunpack.c.l.bf16 %v598
  %v695 = vunpack.c.h.bf16 %v598
  %v696 = vunpack.c.l.bf16 %v602
  %v697 = vunpack.c.h.bf16 %v602
  %v698 = vunpack.c.l.bf16 %v606
  %v699 = vunpack.c.h.bf16 %v606
  %v700 = vunpack.c.l.bf16 %v610
  %v701 = vunpack.c.h.bf16 %v610
  %v702 = vunpack.c.l.bf16 %v614
  %v703 = vunpack.c.h.bf16 %v614
  %v704 = vunpack.c.l.bf16 %v618
  %v705 = vunpack.c.h.bf16 %v618
  %v706 = vunpack.c.l.bf16 %v622
  %v707 = vunpack.c.h.bf16 %v622
  %v708 = vunpack.c.l.bf16 %v626
  %v709 = vunpack.c.h.bf16 %v626
  %v710 = vunpack.c.l.bf16 %v630
  %v711 = vunpack.c.h.bf16 %v630
  %v712 = vunpack.c.l.bf16 %v634
  %v713 = vunpack.c.h.bf16 %v634
  %v714 = vunpack.c.l.bf16 %v638
  %v715 = vunpack.c.h.bf16 %v638
  %v716 = vunpack.c.l.bf16 %v642
  %v717 = vunpack.c.h.bf16 %v642
  %v718 = vunpack.c.l.bf16 %v646
  %v719 = vunpack.c.h.bf16 %v646
  %v720 = vunpack.c.l.bf16 %v650
  %v721 = vunpack.c.h.bf16 %v650
  %v722 = vunpack.c.l.bf16 %v654
  %v723 = vunpack.c.h.bf16 %v654
  %v724 = vunpack.c.l.bf16 %v658
  %v725 = vunpack.c.h.bf16 %v658
  %v726 = vunpack.c.l.bf16 %v662
  %v727 = vunpack.c.h.bf16 %v662
  %v728 = vld [vmem:[%s2] sm:$0x1]
  %v730 = vperm.slane %v728, 0
  %v732 = vmul.f32 %v664, %v730
  %v733 = vmul.f32 %v665, %v730
  %v734 = vmul.f32 %v666, %v730
  %v735 = vmul.f32 %v667, %v730
  %v736 = vmul.f32 %v668, %v730
  %v737 = vmul.f32 %v669, %v730
  %v738 = vmul.f32 %v670, %v730
  %v739 = vmul.f32 %v671, %v730
  %v740 = vmul.f32 %v672, %v730
  %v741 = vmul.f32 %v673, %v730
  %v742 = vmul.f32 %v674, %v730
  %v743 = vmul.f32 %v675, %v730
  %v744 = vmul.f32 %v676, %v730
  %v745 = vmul.f32 %v677, %v730
  %v746 = vmul.f32 %v678, %v730
  %v747 = vmul.f32 %v679, %v730
  %v748 = vmul.f32 %v680, %v730
  %v749 = vmul.f32 %v681, %v730
  %v750 = vmul.f32 %v682, %v730
  %v751 = vmul.f32 %v683, %v730
  %v752 = vmul.f32 %v684, %v730
  %v753 = vmul.f32 %v685, %v730
  %v754 = vmul.f32 %v686, %v730
  %v755 = vmul.f32 %v687, %v730
  %v756 = vmul.f32 %v688, %v730
  %v757 = vmul.f32 %v689, %v730
  %v758 = vmul.f32 %v690, %v730
  %v759 = vmul.f32 %v691, %v730
  %v760 = vmul.f32 %v692, %v730
  %v761 = vmul.f32 %v693, %v730
  %v762 = vmul.f32 %v694, %v730
  %v763 = vmul.f32 %v695, %v730
  %v764 = vmul.f32 %v696, %v730
  %v765 = vmul.f32 %v697, %v730
  %v766 = vmul.f32 %v698, %v730
  %v767 = vmul.f32 %v699, %v730
  %v768 = vmul.f32 %v700, %v730
  %v769 = vmul.f32 %v701, %v730
  %v770 = vmul.f32 %v702, %v730
  %v771 = vmul.f32 %v703, %v730
  %v772 = vmul.f32 %v704, %v730
  %v773 = vmul.f32 %v705, %v730
  %v774 = vmul.f32 %v706, %v730
  %v775 = vmul.f32 %v707, %v730
  %v776 = vmul.f32 %v708, %v730
  %v777 = vmul.f32 %v709, %v730
  %v778 = vmul.f32 %v710, %v730
  %v779 = vmul.f32 %v711, %v730
  %v780 = vmul.f32 %v712, %v730
  %v781 = vmul.f32 %v713, %v730
  %v782 = vmul.f32 %v714, %v730
  %v783 = vmul.f32 %v715, %v730
  %v784 = vmul.f32 %v716, %v730
  %v785 = vmul.f32 %v717, %v730
  %v786 = vmul.f32 %v718, %v730
  %v787 = vmul.f32 %v719, %v730
  %v788 = vmul.f32 %v720, %v730
  %v789 = vmul.f32 %v721, %v730
  %v790 = vmul.f32 %v722, %v730
  %v791 = vmul.f32 %v723, %v730
  %v792 = vmul.f32 %v724, %v730
  %v793 = vmul.f32 %v725, %v730
  %v794 = vmul.f32 %v726, %v730
  %v795 = vmul.f32 %v727, %v730
  %v796 = vld [vmem:[%s3] sm:$0x1]
  %v798 = vperm.slane %v796, 0
  %v800 = vadd.f32 %v732, %v798
  %v801 = vadd.f32 %v733, %v798
  %v802 = vadd.f32 %v734, %v798
  %v803 = vadd.f32 %v735, %v798
  %v804 = vadd.f32 %v736, %v798
  %v805 = vadd.f32 %v737, %v798
  %v806 = vadd.f32 %v738, %v798
  %v807 = vadd.f32 %v739, %v798
  %v808 = vadd.f32 %v740, %v798
  %v809 = vadd.f32 %v741, %v798
  %v810 = vadd.f32 %v742, %v798
  %v811 = vadd.f32 %v743, %v798
  %v812 = vadd.f32 %v744, %v798
  %v813 = vadd.f32 %v745, %v798
  %v814 = vadd.f32 %v746, %v798
  %v815 = vadd.f32 %v747, %v798
  %v816 = vadd.f32 %v748, %v798
  %v817 = vadd.f32 %v749, %v798
  %v818 = vadd.f32 %v750, %v798
  %v819 = vadd.f32 %v751, %v798
  %v820 = vadd.f32 %v752, %v798
  %v821 = vadd.f32 %v753, %v798
  %v822 = vadd.f32 %v754, %v798
  %v823 = vadd.f32 %v755, %v798
  %v824 = vadd.f32 %v756, %v798
  %v825 = vadd.f32 %v757, %v798
  %v826 = vadd.f32 %v758, %v798
  %v827 = vadd.f32 %v759, %v798
  %v828 = vadd.f32 %v760, %v798
  %v829 = vadd.f32 %v761, %v798
  %v830 = vadd.f32 %v762, %v798
  %v831 = vadd.f32 %v763, %v798
  %v832 = vadd.f32 %v764, %v798
  %v833 = vadd.f32 %v765, %v798
  %v834 = vadd.f32 %v766, %v798
  %v835 = vadd.f32 %v767, %v798
  %v836 = vadd.f32 %v768, %v798
  %v837 = vadd.f32 %v769, %v798
  %v838 = vadd.f32 %v770, %v798
  %v839 = vadd.f32 %v771, %v798
  %v840 = vadd.f32 %v772, %v798
  %v841 = vadd.f32 %v773, %v798
  %v842 = vadd.f32 %v774, %v798
  %v843 = vadd.f32 %v775, %v798
  %v844 = vadd.f32 %v776, %v798
  %v845 = vadd.f32 %v777, %v798
  %v846 = vadd.f32 %v778, %v798
  %v847 = vadd.f32 %v779, %v798
  %v848 = vadd.f32 %v780, %v798
  %v849 = vadd.f32 %v781, %v798
  %v850 = vadd.f32 %v782, %v798
  %v851 = vadd.f32 %v783, %v798
  %v852 = vadd.f32 %v784, %v798
  %v853 = vadd.f32 %v785, %v798
  %v854 = vadd.f32 %v786, %v798
  %v855 = vadd.f32 %v787, %v798
  %v856 = vadd.f32 %v788, %v798
  %v857 = vadd.f32 %v789, %v798
  %v858 = vadd.f32 %v790, %v798
  %v859 = vadd.f32 %v791, %v798
  %v860 = vadd.f32 %v792, %v798
  %v861 = vadd.f32 %v793, %v798
  %v862 = vadd.f32 %v794, %v798
  %v863 = vadd.f32 %v795, %v798
  %v864 = vmax.f32 %v800, 0.0
  %v865 = vmax.f32 %v801, 0.0
  %v866 = vmax.f32 %v802, 0.0
  %v867 = vmax.f32 %v803, 0.0
  %v868 = vmax.f32 %v804, 0.0
  %v869 = vmax.f32 %v805, 0.0
  %v870 = vmax.f32 %v806, 0.0
  %v871 = vmax.f32 %v807, 0.0
  %v872 = vmax.f32 %v808, 0.0
  %v873 = vmax.f32 %v809, 0.0
  %v874 = vmax.f32 %v810, 0.0
  %v875 = vmax.f32 %v811, 0.0
  %v876 = vmax.f32 %v812, 0.0
  %v877 = vmax.f32 %v813, 0.0
  %v878 = vmax.f32 %v814, 0.0
  %v879 = vmax.f32 %v815, 0.0
  %v880 = vmax.f32 %v816, 0.0
  %v881 = vmax.f32 %v817, 0.0
  %v882 = vmax.f32 %v818, 0.0
  %v883 = vmax.f32 %v819, 0.0
  %v884 = vmax.f32 %v820, 0.0
  %v885 = vmax.f32 %v821, 0.0
  %v886 = vmax.f32 %v822, 0.0
  %v887 = vmax.f32 %v823, 0.0
  %v888 = vmax.f32 %v824, 0.0
  %v889 = vmax.f32 %v825, 0.0
  %v890 = vmax.f32 %v826, 0.0
  %v891 = vmax.f32 %v827, 0.0
  %v892 = vmax.f32 %v828, 0.0
  %v893 = vmax.f32 %v829, 0.0
  %v894 = vmax.f32 %v830, 0.0
  %v895 = vmax.f32 %v831, 0.0
  %v896 = vmax.f32 %v832, 0.0
  %v897 = vmax.f32 %v833, 0.0
  %v898 = vmax.f32 %v834, 0.0
  %v899 = vmax.f32 %v835, 0.0
  %v900 = vmax.f32 %v836, 0.0
  %v901 = vmax.f32 %v837, 0.0
  %v902 = vmax.f32 %v838, 0.0
  %v903 = vmax.f32 %v839, 0.0
  %v904 = vmax.f32 %v840, 0.0
  %v905 = vmax.f32 %v841, 0.0
  %v906 = vmax.f32 %v842, 0.0
  %v907 = vmax.f32 %v843, 0.0
  %v908 = vmax.f32 %v844, 0.0
  %v909 = vmax.f32 %v845, 0.0
  %v910 = vmax.f32 %v846, 0.0
  %v911 = vmax.f32 %v847, 0.0
  %v912 = vmax.f32 %v848, 0.0
  %v913 = vmax.f32 %v849, 0.0
  %v914 = vmax.f32 %v850, 0.0
  %v915 = vmax.f32 %v851, 0.0
  %v916 = vmax.f32 %v852, 0.0
  %v917 = vmax.f32 %v853, 0.0
  %v918 = vmax.f32 %v854, 0.0
  %v919 = vmax.f32 %v855, 0.0
  %v920 = vmax.f32 %v856, 0.0
  %v921 = vmax.f32 %v857, 0.0
  %v922 = vmax.f32 %v858, 0.0
  %v923 = vmax.f32 %v859, 0.0
  %v924 = vmax.f32 %v860, 0.0
  %v925 = vmax.f32 %v861, 0.0
  %v926 = vmax.f32 %v862, 0.0
  %v927 = vmax.f32 %v863, 0.0
  %v928 = vpack.c.bf16 %v865, %v864
  %v929 = vpack.c.bf16 %v867, %v866
  %v930 = vpack.c.bf16 %v869, %v868
  %v931 = vpack.c.bf16 %v871, %v870
  %v932 = vpack.c.bf16 %v873, %v872
  %v933 = vpack.c.bf16 %v875, %v874
  %v934 = vpack.c.bf16 %v877, %v876
  %v935 = vpack.c.bf16 %v879, %v878
  %v936 = vpack.c.bf16 %v881, %v880
  %v937 = vpack.c.bf16 %v883, %v882
  %v938 = vpack.c.bf16 %v885, %v884
  %v939 = vpack.c.bf16 %v887, %v886
  %v940 = vpack.c.bf16 %v889, %v888
  %v941 = vpack.c.bf16 %v891, %v890
  %v942 = vpack.c.bf16 %v893, %v892
  %v943 = vpack.c.bf16 %v895, %v894
  %v944 = vpack.c.bf16 %v897, %v896
  %v945 = vpack.c.bf16 %v899, %v898
  %v946 = vpack.c.bf16 %v901, %v900
  %v947 = vpack.c.bf16 %v903, %v902
  %v948 = vpack.c.bf16 %v905, %v904
  %v949 = vpack.c.bf16 %v907, %v906
  %v950 = vpack.c.bf16 %v909, %v908
  %v951 = vpack.c.bf16 %v911, %v910
  %v952 = vpack.c.bf16 %v913, %v912
  %v953 = vpack.c.bf16 %v915, %v914
  %v954 = vpack.c.bf16 %v917, %v916
  %v955 = vpack.c.bf16 %v919, %v918
  %v956 = vpack.c.bf16 %v921, %v920
  %v957 = vpack.c.bf16 %v923, %v922
  %v958 = vpack.c.bf16 %v925, %v924
  %v959 = vpack.c.bf16 %v927, %v926
  %v960 = vld [vmem:[%s4] sm:$0xf]
  %vm961 = vcmask 64512
  %v963 = vsel %vm961, %v928, 0
  %v966 = vsel %vm961, %v929, 0
  %v969 = vsel %vm961, %v930, 0
  %v972 = vsel %vm961, %v931, 0
  %v975 = vsel %vm961, %v932, 0
  %v978 = vsel %vm961, %v933, 0
  %v981 = vsel %vm961, %v934, 0
  %v984 = vsel %vm961, %v935, 0
  %v987 = vsel %vm961, %v936, 0
  %v990 = vsel %vm961, %v937, 0
  %v993 = vsel %vm961, %v938, 0
  %v996 = vsel %vm961, %v939, 0
  %v999 = vsel %vm961, %v940, 0
  %v1002 = vsel %vm961, %v941, 0
  %v1005 = vsel %vm961, %v942, 0
  %v1008 = vsel %vm961, %v943, 0
  %v1011 = vsel %vm961, %v944, 0
  %v1014 = vsel %vm961, %v945, 0
  %v1017 = vsel %vm961, %v946, 0
  %v1020 = vsel %vm961, %v947, 0
  %v1023 = vsel %vm961, %v948, 0
  %v1026 = vsel %vm961, %v949, 0
  %v1029 = vsel %vm961, %v950, 0
  %v1032 = vsel %vm961, %v951, 0
  %v1035 = vsel %vm961, %v952, 0
  %v1038 = vsel %vm961, %v953, 0
  %v1041 = vsel %vm961, %v954, 0
  %v1044 = vsel %vm961, %v955, 0
  %v1047 = vsel %vm961, %v956, 0
  %v1050 = vsel %vm961, %v957, 0
  %v1053 = vsel %vm961, %v958, 0
  %v1056 = vsel %vm961, %v959, 0
  %vm1058 = vcmask 1043456
  %v1060 = vsel %vm1058, %v960, 0
  %1062 = vmatpush.bf16.msra.mxu0 0
  %1063 = vmatpush.bf16.msra.mxu0 0
  %1064 = vmatpush.bf16.msra.mxu0 0
  %1065 = vmatpush.bf16.msra.mxu0 0
  %1066 = vmatpush.bf16.msra.mxu0 0
  %1067 = vmatpush.bf16.msra.mxu0 0
  %1068 = vmatpush.bf16.msra.mxu0 0
  %1069 = vmatpush.bf16.msra.mxu0 %v1060
  %1070 = vmatmul.bf16.gmra.mxu0 %v963
  %v1071 = vpop.f32.mrf.mxu0
  %v1072 = vadd.f32 0.0, %v1071
  %v1073 = vpop.f32.mrf.mxu0
  %v1074 = vadd.f32 0.0, %v1073
  %1075 = vmatmul.bf16.gmra.mxu0 %v966
  %v1076 = vpop.f32.mrf.mxu0
  %v1077 = vadd.f32 0.0, %v1076
  %v1078 = vpop.f32.mrf.mxu0
  %v1079 = vadd.f32 0.0, %v1078
  %1080 = vmatmul.bf16.gmra.mxu0 %v969
  %v1081 = vpop.f32.mrf.mxu0
  %v1082 = vadd.f32 0.0, %v1081
  %v1083 = vpop.f32.mrf.mxu0
  %v1084 = vadd.f32 0.0, %v1083
  %1085 = vmatmul.bf16.gmra.mxu0 %v972
  %v1086 = vpop.f32.mrf.mxu0
  %v1087 = vadd.f32 0.0, %v1086
  %v1088 = vpop.f32.mrf.mxu0
  %v1089 = vadd.f32 0.0, %v1088
  %1090 = vmatmul.bf16.gmra.mxu0 %v975
  %v1091 = vpop.f32.mrf.mxu0
  %v1092 = vadd.f32 0.0, %v1091
  %v1093 = vpop.f32.mrf.mxu0
  %v1094 = vadd.f32 0.0, %v1093
  %1095 = vmatmul.bf16.gmra.mxu0 %v978
  %v1096 = vpop.f32.mrf.mxu0
  %v1097 = vadd.f32 0.0, %v1096
  %v1098 = vpop.f32.mrf.mxu0
  %v1099 = vadd.f32 0.0, %v1098
  %1100 = vmatmul.bf16.gmra.mxu0 %v981
  %v1101 = vpop.f32.mrf.mxu0
  %v1102 = vadd.f32 0.0, %v1101
  %v1103 = vpop.f32.mrf.mxu0
  %v1104 = vadd.f32 0.0, %v1103
  %1105 = vmatmul.bf16.gmra.mxu0 %v984
  %v1106 = vpop.f32.mrf.mxu0
  %v1107 = vadd.f32 0.0, %v1106
  %v1108 = vpop.f32.mrf.mxu0
  %v1109 = vadd.f32 0.0, %v1108
  %1110 = vmatmul.bf16.gmra.mxu0 %v987
  %v1111 = vpop.f32.mrf.mxu0
  %v1112 = vadd.f32 0.0, %v1111
  %v1113 = vpop.f32.mrf.mxu0
  %v1114 = vadd.f32 0.0, %v1113
  %1115 = vmatmul.bf16.gmra.mxu0 %v990
  %v1116 = vpop.f32.mrf.mxu0
  %v1117 = vadd.f32 0.0, %v1116
  %v1118 = vpop.f32.mrf.mxu0
  %v1119 = vadd.f32 0.0, %v1118
  %1120 = vmatmul.bf16.gmra.mxu0 %v993
  %v1121 = vpop.f32.mrf.mxu0
  %v1122 = vadd.f32 0.0, %v1121
  %v1123 = vpop.f32.mrf.mxu0
  %v1124 = vadd.f32 0.0, %v1123
  %1125 = vmatmul.bf16.gmra.mxu0 %v996
  %v1126 = vpop.f32.mrf.mxu0
  %v1127 = vadd.f32 0.0, %v1126
  %v1128 = vpop.f32.mrf.mxu0
  %v1129 = vadd.f32 0.0, %v1128
  %1130 = vmatmul.bf16.gmra.mxu0 %v999
  %v1131 = vpop.f32.mrf.mxu0
  %v1132 = vadd.f32 0.0, %v1131
  %v1133 = vpop.f32.mrf.mxu0
  %v1134 = vadd.f32 0.0, %v1133
  %1135 = vmatmul.bf16.gmra.mxu0 %v1002
  %v1136 = vpop.f32.mrf.mxu0
  %v1137 = vadd.f32 0.0, %v1136
  %v1138 = vpop.f32.mrf.mxu0
  %v1139 = vadd.f32 0.0, %v1138
  %1140 = vmatmul.bf16.gmra.mxu0 %v1005
  %v1141 = vpop.f32.mrf.mxu0
  %v1142 = vadd.f32 0.0, %v1141
  %v1143 = vpop.f32.mrf.mxu0
  %v1144 = vadd.f32 0.0, %v1143
  %1145 = vmatmul.bf16.gmra.mxu0 %v1008
  %v1146 = vpop.f32.mrf.mxu0
  %v1147 = vadd.f32 0.0, %v1146
  %v1148 = vpop.f32.mrf.mxu0
  %v1149 = vadd.f32 0.0, %v1148
  %1150 = vmatmul.bf16.gmra.mxu0 %v1011
  %v1151 = vpop.f32.mrf.mxu0
  %v1152 = vadd.f32 0.0, %v1151
  %v1153 = vpop.f32.mrf.mxu0
  %v1154 = vadd.f32 0.0, %v1153
  %1155 = vmatmul.bf16.gmra.mxu0 %v1014
  %v1156 = vpop.f32.mrf.mxu0
  %v1157 = vadd.f32 0.0, %v1156
  %v1158 = vpop.f32.mrf.mxu0
  %v1159 = vadd.f32 0.0, %v1158
  %1160 = vmatmul.bf16.gmra.mxu0 %v1017
  %v1161 = vpop.f32.mrf.mxu0
  %v1162 = vadd.f32 0.0, %v1161
  %v1163 = vpop.f32.mrf.mxu0
  %v1164 = vadd.f32 0.0, %v1163
  %1165 = vmatmul.bf16.gmra.mxu0 %v1020
  %v1166 = vpop.f32.mrf.mxu0
  %v1167 = vadd.f32 0.0, %v1166
  %v1168 = vpop.f32.mrf.mxu0
  %v1169 = vadd.f32 0.0, %v1168
  %1170 = vmatmul.bf16.gmra.mxu0 %v1023
  %v1171 = vpop.f32.mrf.mxu0
  %v1172 = vadd.f32 0.0, %v1171
  %v1173 = vpop.f32.mrf.mxu0
  %v1174 = vadd.f32 0.0, %v1173
  %1175 = vmatmul.bf16.gmra.mxu0 %v1026
  %v1176 = vpop.f32.mrf.mxu0
  %v1177 = vadd.f32 0.0, %v1176
  %v1178 = vpop.f32.mrf.mxu0
  %v1179 = vadd.f32 0.0, %v1178
  %1180 = vmatmul.bf16.gmra.mxu0 %v1029
  %v1181 = vpop.f32.mrf.mxu0
  %v1182 = vadd.f32 0.0, %v1181
  %v1183 = vpop.f32.mrf.mxu0
  %v1184 = vadd.f32 0.0, %v1183
  %1185 = vmatmul.bf16.gmra.mxu0 %v1032
  %v1186 = vpop.f32.mrf.mxu0
  %v1187 = vadd.f32 0.0, %v1186
  %v1188 = vpop.f32.mrf.mxu0
  %v1189 = vadd.f32 0.0, %v1188
  %1190 = vmatmul.bf16.gmra.mxu0 %v1035
  %v1191 = vpop.f32.mrf.mxu0
  %v1192 = vadd.f32 0.0, %v1191
  %v1193 = vpop.f32.mrf.mxu0
  %v1194 = vadd.f32 0.0, %v1193
  %1195 = vmatmul.bf16.gmra.mxu0 %v1038
  %v1196 = vpop.f32.mrf.mxu0
  %v1197 = vadd.f32 0.0, %v1196
  %v1198 = vpop.f32.mrf.mxu0
  %v1199 = vadd.f32 0.0, %v1198
  %1200 = vmatmul.bf16.gmra.mxu0 %v1041
  %v1201 = vpop.f32.mrf.mxu0
  %v1202 = vadd.f32 0.0, %v1201
  %v1203 = vpop.f32.mrf.mxu0
  %v1204 = vadd.f32 0.0, %v1203
  %1205 = vmatmul.bf16.gmra.mxu0 %v1044
  %v1206 = vpop.f32.mrf.mxu0
  %v1207 = vadd.f32 0.0, %v1206
  %v1208 = vpop.f32.mrf.mxu0
  %v1209 = vadd.f32 0.0, %v1208
  %1210 = vmatmul.bf16.gmra.mxu0 %v1047
  %v1211 = vpop.f32.mrf.mxu0
  %v1212 = vadd.f32 0.0, %v1211
  %v1213 = vpop.f32.mrf.mxu0
  %v1214 = vadd.f32 0.0, %v1213
  %1215 = vmatmul.bf16.gmra.mxu0 %v1050
  %v1216 = vpop.f32.mrf.mxu0
  %v1217 = vadd.f32 0.0, %v1216
  %v1218 = vpop.f32.mrf.mxu0
  %v1219 = vadd.f32 0.0, %v1218
  %1220 = vmatmul.bf16.gmra.mxu0 %v1053
  %v1221 = vpop.f32.mrf.mxu0
  %v1222 = vadd.f32 0.0, %v1221
  %v1223 = vpop.f32.mrf.mxu0
  %v1224 = vadd.f32 0.0, %v1223
  %1225 = vmatmul.bf16.gmra.mxu0 %v1056
  %v1226 = vpop.f32.mrf.mxu0
  %v1227 = vadd.f32 0.0, %v1226
  %v1228 = vpop.f32.mrf.mxu0
  %v1229 = vadd.f32 0.0, %v1228
  %1230 = vdwg.mxu0
  %vm1231 = vcmask 130048
  %1232 = vst.msk [vmem:[%s5] sm:$0xff] %vm1231, %v1072
  %1233 = vst.msk [vmem:[%s5 + $0x8] sm:$0xff] %vm1231, %v1074
  %1234 = vst.msk [vmem:[%s5 + $0x10] sm:$0xff] %vm1231, %v1077
  %1235 = vst.msk [vmem:[%s5 + $0x18] sm:$0xff] %vm1231, %v1079
  %1236 = vst.msk [vmem:[%s5 + $0x20] sm:$0xff] %vm1231, %v1082
  %1237 = vst.msk [vmem:[%s5 + $0x28] sm:$0xff] %vm1231, %v1084
  %1238 = vst.msk [vmem:[%s5 + $0x30] sm:$0xff] %vm1231, %v1087
  %1239 = vst.msk [vmem:[%s5 + $0x38] sm:$0xff] %vm1231, %v1089
  %1240 = vst.msk [vmem:[%s5 + $0x40] sm:$0xff] %vm1231, %v1092
  %1241 = vst.msk [vmem:[%s5 + $0x48] sm:$0xff] %vm1231, %v1094
  %1242 = vst.msk [vmem:[%s5 + $0x50] sm:$0xff] %vm1231, %v1097
  %1243 = vst.msk [vmem:[%s5 + $0x58] sm:$0xff] %vm1231, %v1099
  %1244 = vst.msk [vmem:[%s5 + $0x60] sm:$0xff] %vm1231, %v1102
  %1245 = vst.msk [vmem:[%s5 + $0x68] sm:$0xff] %vm1231, %v1104
  %1246 = vst.msk [vmem:[%s5 + $0x70] sm:$0xff] %vm1231, %v1107
  %1247 = vst.msk [vmem:[%s5 + $0x78] sm:$0xff] %vm1231, %v1109
  %1248 = vst.msk [vmem:[%s5 + $0x80] sm:$0xff] %vm1231, %v1112
  %1249 = vst.msk [vmem:[%s5 + $0x88] sm:$0xff] %vm1231, %v1114
  %1250 = vst.msk [vmem:[%s5 + $0x90] sm:$0xff] %vm1231, %v1117
  %1251 = vst.msk [vmem:[%s5 + $0x98] sm:$0xff] %vm1231, %v1119
  %1252 = vst.msk [vmem:[%s5 + $0xa0] sm:$0xff] %vm1231, %v1122
  %1253 = vst.msk [vmem:[%s5 + $0xa8] sm:$0xff] %vm1231, %v1124
  %1254 = vst.msk [vmem:[%s5 + $0xb0] sm:$0xff] %vm1231, %v1127
  %1255 = vst.msk [vmem:[%s5 + $0xb8] sm:$0xff] %vm1231, %v1129
  %1256 = vst.msk [vmem:[%s5 + $0xc0] sm:$0xff] %vm1231, %v1132
  %1257 = vst.msk [vmem:[%s5 + $0xc8] sm:$0xff] %vm1231, %v1134
  %1258 = vst.msk [vmem:[%s5 + $0xd0] sm:$0xff] %vm1231, %v1137
  %1259 = vst.msk [vmem:[%s5 + $0xd8] sm:$0xff] %vm1231, %v1139
  %1260 = vst.msk [vmem:[%s5 + $0xe0] sm:$0xff] %vm1231, %v1142
  %1261 = vst.msk [vmem:[%s5 + $0xe8] sm:$0xff] %vm1231, %v1144
  %1262 = vst.msk [vmem:[%s5 + $0xf0] sm:$0xff] %vm1231, %v1147
  %1263 = vst.msk [vmem:[%s5 + $0xf8] sm:$0xff] %vm1231, %v1149
  %1264 = vst.msk [vmem:[%s5 + $0x100] sm:$0xff] %vm1231, %v1152
  %1265 = vst.msk [vmem:[%s5 + $0x108] sm:$0xff] %vm1231, %v1154
  %1266 = vst.msk [vmem:[%s5 + $0x110] sm:$0xff] %vm1231, %v1157
  %1267 = vst.msk [vmem:[%s5 + $0x118] sm:$0xff] %vm1231, %v1159
  %1268 = vst.msk [vmem:[%s5 + $0x120] sm:$0xff] %vm1231, %v1162
  %1269 = vst.msk [vmem:[%s5 + $0x128] sm:$0xff] %vm1231, %v1164
  %1270 = vst.msk [vmem:[%s5 + $0x130] sm:$0xff] %vm1231, %v1167
  %1271 = vst.msk [vmem:[%s5 + $0x138] sm:$0xff] %vm1231, %v1169
  %1272 = vst.msk [vmem:[%s5 + $0x140] sm:$0xff] %vm1231, %v1172
  %1273 = vst.msk [vmem:[%s5 + $0x148] sm:$0xff] %vm1231, %v1174
  %1274 = vst.msk [vmem:[%s5 + $0x150] sm:$0xff] %vm1231, %v1177
  %1275 = vst.msk [vmem:[%s5 + $0x158] sm:$0xff] %vm1231, %v1179
  %1276 = vst.msk [vmem:[%s5 + $0x160] sm:$0xff] %vm1231, %v1182
  %1277 = vst.msk [vmem:[%s5 + $0x168] sm:$0xff] %vm1231, %v1184
  %1278 = vst.msk [vmem:[%s5 + $0x170] sm:$0xff] %vm1231, %v1187
  %1279 = vst.msk [vmem:[%s5 + $0x178] sm:$0xff] %vm1231, %v1189
  %1280 = vst.msk [vmem:[%s5 + $0x180] sm:$0xff] %vm1231, %v1192
  %1281 = vst.msk [vmem:[%s5 + $0x188] sm:$0xff] %vm1231, %v1194
  %1282 = vst.msk [vmem:[%s5 + $0x190] sm:$0xff] %vm1231, %v1197
  %1283 = vst.msk [vmem:[%s5 + $0x198] sm:$0xff] %vm1231, %v1199
  %1284 = vst.msk [vmem:[%s5 + $0x1a0] sm:$0xff] %vm1231, %v1202
  %1285 = vst.msk [vmem:[%s5 + $0x1a8] sm:$0xff] %vm1231, %v1204
  %1286 = vst.msk [vmem:[%s5 + $0x1b0] sm:$0xff] %vm1231, %v1207
  %1287 = vst.msk [vmem:[%s5 + $0x1b8] sm:$0xff] %vm1231, %v1209
  %1288 = vst.msk [vmem:[%s5 + $0x1c0] sm:$0xff] %vm1231, %v1212
  %1289 = vst.msk [vmem:[%s5 + $0x1c8] sm:$0xff] %vm1231, %v1214
  %1290 = vst.msk [vmem:[%s5 + $0x1d0] sm:$0xff] %vm1231, %v1217
  %1291 = vst.msk [vmem:[%s5 + $0x1d8] sm:$0xff] %vm1231, %v1219
  %1292 = vst.msk [vmem:[%s5 + $0x1e0] sm:$0xff] %vm1231, %v1222
  %1293 = vst.msk [vmem:[%s5 + $0x1e8] sm:$0xff] %vm1231, %v1224
  %1294 = vst.msk [vmem:[%s5 + $0x1f0] sm:$0xff] %vm1231, %v1227
  %1295 = vst.msk [vmem:[%s5 + $0x1f8] sm:$0xff] %vm1231, %v1229
  %v1296 = vsel %vm1231, %v1072, 0.0
  %v1297 = vsel %vm1231, %v1074, 0.0
  %v1298 = vadd.f32 %v1296, %v1297
  %v1299 = vsel %vm1231, %v1077, 0.0
  %v1300 = vadd.f32 %v1298, %v1299
  %v1301 = vsel %vm1231, %v1079, 0.0
  %v1302 = vadd.f32 %v1300, %v1301
  %v1303 = vsel %vm1231, %v1082, 0.0
  %v1304 = vadd.f32 %v1302, %v1303
  %v1305 = vsel %vm1231, %v1084, 0.0
  %v1306 = vadd.f32 %v1304, %v1305
  %v1307 = vsel %vm1231, %v1087, 0.0
  %v1308 = vadd.f32 %v1306, %v1307
  %v1309 = vsel %vm1231, %v1089, 0.0
  %v1310 = vadd.f32 %v1308, %v1309
  %v1311 = vsel %vm1231, %v1092, 0.0
  %v1312 = vadd.f32 %v1310, %v1311
  %v1313 = vsel %vm1231, %v1094, 0.0
  %v1314 = vadd.f32 %v1312, %v1313
  %v1315 = vsel %vm1231, %v1097, 0.0
  %v1316 = vadd.f32 %v1314, %v1315
  %v1317 = vsel %vm1231, %v1099, 0.0
  %v1318 = vadd.f32 %v1316, %v1317
  %v1319 = vsel %vm1231, %v1102, 0.0
  %v1320 = vadd.f32 %v1318, %v1319
  %v1321 = vsel %vm1231, %v1104, 0.0
  %v1322 = vadd.f32 %v1320, %v1321
  %v1323 = vsel %vm1231, %v1107, 0.0
  %v1324 = vadd.f32 %v1322, %v1323
  %v1325 = vsel %vm1231, %v1109, 0.0
  %v1326 = vadd.f32 %v1324, %v1325
  %v1327 = vsel %vm1231, %v1112, 0.0
  %v1328 = vadd.f32 %v1326, %v1327
  %v1329 = vsel %vm1231, %v1114, 0.0
  %v1330 = vadd.f32 %v1328, %v1329
  %v1331 = vsel %vm1231, %v1117, 0.0
  %v1332 = vadd.f32 %v1330, %v1331
  %v1333 = vsel %vm1231, %v1119, 0.0
  %v1334 = vadd.f32 %v1332, %v1333
  %v1335 = vsel %vm1231, %v1122, 0.0
  %v1336 = vadd.f32 %v1334, %v1335
  %v1337 = vsel %vm1231, %v1124, 0.0
  %v1338 = vadd.f32 %v1336, %v1337
  %v1339 = vsel %vm1231, %v1127, 0.0
  %v1340 = vadd.f32 %v1338, %v1339
  %v1341 = vsel %vm1231, %v1129, 0.0
  %v1342 = vadd.f32 %v1340, %v1341
  %v1343 = vsel %vm1231, %v1132, 0.0
  %v1344 = vadd.f32 %v1342, %v1343
  %v1345 = vsel %vm1231, %v1134, 0.0
  %v1346 = vadd.f32 %v1344, %v1345
  %v1347 = vsel %vm1231, %v1137, 0.0
  %v1348 = vadd.f32 %v1346, %v1347
  %v1349 = vsel %vm1231, %v1139, 0.0
  %v1350 = vadd.f32 %v1348, %v1349
  %v1351 = vsel %vm1231, %v1142, 0.0
  %v1352 = vadd.f32 %v1350, %v1351
  %v1353 = vsel %vm1231, %v1144, 0.0
  %v1354 = vadd.f32 %v1352, %v1353
  %v1355 = vsel %vm1231, %v1147, 0.0
  %v1356 = vadd.f32 %v1354, %v1355
  %v1357 = vsel %vm1231, %v1149, 0.0
  %v1358 = vadd.f32 %v1356, %v1357
  %v1359 = vsel %vm1231, %v1152, 0.0
  %v1360 = vadd.f32 %v1358, %v1359
  %v1361 = vsel %vm1231, %v1154, 0.0
  %v1362 = vadd.f32 %v1360, %v1361
  %v1363 = vsel %vm1231, %v1157, 0.0
  %v1364 = vadd.f32 %v1362, %v1363
  %v1365 = vsel %vm1231, %v1159, 0.0
  %v1366 = vadd.f32 %v1364, %v1365
  %v1367 = vsel %vm1231, %v1162, 0.0
  %v1368 = vadd.f32 %v1366, %v1367
  %v1369 = vsel %vm1231, %v1164, 0.0
  %v1370 = vadd.f32 %v1368, %v1369
  %v1371 = vsel %vm1231, %v1167, 0.0
  %v1372 = vadd.f32 %v1370, %v1371
  %v1373 = vsel %vm1231, %v1169, 0.0
  %v1374 = vadd.f32 %v1372, %v1373
  %v1375 = vsel %vm1231, %v1172, 0.0
  %v1376 = vadd.f32 %v1374, %v1375
  %v1377 = vsel %vm1231, %v1174, 0.0
  %v1378 = vadd.f32 %v1376, %v1377
  %v1379 = vsel %vm1231, %v1177, 0.0
  %v1380 = vadd.f32 %v1378, %v1379
  %v1381 = vsel %vm1231, %v1179, 0.0
  %v1382 = vadd.f32 %v1380, %v1381
  %v1383 = vsel %vm1231, %v1182, 0.0
  %v1384 = vadd.f32 %v1382, %v1383
  %v1385 = vsel %vm1231, %v1184, 0.0
  %v1386 = vadd.f32 %v1384, %v1385
  %v1387 = vsel %vm1231, %v1187, 0.0
  %v1388 = vadd.f32 %v1386, %v1387
  %v1389 = vsel %vm1231, %v1189, 0.0
  %v1390 = vadd.f32 %v1388, %v1389
  %v1391 = vsel %vm1231, %v1192, 0.0
  %v1392 = vadd.f32 %v1390, %v1391
  %v1393 = vsel %vm1231, %v1194, 0.0
  %v1394 = vadd.f32 %v1392, %v1393
  %v1395 = vsel %vm1231, %v1197, 0.0
  %v1396 = vadd.f32 %v1394, %v1395
  %v1397 = vsel %vm1231, %v1199, 0.0
  %v1398 = vadd.f32 %v1396, %v1397
  %v1399 = vsel %vm1231, %v1202, 0.0
  %v1400 = vadd.f32 %v1398, %v1399
  %v1401 = vsel %vm1231, %v1204, 0.0
  %v1402 = vadd.f32 %v1400, %v1401
  %v1403 = vsel %vm1231, %v1207, 0.0
  %v1404 = vadd.f32 %v1402, %v1403
  %v1405 = vsel %vm1231, %v1209, 0.0
  %v1406 = vadd.f32 %v1404, %v1405
  %v1407 = vsel %vm1231, %v1212, 0.0
  %v1408 = vadd.f32 %v1406, %v1407
  %v1409 = vsel %vm1231, %v1214, 0.0
  %v1410 = vadd.f32 %v1408, %v1409
  %v1411 = vsel %vm1231, %v1217, 0.0
  %v1412 = vadd.f32 %v1410, %v1411
  %v1413 = vsel %vm1231, %v1219, 0.0
  %v1414 = vadd.f32 %v1412, %v1413
  %v1415 = vsel %vm1231, %v1222, 0.0
  %v1416 = vadd.f32 %v1414, %v1415
  %v1417 = vsel %vm1231, %v1224, 0.0
  %v1418 = vadd.f32 %v1416, %v1417
  %v1419 = vsel %vm1231, %v1227, 0.0
  %v1420 = vadd.f32 %v1418, %v1419
  %v1421 = vsel %vm1231, %v1229, 0.0
  %v1422 = vadd.f32 %v1420, %v1421
  %v1423 = vrot.slane %v1422, 4
  %v1424 = vadd.f32 %v1422, %v1423
  %v1425 = vrot.slane %v1424, 2
  %v1426 = vadd.f32 %v1424, %v1425
  %v1427 = vrot.slane %v1426, 1
  %v1428 = vadd.f32 %v1426, %v1427
  %vm1429 = vcmask 122880
  %1430 = vst.msk [vmem:[%s6] sm:$0x1] %vm1429, %v1428
  %v1431 = vmul.f32 %v1072, %v1072
  %v1432 = vmul.f32 %v1074, %v1074
  %v1433 = vmul.f32 %v1077, %v1077
  %v1434 = vmul.f32 %v1079, %v1079
  %v1435 = vmul.f32 %v1082, %v1082
  %v1436 = vmul.f32 %v1084, %v1084
  %v1437 = vmul.f32 %v1087, %v1087
  %v1438 = vmul.f32 %v1089, %v1089
  %v1439 = vmul.f32 %v1092, %v1092
  %v1440 = vmul.f32 %v1094, %v1094
  %v1441 = vmul.f32 %v1097, %v1097
  %v1442 = vmul.f32 %v1099, %v1099
  %v1443 = vmul.f32 %v1102, %v1102
  %v1444 = vmul.f32 %v1104, %v1104
  %v1445 = vmul.f32 %v1107, %v1107
  %v1446 = vmul.f32 %v1109, %v1109
  %v1447 = vmul.f32 %v1112, %v1112
  %v1448 = vmul.f32 %v1114, %v1114
  %v1449 = vmul.f32 %v1117, %v1117
  %v1450 = vmul.f32 %v1119, %v1119
  %v1451 = vmul.f32 %v1122, %v1122
  %v1452 = vmul.f32 %v1124, %v1124
  %v1453 = vmul.f32 %v1127, %v1127
  %v1454 = vmul.f32 %v1129, %v1129
  %v1455 = vmul.f32 %v1132, %v1132
  %v1456 = vmul.f32 %v1134, %v1134
  %v1457 = vmul.f32 %v1137, %v1137
  %v1458 = vmul.f32 %v1139, %v1139
  %v1459 = vmul.f32 %v1142, %v1142
  %v1460 = vmul.f32 %v1144, %v1144
  %v1461 = vmul.f32 %v1147, %v1147
  %v1462 = vmul.f32 %v1149, %v1149
  %v1463 = vmul.f32 %v1152, %v1152
  %v1464 = vmul.f32 %v1154, %v1154
  %v1465 = vmul.f32 %v1157, %v1157
  %v1466 = vmul.f32 %v1159, %v1159
  %v1467 = vmul.f32 %v1162, %v1162
  %v1468 = vmul.f32 %v1164, %v1164
  %v1469 = vmul.f32 %v1167, %v1167
  %v1470 = vmul.f32 %v1169, %v1169
  %v1471 = vmul.f32 %v1172, %v1172
  %v1472 = vmul.f32 %v1174, %v1174
  %v1473 = vmul.f32 %v1177, %v1177
  %v1474 = vmul.f32 %v1179, %v1179
  %v1475 = vmul.f32 %v1182, %v1182
  %v1476 = vmul.f32 %v1184, %v1184
  %v1477 = vmul.f32 %v1187, %v1187
  %v1478 = vmul.f32 %v1189, %v1189
  %v1479 = vmul.f32 %v1192, %v1192
  %v1480 = vmul.f32 %v1194, %v1194
  %v1481 = vmul.f32 %v1197, %v1197
  %v1482 = vmul.f32 %v1199, %v1199
  %v1483 = vmul.f32 %v1202, %v1202
  %v1484 = vmul.f32 %v1204, %v1204
  %v1485 = vmul.f32 %v1207, %v1207
  %v1486 = vmul.f32 %v1209, %v1209
  %v1487 = vmul.f32 %v1212, %v1212
  %v1488 = vmul.f32 %v1214, %v1214
  %v1489 = vmul.f32 %v1217, %v1217
  %v1490 = vmul.f32 %v1219, %v1219
  %v1491 = vmul.f32 %v1222, %v1222
  %v1492 = vmul.f32 %v1224, %v1224
  %v1493 = vmul.f32 %v1227, %v1227
  %v1494 = vmul.f32 %v1229, %v1229
  %v1495 = vsel %vm1231, %v1431, 0.0
  %v1496 = vsel %vm1231, %v1432, 0.0
  %v1497 = vadd.f32 %v1495, %v1496
  %v1498 = vsel %vm1231, %v1433, 0.0
  %v1499 = vadd.f32 %v1497, %v1498
  %v1500 = vsel %vm1231, %v1434, 0.0
  %v1501 = vadd.f32 %v1499, %v1500
  %v1502 = vsel %vm1231, %v1435, 0.0
  %v1503 = vadd.f32 %v1501, %v1502
  %v1504 = vsel %vm1231, %v1436, 0.0
  %v1505 = vadd.f32 %v1503, %v1504
  %v1506 = vsel %vm1231, %v1437, 0.0
  %v1507 = vadd.f32 %v1505, %v1506
  %v1508 = vsel %vm1231, %v1438, 0.0
  %v1509 = vadd.f32 %v1507, %v1508
  %v1510 = vsel %vm1231, %v1439, 0.0
  %v1511 = vadd.f32 %v1509, %v1510
  %v1512 = vsel %vm1231, %v1440, 0.0
  %v1513 = vadd.f32 %v1511, %v1512
  %v1514 = vsel %vm1231, %v1441, 0.0
  %v1515 = vadd.f32 %v1513, %v1514
  %v1516 = vsel %vm1231, %v1442, 0.0
  %v1517 = vadd.f32 %v1515, %v1516
  %v1518 = vsel %vm1231, %v1443, 0.0
  %v1519 = vadd.f32 %v1517, %v1518
  %v1520 = vsel %vm1231, %v1444, 0.0
  %v1521 = vadd.f32 %v1519, %v1520
  %v1522 = vsel %vm1231, %v1445, 0.0
  %v1523 = vadd.f32 %v1521, %v1522
  %v1524 = vsel %vm1231, %v1446, 0.0
  %v1525 = vadd.f32 %v1523, %v1524
  %v1526 = vsel %vm1231, %v1447, 0.0
  %v1527 = vadd.f32 %v1525, %v1526
  %v1528 = vsel %vm1231, %v1448, 0.0
  %v1529 = vadd.f32 %v1527, %v1528
  %v1530 = vsel %vm1231, %v1449, 0.0
  %v1531 = vadd.f32 %v1529, %v1530
  %v1532 = vsel %vm1231, %v1450, 0.0
  %v1533 = vadd.f32 %v1531, %v1532
  %v1534 = vsel %vm1231, %v1451, 0.0
  %v1535 = vadd.f32 %v1533, %v1534
  %v1536 = vsel %vm1231, %v1452, 0.0
  %v1537 = vadd.f32 %v1535, %v1536
  %v1538 = vsel %vm1231, %v1453, 0.0
  %v1539 = vadd.f32 %v1537, %v1538
  %v1540 = vsel %vm1231, %v1454, 0.0
  %v1541 = vadd.f32 %v1539, %v1540
  %v1542 = vsel %vm1231, %v1455, 0.0
  %v1543 = vadd.f32 %v1541, %v1542
  %v1544 = vsel %vm1231, %v1456, 0.0
  %v1545 = vadd.f32 %v1543, %v1544
  %v1546 = vsel %vm1231, %v1457, 0.0
  %v1547 = vadd.f32 %v1545, %v1546
  %v1548 = vsel %vm1231, %v1458, 0.0
  %v1549 = vadd.f32 %v1547, %v1548
  %v1550 = vsel %vm1231, %v1459, 0.0
  %v1551 = vadd.f32 %v1549, %v1550
  %v1552 = vsel %vm1231, %v1460, 0.0
  %v1553 = vadd.f32 %v1551, %v1552
  %v1554 = vsel %vm1231, %v1461, 0.0
  %v1555 = vadd.f32 %v1553, %v1554
  %v1556 = vsel %vm1231, %v1462, 0.0
  %v1557 = vadd.f32 %v1555, %v1556
  %v1558 = vsel %vm1231, %v1463, 0.0
  %v1559 = vadd.f32 %v1557, %v1558
  %v1560 = vsel %vm1231, %v1464, 0.0
  %v1561 = vadd.f32 %v1559, %v1560
  %v1562 = vsel %vm1231, %v1465, 0.0
  %v1563 = vadd.f32 %v1561, %v1562
  %v1564 = vsel %vm1231, %v1466, 0.0
  %v1565 = vadd.f32 %v1563, %v1564
  %v1566 = vsel %vm1231, %v1467, 0.0
  %v1567 = vadd.f32 %v1565, %v1566
  %v1568 = vsel %vm1231, %v1468, 0.0
  %v1569 = vadd.f32 %v1567, %v1568
  %v1570 = vsel %vm1231, %v1469, 0.0
  %v1571 = vadd.f32 %v1569, %v1570
  %v1572 = vsel %vm1231, %v1470, 0.0
  %v1573 = vadd.f32 %v1571, %v1572
  %v1574 = vsel %vm1231, %v1471, 0.0
  %v1575 = vadd.f32 %v1573, %v1574
  %v1576 = vsel %vm1231, %v1472, 0.0
  %v1577 = vadd.f32 %v1575, %v1576
  %v1578 = vsel %vm1231, %v1473, 0.0
  %v1579 = vadd.f32 %v1577, %v1578
  %v1580 = vsel %vm1231, %v1474, 0.0
  %v1581 = vadd.f32 %v1579, %v1580
  %v1582 = vsel %vm1231, %v1475, 0.0
  %v1583 = vadd.f32 %v1581, %v1582
  %v1584 = vsel %vm1231, %v1476, 0.0
  %v1585 = vadd.f32 %v1583, %v1584
  %v1586 = vsel %vm1231, %v1477, 0.0
  %v1587 = vadd.f32 %v1585, %v1586
  %v1588 = vsel %vm1231, %v1478, 0.0
  %v1589 = vadd.f32 %v1587, %v1588
  %v1590 = vsel %vm1231, %v1479, 0.0
  %v1591 = vadd.f32 %v1589, %v1590
  %v1592 = vsel %vm1231, %v1480, 0.0
  %v1593 = vadd.f32 %v1591, %v1592
  %v1594 = vsel %vm1231, %v1481, 0.0
  %v1595 = vadd.f32 %v1593, %v1594
  %v1596 = vsel %vm1231, %v1482, 0.0
  %v1597 = vadd.f32 %v1595, %v1596
  %v1598 = vsel %vm1231, %v1483, 0.0
  %v1599 = vadd.f32 %v1597, %v1598
  %v1600 = vsel %vm1231, %v1484, 0.0
  %v1601 = vadd.f32 %v1599, %v1600
  %v1602 = vsel %vm1231, %v1485, 0.0
  %v1603 = vadd.f32 %v1601, %v1602
  %v1604 = vsel %vm1231, %v1486, 0.0
  %v1605 = vadd.f32 %v1603, %v1604
  %v1606 = vsel %vm1231, %v1487, 0.0
  %v1607 = vadd.f32 %v1605, %v1606
  %v1608 = vsel %vm1231, %v1488, 0.0
  %v1609 = vadd.f32 %v1607, %v1608
  %v1610 = vsel %vm1231, %v1489, 0.0
  %v1611 = vadd.f32 %v1609, %v1610
  %v1612 = vsel %vm1231, %v1490, 0.0
  %v1613 = vadd.f32 %v1611, %v1612
  %v1614 = vsel %vm1231, %v1491, 0.0
  %v1615 = vadd.f32 %v1613, %v1614
  %v1616 = vsel %vm1231, %v1492, 0.0
  %v1617 = vadd.f32 %v1615, %v1616
  %v1618 = vsel %vm1231, %v1493, 0.0
  %v1619 = vadd.f32 %v1617, %v1618
  %v1620 = vsel %vm1231, %v1494, 0.0
  %v1621 = vadd.f32 %v1619, %v1620
  %v1622 = vrot.slane %v1621, 4
  %v1623 = vadd.f32 %v1621, %v1622
  %v1624 = vrot.slane %v1623, 2
  %v1625 = vadd.f32 %v1623, %v1624
  %v1626 = vrot.slane %v1625, 1
  %v1627 = vadd.f32 %v1625, %v1626
  %1628 = vst.msk [vmem:[%s6 + $0x1] sm:$0x1] %vm1429, %v1627
  // Predicated region
  $region22: #{_lambda_.8} parent=0 // pred_check
    _
  $region23: #{_lambda_.8} parent=0 // pred_check_branch
    %1630 = sbr.rel (0) target = $region25
  $region24: #{_lambda_.8} parent=0 // pred_region
    _
  $region25: #{_lambda_.8} parent=0 // pred_fallthru
    _
  // Predicated region
  $region26: #{_lambda_.8} parent=0 // pred_check
    _
  $region27: #{_lambda_.8} parent=0 // pred_check_branch
    %1632 = sbr.rel (0) target = $region29
  $region28: #{_lambda_.8} parent=0 // pred_region
    _
  $region29: #{_lambda_.8} parent=0 // pred_fallthru
    _
  // Predicated region
  $region30: #{_lambda_.8} parent=0 // pred_check
    _
  $region31: #{_lambda_.8} parent=0 // pred_check_branch
    %1634 = sbr.rel (0) target = $region33
  $region32: #{_lambda_.8} parent=0 // pred_region
    _
  $region33: #{_lambda_.8} parent=0 // pred_fallthru
    _
  // Predicated region
  $region34: #{_lambda_.8} parent=0 // pred_check
    _
  $region35: #{_lambda_.8} parent=0 // pred_check_branch
    %1636 = sbr.rel (0) target = $region37
  $region36: #{_lambda_.8} parent=0 // pred_region
    _
  $region37: #{_lambda_.8} parent=0 // pred_fallthru
    _

// kernel: _lambda_.10
$region0: #{_lambda_.10}
  #allocation0 [shape = 'u32[]', space=smem, size = 0x4, offset = 0x4, fixed_abs, tag = 'smem constant byte address 0x4 - core index']
  #allocation1 [shape = 'u32[72,128]{1,0:T(1,128)}', space=vmem, size = 0x9000, scoped, tag = 'internal scratch']
  %s0 = inlined_call_operand.vmem [shape: bf16[512,4], index: 0, kind: input, shape index: {}]
  %s1 = inlined_call_operand.vmem [shape: bf16[512,4], index: 1, kind: input, shape index: {}]
  %s2 = inlined_call_operand.vmem [shape: bf16[512,4], index: 2, kind: input, shape index: {}]
  %s3 = inlined_call_operand.vmem [shape: f32[1,12], index: 3, kind: input, shape index: {}]
  %s4 = inlined_call_operand.vmem [shape: f32[1,12], index: 4, kind: input, shape index: {}]
  %s5 = inlined_call_operand.vmem [shape: bf16[12,16], index: 5, kind: input, shape index: {}]
  %s6 = inlined_call_operand.vmem [shape: f32[512,16], index: 6, kind: output, shape index: {0}]
  %s7 = inlined_call_operand.vmem [shape: f32[1,2,16], index: 7, kind: output, shape index: {1}]
  %8 = xla_tuple %s6, %s7
  %s9 = sld [smem:[#allocation0]]
  $region42: #{_lambda_.10} parent=0
    _
  %s11 = ssub.s32 1, %s9
  %s12 = scalar_select 0, %s11, %s9
  // Predicated region
  $region2: #{_lambda_.10} parent=0 // pred_check
    _
  $region3: #{_lambda_.10} parent=0 // pred_check_branch
    %14 = sbr.rel (0) target = $region5
  $region4: #{_lambda_.10} parent=0 // pred_region
    _
  $region5: #{_lambda_.10} parent=0 // pred_fallthru
    _
  // Predicated region
  $region6: #{_lambda_.10} parent=0 // pred_check
    _
  $region7: #{_lambda_.10} parent=0 // pred_check_branch
    %16 = sbr.rel (0) target = $region9
  $region8: #{_lambda_.10} parent=0 // pred_region
    _
  $region9: #{_lambda_.10} parent=0 // pred_fallthru
    _
  // Predicated region
  $region10: #{_lambda_.10} parent=0 // pred_check
    _
  $region11: #{_lambda_.10} parent=0 // pred_check_branch
    %18 = sbr.rel (0) target = $region13
  $region12: #{_lambda_.10} parent=0 // pred_region
    _
  $region13: #{_lambda_.10} parent=0 // pred_fallthru
    _
  // Predicated region
  $region14: #{_lambda_.10} parent=0 // pred_check
    _
  $region15: #{_lambda_.10} parent=0 // pred_check_branch
    %20 = sbr.rel (0) target = $region17
  $region16: #{_lambda_.10} parent=0 // pred_region
    _
  $region17: #{_lambda_.10} parent=0 // pred_fallthru
    _
  // Predicated region
  $region18: #{_lambda_.10} parent=0 // pred_check
    _
  $region19: #{_lambda_.10} parent=0 // pred_check_branch
    %22 = sbr.rel (0) target = $region21
  $region20: #{_lambda_.10} parent=0 // pred_region
    _
  $region21: #{_lambda_.10} parent=0 // pred_fallthru
    _
  // Predicated region
  $region22: #{_lambda_.10} parent=0 // pred_check
    _
  $region23: #{_lambda_.10} parent=0 // pred_check_branch
    %24 = sbr.rel (0) target = $region25
  $region24: #{_lambda_.10} parent=0 // pred_region
    _
  $region25: #{_lambda_.10} parent=0 // pred_fallthru
    _
  %v26 = vld [vmem:[%s0] sm:$0xf]
  %v27 = vld [vmem:[%s0 + $0x4] sm:$0xf]
  %v28 = vld [vmem:[%s0 + $0x8] sm:$0xf]
  %v29 = vld [vmem:[%s0 + $0xc] sm:$0xf]
  %v30 = vld [vmem:[%s0 + $0x10] sm:$0xf]
  %v31 = vld [vmem:[%s0 + $0x14] sm:$0xf]
  %v32 = vld [vmem:[%s0 + $0x18] sm:$0xf]
  %v33 = vld [vmem:[%s0 + $0x1c] sm:$0xf]
  %v34 = vld [vmem:[%s0 + $0x20] sm:$0xf]
  %v35 = vld [vmem:[%s0 + $0x24] sm:$0xf]
  %v36 = vld [vmem:[%s0 + $0x28] sm:$0xf]
  %v37 = vld [vmem:[%s0 + $0x2c] sm:$0xf]
  %v38 = vld [vmem:[%s0 + $0x30] sm:$0xf]
  %v39 = vld [vmem:[%s0 + $0x34] sm:$0xf]
  %v40 = vld [vmem:[%s0 + $0x38] sm:$0xf]
  %v41 = vld [vmem:[%s0 + $0x3c] sm:$0xf]
  %v42 = vld [vmem:[%s0 + $0x40] sm:$0xf]
  %v43 = vld [vmem:[%s0 + $0x44] sm:$0xf]
  %v44 = vld [vmem:[%s0 + $0x48] sm:$0xf]
  %v45 = vld [vmem:[%s0 + $0x4c] sm:$0xf]
  %v46 = vld [vmem:[%s0 + $0x50] sm:$0xf]
  %v47 = vld [vmem:[%s0 + $0x54] sm:$0xf]
  %v48 = vld [vmem:[%s0 + $0x58] sm:$0xf]
  %v49 = vld [vmem:[%s0 + $0x5c] sm:$0xf]
  %v50 = vld [vmem:[%s0 + $0x60] sm:$0xf]
  %v51 = vld [vmem:[%s0 + $0x64] sm:$0xf]
  %v52 = vld [vmem:[%s0 + $0x68] sm:$0xf]
  %v53 = vld [vmem:[%s0 + $0x6c] sm:$0xf]
  %v54 = vld [vmem:[%s0 + $0x70] sm:$0xf]
  %v55 = vld [vmem:[%s0 + $0x74] sm:$0xf]
  %v56 = vld [vmem:[%s0 + $0x78] sm:$0xf]
  %v57 = vld [vmem:[%s0 + $0x7c] sm:$0xf]
  %v58 = vld [vmem:[%s0 + $0x80] sm:$0xf]
  %v59 = vld [vmem:[%s0 + $0x84] sm:$0xf]
  %v60 = vld [vmem:[%s0 + $0x88] sm:$0xf]
  %v61 = vld [vmem:[%s0 + $0x8c] sm:$0xf]
  %v62 = vld [vmem:[%s0 + $0x90] sm:$0xf]
  %v63 = vld [vmem:[%s0 + $0x94] sm:$0xf]
  %v64 = vld [vmem:[%s0 + $0x98] sm:$0xf]
  %v65 = vld [vmem:[%s0 + $0x9c] sm:$0xf]
  %v66 = vld [vmem:[%s0 + $0xa0] sm:$0xf]
  %v67 = vld [vmem:[%s0 + $0xa4] sm:$0xf]
  %v68 = vld [vmem:[%s0 + $0xa8] sm:$0xf]
  %v69 = vld [vmem:[%s0 + $0xac] sm:$0xf]
  %v70 = vld [vmem:[%s0 + $0xb0] sm:$0xf]
  %v71 = vld [vmem:[%s0 + $0xb4] sm:$0xf]
  %v72 = vld [vmem:[%s0 + $0xb8] sm:$0xf]
  %v73 = vld [vmem:[%s0 + $0xbc] sm:$0xf]
  %v74 = vld [vmem:[%s0 + $0xc0] sm:$0xf]
  %v75 = vld [vmem:[%s0 + $0xc4] sm:$0xf]
  %v76 = vld [vmem:[%s0 + $0xc8] sm:$0xf]
  %v77 = vld [vmem:[%s0 + $0xcc] sm:$0xf]
  %v78 = vld [vmem:[%s0 + $0xd0] sm:$0xf]
  %v79 = vld [vmem:[%s0 + $0xd4] sm:$0xf]
  %v80 = vld [vmem:[%s0 + $0xd8] sm:$0xf]
  %v81 = vld [vmem:[%s0 + $0xdc] sm:$0xf]
  %v82 = vld [vmem:[%s0 + $0xe0] sm:$0xf]
  %v83 = vld [vmem:[%s0 + $0xe4] sm:$0xf]
  %v84 = vld [vmem:[%s0 + $0xe8] sm:$0xf]
  %v85 = vld [vmem:[%s0 + $0xec] sm:$0xf]
  %v86 = vld [vmem:[%s0 + $0xf0] sm:$0xf]
  %v87 = vld [vmem:[%s0 + $0xf4] sm:$0xf]
  %v88 = vld [vmem:[%s0 + $0xf8] sm:$0xf]
  %v89 = vld [vmem:[%s0 + $0xfc] sm:$0xf]
  %v90 = vld [vmem:[%s1] sm:$0xf]
  %v91 = vld [vmem:[%s1 + $0x4] sm:$0xf]
  %v92 = vld [vmem:[%s1 + $0x8] sm:$0xf]
  %v93 = vld [vmem:[%s1 + $0xc] sm:$0xf]
  %v94 = vld [vmem:[%s1 + $0x10] sm:$0xf]
  %v95 = vld [vmem:[%s1 + $0x14] sm:$0xf]
  %v96 = vld [vmem:[%s1 + $0x18] sm:$0xf]
  %v97 = vld [vmem:[%s1 + $0x1c] sm:$0xf]
  %v98 = vld [vmem:[%s1 + $0x20] sm:$0xf]
  %v99 = vld [vmem:[%s1 + $0x24] sm:$0xf]
  %v100 = vld [vmem:[%s1 + $0x28] sm:$0xf]
  %v101 = vld [vmem:[%s1 + $0x2c] sm:$0xf]
  %v102 = vld [vmem:[%s1 + $0x30] sm:$0xf]
  %v103 = vld [vmem:[%s1 + $0x34] sm:$0xf]
  %v104 = vld [vmem:[%s1 + $0x38] sm:$0xf]
  %v105 = vld [vmem:[%s1 + $0x3c] sm:$0xf]
  %v106 = vld [vmem:[%s1 + $0x40] sm:$0xf]
  %v107 = vld [vmem:[%s1 + $0x44] sm:$0xf]
  %v108 = vld [vmem:[%s1 + $0x48] sm:$0xf]
  %v109 = vld [vmem:[%s1 + $0x4c] sm:$0xf]
  %v110 = vld [vmem:[%s1 + $0x50] sm:$0xf]
  %v111 = vld [vmem:[%s1 + $0x54] sm:$0xf]
  %v112 = vld [vmem:[%s1 + $0x58] sm:$0xf]
  %v113 = vld [vmem:[%s1 + $0x5c] sm:$0xf]
  %v114 = vld [vmem:[%s1 + $0x60] sm:$0xf]
  %v115 = vld [vmem:[%s1 + $0x64] sm:$0xf]
  %v116 = vld [vmem:[%s1 + $0x68] sm:$0xf]
  %v117 = vld [vmem:[%s1 + $0x6c] sm:$0xf]
  %v118 = vld [vmem:[%s1 + $0x70] sm:$0xf]
  %v119 = vld [vmem:[%s1 + $0x74] sm:$0xf]
  %v120 = vld [vmem:[%s1 + $0x78] sm:$0xf]
  %v121 = vld [vmem:[%s1 + $0x7c] sm:$0xf]
  %v122 = vld [vmem:[%s1 + $0x80] sm:$0xf]
  %v123 = vld [vmem:[%s1 + $0x84] sm:$0xf]
  %v124 = vld [vmem:[%s1 + $0x88] sm:$0xf]
  %v125 = vld [vmem:[%s1 + $0x8c] sm:$0xf]
  %v126 = vld [vmem:[%s1 + $0x90] sm:$0xf]
  %v127 = vld [vmem:[%s1 + $0x94] sm:$0xf]
  %v128 = vld [vmem:[%s1 + $0x98] sm:$0xf]
  %v129 = vld [vmem:[%s1 + $0x9c] sm:$0xf]
  %v130 = vld [vmem:[%s1 + $0xa0] sm:$0xf]
  %v131 = vld [vmem:[%s1 + $0xa4] sm:$0xf]
  %v132 = vld [vmem:[%s1 + $0xa8] sm:$0xf]
  %v133 = vld [vmem:[%s1 + $0xac] sm:$0xf]
  %v134 = vld [vmem:[%s1 + $0xb0] sm:$0xf]
  %v135 = vld [vmem:[%s1 + $0xb4] sm:$0xf]
  %v136 = vld [vmem:[%s1 + $0xb8] sm:$0xf]
  %v137 = vld [vmem:[%s1 + $0xbc] sm:$0xf]
  %v138 = vld [vmem:[%s1 + $0xc0] sm:$0xf]
  %v139 = vld [vmem:[%s1 + $0xc4] sm:$0xf]
  %v140 = vld [vmem:[%s1 + $0xc8] sm:$0xf]
  %v141 = vld [vmem:[%s1 + $0xcc] sm:$0xf]
  %v142 = vld [vmem:[%s1 + $0xd0] sm:$0xf]
  %v143 = vld [vmem:[%s1 + $0xd4] sm:$0xf]
  %v144 = vld [vmem:[%s1 + $0xd8] sm:$0xf]
  %v145 = vld [vmem:[%s1 + $0xdc] sm:$0xf]
  %v146 = vld [vmem:[%s1 + $0xe0] sm:$0xf]
  %v147 = vld [vmem:[%s1 + $0xe4] sm:$0xf]
  %v148 = vld [vmem:[%s1 + $0xe8] sm:$0xf]
  %v149 = vld [vmem:[%s1 + $0xec] sm:$0xf]
  %v150 = vld [vmem:[%s1 + $0xf0] sm:$0xf]
  %v151 = vld [vmem:[%s1 + $0xf4] sm:$0xf]
  %v152 = vld [vmem:[%s1 + $0xf8] sm:$0xf]
  %v153 = vld [vmem:[%s1 + $0xfc] sm:$0xf]
  %v154 = vld [vmem:[%s2] sm:$0xf]
  %v155 = vld [vmem:[%s2 + $0x4] sm:$0xf]
  %v156 = vld [vmem:[%s2 + $0x8] sm:$0xf]
  %v157 = vld [vmem:[%s2 + $0xc] sm:$0xf]
  %v158 = vld [vmem:[%s2 + $0x10] sm:$0xf]
  %v159 = vld [vmem:[%s2 + $0x14] sm:$0xf]
  %v160 = vld [vmem:[%s2 + $0x18] sm:$0xf]
  %v161 = vld [vmem:[%s2 + $0x1c] sm:$0xf]
  %v162 = vld [vmem:[%s2 + $0x20] sm:$0xf]
  %v163 = vld [vmem:[%s2 + $0x24] sm:$0xf]
  %v164 = vld [vmem:[%s2 + $0x28] sm:$0xf]
  %v165 = vld [vmem:[%s2 + $0x2c] sm:$0xf]
  %v166 = vld [vmem:[%s2 + $0x30] sm:$0xf]
  %v167 = vld [vmem:[%s2 + $0x34] sm:$0xf]
  %v168 = vld [vmem:[%s2 + $0x38] sm:$0xf]
  %v169 = vld [vmem:[%s2 + $0x3c] sm:$0xf]
  %v170 = vld [vmem:[%s2 + $0x40] sm:$0xf]
  %v171 = vld [vmem:[%s2 + $0x44] sm:$0xf]
  %v172 = vld [vmem:[%s2 + $0x48] sm:$0xf]
  %v173 = vld [vmem:[%s2 + $0x4c] sm:$0xf]
  %v174 = vld [vmem:[%s2 + $0x50] sm:$0xf]
  %v175 = vld [vmem:[%s2 + $0x54] sm:$0xf]
  %v176 = vld [vmem:[%s2 + $0x58] sm:$0xf]
  %v177 = vld [vmem:[%s2 + $0x5c] sm:$0xf]
  %v178 = vld [vmem:[%s2 + $0x60] sm:$0xf]
  %v179 = vld [vmem:[%s2 + $0x64] sm:$0xf]
  %v180 = vld [vmem:[%s2 + $0x68] sm:$0xf]
  %v181 = vld [vmem:[%s2 + $0x6c] sm:$0xf]
  %v182 = vld [vmem:[%s2 + $0x70] sm:$0xf]
  %v183 = vld [vmem:[%s2 + $0x74] sm:$0xf]
  %v184 = vld [vmem:[%s2 + $0x78] sm:$0xf]
  %v185 = vld [vmem:[%s2 + $0x7c] sm:$0xf]
  %v186 = vld [vmem:[%s2 + $0x80] sm:$0xf]
  %v187 = vld [vmem:[%s2 + $0x84] sm:$0xf]
  %v188 = vld [vmem:[%s2 + $0x88] sm:$0xf]
  %v189 = vld [vmem:[%s2 + $0x8c] sm:$0xf]
  %v190 = vld [vmem:[%s2 + $0x90] sm:$0xf]
  %v191 = vld [vmem:[%s2 + $0x94] sm:$0xf]
  %v192 = vld [vmem:[%s2 + $0x98] sm:$0xf]
  %v193 = vld [vmem:[%s2 + $0x9c] sm:$0xf]
  %v194 = vld [vmem:[%s2 + $0xa0] sm:$0xf]
  %v195 = vld [vmem:[%s2 + $0xa4] sm:$0xf]
  %v196 = vld [vmem:[%s2 + $0xa8] sm:$0xf]
  %v197 = vld [vmem:[%s2 + $0xac] sm:$0xf]
  %v198 = vld [vmem:[%s2 + $0xb0] sm:$0xf]
  %v199 = vld [vmem:[%s2 + $0xb4] sm:$0xf]
  %v200 = vld [vmem:[%s2 + $0xb8] sm:$0xf]
  %v201 = vld [vmem:[%s2 + $0xbc] sm:$0xf]
  %v202 = vld [vmem:[%s2 + $0xc0] sm:$0xf]
  %v203 = vld [vmem:[%s2 + $0xc4] sm:$0xf]
  %v204 = vld [vmem:[%s2 + $0xc8] sm:$0xf]
  %v205 = vld [vmem:[%s2 + $0xcc] sm:$0xf]
  %v206 = vld [vmem:[%s2 + $0xd0] sm:$0xf]
  %v207 = vld [vmem:[%s2 + $0xd4] sm:$0xf]
  %v208 = vld [vmem:[%s2 + $0xd8] sm:$0xf]
  %v209 = vld [vmem:[%s2 + $0xdc] sm:$0xf]
  %v210 = vld [vmem:[%s2 + $0xe0] sm:$0xf]
  %v211 = vld [vmem:[%s2 + $0xe4] sm:$0xf]
  %v212 = vld [vmem:[%s2 + $0xe8] sm:$0xf]
  %v213 = vld [vmem:[%s2 + $0xec] sm:$0xf]
  %v214 = vld [vmem:[%s2 + $0xf0] sm:$0xf]
  %v215 = vld [vmem:[%s2 + $0xf4] sm:$0xf]
  %v216 = vld [vmem:[%s2 + $0xf8] sm:$0xf]
  %v217 = vld [vmem:[%s2 + $0xfc] sm:$0xf]
  %v282 = vunpack.c.l.b16 %v26
  %v283 = vunpack.c.l.b16 %v27
  %v284 = vunpack.c.l.b16 %v28
  %v285 = vunpack.c.l.b16 %v29
  %v286 = vunpack.c.l.b16 %v30
  %v287 = vunpack.c.l.b16 %v31
  %v288 = vunpack.c.l.b16 %v32
  %v289 = vunpack.c.l.b16 %v33
  %v290 = vunpack.c.l.b16 %v34
  %v291 = vunpack.c.l.b16 %v35
  %v292 = vunpack.c.l.b16 %v36
  %v293 = vunpack.c.l.b16 %v37
  %v294 = vunpack.c.l.b16 %v38
  %v295 = vunpack.c.l.b16 %v39
  %v296 = vunpack.c.l.b16 %v40
  %v297 = vunpack.c.l.b16 %v41
  %v298 = vunpack.c.l.b16 %v42
  %v299 = vunpack.c.l.b16 %v43
  %v300 = vunpack.c.l.b16 %v44
  %v301 = vunpack.c.l.b16 %v45
  %v302 = vunpack.c.l.b16 %v46
  %v303 = vunpack.c.l.b16 %v47
  %v304 = vunpack.c.l.b16 %v48
  %v305 = vunpack.c.l.b16 %v49
  %v306 = vunpack.c.l.b16 %v50
  %v307 = vunpack.c.l.b16 %v51
  %v308 = vunpack.c.l.b16 %v52
  %v309 = vunpack.c.l.b16 %v53
  %v310 = vunpack.c.l.b16 %v54
  %v311 = vunpack.c.l.b16 %v55
  %v312 = vunpack.c.l.b16 %v56
  %v313 = vunpack.c.l.b16 %v57
  %v314 = vunpack.c.l.b16 %v58
  %v315 = vunpack.c.l.b16 %v59
  %v316 = vunpack.c.l.b16 %v60
  %v317 = vunpack.c.l.b16 %v61
  %v318 = vunpack.c.l.b16 %v62
  %v319 = vunpack.c.l.b16 %v63
  %v320 = vunpack.c.l.b16 %v64
  %v321 = vunpack.c.l.b16 %v65
  %v322 = vunpack.c.l.b16 %v66
  %v323 = vunpack.c.l.b16 %v67
  %v324 = vunpack.c.l.b16 %v68
  %v325 = vunpack.c.l.b16 %v69
  %v326 = vunpack.c.l.b16 %v70
  %v327 = vunpack.c.l.b16 %v71
  %v328 = vunpack.c.l.b16 %v72
  %v329 = vunpack.c.l.b16 %v73
  %v330 = vunpack.c.l.b16 %v74
  %v331 = vunpack.c.l.b16 %v75
  %v332 = vunpack.c.l.b16 %v76
  %v333 = vunpack.c.l.b16 %v77
  %v334 = vunpack.c.l.b16 %v78
  %v335 = vunpack.c.l.b16 %v79
  %v336 = vunpack.c.l.b16 %v80
  %v337 = vunpack.c.l.b16 %v81
  %v338 = vunpack.c.l.b16 %v82
  %v339 = vunpack.c.l.b16 %v83
  %v340 = vunpack.c.l.b16 %v84
  %v341 = vunpack.c.l.b16 %v85
  %v342 = vunpack.c.l.b16 %v86
  %v343 = vunpack.c.l.b16 %v87
  %v344 = vunpack.c.l.b16 %v88
  %v345 = vunpack.c.l.b16 %v89
  %v346 = vpack.c.b16 %v283, %v282
  %v347 = vpack.c.b16 %v285, %v284
  %v348 = vpack.c.b16 %v287, %v286
  %v349 = vpack.c.b16 %v289, %v288
  %v350 = vpack.c.b16 %v291, %v290
  %v351 = vpack.c.b16 %v293, %v292
  %v352 = vpack.c.b16 %v295, %v294
  %v353 = vpack.c.b16 %v297, %v296
  %v354 = vpack.c.b16 %v299, %v298
  %v355 = vpack.c.b16 %v301, %v300
  %v356 = vpack.c.b16 %v303, %v302
  %v357 = vpack.c.b16 %v305, %v304
  %v358 = vpack.c.b16 %v307, %v306
  %v359 = vpack.c.b16 %v309, %v308
  %v360 = vpack.c.b16 %v311, %v310
  %v361 = vpack.c.b16 %v313, %v312
  %v362 = vpack.c.b16 %v315, %v314
  %v363 = vpack.c.b16 %v317, %v316
  %v364 = vpack.c.b16 %v319, %v318
  %v365 = vpack.c.b16 %v321, %v320
  %v366 = vpack.c.b16 %v323, %v322
  %v367 = vpack.c.b16 %v325, %v324
  %v368 = vpack.c.b16 %v327, %v326
  %v369 = vpack.c.b16 %v329, %v328
  %v370 = vpack.c.b16 %v331, %v330
  %v371 = vpack.c.b16 %v333, %v332
  %v372 = vpack.c.b16 %v335, %v334
  %v373 = vpack.c.b16 %v337, %v336
  %v374 = vpack.c.b16 %v339, %v338
  %v375 = vpack.c.b16 %v341, %v340
  %v376 = vpack.c.b16 %v343, %v342
  %v377 = vpack.c.b16 %v345, %v344
  %v442 = vunpack.c.l.b16 %v90
  %v443 = vunpack.c.l.b16 %v91
  %v444 = vunpack.c.l.b16 %v92
  %v445 = vunpack.c.l.b16 %v93
  %v446 = vunpack.c.l.b16 %v94
  %v447 = vunpack.c.l.b16 %v95
  %v448 = vunpack.c.l.b16 %v96
  %v449 = vunpack.c.l.b16 %v97
  %v450 = vunpack.c.l.b16 %v98
  %v451 = vunpack.c.l.b16 %v99
  %v452 = vunpack.c.l.b16 %v100
  %v453 = vunpack.c.l.b16 %v101
  %v454 = vunpack.c.l.b16 %v102
  %v455 = vunpack.c.l.b16 %v103
  %v456 = vunpack.c.l.b16 %v104
  %v457 = vunpack.c.l.b16 %v105
  %v458 = vunpack.c.l.b16 %v106
  %v459 = vunpack.c.l.b16 %v107
  %v460 = vunpack.c.l.b16 %v108
  %v461 = vunpack.c.l.b16 %v109
  %v462 = vunpack.c.l.b16 %v110
  %v463 = vunpack.c.l.b16 %v111
  %v464 = vunpack.c.l.b16 %v112
  %v465 = vunpack.c.l.b16 %v113
  %v466 = vunpack.c.l.b16 %v114
  %v467 = vunpack.c.l.b16 %v115
  %v468 = vunpack.c.l.b16 %v116
  %v469 = vunpack.c.l.b16 %v117
  %v470 = vunpack.c.l.b16 %v118
  %v471 = vunpack.c.l.b16 %v119
  %v472 = vunpack.c.l.b16 %v120
  %v473 = vunpack.c.l.b16 %v121
  %v474 = vunpack.c.l.b16 %v122
  %v475 = vunpack.c.l.b16 %v123
  %v476 = vunpack.c.l.b16 %v124
  %v477 = vunpack.c.l.b16 %v125
  %v478 = vunpack.c.l.b16 %v126
  %v479 = vunpack.c.l.b16 %v127
  %v480 = vunpack.c.l.b16 %v128
  %v481 = vunpack.c.l.b16 %v129
  %v482 = vunpack.c.l.b16 %v130
  %v483 = vunpack.c.l.b16 %v131
  %v484 = vunpack.c.l.b16 %v132
  %v485 = vunpack.c.l.b16 %v133
  %v486 = vunpack.c.l.b16 %v134
  %v487 = vunpack.c.l.b16 %v135
  %v488 = vunpack.c.l.b16 %v136
  %v489 = vunpack.c.l.b16 %v137
  %v490 = vunpack.c.l.b16 %v138
  %v491 = vunpack.c.l.b16 %v139
  %v492 = vunpack.c.l.b16 %v140
  %v493 = vunpack.c.l.b16 %v141
  %v494 = vunpack.c.l.b16 %v142
  %v495 = vunpack.c.l.b16 %v143
  %v496 = vunpack.c.l.b16 %v144
  %v497 = vunpack.c.l.b16 %v145
  %v498 = vunpack.c.l.b16 %v146
  %v499 = vunpack.c.l.b16 %v147
  %v500 = vunpack.c.l.b16 %v148
  %v501 = vunpack.c.l.b16 %v149
  %v502 = vunpack.c.l.b16 %v150
  %v503 = vunpack.c.l.b16 %v151
  %v504 = vunpack.c.l.b16 %v152
  %v505 = vunpack.c.l.b16 %v153
  %v506 = vpack.c.b16 %v443, %v442
  %v507 = vpack.c.b16 %v445, %v444
  %v508 = vpack.c.b16 %v447, %v446
  %v509 = vpack.c.b16 %v449, %v448
  %v510 = vpack.c.b16 %v451, %v450
  %v511 = vpack.c.b16 %v453, %v452
  %v512 = vpack.c.b16 %v455, %v454
  %v513 = vpack.c.b16 %v457, %v456
  %v514 = vpack.c.b16 %v459, %v458
  %v515 = vpack.c.b16 %v461, %v460
  %v516 = vpack.c.b16 %v463, %v462
  %v517 = vpack.c.b16 %v465, %v464
  %v518 = vpack.c.b16 %v467, %v466
  %v519 = vpack.c.b16 %v469, %v468
  %v520 = vpack.c.b16 %v471, %v470
  %v521 = vpack.c.b16 %v473, %v472
  %v522 = vpack.c.b16 %v475, %v474
  %v523 = vpack.c.b16 %v477, %v476
  %v524 = vpack.c.b16 %v479, %v478
  %v525 = vpack.c.b16 %v481, %v480
  %v526 = vpack.c.b16 %v483, %v482
  %v527 = vpack.c.b16 %v485, %v484
  %v528 = vpack.c.b16 %v487, %v486
  %v529 = vpack.c.b16 %v489, %v488
  %v530 = vpack.c.b16 %v491, %v490
  %v531 = vpack.c.b16 %v493, %v492
  %v532 = vpack.c.b16 %v495, %v494
  %v533 = vpack.c.b16 %v497, %v496
  %v534 = vpack.c.b16 %v499, %v498
  %v535 = vpack.c.b16 %v501, %v500
  %v536 = vpack.c.b16 %v503, %v502
  %v537 = vpack.c.b16 %v505, %v504
  %538 = vrot.lane.b32.xlu0 %v506, 4
  %v539 = vpop.permute.xlu0 %538
  %540 = vrot.lane.b32.xlu0 %v507, 4
  %v541 = vpop.permute.xlu0 %540
  %542 = vrot.lane.b32.xlu0 %v508, 4
  %v543 = vpop.permute.xlu0 %542
  %544 = vrot.lane.b32.xlu0 %v509, 4
  %v545 = vpop.permute.xlu0 %544
  %546 = vrot.lane.b32.xlu0 %v510, 4
  %v547 = vpop.permute.xlu0 %546
  %548 = vrot.lane.b32.xlu0 %v511, 4
  %v549 = vpop.permute.xlu0 %548
  %550 = vrot.lane.b32.xlu0 %v512, 4
  %v551 = vpop.permute.xlu0 %550
  %552 = vrot.lane.b32.xlu0 %v513, 4
  %v553 = vpop.permute.xlu0 %552
  %554 = vrot.lane.b32.xlu0 %v514, 4
  %v555 = vpop.permute.xlu0 %554
  %556 = vrot.lane.b32.xlu0 %v515, 4
  %v557 = vpop.permute.xlu0 %556
  %558 = vrot.lane.b32.xlu0 %v516, 4
  %v559 = vpop.permute.xlu0 %558
  %560 = vrot.lane.b32.xlu0 %v517, 4
  %v561 = vpop.permute.xlu0 %560
  %562 = vrot.lane.b32.xlu0 %v518, 4
  %v563 = vpop.permute.xlu0 %562
  %564 = vrot.lane.b32.xlu0 %v519, 4
  %v565 = vpop.permute.xlu0 %564
  %566 = vrot.lane.b32.xlu0 %v520, 4
  %v567 = vpop.permute.xlu0 %566
  %568 = vrot.lane.b32.xlu0 %v521, 4
  %v569 = vpop.permute.xlu0 %568
  %570 = vrot.lane.b32.xlu0 %v522, 4
  %v571 = vpop.permute.xlu0 %570
  %572 = vrot.lane.b32.xlu0 %v523, 4
  %v573 = vpop.permute.xlu0 %572
  %574 = vrot.lane.b32.xlu0 %v524, 4
  %v575 = vpop.permute.xlu0 %574
  %576 = vrot.lane.b32.xlu0 %v525, 4
  %v577 = vpop.permute.xlu0 %576
  %578 = vrot.lane.b32.xlu0 %v526, 4
  %v579 = vpop.permute.xlu0 %578
  %580 = vrot.lane.b32.xlu0 %v527, 4
  %v581 = vpop.permute.xlu0 %580
  %582 = vrot.lane.b32.xlu0 %v528, 4
  %v583 = vpop.permute.xlu0 %582
  %584 = vrot.lane.b32.xlu0 %v529, 4
  %v585 = vpop.permute.xlu0 %584
  %586 = vrot.lane.b32.xlu0 %v530, 4
  %v587 = vpop.permute.xlu0 %586
  %588 = vrot.lane.b32.xlu0 %v531, 4
  %v589 = vpop.permute.xlu0 %588
  %590 = vrot.lane.b32.xlu0 %v532, 4
  %v591 = vpop.permute.xlu0 %590
  %592 = vrot.lane.b32.xlu0 %v533, 4
  %v593 = vpop.permute.xlu0 %592
  %594 = vrot.lane.b32.xlu0 %v534, 4
  %v595 = vpop.permute.xlu0 %594
  %596 = vrot.lane.b32.xlu0 %v535, 4
  %v597 = vpop.permute.xlu0 %596
  %598 = vrot.lane.b32.xlu0 %v536, 4
  %v599 = vpop.permute.xlu0 %598
  %600 = vrot.lane.b32.xlu0 %v537, 4
  %v601 = vpop.permute.xlu0 %600
  %v666 = vunpack.c.l.b16 %v154
  %v667 = vunpack.c.l.b16 %v155
  %v668 = vunpack.c.l.b16 %v156
  %v669 = vunpack.c.l.b16 %v157
  %v670 = vunpack.c.l.b16 %v158
  %v671 = vunpack.c.l.b16 %v159
  %v672 = vunpack.c.l.b16 %v160
  %v673 = vunpack.c.l.b16 %v161
  %v674 = vunpack.c.l.b16 %v162
  %v675 = vunpack.c.l.b16 %v163
  %v676 = vunpack.c.l.b16 %v164
  %v677 = vunpack.c.l.b16 %v165
  %v678 = vunpack.c.l.b16 %v166
  %v679 = vunpack.c.l.b16 %v167
  %v680 = vunpack.c.l.b16 %v168
  %v681 = vunpack.c.l.b16 %v169
  %v682 = vunpack.c.l.b16 %v170
  %v683 = vunpack.c.l.b16 %v171
  %v684 = vunpack.c.l.b16 %v172
  %v685 = vunpack.c.l.b16 %v173
  %v686 = vunpack.c.l.b16 %v174
  %v687 = vunpack.c.l.b16 %v175
  %v688 = vunpack.c.l.b16 %v176
  %v689 = vunpack.c.l.b16 %v177
  %v690 = vunpack.c.l.b16 %v178
  %v691 = vunpack.c.l.b16 %v179
  %v692 = vunpack.c.l.b16 %v180
  %v693 = vunpack.c.l.b16 %v181
  %v694 = vunpack.c.l.b16 %v182
  %v695 = vunpack.c.l.b16 %v183
  %v696 = vunpack.c.l.b16 %v184
  %v697 = vunpack.c.l.b16 %v185
  %v698 = vunpack.c.l.b16 %v186
  %v699 = vunpack.c.l.b16 %v187
  %v700 = vunpack.c.l.b16 %v188
  %v701 = vunpack.c.l.b16 %v189
  %v702 = vunpack.c.l.b16 %v190
  %v703 = vunpack.c.l.b16 %v191
  %v704 = vunpack.c.l.b16 %v192
  %v705 = vunpack.c.l.b16 %v193
  %v706 = vunpack.c.l.b16 %v194
  %v707 = vunpack.c.l.b16 %v195
  %v708 = vunpack.c.l.b16 %v196
  %v709 = vunpack.c.l.b16 %v197
  %v710 = vunpack.c.l.b16 %v198
  %v711 = vunpack.c.l.b16 %v199
  %v712 = vunpack.c.l.b16 %v200
  %v713 = vunpack.c.l.b16 %v201
  %v714 = vunpack.c.l.b16 %v202
  %v715 = vunpack.c.l.b16 %v203
  %v716 = vunpack.c.l.b16 %v204
  %v717 = vunpack.c.l.b16 %v205
  %v718 = vunpack.c.l.b16 %v206
  %v719 = vunpack.c.l.b16 %v207
  %v720 = vunpack.c.l.b16 %v208
  %v721 = vunpack.c.l.b16 %v209
  %v722 = vunpack.c.l.b16 %v210
  %v723 = vunpack.c.l.b16 %v211
  %v724 = vunpack.c.l.b16 %v212
  %v725 = vunpack.c.l.b16 %v213
  %v726 = vunpack.c.l.b16 %v214
  %v727 = vunpack.c.l.b16 %v215
  %v728 = vunpack.c.l.b16 %v216
  %v729 = vunpack.c.l.b16 %v217
  %v730 = vpack.c.b16 %v667, %v666
  %v731 = vpack.c.b16 %v669, %v668
  %v732 = vpack.c.b16 %v671, %v670
  %v733 = vpack.c.b16 %v673, %v672
  %v734 = vpack.c.b16 %v675, %v674
  %v735 = vpack.c.b16 %v677, %v676
  %v736 = vpack.c.b16 %v679, %v678
  %v737 = vpack.c.b16 %v681, %v680
  %v738 = vpack.c.b16 %v683, %v682
  %v739 = vpack.c.b16 %v685, %v684
  %v740 = vpack.c.b16 %v687, %v686
  %v741 = vpack.c.b16 %v689, %v688
  %v742 = vpack.c.b16 %v691, %v690
  %v743 = vpack.c.b16 %v693, %v692
  %v744 = vpack.c.b16 %v695, %v694
  %v745 = vpack.c.b16 %v697, %v696
  %v746 = vpack.c.b16 %v699, %v698
  %v747 = vpack.c.b16 %v701, %v700
  %v748 = vpack.c.b16 %v703, %v702
  %v749 = vpack.c.b16 %v705, %v704
  %v750 = vpack.c.b16 %v707, %v706
  %v751 = vpack.c.b16 %v709, %v708
  %v752 = vpack.c.b16 %v711, %v710
  %v753 = vpack.c.b16 %v713, %v712
  %v754 = vpack.c.b16 %v715, %v714
  %v755 = vpack.c.b16 %v717, %v716
  %v756 = vpack.c.b16 %v719, %v718
  %v757 = vpack.c.b16 %v721, %v720
  %v758 = vpack.c.b16 %v723, %v722
  %v759 = vpack.c.b16 %v725, %v724
  %v760 = vpack.c.b16 %v727, %v726
  %v761 = vpack.c.b16 %v729, %v728
  %762 = vrot.lane.b32.xlu0 %v730, 8
  %v763 = vpop.permute.xlu0 %762
  %764 = vrot.lane.b32.xlu0 %v731, 8
  %v765 = vpop.permute.xlu0 %764
  %766 = vrot.lane.b32.xlu0 %v732, 8
  %v767 = vpop.permute.xlu0 %766
  %768 = vrot.lane.b32.xlu0 %v733, 8
  %v769 = vpop.permute.xlu0 %768
  %770 = vrot.lane.b32.xlu0 %v734, 8
  %v771 = vpop.permute.xlu0 %770
  %772 = vrot.lane.b32.xlu0 %v735, 8
  %v773 = vpop.permute.xlu0 %772
  %774 = vrot.lane.b32.xlu0 %v736, 8
  %v775 = vpop.permute.xlu0 %774
  %776 = vrot.lane.b32.xlu0 %v737, 8
  %v777 = vpop.permute.xlu0 %776
  %778 = vrot.lane.b32.xlu0 %v738, 8
  %v779 = vpop.permute.xlu0 %778
  %780 = vrot.lane.b32.xlu0 %v739, 8
  %v781 = vpop.permute.xlu0 %780
  %782 = vrot.lane.b32.xlu0 %v740, 8
  %v783 = vpop.permute.xlu0 %782
  %784 = vrot.lane.b32.xlu0 %v741, 8
  %v785 = vpop.permute.xlu0 %784
  %786 = vrot.lane.b32.xlu0 %v742, 8
  %v787 = vpop.permute.xlu0 %786
  %788 = vrot.lane.b32.xlu0 %v743, 8
  %v789 = vpop.permute.xlu0 %788
  %790 = vrot.lane.b32.xlu0 %v744, 8
  %v791 = vpop.permute.xlu0 %790
  %792 = vrot.lane.b32.xlu0 %v745, 8
  %v793 = vpop.permute.xlu0 %792
  %794 = vrot.lane.b32.xlu0 %v746, 8
  %v795 = vpop.permute.xlu0 %794
  %796 = vrot.lane.b32.xlu0 %v747, 8
  %v797 = vpop.permute.xlu0 %796
  %798 = vrot.lane.b32.xlu0 %v748, 8
  %v799 = vpop.permute.xlu0 %798
  %800 = vrot.lane.b32.xlu0 %v749, 8
  %v801 = vpop.permute.xlu0 %800
  %802 = vrot.lane.b32.xlu0 %v750, 8
  %v803 = vpop.permute.xlu0 %802
  %804 = vrot.lane.b32.xlu0 %v751, 8
  %v805 = vpop.permute.xlu0 %804
  %806 = vrot.lane.b32.xlu0 %v752, 8
  %v807 = vpop.permute.xlu0 %806
  %808 = vrot.lane.b32.xlu0 %v753, 8
  %v809 = vpop.permute.xlu0 %808
  %810 = vrot.lane.b32.xlu0 %v754, 8
  %v811 = vpop.permute.xlu0 %810
  %812 = vrot.lane.b32.xlu0 %v755, 8
  %v813 = vpop.permute.xlu0 %812
  %814 = vrot.lane.b32.xlu0 %v756, 8
  %v815 = vpop.permute.xlu0 %814
  %816 = vrot.lane.b32.xlu0 %v757, 8
  %v817 = vpop.permute.xlu0 %816
  %818 = vrot.lane.b32.xlu0 %v758, 8
  %v819 = vpop.permute.xlu0 %818
  %820 = vrot.lane.b32.xlu0 %v759, 8
  %v821 = vpop.permute.xlu0 %820
  %822 = vrot.lane.b32.xlu0 %v760, 8
  %v823 = vpop.permute.xlu0 %822
  %824 = vrot.lane.b32.xlu0 %v761, 8
  %v825 = vpop.permute.xlu0 %824
  %vm826 = vcmask 31744
  %v829 = vsel %vm826, %v346, %v539
  %v832 = vsel %vm826, %v347, %v541
  %v835 = vsel %vm826, %v348, %v543
  %v838 = vsel %vm826, %v349, %v545
  %v841 = vsel %vm826, %v350, %v547
  %v844 = vsel %vm826, %v351, %v549
  %v847 = vsel %vm826, %v352, %v551
  %v850 = vsel %vm826, %v353, %v553
  %v853 = vsel %vm826, %v354, %v555
  %v856 = vsel %vm826, %v355, %v557
  %v859 = vsel %vm826, %v356, %v559
  %v862 = vsel %vm826, %v357, %v561
  %v865 = vsel %vm826, %v358, %v563
  %v868 = vsel %vm826, %v359, %v565
  %v871 = vsel %vm826, %v360, %v567
  %v874 = vsel %vm826, %v361, %v569
  %v877 = vsel %vm826, %v362, %v571
  %v880 = vsel %vm826, %v363, %v573
  %v883 = vsel %vm826, %v364, %v575
  %v886 = vsel %vm826, %v365, %v577
  %v889 = vsel %vm826, %v366, %v579
  %v892 = vsel %vm826, %v367, %v581
  %v895 = vsel %vm826, %v368, %v583
  %v898 = vsel %vm826, %v369, %v585
  %v901 = vsel %vm826, %v370, %v587
  %v904 = vsel %vm826, %v371, %v589
  %v907 = vsel %vm826, %v372, %v591
  %v910 = vsel %vm826, %v373, %v593
  %v913 = vsel %vm826, %v374, %v595
  %v916 = vsel %vm826, %v375, %v597
  %v919 = vsel %vm826, %v376, %v599
  %v922 = vsel %vm826, %v377, %v601
  %vm923 = vcmask 64512
  %v925 = vsel %vm923, %v829, %v763
  %v928 = vsel %vm923, %v832, %v765
  %v931 = vsel %vm923, %v835, %v767
  %v934 = vsel %vm923, %v838, %v769
  %v937 = vsel %vm923, %v841, %v771
  %v940 = vsel %vm923, %v844, %v773
  %v943 = vsel %vm923, %v847, %v775
  %v946 = vsel %vm923, %v850, %v777
  %v949 = vsel %vm923, %v853, %v779
  %v952 = vsel %vm923, %v856, %v781
  %v955 = vsel %vm923, %v859, %v783
  %v958 = vsel %vm923, %v862, %v785
  %v961 = vsel %vm923, %v865, %v787
  %v964 = vsel %vm923, %v868, %v789
  %v967 = vsel %vm923, %v871, %v791
  %v970 = vsel %vm923, %v874, %v793
  %v973 = vsel %vm923, %v877, %v795
  %v976 = vsel %vm923, %v880, %v797
  %v979 = vsel %vm923, %v883, %v799
  %v982 = vsel %vm923, %v886, %v801
  %v985 = vsel %vm923, %v889, %v803
  %v988 = vsel %vm923, %v892, %v805
  %v991 = vsel %vm923, %v895, %v807
  %v994 = vsel %vm923, %v898, %v809
  %v997 = vsel %vm923, %v901, %v811
  %v1000 = vsel %vm923, %v904, %v813
  %v1003 = vsel %vm923, %v907, %v815
  %v1006 = vsel %vm923, %v910, %v817
  %v1009 = vsel %vm923, %v913, %v819
  %v1012 = vsel %vm923, %v916, %v821
  %v1015 = vsel %vm923, %v919, %v823
  %v1018 = vsel %vm923, %v922, %v825
  %v1020 = vunpack.c.l.bf16 %v925
  %v1021 = vunpack.c.h.bf16 %v925
  %v1022 = vunpack.c.l.bf16 %v928
  %v1023 = vunpack.c.h.bf16 %v928
  %v1024 = vunpack.c.l.bf16 %v931
  %v1025 = vunpack.c.h.bf16 %v931
  %v1026 = vunpack.c.l.bf16 %v934
  %v1027 = vunpack.c.h.bf16 %v934
  %v1028 = vunpack.c.l.bf16 %v937
  %v1029 = vunpack.c.h.bf16 %v937
  %v1030 = vunpack.c.l.bf16 %v940
  %v1031 = vunpack.c.h.bf16 %v940
  %v1032 = vunpack.c.l.bf16 %v943
  %v1033 = vunpack.c.h.bf16 %v943
  %v1034 = vunpack.c.l.bf16 %v946
  %v1035 = vunpack.c.h.bf16 %v946
  %v1036 = vunpack.c.l.bf16 %v949
  %v1037 = vunpack.c.h.bf16 %v949
  %v1038 = vunpack.c.l.bf16 %v952
  %v1039 = vunpack.c.h.bf16 %v952
  %v1040 = vunpack.c.l.bf16 %v955
  %v1041 = vunpack.c.h.bf16 %v955
  %v1042 = vunpack.c.l.bf16 %v958
  %v1043 = vunpack.c.h.bf16 %v958
  %v1044 = vunpack.c.l.bf16 %v961
  %v1045 = vunpack.c.h.bf16 %v961
  %v1046 = vunpack.c.l.bf16 %v964
  %v1047 = vunpack.c.h.bf16 %v964
  %v1048 = vunpack.c.l.bf16 %v967
  %v1049 = vunpack.c.h.bf16 %v967
  %v1050 = vunpack.c.l.bf16 %v970
  %v1051 = vunpack.c.h.bf16 %v970
  %v1052 = vunpack.c.l.bf16 %v973
  %v1053 = vunpack.c.h.bf16 %v973
  %v1054 = vunpack.c.l.bf16 %v976
  %v1055 = vunpack.c.h.bf16 %v976
  %v1056 = vunpack.c.l.bf16 %v979
  %v1057 = vunpack.c.h.bf16 %v979
  %v1058 = vunpack.c.l.bf16 %v982
  %v1059 = vunpack.c.h.bf16 %v982
  %v1060 = vunpack.c.l.bf16 %v985
  %v1061 = vunpack.c.h.bf16 %v985
  %v1062 = vunpack.c.l.bf16 %v988
  %v1063 = vunpack.c.h.bf16 %v988
  %v1064 = vunpack.c.l.bf16 %v991
  %v1065 = vunpack.c.h.bf16 %v991
  %v1066 = vunpack.c.l.bf16 %v994
  %v1067 = vunpack.c.h.bf16 %v994
  %v1068 = vunpack.c.l.bf16 %v997
  %v1069 = vunpack.c.h.bf16 %v997
  %v1070 = vunpack.c.l.bf16 %v1000
  %v1071 = vunpack.c.h.bf16 %v1000
  %v1072 = vunpack.c.l.bf16 %v1003
  %v1073 = vunpack.c.h.bf16 %v1003
  %v1074 = vunpack.c.l.bf16 %v1006
  %v1075 = vunpack.c.h.bf16 %v1006
  %v1076 = vunpack.c.l.bf16 %v1009
  %v1077 = vunpack.c.h.bf16 %v1009
  %v1078 = vunpack.c.l.bf16 %v1012
  %v1079 = vunpack.c.h.bf16 %v1012
  %v1080 = vunpack.c.l.bf16 %v1015
  %v1081 = vunpack.c.h.bf16 %v1015
  %v1082 = vunpack.c.l.bf16 %v1018
  %v1083 = vunpack.c.h.bf16 %v1018
  %v1084 = vld [vmem:[%s3] sm:$0x1]
  %v1086 = vperm.slane %v1084, 0
  %v1088 = vmul.f32 %v1020, %v1086
  %v1089 = vmul.f32 %v1021, %v1086
  %v1090 = vmul.f32 %v1022, %v1086
  %v1091 = vmul.f32 %v1023, %v1086
  %v1092 = vmul.f32 %v1024, %v1086
  %v1093 = vmul.f32 %v1025, %v1086
  %v1094 = vmul.f32 %v1026, %v1086
  %v1095 = vmul.f32 %v1027, %v1086
  %v1096 = vmul.f32 %v1028, %v1086
  %v1097 = vmul.f32 %v1029, %v1086
  %v1098 = vmul.f32 %v1030, %v1086
  %v1099 = vmul.f32 %v1031, %v1086
  %v1100 = vmul.f32 %v1032, %v1086
  %v1101 = vmul.f32 %v1033, %v1086
  %v1102 = vmul.f32 %v1034, %v1086
  %v1103 = vmul.f32 %v1035, %v1086
  %v1104 = vmul.f32 %v1036, %v1086
  %v1105 = vmul.f32 %v1037, %v1086
  %v1106 = vmul.f32 %v1038, %v1086
  %v1107 = vmul.f32 %v1039, %v1086
  %v1108 = vmul.f32 %v1040, %v1086
  %v1109 = vmul.f32 %v1041, %v1086
  %v1110 = vmul.f32 %v1042, %v1086
  %v1111 = vmul.f32 %v1043, %v1086
  %v1112 = vmul.f32 %v1044, %v1086
  %v1113 = vmul.f32 %v1045, %v1086
  %v1114 = vmul.f32 %v1046, %v1086
  %v1115 = vmul.f32 %v1047, %v1086
  %v1116 = vmul.f32 %v1048, %v1086
  %v1117 = vmul.f32 %v1049, %v1086
  %v1118 = vmul.f32 %v1050, %v1086
  %v1119 = vmul.f32 %v1051, %v1086
  %v1120 = vmul.f32 %v1052, %v1086
  %v1121 = vmul.f32 %v1053, %v1086
  %v1122 = vmul.f32 %v1054, %v1086
  %v1123 = vmul.f32 %v1055, %v1086
  %v1124 = vmul.f32 %v1056, %v1086
  %v1125 = vmul.f32 %v1057, %v1086
  %v1126 = vmul.f32 %v1058, %v1086
  %v1127 = vmul.f32 %v1059, %v1086
  %v1128 = vmul.f32 %v1060, %v1086
  %v1129 = vmul.f32 %v1061, %v1086
  %v1130 = vmul.f32 %v1062, %v1086
  %v1131 = vmul.f32 %v1063, %v1086
  %v1132 = vmul.f32 %v1064, %v1086
  %v1133 = vmul.f32 %v1065, %v1086
  %v1134 = vmul.f32 %v1066, %v1086
  %v1135 = vmul.f32 %v1067, %v1086
  %v1136 = vmul.f32 %v1068, %v1086
  %v1137 = vmul.f32 %v1069, %v1086
  %v1138 = vmul.f32 %v1070, %v1086
  %v1139 = vmul.f32 %v1071, %v1086
  %v1140 = vmul.f32 %v1072, %v1086
  %v1141 = vmul.f32 %v1073, %v1086
  %v1142 = vmul.f32 %v1074, %v1086
  %v1143 = vmul.f32 %v1075, %v1086
  %v1144 = vmul.f32 %v1076, %v1086
  %v1145 = vmul.f32 %v1077, %v1086
  %v1146 = vmul.f32 %v1078, %v1086
  %v1147 = vmul.f32 %v1079, %v1086
  %v1148 = vmul.f32 %v1080, %v1086
  %v1149 = vmul.f32 %v1081, %v1086
  %v1150 = vmul.f32 %v1082, %v1086
  %v1151 = vmul.f32 %v1083, %v1086
  %v1152 = vld [vmem:[%s4] sm:$0x1]
  %v1154 = vperm.slane %v1152, 0
  %v1156 = vadd.f32 %v1088, %v1154
  %v1157 = vadd.f32 %v1089, %v1154
  %v1158 = vadd.f32 %v1090, %v1154
  %v1159 = vadd.f32 %v1091, %v1154
  %v1160 = vadd.f32 %v1092, %v1154
  %v1161 = vadd.f32 %v1093, %v1154
  %v1162 = vadd.f32 %v1094, %v1154
  %v1163 = vadd.f32 %v1095, %v1154
  %v1164 = vadd.f32 %v1096, %v1154
  %v1165 = vadd.f32 %v1097, %v1154
  %v1166 = vadd.f32 %v1098, %v1154
  %v1167 = vadd.f32 %v1099, %v1154
  %v1168 = vadd.f32 %v1100, %v1154
  %v1169 = vadd.f32 %v1101, %v1154
  %v1170 = vadd.f32 %v1102, %v1154
  %v1171 = vadd.f32 %v1103, %v1154
  %v1172 = vadd.f32 %v1104, %v1154
  %v1173 = vadd.f32 %v1105, %v1154
  %v1174 = vadd.f32 %v1106, %v1154
  %v1175 = vadd.f32 %v1107, %v1154
  %v1176 = vadd.f32 %v1108, %v1154
  %v1177 = vadd.f32 %v1109, %v1154
  %v1178 = vadd.f32 %v1110, %v1154
  %v1179 = vadd.f32 %v1111, %v1154
  %v1180 = vadd.f32 %v1112, %v1154
  %v1181 = vadd.f32 %v1113, %v1154
  %v1182 = vadd.f32 %v1114, %v1154
  %v1183 = vadd.f32 %v1115, %v1154
  %v1184 = vadd.f32 %v1116, %v1154
  %v1185 = vadd.f32 %v1117, %v1154
  %v1186 = vadd.f32 %v1118, %v1154
  %v1187 = vadd.f32 %v1119, %v1154
  %v1188 = vadd.f32 %v1120, %v1154
  %v1189 = vadd.f32 %v1121, %v1154
  %v1190 = vadd.f32 %v1122, %v1154
  %v1191 = vadd.f32 %v1123, %v1154
  %v1192 = vadd.f32 %v1124, %v1154
  %v1193 = vadd.f32 %v1125, %v1154
  %v1194 = vadd.f32 %v1126, %v1154
  %v1195 = vadd.f32 %v1127, %v1154
  %v1196 = vadd.f32 %v1128, %v1154
  %v1197 = vadd.f32 %v1129, %v1154
  %v1198 = vadd.f32 %v1130, %v1154
  %v1199 = vadd.f32 %v1131, %v1154
  %v1200 = vadd.f32 %v1132, %v1154
  %v1201 = vadd.f32 %v1133, %v1154
  %v1202 = vadd.f32 %v1134, %v1154
  %v1203 = vadd.f32 %v1135, %v1154
  %v1204 = vadd.f32 %v1136, %v1154
  %v1205 = vadd.f32 %v1137, %v1154
  %v1206 = vadd.f32 %v1138, %v1154
  %v1207 = vadd.f32 %v1139, %v1154
  %v1208 = vadd.f32 %v1140, %v1154
  %v1209 = vadd.f32 %v1141, %v1154
  %v1210 = vadd.f32 %v1142, %v1154
  %v1211 = vadd.f32 %v1143, %v1154
  %v1212 = vadd.f32 %v1144, %v1154
  %v1213 = vadd.f32 %v1145, %v1154
  %v1214 = vadd.f32 %v1146, %v1154
  %v1215 = vadd.f32 %v1147, %v1154
  %v1216 = vadd.f32 %v1148, %v1154
  %v1217 = vadd.f32 %v1149, %v1154
  %v1218 = vadd.f32 %v1150, %v1154
  %v1219 = vadd.f32 %v1151, %v1154
  %v1220 = vmax.f32 %v1156, 0.0
  %v1221 = vmax.f32 %v1157, 0.0
  %v1222 = vmax.f32 %v1158, 0.0
  %v1223 = vmax.f32 %v1159, 0.0
  %v1224 = vmax.f32 %v1160, 0.0
  %v1225 = vmax.f32 %v1161, 0.0
  %v1226 = vmax.f32 %v1162, 0.0
  %v1227 = vmax.f32 %v1163, 0.0
  %v1228 = vmax.f32 %v1164, 0.0
  %v1229 = vmax.f32 %v1165, 0.0
  %v1230 = vmax.f32 %v1166, 0.0
  %v1231 = vmax.f32 %v1167, 0.0
  %v1232 = vmax.f32 %v1168, 0.0
  %v1233 = vmax.f32 %v1169, 0.0
  %v1234 = vmax.f32 %v1170, 0.0
  %v1235 = vmax.f32 %v1171, 0.0
  %v1236 = vmax.f32 %v1172, 0.0
  %v1237 = vmax.f32 %v1173, 0.0
  %v1238 = vmax.f32 %v1174, 0.0
  %v1239 = vmax.f32 %v1175, 0.0
  %v1240 = vmax.f32 %v1176, 0.0
  %v1241 = vmax.f32 %v1177, 0.0
  %v1242 = vmax.f32 %v1178, 0.0
  %v1243 = vmax.f32 %v1179, 0.0
  %v1244 = vmax.f32 %v1180, 0.0
  %v1245 = vmax.f32 %v1181, 0.0
  %v1246 = vmax.f32 %v1182, 0.0
  %v1247 = vmax.f32 %v1183, 0.0
  %v1248 = vmax.f32 %v1184, 0.0
  %v1249 = vmax.f32 %v1185, 0.0
  %v1250 = vmax.f32 %v1186, 0.0
  %v1251 = vmax.f32 %v1187, 0.0
  %v1252 = vmax.f32 %v1188, 0.0
  %v1253 = vmax.f32 %v1189, 0.0
  %v1254 = vmax.f32 %v1190, 0.0
  %v1255 = vmax.f32 %v1191, 0.0
  %v1256 = vmax.f32 %v1192, 0.0
  %v1257 = vmax.f32 %v1193, 0.0
  %v1258 = vmax.f32 %v1194, 0.0
  %v1259 = vmax.f32 %v1195, 0.0
  %v1260 = vmax.f32 %v1196, 0.0
  %v1261 = vmax.f32 %v1197, 0.0
  %v1262 = vmax.f32 %v1198, 0.0
  %v1263 = vmax.f32 %v1199, 0.0
  %v1264 = vmax.f32 %v1200, 0.0
  %v1265 = vmax.f32 %v1201, 0.0
  %v1266 = vmax.f32 %v1202, 0.0
  %v1267 = vmax.f32 %v1203, 0.0
  %v1268 = vmax.f32 %v1204, 0.0
  %v1269 = vmax.f32 %v1205, 0.0
  %v1270 = vmax.f32 %v1206, 0.0
  %v1271 = vmax.f32 %v1207, 0.0
  %v1272 = vmax.f32 %v1208, 0.0
  %v1273 = vmax.f32 %v1209, 0.0
  %v1274 = vmax.f32 %v1210, 0.0
  %v1275 = vmax.f32 %v1211, 0.0
  %v1276 = vmax.f32 %v1212, 0.0
  %v1277 = vmax.f32 %v1213, 0.0
  %v1278 = vmax.f32 %v1214, 0.0
  %v1279 = vmax.f32 %v1215, 0.0
  %v1280 = vmax.f32 %v1216, 0.0
  %v1281 = vmax.f32 %v1217, 0.0
  %v1282 = vmax.f32 %v1218, 0.0
  %v1283 = vmax.f32 %v1219, 0.0
  %v1284 = vpack.c.bf16 %v1221, %v1220
  %v1285 = vpack.c.bf16 %v1223, %v1222
  %v1286 = vpack.c.bf16 %v1225, %v1224
  %v1287 = vpack.c.bf16 %v1227, %v1226
  %v1288 = vpack.c.bf16 %v1229, %v1228
  %v1289 = vpack.c.bf16 %v1231, %v1230
  %v1290 = vpack.c.bf16 %v1233, %v1232
  %v1291 = vpack.c.bf16 %v1235, %v1234
  %v1292 = vpack.c.bf16 %v1237, %v1236
  %v1293 = vpack.c.bf16 %v1239, %v1238
  %v1294 = vpack.c.bf16 %v1241, %v1240
  %v1295 = vpack.c.bf16 %v1243, %v1242
  %v1296 = vpack.c.bf16 %v1245, %v1244
  %v1297 = vpack.c.bf16 %v1247, %v1246
  %v1298 = vpack.c.bf16 %v1249, %v1248
  %v1299 = vpack.c.bf16 %v1251, %v1250
  %v1300 = vpack.c.bf16 %v1253, %v1252
  %v1301 = vpack.c.bf16 %v1255, %v1254
  %v1302 = vpack.c.bf16 %v1257, %v1256
  %v1303 = vpack.c.bf16 %v1259, %v1258
  %v1304 = vpack.c.bf16 %v1261, %v1260
  %v1305 = vpack.c.bf16 %v1263, %v1262
  %v1306 = vpack.c.bf16 %v1265, %v1264
  %v1307 = vpack.c.bf16 %v1267, %v1266
  %v1308 = vpack.c.bf16 %v1269, %v1268
  %v1309 = vpack.c.bf16 %v1271, %v1270
  %v1310 = vpack.c.bf16 %v1273, %v1272
  %v1311 = vpack.c.bf16 %v1275, %v1274
  %v1312 = vpack.c.bf16 %v1277, %v1276
  %v1313 = vpack.c.bf16 %v1279, %v1278
  %v1314 = vpack.c.bf16 %v1281, %v1280
  %v1315 = vpack.c.bf16 %v1283, %v1282
  %v1316 = vld [vmem:[%s5] sm:$0xf]
  %v1317 = vld [vmem:[%s5 + $0x4] sm:$0x3]
  %v1320 = vunpack.c.l.b16 %v1316
  %v1321 = vunpack.c.l.b16 %v1317
  %v1322 = vpack.c.b16 %v1321, %v1320
  %vm1323 = vcmask 97280
  %v1325 = vsel %vm1323, %v1284, 0
  %v1328 = vsel %vm1323, %v1285, 0
  %v1331 = vsel %vm1323, %v1286, 0
  %v1334 = vsel %vm1323, %v1287, 0
  %v1337 = vsel %vm1323, %v1288, 0
  %v1340 = vsel %vm1323, %v1289, 0
  %v1343 = vsel %vm1323, %v1290, 0
  %v1346 = vsel %vm1323, %v1291, 0
  %v1349 = vsel %vm1323, %v1292, 0
  %v1352 = vsel %vm1323, %v1293, 0
  %v1355 = vsel %vm1323, %v1294, 0
  %v1358 = vsel %vm1323, %v1295, 0
  %v1361 = vsel %vm1323, %v1296, 0
  %v1364 = vsel %vm1323, %v1297, 0
  %v1367 = vsel %vm1323, %v1298, 0
  %v1370 = vsel %vm1323, %v1299, 0
  %v1373 = vsel %vm1323, %v1300, 0
  %v1376 = vsel %vm1323, %v1301, 0
  %v1379 = vsel %vm1323, %v1302, 0
  %v1382 = vsel %vm1323, %v1303, 0
  %v1385 = vsel %vm1323, %v1304, 0
  %v1388 = vsel %vm1323, %v1305, 0
  %v1391 = vsel %vm1323, %v1306, 0
  %v1394 = vsel %vm1323, %v1307, 0
  %v1397 = vsel %vm1323, %v1308, 0
  %v1400 = vsel %vm1323, %v1309, 0
  %v1403 = vsel %vm1323, %v1310, 0
  %v1406 = vsel %vm1323, %v1311, 0
  %v1409 = vsel %vm1323, %v1312, 0
  %v1412 = vsel %vm1323, %v1313, 0
  %v1415 = vsel %vm1323, %v1314, 0
  %v1418 = vsel %vm1323, %v1315, 0
  %vm1420 = vcmask 1045504
  %v1422 = vsel %vm1420, %v1322, 0
  %1424 = vmatpush.bf16.msra.mxu0 0
  %1425 = vmatpush.bf16.msra.mxu0 0
  %1426 = vmatpush.bf16.msra.mxu0 0
  %1427 = vmatpush.bf16.msra.mxu0 0
  %1428 = vmatpush.bf16.msra.mxu0 0
  %1429 = vmatpush.bf16.msra.mxu0 0
  %1430 = vmatpush.bf16.msra.mxu0 0
  %1431 = vmatpush.bf16.msra.mxu0 %v1422
  %1432 = vmatmul.bf16.gmra.mxu0 %v1325
  %v1433 = vpop.f32.mrf.mxu0
  %v1434 = vadd.f32 0.0, %v1433
  %v1435 = vpop.f32.mrf.mxu0
  %v1436 = vadd.f32 0.0, %v1435
  %1437 = vmatmul.bf16.gmra.mxu0 %v1328
  %v1438 = vpop.f32.mrf.mxu0
  %v1439 = vadd.f32 0.0, %v1438
  %v1440 = vpop.f32.mrf.mxu0
  %v1441 = vadd.f32 0.0, %v1440
  %1442 = vmatmul.bf16.gmra.mxu0 %v1331
  %v1443 = vpop.f32.mrf.mxu0
  %v1444 = vadd.f32 0.0, %v1443
  %v1445 = vpop.f32.mrf.mxu0
  %v1446 = vadd.f32 0.0, %v1445
  %1447 = vmatmul.bf16.gmra.mxu0 %v1334
  %v1448 = vpop.f32.mrf.mxu0
  %v1449 = vadd.f32 0.0, %v1448
  %v1450 = vpop.f32.mrf.mxu0
  %v1451 = vadd.f32 0.0, %v1450
  %1452 = vmatmul.bf16.gmra.mxu0 %v1337
  %v1453 = vpop.f32.mrf.mxu0
  %v1454 = vadd.f32 0.0, %v1453
  %v1455 = vpop.f32.mrf.mxu0
  %v1456 = vadd.f32 0.0, %v1455
  %1457 = vmatmul.bf16.gmra.mxu0 %v1340
  %v1458 = vpop.f32.mrf.mxu0
  %v1459 = vadd.f32 0.0, %v1458
  %v1460 = vpop.f32.mrf.mxu0
  %v1461 = vadd.f32 0.0, %v1460
  %1462 = vmatmul.bf16.gmra.mxu0 %v1343
  %v1463 = vpop.f32.mrf.mxu0
  %v1464 = vadd.f32 0.0, %v1463
  %v1465 = vpop.f32.mrf.mxu0
  %v1466 = vadd.f32 0.0, %v1465
  %1467 = vmatmul.bf16.gmra.mxu0 %v1346
  %v1468 = vpop.f32.mrf.mxu0
  %v1469 = vadd.f32 0.0, %v1468
  %v1470 = vpop.f32.mrf.mxu0
  %v1471 = vadd.f32 0.0, %v1470
  %1472 = vmatmul.bf16.gmra.mxu0 %v1349
  %v1473 = vpop.f32.mrf.mxu0
  %v1474 = vadd.f32 0.0, %v1473
  %v1475 = vpop.f32.mrf.mxu0
  %v1476 = vadd.f32 0.0, %v1475
  %1477 = vmatmul.bf16.gmra.mxu0 %v1352
  %v1478 = vpop.f32.mrf.mxu0
  %v1479 = vadd.f32 0.0, %v1478
  %v1480 = vpop.f32.mrf.mxu0
  %v1481 = vadd.f32 0.0, %v1480
  %1482 = vmatmul.bf16.gmra.mxu0 %v1355
  %v1483 = vpop.f32.mrf.mxu0
  %v1484 = vadd.f32 0.0, %v1483
  %v1485 = vpop.f32.mrf.mxu0
  %v1486 = vadd.f32 0.0, %v1485
  %1487 = vmatmul.bf16.gmra.mxu0 %v1358
  %v1488 = vpop.f32.mrf.mxu0
  %v1489 = vadd.f32 0.0, %v1488
  %v1490 = vpop.f32.mrf.mxu0
  %v1491 = vadd.f32 0.0, %v1490
  %1492 = vmatmul.bf16.gmra.mxu0 %v1361
  %v1493 = vpop.f32.mrf.mxu0
  %v1494 = vadd.f32 0.0, %v1493
  %v1495 = vpop.f32.mrf.mxu0
  %v1496 = vadd.f32 0.0, %v1495
  %1497 = vmatmul.bf16.gmra.mxu0 %v1364
  %v1498 = vpop.f32.mrf.mxu0
  %v1499 = vadd.f32 0.0, %v1498
  %v1500 = vpop.f32.mrf.mxu0
  %v1501 = vadd.f32 0.0, %v1500
  %1502 = vmatmul.bf16.gmra.mxu0 %v1367
  %v1503 = vpop.f32.mrf.mxu0
  %v1504 = vadd.f32 0.0, %v1503
  %v1505 = vpop.f32.mrf.mxu0
  %v1506 = vadd.f32 0.0, %v1505
  %1507 = vmatmul.bf16.gmra.mxu0 %v1370
  %v1508 = vpop.f32.mrf.mxu0
  %v1509 = vadd.f32 0.0, %v1508
  %v1510 = vpop.f32.mrf.mxu0
  %v1511 = vadd.f32 0.0, %v1510
  %1512 = vmatmul.bf16.gmra.mxu0 %v1373
  %v1513 = vpop.f32.mrf.mxu0
  %v1514 = vadd.f32 0.0, %v1513
  %v1515 = vpop.f32.mrf.mxu0
  %v1516 = vadd.f32 0.0, %v1515
  %1517 = vmatmul.bf16.gmra.mxu0 %v1376
  %v1518 = vpop.f32.mrf.mxu0
  %v1519 = vadd.f32 0.0, %v1518
  %v1520 = vpop.f32.mrf.mxu0
  %v1521 = vadd.f32 0.0, %v1520
  %1522 = vmatmul.bf16.gmra.mxu0 %v1379
  %v1523 = vpop.f32.mrf.mxu0
  %v1524 = vadd.f32 0.0, %v1523
  %v1525 = vpop.f32.mrf.mxu0
  %v1526 = vadd.f32 0.0, %v1525
  %1527 = vmatmul.bf16.gmra.mxu0 %v1382
  %v1528 = vpop.f32.mrf.mxu0
  %v1529 = vadd.f32 0.0, %v1528
  %v1530 = vpop.f32.mrf.mxu0
  %v1531 = vadd.f32 0.0, %v1530
  %1532 = vmatmul.bf16.gmra.mxu0 %v1385
  %v1533 = vpop.f32.mrf.mxu0
  %v1534 = vadd.f32 0.0, %v1533
  %v1535 = vpop.f32.mrf.mxu0
  %v1536 = vadd.f32 0.0, %v1535
  %1537 = vmatmul.bf16.gmra.mxu0 %v1388
  %v1538 = vpop.f32.mrf.mxu0
  %v1539 = vadd.f32 0.0, %v1538
  %v1540 = vpop.f32.mrf.mxu0
  %v1541 = vadd.f32 0.0, %v1540
  %1542 = vmatmul.bf16.gmra.mxu0 %v1391
  %v1543 = vpop.f32.mrf.mxu0
  %v1544 = vadd.f32 0.0, %v1543
  %v1545 = vpop.f32.mrf.mxu0
  %v1546 = vadd.f32 0.0, %v1545
  %1547 = vmatmul.bf16.gmra.mxu0 %v1394
  %v1548 = vpop.f32.mrf.mxu0
  %v1549 = vadd.f32 0.0, %v1548
  %v1550 = vpop.f32.mrf.mxu0
  %v1551 = vadd.f32 0.0, %v1550
  %1552 = vmatmul.bf16.gmra.mxu0 %v1397
  %v1553 = vpop.f32.mrf.mxu0
  %v1554 = vadd.f32 0.0, %v1553
  %v1555 = vpop.f32.mrf.mxu0
  %v1556 = vadd.f32 0.0, %v1555
  %1557 = vmatmul.bf16.gmra.mxu0 %v1400
  %v1558 = vpop.f32.mrf.mxu0
  %v1559 = vadd.f32 0.0, %v1558
  %v1560 = vpop.f32.mrf.mxu0
  %v1561 = vadd.f32 0.0, %v1560
  %1562 = vmatmul.bf16.gmra.mxu0 %v1403
  %v1563 = vpop.f32.mrf.mxu0
  %v1564 = vadd.f32 0.0, %v1563
  %v1565 = vpop.f32.mrf.mxu0
  %v1566 = vadd.f32 0.0, %v1565
  %1567 = vmatmul.bf16.gmra.mxu0 %v1406
  %v1568 = vpop.f32.mrf.mxu0
  %v1569 = vadd.f32 0.0, %v1568
  %v1570 = vpop.f32.mrf.mxu0
  %v1571 = vadd.f32 0.0, %v1570
  %1572 = vmatmul.bf16.gmra.mxu0 %v1409
  %v1573 = vpop.f32.mrf.mxu0
  %v1574 = vadd.f32 0.0, %v1573
  %v1575 = vpop.f32.mrf.mxu0
  %v1576 = vadd.f32 0.0, %v1575
  %1577 = vmatmul.bf16.gmra.mxu0 %v1412
  %v1578 = vpop.f32.mrf.mxu0
  %v1579 = vadd.f32 0.0, %v1578
  %v1580 = vpop.f32.mrf.mxu0
  %v1581 = vadd.f32 0.0, %v1580
  %1582 = vmatmul.bf16.gmra.mxu0 %v1415
  %v1583 = vpop.f32.mrf.mxu0
  %v1584 = vadd.f32 0.0, %v1583
  %v1585 = vpop.f32.mrf.mxu0
  %v1586 = vadd.f32 0.0, %v1585
  %1587 = vmatmul.bf16.gmra.mxu0 %v1418
  %v1588 = vpop.f32.mrf.mxu0
  %v1589 = vadd.f32 0.0, %v1588
  %v1590 = vpop.f32.mrf.mxu0
  %v1591 = vadd.f32 0.0, %v1590
  %1592 = vdwg.mxu0
  %vm1593 = vcmask 130048
  %1594 = vst.msk [vmem:[%s6] sm:$0xff] %vm1593, %v1434
  %1595 = vst.msk [vmem:[%s6 + $0x8] sm:$0xff] %vm1593, %v1436
  %1596 = vst.msk [vmem:[%s6 + $0x10] sm:$0xff] %vm1593, %v1439
  %1597 = vst.msk [vmem:[%s6 + $0x18] sm:$0xff] %vm1593, %v1441
  %1598 = vst.msk [vmem:[%s6 + $0x20] sm:$0xff] %vm1593, %v1444
  %1599 = vst.msk [vmem:[%s6 + $0x28] sm:$0xff] %vm1593, %v1446
  %1600 = vst.msk [vmem:[%s6 + $0x30] sm:$0xff] %vm1593, %v1449
  %1601 = vst.msk [vmem:[%s6 + $0x38] sm:$0xff] %vm1593, %v1451
  %1602 = vst.msk [vmem:[%s6 + $0x40] sm:$0xff] %vm1593, %v1454
  %1603 = vst.msk [vmem:[%s6 + $0x48] sm:$0xff] %vm1593, %v1456
  %1604 = vst.msk [vmem:[%s6 + $0x50] sm:$0xff] %vm1593, %v1459
  %1605 = vst.msk [vmem:[%s6 + $0x58] sm:$0xff] %vm1593, %v1461
  %1606 = vst.msk [vmem:[%s6 + $0x60] sm:$0xff] %vm1593, %v1464
  %1607 = vst.msk [vmem:[%s6 + $0x68] sm:$0xff] %vm1593, %v1466
  %1608 = vst.msk [vmem:[%s6 + $0x70] sm:$0xff] %vm1593, %v1469
  %1609 = vst.msk [vmem:[%s6 + $0x78] sm:$0xff] %vm1593, %v1471
  %1610 = vst.msk [vmem:[%s6 + $0x80] sm:$0xff] %vm1593, %v1474
  %1611 = vst.msk [vmem:[%s6 + $0x88] sm:$0xff] %vm1593, %v1476
  %1612 = vst.msk [vmem:[%s6 + $0x90] sm:$0xff] %vm1593, %v1479
  %1613 = vst.msk [vmem:[%s6 + $0x98] sm:$0xff] %vm1593, %v1481
  %1614 = vst.msk [vmem:[%s6 + $0xa0] sm:$0xff] %vm1593, %v1484
  %1615 = vst.msk [vmem:[%s6 + $0xa8] sm:$0xff] %vm1593, %v1486
  %1616 = vst.msk [vmem:[%s6 + $0xb0] sm:$0xff] %vm1593, %v1489
  %1617 = vst.msk [vmem:[%s6 + $0xb8] sm:$0xff] %vm1593, %v1491
  %1618 = vst.msk [vmem:[%s6 + $0xc0] sm:$0xff] %vm1593, %v1494
  %1619 = vst.msk [vmem:[%s6 + $0xc8] sm:$0xff] %vm1593, %v1496
  %1620 = vst.msk [vmem:[%s6 + $0xd0] sm:$0xff] %vm1593, %v1499
  %1621 = vst.msk [vmem:[%s6 + $0xd8] sm:$0xff] %vm1593, %v1501
  %1622 = vst.msk [vmem:[%s6 + $0xe0] sm:$0xff] %vm1593, %v1504
  %1623 = vst.msk [vmem:[%s6 + $0xe8] sm:$0xff] %vm1593, %v1506
  %1624 = vst.msk [vmem:[%s6 + $0xf0] sm:$0xff] %vm1593, %v1509
  %1625 = vst.msk [vmem:[%s6 + $0xf8] sm:$0xff] %vm1593, %v1511
  %1626 = vst.msk [vmem:[%s6 + $0x100] sm:$0xff] %vm1593, %v1514
  %1627 = vst.msk [vmem:[%s6 + $0x108] sm:$0xff] %vm1593, %v1516
  %1628 = vst.msk [vmem:[%s6 + $0x110] sm:$0xff] %vm1593, %v1519
  %1629 = vst.msk [vmem:[%s6 + $0x118] sm:$0xff] %vm1593, %v1521
  %1630 = vst.msk [vmem:[%s6 + $0x120] sm:$0xff] %vm1593, %v1524
  %1631 = vst.msk [vmem:[%s6 + $0x128] sm:$0xff] %vm1593, %v1526
  %1632 = vst.msk [vmem:[%s6 + $0x130] sm:$0xff] %vm1593, %v1529
  %1633 = vst.msk [vmem:[%s6 + $0x138] sm:$0xff] %vm1593, %v1531
  %1634 = vst.msk [vmem:[%s6 + $0x140] sm:$0xff] %vm1593, %v1534
  %1635 = vst.msk [vmem:[%s6 + $0x148] sm:$0xff] %vm1593, %v1536
  %1636 = vst.msk [vmem:[%s6 + $0x150] sm:$0xff] %vm1593, %v1539
  %1637 = vst.msk [vmem:[%s6 + $0x158] sm:$0xff] %vm1593, %v1541
  %1638 = vst.msk [vmem:[%s6 + $0x160] sm:$0xff] %vm1593, %v1544
  %1639 = vst.msk [vmem:[%s6 + $0x168] sm:$0xff] %vm1593, %v1546
  %1640 = vst.msk [vmem:[%s6 + $0x170] sm:$0xff] %vm1593, %v1549
  %1641 = vst.msk [vmem:[%s6 + $0x178] sm:$0xff] %vm1593, %v1551
  %1642 = vst.msk [vmem:[%s6 + $0x180] sm:$0xff] %vm1593, %v1554
  %1643 = vst.msk [vmem:[%s6 + $0x188] sm:$0xff] %vm1593, %v1556
  %1644 = vst.msk [vmem:[%s6 + $0x190] sm:$0xff] %vm1593, %v1559
  %1645 = vst.msk [vmem:[%s6 + $0x198] sm:$0xff] %vm1593, %v1561
  %1646 = vst.msk [vmem:[%s6 + $0x1a0] sm:$0xff] %vm1593, %v1564
  %1647 = vst.msk [vmem:[%s6 + $0x1a8] sm:$0xff] %vm1593, %v1566
  %1648 = vst.msk [vmem:[%s6 + $0x1b0] sm:$0xff] %vm1593, %v1569
  %1649 = vst.msk [vmem:[%s6 + $0x1b8] sm:$0xff] %vm1593, %v1571
  %1650 = vst.msk [vmem:[%s6 + $0x1c0] sm:$0xff] %vm1593, %v1574
  %1651 = vst.msk [vmem:[%s6 + $0x1c8] sm:$0xff] %vm1593, %v1576
  %1652 = vst.msk [vmem:[%s6 + $0x1d0] sm:$0xff] %vm1593, %v1579
  %1653 = vst.msk [vmem:[%s6 + $0x1d8] sm:$0xff] %vm1593, %v1581
  %1654 = vst.msk [vmem:[%s6 + $0x1e0] sm:$0xff] %vm1593, %v1584
  %1655 = vst.msk [vmem:[%s6 + $0x1e8] sm:$0xff] %vm1593, %v1586
  %1656 = vst.msk [vmem:[%s6 + $0x1f0] sm:$0xff] %vm1593, %v1589
  %1657 = vst.msk [vmem:[%s6 + $0x1f8] sm:$0xff] %vm1593, %v1591
  %v1658 = vsel %vm1593, %v1434, 0.0
  %v1659 = vsel %vm1593, %v1436, 0.0
  %v1660 = vadd.f32 %v1658, %v1659
  %v1661 = vsel %vm1593, %v1439, 0.0
  %v1662 = vadd.f32 %v1660, %v1661
  %v1663 = vsel %vm1593, %v1441, 0.0
  %v1664 = vadd.f32 %v1662, %v1663
  %v1665 = vsel %vm1593, %v1444, 0.0
  %v1666 = vadd.f32 %v1664, %v1665
  %v1667 = vsel %vm1593, %v1446, 0.0
  %v1668 = vadd.f32 %v1666, %v1667
  %v1669 = vsel %vm1593, %v1449, 0.0
  %v1670 = vadd.f32 %v1668, %v1669
  %v1671 = vsel %vm1593, %v1451, 0.0
  %v1672 = vadd.f32 %v1670, %v1671
  %v1673 = vsel %vm1593, %v1454, 0.0
  %v1674 = vadd.f32 %v1672, %v1673
  %v1675 = vsel %vm1593, %v1456, 0.0
  %v1676 = vadd.f32 %v1674, %v1675
  %v1677 = vsel %vm1593, %v1459, 0.0
  %v1678 = vadd.f32 %v1676, %v1677
  %v1679 = vsel %vm1593, %v1461, 0.0
  %v1680 = vadd.f32 %v1678, %v1679
  %v1681 = vsel %vm1593, %v1464, 0.0
  %v1682 = vadd.f32 %v1680, %v1681
  %v1683 = vsel %vm1593, %v1466, 0.0
  %v1684 = vadd.f32 %v1682, %v1683
  %v1685 = vsel %vm1593, %v1469, 0.0
  %v1686 = vadd.f32 %v1684, %v1685
  %v1687 = vsel %vm1593, %v1471, 0.0
  %v1688 = vadd.f32 %v1686, %v1687
  %v1689 = vsel %vm1593, %v1474, 0.0
  %v1690 = vadd.f32 %v1688, %v1689
  %v1691 = vsel %vm1593, %v1476, 0.0
  %v1692 = vadd.f32 %v1690, %v1691
  %v1693 = vsel %vm1593, %v1479, 0.0
  %v1694 = vadd.f32 %v1692, %v1693
  %v1695 = vsel %vm1593, %v1481, 0.0
  %v1696 = vadd.f32 %v1694, %v1695
  %v1697 = vsel %vm1593, %v1484, 0.0
  %v1698 = vadd.f32 %v1696, %v1697
  %v1699 = vsel %vm1593, %v1486, 0.0
  %v1700 = vadd.f32 %v1698, %v1699
  %v1701 = vsel %vm1593, %v1489, 0.0
  %v1702 = vadd.f32 %v1700, %v1701
  %v1703 = vsel %vm1593, %v1491, 0.0
  %v1704 = vadd.f32 %v1702, %v1703
  %v1705 = vsel %vm1593, %v1494, 0.0
  %v1706 = vadd.f32 %v1704, %v1705
  %v1707 = vsel %vm1593, %v1496, 0.0
  %v1708 = vadd.f32 %v1706, %v1707
  %v1709 = vsel %vm1593, %v1499, 0.0
  %v1710 = vadd.f32 %v1708, %v1709
  %v1711 = vsel %vm1593, %v1501, 0.0
  %v1712 = vadd.f32 %v1710, %v1711
  %v1713 = vsel %vm1593, %v1504, 0.0
  %v1714 = vadd.f32 %v1712, %v1713
  %v1715 = vsel %vm1593, %v1506, 0.0
  %v1716 = vadd.f32 %v1714, %v1715
  %v1717 = vsel %vm1593, %v1509, 0.0
  %v1718 = vadd.f32 %v1716, %v1717
  %v1719 = vsel %vm1593, %v1511, 0.0
  %v1720 = vadd.f32 %v1718, %v1719
  %v1721 = vsel %vm1593, %v1514, 0.0
  %v1722 = vadd.f32 %v1720, %v1721
  %v1723 = vsel %vm1593, %v1516, 0.0
  %v1724 = vadd.f32 %v1722, %v1723
  %v1725 = vsel %vm1593, %v1519, 0.0
  %v1726 = vadd.f32 %v1724, %v1725
  %v1727 = vsel %vm1593, %v1521, 0.0
  %v1728 = vadd.f32 %v1726, %v1727
  %v1729 = vsel %vm1593, %v1524, 0.0
  %v1730 = vadd.f32 %v1728, %v1729
  %v1731 = vsel %vm1593, %v1526, 0.0
  %v1732 = vadd.f32 %v1730, %v1731
  %v1733 = vsel %vm1593, %v1529, 0.0
  %v1734 = vadd.f32 %v1732, %v1733
  %v1735 = vsel %vm1593, %v1531, 0.0
  %v1736 = vadd.f32 %v1734, %v1735
  %v1737 = vsel %vm1593, %v1534, 0.0
  %v1738 = vadd.f32 %v1736, %v1737
  %v1739 = vsel %vm1593, %v1536, 0.0
  %v1740 = vadd.f32 %v1738, %v1739
  %v1741 = vsel %vm1593, %v1539, 0.0
  %v1742 = vadd.f32 %v1740, %v1741
  %v1743 = vsel %vm1593, %v1541, 0.0
  %v1744 = vadd.f32 %v1742, %v1743
  %v1745 = vsel %vm1593, %v1544, 0.0
  %v1746 = vadd.f32 %v1744, %v1745
  %v1747 = vsel %vm1593, %v1546, 0.0
  %v1748 = vadd.f32 %v1746, %v1747
  %v1749 = vsel %vm1593, %v1549, 0.0
  %v1750 = vadd.f32 %v1748, %v1749
  %v1751 = vsel %vm1593, %v1551, 0.0
  %v1752 = vadd.f32 %v1750, %v1751
  %v1753 = vsel %vm1593, %v1554, 0.0
  %v1754 = vadd.f32 %v1752, %v1753
  %v1755 = vsel %vm1593, %v1556, 0.0
  %v1756 = vadd.f32 %v1754, %v1755
  %v1757 = vsel %vm1593, %v1559, 0.0
  %v1758 = vadd.f32 %v1756, %v1757
  %v1759 = vsel %vm1593, %v1561, 0.0
  %v1760 = vadd.f32 %v1758, %v1759
  %v1761 = vsel %vm1593, %v1564, 0.0
  %v1762 = vadd.f32 %v1760, %v1761
  %v1763 = vsel %vm1593, %v1566, 0.0
  %v1764 = vadd.f32 %v1762, %v1763
  %v1765 = vsel %vm1593, %v1569, 0.0
  %v1766 = vadd.f32 %v1764, %v1765
  %v1767 = vsel %vm1593, %v1571, 0.0
  %v1768 = vadd.f32 %v1766, %v1767
  %v1769 = vsel %vm1593, %v1574, 0.0
  %v1770 = vadd.f32 %v1768, %v1769
  %v1771 = vsel %vm1593, %v1576, 0.0
  %v1772 = vadd.f32 %v1770, %v1771
  %v1773 = vsel %vm1593, %v1579, 0.0
  %v1774 = vadd.f32 %v1772, %v1773
  %v1775 = vsel %vm1593, %v1581, 0.0
  %v1776 = vadd.f32 %v1774, %v1775
  %v1777 = vsel %vm1593, %v1584, 0.0
  %v1778 = vadd.f32 %v1776, %v1777
  %v1779 = vsel %vm1593, %v1586, 0.0
  %v1780 = vadd.f32 %v1778, %v1779
  %v1781 = vsel %vm1593, %v1589, 0.0
  %v1782 = vadd.f32 %v1780, %v1781
  %v1783 = vsel %vm1593, %v1591, 0.0
  %v1784 = vadd.f32 %v1782, %v1783
  %v1785 = vrot.slane %v1784, 4
  %v1786 = vadd.f32 %v1784, %v1785
  %v1787 = vrot.slane %v1786, 2
  %v1788 = vadd.f32 %v1786, %v1787
  %v1789 = vrot.slane %v1788, 1
  %v1790 = vadd.f32 %v1788, %v1789
  %vm1791 = vcmask 122880
  %1792 = vst.msk [vmem:[%s7] sm:$0x1] %vm1791, %v1790
  %v1793 = vmul.f32 %v1434, %v1434
  %v1794 = vmul.f32 %v1436, %v1436
  %v1795 = vmul.f32 %v1439, %v1439
  %v1796 = vmul.f32 %v1441, %v1441
  %v1797 = vmul.f32 %v1444, %v1444
  %v1798 = vmul.f32 %v1446, %v1446
  %v1799 = vmul.f32 %v1449, %v1449
  %v1800 = vmul.f32 %v1451, %v1451
  %v1801 = vmul.f32 %v1454, %v1454
  %v1802 = vmul.f32 %v1456, %v1456
  %v1803 = vmul.f32 %v1459, %v1459
  %v1804 = vmul.f32 %v1461, %v1461
  %v1805 = vmul.f32 %v1464, %v1464
  %v1806 = vmul.f32 %v1466, %v1466
  %v1807 = vmul.f32 %v1469, %v1469
  %v1808 = vmul.f32 %v1471, %v1471
  %v1809 = vmul.f32 %v1474, %v1474
  %v1810 = vmul.f32 %v1476, %v1476
  %v1811 = vmul.f32 %v1479, %v1479
  %v1812 = vmul.f32 %v1481, %v1481
  %v1813 = vmul.f32 %v1484, %v1484
  %v1814 = vmul.f32 %v1486, %v1486
  %v1815 = vmul.f32 %v1489, %v1489
  %v1816 = vmul.f32 %v1491, %v1491
  %v1817 = vmul.f32 %v1494, %v1494
  %v1818 = vmul.f32 %v1496, %v1496
  %v1819 = vmul.f32 %v1499, %v1499
  %v1820 = vmul.f32 %v1501, %v1501
  %v1821 = vmul.f32 %v1504, %v1504
  %v1822 = vmul.f32 %v1506, %v1506
  %v1823 = vmul.f32 %v1509, %v1509
  %v1824 = vmul.f32 %v1511, %v1511
  %v1825 = vmul.f32 %v1514, %v1514
  %v1826 = vmul.f32 %v1516, %v1516
  %v1827 = vmul.f32 %v1519, %v1519
  %v1828 = vmul.f32 %v1521, %v1521
  %v1829 = vmul.f32 %v1524, %v1524
  %v1830 = vmul.f32 %v1526, %v1526
  %v1831 = vmul.f32 %v1529, %v1529
  %v1832 = vmul.f32 %v1531, %v1531
  %v1833 = vmul.f32 %v1534, %v1534
  %v1834 = vmul.f32 %v1536, %v1536
  %v1835 = vmul.f32 %v1539, %v1539
  %v1836 = vmul.f32 %v1541, %v1541
  %v1837 = vmul.f32 %v1544, %v1544
  %v1838 = vmul.f32 %v1546, %v1546
  %v1839 = vmul.f32 %v1549, %v1549
  %v1840 = vmul.f32 %v1551, %v1551
  %v1841 = vmul.f32 %v1554, %v1554
  %v1842 = vmul.f32 %v1556, %v1556
  %v1843 = vmul.f32 %v1559, %v1559
  %v1844 = vmul.f32 %v1561, %v1561
  %v1845 = vmul.f32 %v1564, %v1564
  %v1846 = vmul.f32 %v1566, %v1566
  %v1847 = vmul.f32 %v1569, %v1569
  %v1848 = vmul.f32 %v1571, %v1571
  %v1849 = vmul.f32 %v1574, %v1574
  %v1850 = vmul.f32 %v1576, %v1576
  %v1851 = vmul.f32 %v1579, %v1579
  %v1852 = vmul.f32 %v1581, %v1581
  %v1853 = vmul.f32 %v1584, %v1584
  %v1854 = vmul.f32 %v1586, %v1586
  %v1855 = vmul.f32 %v1589, %v1589
  %v1856 = vmul.f32 %v1591, %v1591
  %v1857 = vsel %vm1593, %v1793, 0.0
  %v1858 = vsel %vm1593, %v1794, 0.0
  %v1859 = vadd.f32 %v1857, %v1858
  %v1860 = vsel %vm1593, %v1795, 0.0
  %v1861 = vadd.f32 %v1859, %v1860
  %v1862 = vsel %vm1593, %v1796, 0.0
  %v1863 = vadd.f32 %v1861, %v1862
  %v1864 = vsel %vm1593, %v1797, 0.0
  %v1865 = vadd.f32 %v1863, %v1864
  %v1866 = vsel %vm1593, %v1798, 0.0
  %v1867 = vadd.f32 %v1865, %v1866
  %v1868 = vsel %vm1593, %v1799, 0.0
  %v1869 = vadd.f32 %v1867, %v1868
  %v1870 = vsel %vm1593, %v1800, 0.0
  %v1871 = vadd.f32 %v1869, %v1870
  %v1872 = vsel %vm1593, %v1801, 0.0
  %v1873 = vadd.f32 %v1871, %v1872
  %v1874 = vsel %vm1593, %v1802, 0.0
  %v1875 = vadd.f32 %v1873, %v1874
  %v1876 = vsel %vm1593, %v1803, 0.0
  %v1877 = vadd.f32 %v1875, %v1876
  %v1878 = vsel %vm1593, %v1804, 0.0
  %v1879 = vadd.f32 %v1877, %v1878
  %v1880 = vsel %vm1593, %v1805, 0.0
  %v1881 = vadd.f32 %v1879, %v1880
  %v1882 = vsel %vm1593, %v1806, 0.0
  %v1883 = vadd.f32 %v1881, %v1882
  %v1884 = vsel %vm1593, %v1807, 0.0
  %v1885 = vadd.f32 %v1883, %v1884
  %v1886 = vsel %vm1593, %v1808, 0.0
  %v1887 = vadd.f32 %v1885, %v1886
  %v1888 = vsel %vm1593, %v1809, 0.0
  %v1889 = vadd.f32 %v1887, %v1888
  %v1890 = vsel %vm1593, %v1810, 0.0
  %v1891 = vadd.f32 %v1889, %v1890
  %v1892 = vsel %vm1593, %v1811, 0.0
  %v1893 = vadd.f32 %v1891, %v1892
  %v1894 = vsel %vm1593, %v1812, 0.0
  %v1895 = vadd.f32 %v1893, %v1894
  %v1896 = vsel %vm1593, %v1813, 0.0
  %v1897 = vadd.f32 %v1895, %v1896
  %v1898 = vsel %vm1593, %v1814, 0.0
  %v1899 = vadd.f32 %v1897, %v1898
  %v1900 = vsel %vm1593, %v1815, 0.0
  %v1901 = vadd.f32 %v1899, %v1900
  %v1902 = vsel %vm1593, %v1816, 0.0
  %v1903 = vadd.f32 %v1901, %v1902
  %v1904 = vsel %vm1593, %v1817, 0.0
  %v1905 = vadd.f32 %v1903, %v1904
  %v1906 = vsel %vm1593, %v1818, 0.0
  %v1907 = vadd.f32 %v1905, %v1906
  %v1908 = vsel %vm1593, %v1819, 0.0
  %v1909 = vadd.f32 %v1907, %v1908
  %v1910 = vsel %vm1593, %v1820, 0.0
  %v1911 = vadd.f32 %v1909, %v1910
  %v1912 = vsel %vm1593, %v1821, 0.0
  %v1913 = vadd.f32 %v1911, %v1912
  %v1914 = vsel %vm1593, %v1822, 0.0
  %v1915 = vadd.f32 %v1913, %v1914
  %v1916 = vsel %vm1593, %v1823, 0.0
  %v1917 = vadd.f32 %v1915, %v1916
  %v1918 = vsel %vm1593, %v1824, 0.0
  %v1919 = vadd.f32 %v1917, %v1918
  %v1920 = vsel %vm1593, %v1825, 0.0
  %v1921 = vadd.f32 %v1919, %v1920
  %v1922 = vsel %vm1593, %v1826, 0.0
  %v1923 = vadd.f32 %v1921, %v1922
  %v1924 = vsel %vm1593, %v1827, 0.0
  %v1925 = vadd.f32 %v1923, %v1924
  %v1926 = vsel %vm1593, %v1828, 0.0
  %v1927 = vadd.f32 %v1925, %v1926
  %v1928 = vsel %vm1593, %v1829, 0.0
  %v1929 = vadd.f32 %v1927, %v1928
  %v1930 = vsel %vm1593, %v1830, 0.0
  %v1931 = vadd.f32 %v1929, %v1930
  %v1932 = vsel %vm1593, %v1831, 0.0
  %v1933 = vadd.f32 %v1931, %v1932
  %v1934 = vsel %vm1593, %v1832, 0.0
  %v1935 = vadd.f32 %v1933, %v1934
  %v1936 = vsel %vm1593, %v1833, 0.0
  %v1937 = vadd.f32 %v1935, %v1936
  %v1938 = vsel %vm1593, %v1834, 0.0
  %v1939 = vadd.f32 %v1937, %v1938
  %v1940 = vsel %vm1593, %v1835, 0.0
  %v1941 = vadd.f32 %v1939, %v1940
  %v1942 = vsel %vm1593, %v1836, 0.0
  %v1943 = vadd.f32 %v1941, %v1942
  %v1944 = vsel %vm1593, %v1837, 0.0
  %v1945 = vadd.f32 %v1943, %v1944
  %v1946 = vsel %vm1593, %v1838, 0.0
  %v1947 = vadd.f32 %v1945, %v1946
  %v1948 = vsel %vm1593, %v1839, 0.0
  %v1949 = vadd.f32 %v1947, %v1948
  %v1950 = vsel %vm1593, %v1840, 0.0
  %v1951 = vadd.f32 %v1949, %v1950
  %v1952 = vsel %vm1593, %v1841, 0.0
  %v1953 = vadd.f32 %v1951, %v1952
  %v1954 = vsel %vm1593, %v1842, 0.0
  %v1955 = vadd.f32 %v1953, %v1954
  %v1956 = vsel %vm1593, %v1843, 0.0
  %v1957 = vadd.f32 %v1955, %v1956
  %v1958 = vsel %vm1593, %v1844, 0.0
  %v1959 = vadd.f32 %v1957, %v1958
  %v1960 = vsel %vm1593, %v1845, 0.0
  %v1961 = vadd.f32 %v1959, %v1960
  %v1962 = vsel %vm1593, %v1846, 0.0
  %v1963 = vadd.f32 %v1961, %v1962
  %v1964 = vsel %vm1593, %v1847, 0.0
  %v1965 = vadd.f32 %v1963, %v1964
  %v1966 = vsel %vm1593, %v1848, 0.0
  %v1967 = vadd.f32 %v1965, %v1966
  %v1968 = vsel %vm1593, %v1849, 0.0
  %v1969 = vadd.f32 %v1967, %v1968
  %v1970 = vsel %vm1593, %v1850, 0.0
  %v1971 = vadd.f32 %v1969, %v1970
  %v1972 = vsel %vm1593, %v1851, 0.0
  %v1973 = vadd.f32 %v1971, %v1972
  %v1974 = vsel %vm1593, %v1852, 0.0
  %v1975 = vadd.f32 %v1973, %v1974
  %v1976 = vsel %vm1593, %v1853, 0.0
  %v1977 = vadd.f32 %v1975, %v1976
  %v1978 = vsel %vm1593, %v1854, 0.0
  %v1979 = vadd.f32 %v1977, %v1978
  %v1980 = vsel %vm1593, %v1855, 0.0
  %v1981 = vadd.f32 %v1979, %v1980
  %v1982 = vsel %vm1593, %v1856, 0.0
  %v1983 = vadd.f32 %v1981, %v1982
  %v1984 = vrot.slane %v1983, 4
  %v1985 = vadd.f32 %v1983, %v1984
  %v1986 = vrot.slane %v1985, 2
  %v1987 = vadd.f32 %v1985, %v1986
  %v1988 = vrot.slane %v1987, 1
  %v1989 = vadd.f32 %v1987, %v1988
  %1990 = vst.msk [vmem:[%s7 + $0x1] sm:$0x1] %vm1791, %v1989
  // Predicated region
  $region26: #{_lambda_.10} parent=0 // pred_check
    _
  $region27: #{_lambda_.10} parent=0 // pred_check_branch
    %1992 = sbr.rel (0) target = $region29
  $region28: #{_lambda_.10} parent=0 // pred_region
    _
  $region29: #{_lambda_.10} parent=0 // pred_fallthru
    _
  // Predicated region
  $region30: #{_lambda_.10} parent=0 // pred_check
    _
  $region31: #{_lambda_.10} parent=0 // pred_check_branch
    %1994 = sbr.rel (0) target = $region33
  $region32: #{_lambda_.10} parent=0 // pred_region
    _
  $region33: #{_lambda_.10} parent=0 // pred_fallthru
    _
  // Predicated region
  $region34: #{_lambda_.10} parent=0 // pred_check
    _
  $region35: #{_lambda_.10} parent=0 // pred_check_branch
    %1996 = sbr.rel (0) target = $region37
  $region36: #{_lambda_.10} parent=0 // pred_region
    _
  $region37: #{_lambda_.10} parent=0 // pred_fallthru
    _
  // Predicated region
  $region38: #{_lambda_.10} parent=0 // pred_check
    _
  $region39: #{_lambda_.10} parent=0 // pred_check_branch
    %1998 = sbr.rel (0) target = $region41
  $region40: #{_lambda_.10} parent=0 // pred_region
    _
  $region41: #{_lambda_.10} parent=0 // pred_fallthru
    _

// kernel: _lambda_.7
$region0: #{_lambda_.7}
  #allocation0 [shape = 'u32[]', space=smem, size = 0x4, offset = 0x4, fixed_abs, tag = 'smem constant byte address 0x4 - core index']
  #allocation1 [shape = 'u32[72,128]{1,0:T(1,128)}', space=vmem, size = 0x9000, scoped, tag = 'internal scratch']
  #allocation2 [shape = 'bf16[20,32,16]{2,1,0:T(8,128)(2,1)}', space=vmem, size = 0x28000, scoped, tag = 'scratch operand']
  %s0 = inlined_call_operand.vmem [shape: f32[512,16], index: 0, kind: input, shape index: {}]
  %s1 = inlined_call_operand.vmem [shape: f32[1,16], index: 1, kind: input, shape index: {}]
  %s2 = inlined_call_operand.vmem [shape: f32[1,16], index: 2, kind: input, shape index: {}]
  %s3 = inlined_call_operand.vmem [shape: bf16[3,3,16,4], index: 3, kind: input, shape index: {}]
  %s4 = inlined_call_operand.vmem [shape: bf16[512,4], index: 4, kind: output, shape index: {0}]
  %s5 = inlined_call_operand.vmem [shape: f32[2,2,4], index: 5, kind: output, shape index: {1}]
  %6 = xla_tuple %s4, %s5
  %s7 = sld [smem:[#allocation0]]
  $region57: #{_lambda_.7} parent=0
    _
  %s9 = ssub.s32 1, %s7
  %s10 = scalar_select 0, %s9, %s7
  loop: start=0, step=1, limit=4
  $region2: #{_lambda_.7} parent=0 // loop_pre_header
    _
  $region3: #{_lambda_.7} parent=0 // loop_header
    %s12 = sphi 0, %s16
    %p13 = scmp.ge.s32.totalorder %s12, 4
    %s22 = sphi 0, %s24
    %s25 = sphi 0, %s22
    %s26 = sphi 0, %s25
    %s42 = sphi 0, %s26
    %s46 = sphi 0, %s46
    %s48 = sphi 0, %s46
    %s49 = sphi 0, %s48
    %s63 = sphi 0, %s49
    %s67 = sphi 0, %s67
    %s69 = sphi 0, %s67
    %s70 = sphi 0, %s69
    %s84 = sphi 0, %s70
    %s88 = sphi 0, %s88
    %s90 = sphi 0, %s88
    %s91 = sphi 0, %s90
    %s105 = sphi 0, %s91
    %s111 = sphi 0, %s113
    %s114 = sphi 0, %s111
    %s115 = sphi 0, %s114
    %s131 = sphi 0, %s115
    %s137 = sphi 0, %s139
    %s140 = sphi 0, %s137
    %s141 = sphi 0, %s140
    %s157 = sphi 0, %s141
  $region4: #{_lambda_.7} parent=0 // loop_header_branch
    %15 = sbr.rel (%p13) target = $region8
  $region5: #{_lambda_.7} parent=0 // loop_body
    %s17 = ssub.s32 %s12, 1
    %s18 = ssub.s32 %s12, 2
    %s19 = sadd.s32 %s12, 1
    %s20 = ssub.s32 %s12, %s19
    %p21 = scmp.eq.s32.totalorder %s20, 0
    %s23 = sadd.s32 %s22, 1
    %s24 = scalar_select %p21, %s22, %s23
    %p27 = pneg %p21
    %p28 = scmp.eq.s32.totalorder %s12, 1
    %p29 = por %p27, %p28
    %p30 = scmp.ne.s32.totalorder %s22, %s25
    %p31 = scmp.eq.s32.totalorder %s12, 0
    %p32 = por %p30, %p31
    %p33 = scmp.ne.s32.totalorder %s22, %s25
    %p34 = scmp.eq.s32.totalorder %s17, 1
    %p35 = por %p33, %p34
    %p36 = scmp.ne.s32.totalorder %s25, %s26
    %p37 = scmp.eq.s32.totalorder %s17, 0
    %p38 = por %p36, %p37
    %p39 = scmp.ne.s32.totalorder %s25, %s26
    %p40 = scmp.eq.s32.totalorder %s18, 1
    %p41 = por %p39, %p40
    %p43 = scmp.ne.s32.totalorder %s26, %s42
    %p44 = scmp.eq.s32.totalorder %s18, 0
    %p45 = por %p43, %p44
    %s47 = sadd.s32 %s46, 1
    %p50 = scmp.eq.s32.totalorder %s12, 1
    %p51 = scmp.ne.s32.totalorder %s46, %s48
    %p52 = scmp.eq.s32.totalorder %s12, 0
    %p53 = por %p51, %p52
    %p54 = scmp.ne.s32.totalorder %s46, %s48
    %p55 = scmp.eq.s32.totalorder %s17, 1
    %p56 = por %p54, %p55
    %p57 = scmp.ne.s32.totalorder %s48, %s49
    %p58 = scmp.eq.s32.totalorder %s17, 0
    %p59 = por %p57, %p58
    %p60 = scmp.ne.s32.totalorder %s48, %s49
    %p61 = scmp.eq.s32.totalorder %s18, 1
    %p62 = por %p60, %p61
    %p64 = scmp.ne.s32.totalorder %s49, %s63
    %p65 = scmp.eq.s32.totalorder %s18, 0
    %p66 = por %p64, %p65
    %s68 = sadd.s32 %s67, 1
    %p71 = scmp.eq.s32.totalorder %s12, 1
    %p72 = scmp.ne.s32.totalorder %s67, %s69
    %p73 = scmp.eq.s32.totalorder %s12, 0
    %p74 = por %p72, %p73
    %p75 = scmp.ne.s32.totalorder %s67, %s69
    %p76 = scmp.eq.s32.totalorder %s17, 1
    %p77 = por %p75, %p76
    %p78 = scmp.ne.s32.totalorder %s69, %s70
    %p79 = scmp.eq.s32.totalorder %s17, 0
    %p80 = por %p78, %p79
    %p81 = scmp.ne.s32.totalorder %s69, %s70
    %p82 = scmp.eq.s32.totalorder %s18, 1
    %p83 = por %p81, %p82
    %p85 = scmp.ne.s32.totalorder %s70, %s84
    %p86 = scmp.eq.s32.totalorder %s18, 0
    %p87 = por %p85, %p86
    %s89 = sadd.s32 %s88, 1
    %p92 = scmp.eq.s32.totalorder %s12, 1
    %p93 = scmp.ne.s32.totalorder %s88, %s90
    %p94 = scmp.eq.s32.totalorder %s12, 0
    %p95 = por %p93, %p94
    %p96 = scmp.ne.s32.totalorder %s88, %s90
    %p97 = scmp.eq.s32.totalorder %s17, 1
    %p98 = por %p96, %p97
    %p99 = scmp.ne.s32.totalorder %s90, %s91
    %p100 = scmp.eq.s32.totalorder %s17, 0
    %p101 = por %p99, %p100
    %p102 = scmp.ne.s32.totalorder %s90, %s91
    %p103 = scmp.eq.s32.totalorder %s18, 1
    %p104 = por %p102, %p103
    %p106 = scmp.ne.s32.totalorder %s91, %s105
    %p107 = scmp.eq.s32.totalorder %s18, 0
    %p108 = por %p106, %p107
    %s109 = ssub.s32 %s12, %s19
    %p110 = scmp.eq.s32.totalorder %s109, 0
    %s112 = sadd.s32 %s111, 1
    %s113 = scalar_select %p110, %s111, %s112
    %p116 = pneg %p110
    %p117 = scmp.eq.s32.totalorder %s12, 1
    %p118 = por %p116, %p117
    %p119 = scmp.ne.s32.totalorder %s111, %s114
    %p120 = scmp.eq.s32.totalorder %s12, 0
    %p121 = por %p119, %p120
    %p122 = scmp.ne.s32.totalorder %s111, %s114
    %p123 = scmp.eq.s32.totalorder %s17, 1
    %p124 = por %p122, %p123
    %p125 = scmp.ne.s32.totalorder %s114, %s115
    %p126 = scmp.eq.s32.totalorder %s17, 0
    %p127 = por %p125, %p126
    %p128 = scmp.ne.s32.totalorder %s114, %s115
    %p129 = scmp.eq.s32.totalorder %s18, 1
    %p130 = por %p128, %p129
    %p132 = scmp.ne.s32.totalorder %s115, %s131
    %p133 = scmp.eq.s32.totalorder %s18, 0
    %p134 = por %p132, %p133
    %s135 = ssub.s32 %s12, %s19
    %p136 = scmp.eq.s32.totalorder %s135, 0
    %s138 = sadd.s32 %s137, 1
    %s139 = scalar_select %p136, %s137, %s138
    %p142 = pneg %p136
    %p143 = scmp.eq.s32.totalorder %s12, 1
    %p144 = por %p142, %p143
    %p145 = scmp.ne.s32.totalorder %s137, %s140
    %p146 = scmp.eq.s32.totalorder %s12, 0
    %p147 = por %p145, %p146
    %p148 = scmp.ne.s32.totalorder %s137, %s140
    %p149 = scmp.eq.s32.totalorder %s17, 1
    %p150 = por %p148, %p149
    %p151 = scmp.ne.s32.totalorder %s140, %s141
    %p152 = scmp.eq.s32.totalorder %s17, 0
    %p153 = por %p151, %p152
    %p154 = scmp.ne.s32.totalorder %s140, %s141
    %p155 = scmp.eq.s32.totalorder %s18, 1
    %p156 = por %p154, %p155
    %p158 = scmp.ne.s32.totalorder %s141, %s157
    %p159 = scmp.eq.s32.totalorder %s18, 0
    %p160 = por %p158, %p159
    %p161 = scmp.le.s32.totalorder 1, %s12
    %p162 = scmp.lt.s32.totalorder %s12, 3
    %p163 = pnand %p161, %p162
    %p164 = pneg %p163
    // Predicated region
    $region9: #{_lambda_.7} parent=5 // pred_check
      _
    $region10: #{_lambda_.7} parent=5 // pred_check_branch
      %166 = sbr.rel (%p163) target = $region12
    $region11: #{_lambda_.7} parent=5 // pred_region
      %s167 = ssub.s32 %s12, 1
      // Predicated region
      $region13: #{_lambda_.7} parent=11 // pred_check
        %p168 = pneg %p59
      $region14: #{_lambda_.7} parent=11 // pred_check_branch
        %170 = sbr.rel (%p168) target = $region16
      $region15: #{_lambda_.7} parent=11 // pred_region
        _
      $region16: #{_lambda_.7} parent=11 // pred_fallthru
        _
      // Predicated region
      $region17: #{_lambda_.7} parent=11 // pred_check
        %p171 = pneg %p80
      $region18: #{_lambda_.7} parent=11 // pred_check_branch
        %173 = sbr.rel (%p171) target = $region20
      $region19: #{_lambda_.7} parent=11 // pred_region
        _
      $region20: #{_lambda_.7} parent=11 // pred_fallthru
        _
      // Predicated region
      $region21: #{_lambda_.7} parent=11 // pred_check
        %p174 = pneg %p101
      $region22: #{_lambda_.7} parent=11 // pred_check_branch
        %176 = sbr.rel (%p174) target = $region24
      $region23: #{_lambda_.7} parent=11 // pred_region
        _
      $region24: #{_lambda_.7} parent=11 // pred_fallthru
        _
    $region12: #{_lambda_.7} parent=5 // pred_fallthru
      _
    %p177 = scmp.lt.s32.totalorder %s12, 2
    // Predicated region
    $region25: #{_lambda_.7} parent=5 // pred_check
      %p178 = pneg %p177
    $region26: #{_lambda_.7} parent=5 // pred_check_branch
      %180 = sbr.rel (%p178) target = $region28
    $region27: #{_lambda_.7} parent=5 // pred_region
      // Predicated region
      $region29: #{_lambda_.7} parent=27 // pred_check
        %p181 = pneg %p32
      $region30: #{_lambda_.7} parent=27 // pred_check_branch
        %183 = sbr.rel (%p181) target = $region32
      $region31: #{_lambda_.7} parent=27 // pred_region
        %s184 = smul.u32 32, %s12
        %p185 = scmp.lt.s32.totalorder %s184, 63
        %s186 = scalar_select %p185, %s184, 63
        %s187 = smul.addr %s186, 8
        %s188 = scalar_lea.vmem %s0, %s187
        %s189 = smul.u32 32, %s12
      $region32: #{_lambda_.7} parent=27 // pred_fallthru
        _
    $region28: #{_lambda_.7} parent=5 // pred_fallthru
      _
    %p190 = scmp.le.s32.totalorder 1, %s12
    %p191 = scmp.lt.s32.totalorder %s12, 3
    %p192 = pnand %p190, %p191
    %p193 = pneg %p192
    // Predicated region
    $region33: #{_lambda_.7} parent=5 // pred_check
      _
    $region34: #{_lambda_.7} parent=5 // pred_check_branch
      %195 = sbr.rel (%p192) target = $region36
    $region35: #{_lambda_.7} parent=5 // pred_region
      %s196 = ssub.s32 %s12, 1
      %s197 = smul.u32 32, %s17
      %p198 = scmp.lt.s32.totalorder %s197, 63
      %s199 = scalar_select %p198, %s197, 63
      %s200 = smul.addr %s199, 8
      %s201 = scalar_lea.vmem %s0, %s200
      %p202 = pneg %p38
      %p203 = pneg %p35
      %p204 = pneg %p59
      %p205 = pneg %p56
      %p206 = pneg %p80
      %p207 = pneg %p77
      %p208 = pneg %p101
      %p209 = pneg %p98
      %p210 = pneg %p127
      %p211 = pneg %p124
      %s212 = smul.u32 32, %s17
      %p213 = scmp.lt.s32.totalorder %s212, 63
      %s214 = scalar_select %p213, %s212, 63
      %s215 = smul.addr %s214, 4
      %s216 = scalar_lea.vmem %s4, %s215
      %p217 = pneg %p153
      %p218 = pneg %p150
      %p219 = scmp.lt.s32.totalorder %s17, 1
      %s220 = scalar_select %p219, %s17, 1
      %s221 = smul.addr %s220, 2
      %s222 = scalar_lea.vmem %s5, %s221
      %s223 = smul.u32 32, %s17
      %p224 = scmp.lt.s32.totalorder %s223, 63
      %s225 = scalar_select %p224, %s223, 63
      %s226 = smul.addr %s225, 8
      %s227 = scalar_lea.vmem %s0, %s226
      %s228 = smul.u32 32, %s17
      %s229 = smul.u32 32, %s17
      %p230 = scmp.lt.s32.totalorder %s229, 63
      %s231 = scalar_select %p230, %s229, 63
      %s232 = smul.addr %s231, 4
      %s233 = scalar_lea.vmem %s4, %s232
      %s234 = smul.u32 32, %s17
      %p235 = scmp.lt.s32.totalorder %s17, 1
      %s236 = scalar_select %p235, %s17, 1
      %s237 = smul.addr %s236, 2
      %s238 = scalar_lea.vmem %s5, %s237
      %v240 = vld [vmem:[%s227] sm:$0xff]
      %v241 = vld [vmem:[%s227 + $0x8] sm:$0xff]
      %v242 = vld [vmem:[%s227 + $0x10] sm:$0xff]
      %v243 = vld [vmem:[%s227 + $0x18] sm:$0xff]
      %v244 = vld [vmem:[%s227 + $0x20] sm:$0xff]
      %v245 = vld [vmem:[%s227 + $0x28] sm:$0xff]
      %v246 = vld [vmem:[%s227 + $0x30] sm:$0xff]
      %v247 = vld [vmem:[%s227 + $0x38] sm:$0xff]
      %v248 = vld [vmem:[%s227 + $0x40] sm:$0xff]
      %v249 = vld [vmem:[%s227 + $0x48] sm:$0xff]
      %v250 = vld [vmem:[%s227 + $0x50] sm:$0xff]
      %v251 = vld [vmem:[%s227 + $0x58] sm:$0xff]
      %v252 = vld [vmem:[%s227 + $0x60] sm:$0xff]
      %v253 = vld [vmem:[%s227 + $0x68] sm:$0xff]
      %v254 = vld [vmem:[%s227 + $0x70] sm:$0xff]
      %v255 = vld [vmem:[%s227 + $0x78] sm:$0xff]
      %v256 = vld [vmem:[%s227 + $0x80] sm:$0xff]
      %v257 = vld [vmem:[%s227 + $0x88] sm:$0xff]
      %v258 = vld [vmem:[%s227 + $0x90] sm:$0xff]
      %v259 = vld [vmem:[%s227 + $0x98] sm:$0xff]
      %v260 = vld [vmem:[%s227 + $0xa0] sm:$0xff]
      %v261 = vld [vmem:[%s227 + $0xa8] sm:$0xff]
      %v262 = vld [vmem:[%s227 + $0xb0] sm:$0xff]
      %v263 = vld [vmem:[%s227 + $0xb8] sm:$0xff]
      %v264 = vld [vmem:[%s227 + $0xc0] sm:$0xff]
      %v265 = vld [vmem:[%s227 + $0xc8] sm:$0xff]
      %v266 = vld [vmem:[%s227 + $0xd0] sm:$0xff]
      %v267 = vld [vmem:[%s227 + $0xd8] sm:$0xff]
      %v268 = vld [vmem:[%s227 + $0xe0] sm:$0xff]
      %v269 = vld [vmem:[%s227 + $0xe8] sm:$0xff]
      %v270 = vld [vmem:[%s227 + $0xf0] sm:$0xff]
      %v271 = vld [vmem:[%s227 + $0xf8] sm:$0xff]
      %v272 = vld [vmem:[%s1] sm:$0x1]
      %v274 = vperm.slane %v272, 0
      %v276 = vmul.f32 %v240, %v274
      %v277 = vmul.f32 %v241, %v274
      %v278 = vmul.f32 %v242, %v274
      %v279 = vmul.f32 %v243, %v274
      %v280 = vmul.f32 %v244, %v274
      %v281 = vmul.f32 %v245, %v274
      %v282 = vmul.f32 %v246, %v274
      %v283 = vmul.f32 %v247, %v274
      %v284 = vmul.f32 %v248, %v274
      %v285 = vmul.f32 %v249, %v274
      %v286 = vmul.f32 %v250, %v274
      %v287 = vmul.f32 %v251, %v274
      %v288 = vmul.f32 %v252, %v274
      %v289 = vmul.f32 %v253, %v274
      %v290 = vmul.f32 %v254, %v274
      %v291 = vmul.f32 %v255, %v274
      %v292 = vmul.f32 %v256, %v274
      %v293 = vmul.f32 %v257, %v274
      %v294 = vmul.f32 %v258, %v274
      %v295 = vmul.f32 %v259, %v274
      %v296 = vmul.f32 %v260, %v274
      %v297 = vmul.f32 %v261, %v274
      %v298 = vmul.f32 %v262, %v274
      %v299 = vmul.f32 %v263, %v274
      %v300 = vmul.f32 %v264, %v274
      %v301 = vmul.f32 %v265, %v274
      %v302 = vmul.f32 %v266, %v274
      %v303 = vmul.f32 %v267, %v274
      %v304 = vmul.f32 %v268, %v274
      %v305 = vmul.f32 %v269, %v274
      %v306 = vmul.f32 %v270, %v274
      %v307 = vmul.f32 %v271, %v274
      %v308 = vld [vmem:[%s2] sm:$0x1]
      %v310 = vperm.slane %v308, 0
      %v312 = vadd.f32 %v276, %v310
      %v313 = vadd.f32 %v277, %v310
      %v314 = vadd.f32 %v278, %v310
      %v315 = vadd.f32 %v279, %v310
      %v316 = vadd.f32 %v280, %v310
      %v317 = vadd.f32 %v281, %v310
      %v318 = vadd.f32 %v282, %v310
      %v319 = vadd.f32 %v283, %v310
      %v320 = vadd.f32 %v284, %v310
      %v321 = vadd.f32 %v285, %v310
      %v322 = vadd.f32 %v286, %v310
      %v323 = vadd.f32 %v287, %v310
      %v324 = vadd.f32 %v288, %v310
      %v325 = vadd.f32 %v289, %v310
      %v326 = vadd.f32 %v290, %v310
      %v327 = vadd.f32 %v291, %v310
      %v328 = vadd.f32 %v292, %v310
      %v329 = vadd.f32 %v293, %v310
      %v330 = vadd.f32 %v294, %v310
      %v331 = vadd.f32 %v295, %v310
      %v332 = vadd.f32 %v296, %v310
      %v333 = vadd.f32 %v297, %v310
      %v334 = vadd.f32 %v298, %v310
      %v335 = vadd.f32 %v299, %v310
      %v336 = vadd.f32 %v300, %v310
      %v337 = vadd.f32 %v301, %v310
      %v338 = vadd.f32 %v302, %v310
      %v339 = vadd.f32 %v303, %v310
      %v340 = vadd.f32 %v304, %v310
      %v341 = vadd.f32 %v305, %v310
      %v342 = vadd.f32 %v306, %v310
      %v343 = vadd.f32 %v307, %v310
      %v344 = vmax.f32 %v312, 0.0
      %v345 = vmax.f32 %v313, 0.0
      %v346 = vmax.f32 %v314, 0.0
      %v347 = vmax.f32 %v315, 0.0
      %v348 = vmax.f32 %v316, 0.0
      %v349 = vmax.f32 %v317, 0.0
      %v350 = vmax.f32 %v318, 0.0
      %v351 = vmax.f32 %v319, 0.0
      %v352 = vmax.f32 %v320, 0.0
      %v353 = vmax.f32 %v321, 0.0
      %v354 = vmax.f32 %v322, 0.0
      %v355 = vmax.f32 %v323, 0.0
      %v356 = vmax.f32 %v324, 0.0
      %v357 = vmax.f32 %v325, 0.0
      %v358 = vmax.f32 %v326, 0.0
      %v359 = vmax.f32 %v327, 0.0
      %v360 = vmax.f32 %v328, 0.0
      %v361 = vmax.f32 %v329, 0.0
      %v362 = vmax.f32 %v330, 0.0
      %v363 = vmax.f32 %v331, 0.0
      %v364 = vmax.f32 %v332, 0.0
      %v365 = vmax.f32 %v333, 0.0
      %v366 = vmax.f32 %v334, 0.0
      %v367 = vmax.f32 %v335, 0.0
      %v368 = vmax.f32 %v336, 0.0
      %v369 = vmax.f32 %v337, 0.0
      %v370 = vmax.f32 %v338, 0.0
      %v371 = vmax.f32 %v339, 0.0
      %v372 = vmax.f32 %v340, 0.0
      %v373 = vmax.f32 %v341, 0.0
      %v374 = vmax.f32 %v342, 0.0
      %v375 = vmax.f32 %v343, 0.0
      %v376 = vpack.c.bf16 %v344, %v344
      %v377 = vpack.c.bf16 %v345, %v345
      %v378 = vpack.c.bf16 %v346, %v346
      %v379 = vpack.c.bf16 %v347, %v347
      %v380 = vpack.c.bf16 %v348, %v348
      %v381 = vpack.c.bf16 %v349, %v349
      %v382 = vpack.c.bf16 %v350, %v350
      %v383 = vpack.c.bf16 %v351, %v351
      %v384 = vpack.c.bf16 %v352, %v352
      %v385 = vpack.c.bf16 %v353, %v353
      %v386 = vpack.c.bf16 %v354, %v354
      %v387 = vpack.c.bf16 %v355, %v355
      %v388 = vpack.c.bf16 %v356, %v356
      %v389 = vpack.c.bf16 %v357, %v357
      %v390 = vpack.c.bf16 %v358, %v358
      %v391 = vpack.c.bf16 %v359, %v359
      %v392 = vpack.c.bf16 %v360, %v360
      %v393 = vpack.c.bf16 %v361, %v361
      %v394 = vpack.c.bf16 %v362, %v362
      %v395 = vpack.c.bf16 %v363, %v363
      %v396 = vpack.c.bf16 %v364, %v364
      %v397 = vpack.c.bf16 %v365, %v365
      %v398 = vpack.c.bf16 %v366, %v366
      %v399 = vpack.c.bf16 %v367, %v367
      %v400 = vpack.c.bf16 %v368, %v368
      %v401 = vpack.c.bf16 %v369, %v369
      %v402 = vpack.c.bf16 %v370, %v370
      %v403 = vpack.c.bf16 %v371, %v371
      %v404 = vpack.c.bf16 %v372, %v372
      %v405 = vpack.c.bf16 %v373, %v373
      %v406 = vpack.c.bf16 %v374, %v374
      %v407 = vpack.c.bf16 %v375, %v375
      %vm408 = vcmask 125952
      %409 = vst.msk [vmem:[#allocation2] sm:$0xf] %vm408, 0
      %410 = vst.msk [vmem:[#allocation2 + $0x4] sm:$0xf] %vm408, 0
      %411 = vst.msk [vmem:[#allocation2 + $0x8] sm:$0xf] %vm408, 0
      %412 = vst.msk [vmem:[#allocation2 + $0xc] sm:$0xf] %vm408, 0
      %413 = vst.msk [vmem:[#allocation2 + $0x10] sm:$0xf] %vm408, 0
      %414 = vst.msk [vmem:[#allocation2 + $0x14] sm:$0xf] %vm408, 0
      %415 = vst.msk [vmem:[#allocation2 + $0x18] sm:$0xf] %vm408, 0
      %416 = vst.msk [vmem:[#allocation2 + $0x1c] sm:$0xf] %vm408, 0
      %s417 = scalar_lea.vmem [#allocation2], 288
      %418 = vst.msk [vmem:[%s417] sm:$0xf] %vm408, 0
      %419 = vst.msk [vmem:[%s417 + $0x4] sm:$0xf] %vm408, 0
      %420 = vst.msk [vmem:[%s417 + $0x8] sm:$0xf] %vm408, 0
      %421 = vst.msk [vmem:[%s417 + $0xc] sm:$0xf] %vm408, 0
      %422 = vst.msk [vmem:[%s417 + $0x10] sm:$0xf] %vm408, 0
      %423 = vst.msk [vmem:[%s417 + $0x14] sm:$0xf] %vm408, 0
      %424 = vst.msk [vmem:[%s417 + $0x18] sm:$0xf] %vm408, 0
      %425 = vst.msk [vmem:[%s417 + $0x1c] sm:$0xf] %vm408, 0
      %s426 = scalar_lea.vmem [#allocation2], 32
      %427 = vst.msk [vmem:[%s426 + $0x8] sm:$0xf] %vm408, 0
      %428 = vst.msk [vmem:[%s426 + $0xc] sm:$0xf] %vm408, 0
      %429 = vst.msk [vmem:[%s426 + $0x18] sm:$0xf] %vm408, 0
      %430 = vst.msk [vmem:[%s426 + $0x1c] sm:$0xf] %vm408, 0
      %431 = vst.msk [vmem:[%s426 + $0x28] sm:$0xf] %vm408, 0
      %432 = vst.msk [vmem:[%s426 + $0x2c] sm:$0xf] %vm408, 0
      %433 = vst.msk [vmem:[%s426 + $0x38] sm:$0xf] %vm408, 0
      %434 = vst.msk [vmem:[%s426 + $0x3c] sm:$0xf] %vm408, 0
      %435 = vst.msk [vmem:[%s426 + $0x48] sm:$0xf] %vm408, 0
      %436 = vst.msk [vmem:[%s426 + $0x4c] sm:$0xf] %vm408, 0
      %437 = vst.msk [vmem:[%s426 + $0x58] sm:$0xf] %vm408, 0
      %438 = vst.msk [vmem:[%s426 + $0x5c] sm:$0xf] %vm408, 0
      %439 = vst.msk [vmem:[%s426 + $0x68] sm:$0xf] %vm408, 0
      %440 = vst.msk [vmem:[%s426 + $0x6c] sm:$0xf] %vm408, 0
      %441 = vst.msk [vmem:[%s426 + $0x78] sm:$0xf] %vm408, 0
      %442 = vst.msk [vmem:[%s426 + $0x7c] sm:$0xf] %vm408, 0
      %443 = vst.msk [vmem:[%s426 + $0x88] sm:$0xf] %vm408, 0
      %444 = vst.msk [vmem:[%s426 + $0x8c] sm:$0xf] %vm408, 0
      %445 = vst.msk [vmem:[%s426 + $0x98] sm:$0xf] %vm408, 0
      %446 = vst.msk [vmem:[%s426 + $0x9c] sm:$0xf] %vm408, 0
      %447 = vst.msk [vmem:[%s426 + $0xa8] sm:$0xf] %vm408, 0
      %448 = vst.msk [vmem:[%s426 + $0xac] sm:$0xf] %vm408, 0
      %449 = vst.msk [vmem:[%s426 + $0xb8] sm:$0xf] %vm408, 0
      %450 = vst.msk [vmem:[%s426 + $0xbc] sm:$0xf] %vm408, 0
      %451 = vst.msk [vmem:[%s426 + $0xc8] sm:$0xf] %vm408, 0
      %452 = vst.msk [vmem:[%s426 + $0xcc] sm:$0xf] %vm408, 0
      %453 = vst.msk [vmem:[%s426 + $0xd8] sm:$0xf] %vm408, 0
      %454 = vst.msk [vmem:[%s426 + $0xdc] sm:$0xf] %vm408, 0
      %455 = vst.msk [vmem:[%s426 + $0xe8] sm:$0xf] %vm408, 0
      %456 = vst.msk [vmem:[%s426 + $0xec] sm:$0xf] %vm408, 0
      %457 = vst.msk [vmem:[%s426 + $0xf8] sm:$0xf] %vm408, 0
      %458 = vst.msk [vmem:[%s426 + $0xfc] sm:$0xf] %vm408, 0
      %459 = vst.msk [vmem:[%s426] sm:$0xf] %vm408, %v376
      %460 = vst.msk [vmem:[%s426 + $0x4] sm:$0xf] %vm408, %v377
      %461 = vst.msk [vmem:[%s426 + $0x10] sm:$0xf] %vm408, %v378
      %462 = vst.msk [vmem:[%s426 + $0x14] sm:$0xf] %vm408, %v379
      %463 = vst.msk [vmem:[%s426 + $0x20] sm:$0xf] %vm408, %v380
      %464 = vst.msk [vmem:[%s426 + $0x24] sm:$0xf] %vm408, %v381
      %465 = vst.msk [vmem:[%s426 + $0x30] sm:$0xf] %vm408, %v382
      %466 = vst.msk [vmem:[%s426 + $0x34] sm:$0xf] %vm408, %v383
      %467 = vst.msk [vmem:[%s426 + $0x40] sm:$0xf] %vm408, %v384
      %468 = vst.msk [vmem:[%s426 + $0x44] sm:$0xf] %vm408, %v385
      %469 = vst.msk [vmem:[%s426 + $0x50] sm:$0xf] %vm408, %v386
      %470 = vst.msk [vmem:[%s426 + $0x54] sm:$0xf] %vm408, %v387
      %471 = vst.msk [vmem:[%s426 + $0x60] sm:$0xf] %vm408, %v388
      %472 = vst.msk [vmem:[%s426 + $0x64] sm:$0xf] %vm408, %v389
      %473 = vst.msk [vmem:[%s426 + $0x70] sm:$0xf] %vm408, %v390
      %474 = vst.msk [vmem:[%s426 + $0x74] sm:$0xf] %vm408, %v391
      %475 = vst.msk [vmem:[%s426 + $0x80] sm:$0xf] %vm408, %v392
      %476 = vst.msk [vmem:[%s426 + $0x84] sm:$0xf] %vm408, %v393
      %477 = vst.msk [vmem:[%s426 + $0x90] sm:$0xf] %vm408, %v394
      %478 = vst.msk [vmem:[%s426 + $0x94] sm:$0xf] %vm408, %v395
      %479 = vst.msk [vmem:[%s426 + $0xa0] sm:$0xf] %vm408, %v396
      %480 = vst.msk [vmem:[%s426 + $0xa4] sm:$0xf] %vm408, %v397
      %481 = vst.msk [vmem:[%s426 + $0xb0] sm:$0xf] %vm408, %v398
      %482 = vst.msk [vmem:[%s426 + $0xb4] sm:$0xf] %vm408, %v399
      %483 = vst.msk [vmem:[%s426 + $0xc0] sm:$0xf] %vm408, %v400
      %484 = vst.msk [vmem:[%s426 + $0xc4] sm:$0xf] %vm408, %v401
      %485 = vst.msk [vmem:[%s426 + $0xd0] sm:$0xf] %vm408, %v402
      %486 = vst.msk [vmem:[%s426 + $0xd4] sm:$0xf] %vm408, %v403
      %487 = vst.msk [vmem:[%s426 + $0xe0] sm:$0xf] %vm408, %v404
      %488 = vst.msk [vmem:[%s426 + $0xe4] sm:$0xf] %vm408, %v405
      %489 = vst.msk [vmem:[%s426 + $0xf0] sm:$0xf] %vm408, %v406
      %490 = vst.msk [vmem:[%s426 + $0xf4] sm:$0xf] %vm408, %v407
      %v491 = vld [vmem:[#allocation2 + $0xc] sm:$0xf]
      %v492 = vld [vmem:[#allocation2 + $0x10] sm:$0xf]
      %v493 = vld [vmem:[#allocation2 + $0x14] sm:$0xf]
      %v494 = vld [vmem:[#allocation2 + $0x18] sm:$0xf]
      %v495 = vld [vmem:[#allocation2 + $0x1c] sm:$0xf]
      %v496 = vld [vmem:[#allocation2 + $0x20] sm:$0xf]
      %v497 = vld [vmem:[#allocation2 + $0x24] sm:$0xf]
      %v498 = vld [vmem:[#allocation2 + $0x28] sm:$0xf]
      %v499 = vld [vmem:[#allocation2 + $0x2c] sm:$0xf]
      %v500 = vld [vmem:[#allocation2 + $0x30] sm:$0xf]
      %v501 = vld [vmem:[#allocation2 + $0x34] sm:$0xf]
      %v502 = vld [vmem:[#allocation2 + $0x38] sm:$0xf]
      %v503 = vld [vmem:[#allocation2 + $0x3c] sm:$0xf]
      %v504 = vld [vmem:[#allocation2 + $0x40] sm:$0xf]
      %v505 = vld [vmem:[#allocation2 + $0x44] sm:$0xf]
      %v506 = vld [vmem:[#allocation2 + $0x48] sm:$0xf]
      %v507 = vld [vmem:[#allocation2 + $0x4c] sm:$0xf]
      %v508 = vld [vmem:[#allocation2 + $0x50] sm:$0xf]
      %v509 = vld [vmem:[#allocation2 + $0x54] sm:$0xf]
      %v510 = vld [vmem:[#allocation2 + $0x58] sm:$0xf]
      %v511 = vld [vmem:[#allocation2 + $0x5c] sm:$0xf]
      %v512 = vld [vmem:[#allocation2 + $0x60] sm:$0xf]
      %v513 = vld [vmem:[#allocation2 + $0x64] sm:$0xf]
      %v514 = vld [vmem:[#allocation2 + $0x68] sm:$0xf]
      %v515 = vld [vmem:[#allocation2 + $0x6c] sm:$0xf]
      %v516 = vld [vmem:[#allocation2 + $0x70] sm:$0xf]
      %v517 = vld [vmem:[#allocation2 + $0x74] sm:$0xf]
      %v518 = vld [vmem:[#allocation2 + $0x78] sm:$0xf]
      %v519 = vld [vmem:[#allocation2 + $0x7c] sm:$0xf]
      %v520 = vld [vmem:[#allocation2 + $0x80] sm:$0xf]
      %v521 = vld [vmem:[#allocation2 + $0x84] sm:$0xf]
      %v522 = vld [vmem:[#allocation2 + $0x88] sm:$0xf]
      %v523 = vld [vmem:[#allocation2 + $0x8c] sm:$0xf]
      %v524 = vld [vmem:[#allocation2 + $0x90] sm:$0xf]
      %v525 = vld [vmem:[#allocation2 + $0x94] sm:$0xf]
      %v526 = vld [vmem:[#allocation2 + $0x98] sm:$0xf]
      %v527 = vld [vmem:[#allocation2 + $0x9c] sm:$0xf]
      %v528 = vld [vmem:[#allocation2 + $0xa0] sm:$0xf]
      %v529 = vld [vmem:[#allocation2 + $0xa4] sm:$0xf]
      %v530 = vld [vmem:[#allocation2 + $0xa8] sm:$0xf]
      %v531 = vld [vmem:[#allocation2 + $0xac] sm:$0xf]
      %v532 = vld [vmem:[#allocation2 + $0xb0] sm:$0xf]
      %v533 = vld [vmem:[#allocation2 + $0xb4] sm:$0xf]
      %v534 = vld [vmem:[#allocation2 + $0xb8] sm:$0xf]
      %v535 = vld [vmem:[#allocation2 + $0xbc] sm:$0xf]
      %v536 = vld [vmem:[#allocation2 + $0xc0] sm:$0xf]
      %v537 = vld [vmem:[#allocation2 + $0xc4] sm:$0xf]
      %v538 = vld [vmem:[#allocation2 + $0xc8] sm:$0xf]
      %v539 = vld [vmem:[#allocation2 + $0xcc] sm:$0xf]
      %v540 = vld [vmem:[#allocation2 + $0xd0] sm:$0xf]
      %v541 = vld [vmem:[#allocation2 + $0xd4] sm:$0xf]
      %v542 = vld [vmem:[#allocation2 + $0xd8] sm:$0xf]
      %v543 = vld [vmem:[#allocation2 + $0xdc] sm:$0xf]
      %v544 = vld [vmem:[#allocation2 + $0xe0] sm:$0xf]
      %v545 = vld [vmem:[#allocation2 + $0xe4] sm:$0xf]
      %v546 = vld [vmem:[#allocation2 + $0xe8] sm:$0xf]
      %v547 = vld [vmem:[#allocation2 + $0xec] sm:$0xf]
      %v548 = vld [vmem:[#allocation2 + $0xf0] sm:$0xf]
      %v549 = vld [vmem:[#allocation2 + $0xf4] sm:$0xf]
      %v550 = vld [vmem:[#allocation2 + $0xf8] sm:$0xf]
      %v551 = vld [vmem:[#allocation2 + $0xfc] sm:$0xf]
      %v552 = vld [vmem:[#allocation2 + $0x100] sm:$0xf]
      %v553 = vld [vmem:[#allocation2 + $0x104] sm:$0xf]
      %v554 = vld [vmem:[#allocation2 + $0x108] sm:$0xf]
      %v555 = vld [vmem:[#allocation2 + $0x10c] sm:$0xf]
      %v556 = vld [vmem:[#allocation2 + $0x110] sm:$0xf]
      %v557 = vld [vmem:[#allocation2 + $0x114] sm:$0xf]
      %v558 = vld [vmem:[#allocation2 + $0x118] sm:$0xf]
      %v559 = vld [vmem:[#allocation2 + $0x11c] sm:$0xf]
      %v560 = vld [vmem:[#allocation2 + $0x120] sm:$0xf]
      %v561 = vld [vmem:[#allocation2 + $0x124] sm:$0xf]
      %v562 = vld [vmem:[#allocation2 + $0x128] sm:$0xf]
      %v563 = vld [vmem:[#allocation2 + $0x12c] sm:$0xf]
      %v564 = vld [vmem:[#allocation2 + $0x130] sm:$0xf]
      %v565 = vld [vmem:[%s3] sm:$0xf]
      %v566 = vld [vmem:[%s3 + $0x4] sm:$0xf]
      %s567 = scalar_lea.vmem %s3, 8
      %v568 = vld [vmem:[%s567] sm:$0xf]
      %v569 = vld [vmem:[%s567 + $0x4] sm:$0xf]
      %v635 = vunpack.c.l.b16 %v495
      %v636 = vunpack.c.l.b16 %v496
      %v637 = vunpack.c.l.b16 %v497
      %v638 = vunpack.c.l.b16 %v498
      %v639 = vunpack.c.l.b16 %v499
      %v640 = vunpack.c.l.b16 %v500
      %v641 = vunpack.c.l.b16 %v501
      %v642 = vunpack.c.l.b16 %v502
      %v643 = vunpack.c.l.b16 %v503
      %v644 = vunpack.c.l.b16 %v504
      %v645 = vunpack.c.l.b16 %v505
      %v646 = vunpack.c.l.b16 %v506
      %v647 = vunpack.c.l.b16 %v507
      %v648 = vunpack.c.l.b16 %v508
      %v649 = vunpack.c.l.b16 %v509
      %v650 = vunpack.c.l.b16 %v510
      %v651 = vunpack.c.l.b16 %v511
      %v652 = vunpack.c.l.b16 %v512
      %v653 = vunpack.c.l.b16 %v513
      %v654 = vunpack.c.l.b16 %v514
      %v655 = vunpack.c.l.b16 %v515
      %v656 = vunpack.c.l.b16 %v516
      %v657 = vunpack.c.l.b16 %v517
      %v658 = vunpack.c.l.b16 %v518
      %v659 = vunpack.c.l.b16 %v519
      %v660 = vunpack.c.l.b16 %v520
      %v661 = vunpack.c.l.b16 %v521
      %v662 = vunpack.c.l.b16 %v522
      %v663 = vunpack.c.l.b16 %v523
      %v664 = vunpack.c.l.b16 %v524
      %v665 = vunpack.c.l.b16 %v525
      %v666 = vunpack.c.l.b16 %v526
      %v667 = vunpack.c.l.b16 %v527
      %v668 = vunpack.c.l.b16 %v528
      %v669 = vunpack.c.l.b16 %v529
      %v670 = vunpack.c.l.b16 %v530
      %v671 = vunpack.c.l.b16 %v531
      %v672 = vunpack.c.l.b16 %v532
      %v673 = vunpack.c.l.b16 %v533
      %v674 = vunpack.c.l.b16 %v534
      %v675 = vunpack.c.l.b16 %v535
      %v676 = vunpack.c.l.b16 %v536
      %v677 = vunpack.c.l.b16 %v537
      %v678 = vunpack.c.l.b16 %v538
      %v679 = vunpack.c.l.b16 %v539
      %v680 = vunpack.c.l.b16 %v540
      %v681 = vunpack.c.l.b16 %v541
      %v682 = vunpack.c.l.b16 %v542
      %v683 = vunpack.c.l.b16 %v543
      %v684 = vunpack.c.l.b16 %v544
      %v685 = vunpack.c.l.b16 %v545
      %v686 = vunpack.c.l.b16 %v546
      %v687 = vunpack.c.l.b16 %v547
      %v688 = vunpack.c.l.b16 %v548
      %v689 = vunpack.c.l.b16 %v549
      %v690 = vunpack.c.l.b16 %v550
      %v691 = vunpack.c.l.b16 %v551
      %v692 = vunpack.c.l.b16 %v552
      %v693 = vunpack.c.l.b16 %v553
      %v694 = vunpack.c.l.b16 %v554
      %v695 = vunpack.c.l.b16 %v555
      %v696 = vunpack.c.l.b16 %v556
      %v697 = vunpack.c.l.b16 %v557
      %v698 = vunpack.c.l.b16 %v558
      %v699 = vunpack.c.l.b16 %v559
      %v700 = vpack.c.b16 %v636, %v635
      %v701 = vpack.c.b16 %v638, %v637
      %v702 = vpack.c.b16 %v640, %v639
      %v703 = vpack.c.b16 %v642, %v641
      %v704 = vpack.c.b16 %v644, %v643
      %v705 = vpack.c.b16 %v646, %v645
      %v706 = vpack.c.b16 %v648, %v647
      %v707 = vpack.c.b16 %v650, %v649
      %v708 = vpack.c.b16 %v652, %v651
      %v709 = vpack.c.b16 %v654, %v653
      %v710 = vpack.c.b16 %v656, %v655
      %v711 = vpack.c.b16 %v658, %v657
      %v712 = vpack.c.b16 %v660, %v659
      %v713 = vpack.c.b16 %v662, %v661
      %v714 = vpack.c.b16 %v664, %v663
      %v715 = vpack.c.b16 %v666, %v665
      %v716 = vpack.c.b16 %v668, %v667
      %v717 = vpack.c.b16 %v670, %v669
      %v718 = vpack.c.b16 %v672, %v671
      %v719 = vpack.c.b16 %v674, %v673
      %v720 = vpack.c.b16 %v676, %v675
      %v721 = vpack.c.b16 %v678, %v677
      %v722 = vpack.c.b16 %v680, %v679
      %v723 = vpack.c.b16 %v682, %v681
      %v724 = vpack.c.b16 %v684, %v683
      %v725 = vpack.c.b16 %v686, %v685
      %v726 = vpack.c.b16 %v688, %v687
      %v727 = vpack.c.b16 %v690, %v689
      %v728 = vpack.c.b16 %v692, %v691
      %v729 = vpack.c.b16 %v694, %v693
      %v730 = vpack.c.b16 %v696, %v695
      %v731 = vpack.c.b16 %v698, %v697
      %v732 = vpack.c.b16 %v699, %v699
      %vm733 = vsmask.f32 4352
      %v735 = vshrl.u32 %v700, 16
      %v737 = vrot.slane %v735, 3
      %v738 = vshll.u32 %v700, 16
      %v740 = vrot.slane %v738, 4
      %v741 = vor.u32 %v737, %v740
      %v743 = vshrl.u32 %v701, 16
      %v745 = vrot.slane %v743, 3
      %v746 = vshll.u32 %v701, 16
      %v748 = vrot.slane %v746, 4
      %v749 = vor.u32 %v745, %v748
      %v750 = vsel %vm733, %v741, %v749
      %v752 = vshrl.u32 %v702, 16
      %v754 = vrot.slane %v752, 3
      %v755 = vshll.u32 %v702, 16
      %v757 = vrot.slane %v755, 4
      %v758 = vor.u32 %v754, %v757
      %v759 = vsel %vm733, %v749, %v758
      %v761 = vshrl.u32 %v703, 16
      %v763 = vrot.slane %v761, 3
      %v764 = vshll.u32 %v703, 16
      %v766 = vrot.slane %v764, 4
      %v767 = vor.u32 %v763, %v766
      %v768 = vsel %vm733, %v758, %v767
      %v770 = vshrl.u32 %v704, 16
      %v772 = vrot.slane %v770, 3
      %v773 = vshll.u32 %v704, 16
      %v775 = vrot.slane %v773, 4
      %v776 = vor.u32 %v772, %v775
      %v777 = vsel %vm733, %v767, %v776
      %v779 = vshrl.u32 %v705, 16
      %v781 = vrot.slane %v779, 3
      %v782 = vshll.u32 %v705, 16
      %v784 = vrot.slane %v782, 4
      %v785 = vor.u32 %v781, %v784
      %v786 = vsel %vm733, %v776, %v785
      %v788 = vshrl.u32 %v706, 16
      %v790 = vrot.slane %v788, 3
      %v791 = vshll.u32 %v706, 16
      %v793 = vrot.slane %v791, 4
      %v794 = vor.u32 %v790, %v793
      %v795 = vsel %vm733, %v785, %v794
      %v797 = vshrl.u32 %v707, 16
      %v799 = vrot.slane %v797, 3
      %v800 = vshll.u32 %v707, 16
      %v802 = vrot.slane %v800, 4
      %v803 = vor.u32 %v799, %v802
      %v804 = vsel %vm733, %v794, %v803
      %v806 = vshrl.u32 %v708, 16
      %v808 = vrot.slane %v806, 3
      %v809 = vshll.u32 %v708, 16
      %v811 = vrot.slane %v809, 4
      %v812 = vor.u32 %v808, %v811
      %v813 = vsel %vm733, %v803, %v812
      %v815 = vshrl.u32 %v709, 16
      %v817 = vrot.slane %v815, 3
      %v818 = vshll.u32 %v709, 16
      %v820 = vrot.slane %v818, 4
      %v821 = vor.u32 %v817, %v820
      %v822 = vsel %vm733, %v812, %v821
      %v824 = vshrl.u32 %v710, 16
      %v826 = vrot.slane %v824, 3
      %v827 = vshll.u32 %v710, 16
      %v829 = vrot.slane %v827, 4
      %v830 = vor.u32 %v826, %v829
      %v831 = vsel %vm733, %v821, %v830
      %v833 = vshrl.u32 %v711, 16
      %v835 = vrot.slane %v833, 3
      %v836 = vshll.u32 %v711, 16
      %v838 = vrot.slane %v836, 4
      %v839 = vor.u32 %v835, %v838
      %v840 = vsel %vm733, %v830, %v839
      %v842 = vshrl.u32 %v712, 16
      %v844 = vrot.slane %v842, 3
      %v845 = vshll.u32 %v712, 16
      %v847 = vrot.slane %v845, 4
      %v848 = vor.u32 %v844, %v847
      %v849 = vsel %vm733, %v839, %v848
      %v851 = vshrl.u32 %v713, 16
      %v853 = vrot.slane %v851, 3
      %v854 = vshll.u32 %v713, 16
      %v856 = vrot.slane %v854, 4
      %v857 = vor.u32 %v853, %v856
      %v858 = vsel %vm733, %v848, %v857
      %v860 = vshrl.u32 %v714, 16
      %v862 = vrot.slane %v860, 3
      %v863 = vshll.u32 %v714, 16
      %v865 = vrot.slane %v863, 4
      %v866 = vor.u32 %v862, %v865
      %v867 = vsel %vm733, %v857, %v866
      %v869 = vshrl.u32 %v715, 16
      %v871 = vrot.slane %v869, 3
      %v872 = vshll.u32 %v715, 16
      %v874 = vrot.slane %v872, 4
      %v875 = vor.u32 %v871, %v874
      %v876 = vsel %vm733, %v866, %v875
      %v878 = vshrl.u32 %v716, 16
      %v880 = vrot.slane %v878, 3
      %v881 = vshll.u32 %v716, 16
      %v883 = vrot.slane %v881, 4
      %v884 = vor.u32 %v880, %v883
      %v885 = vsel %vm733, %v875, %v884
      %v887 = vshrl.u32 %v717, 16
      %v889 = vrot.slane %v887, 3
      %v890 = vshll.u32 %v717, 16
      %v892 = vrot.slane %v890, 4
      %v893 = vor.u32 %v889, %v892
      %v894 = vsel %vm733, %v884, %v893
      %v896 = vshrl.u32 %v718, 16
      %v898 = vrot.slane %v896, 3
      %v899 = vshll.u32 %v718, 16
      %v901 = vrot.slane %v899, 4
      %v902 = vor.u32 %v898, %v901
      %v903 = vsel %vm733, %v893, %v902
      %v905 = vshrl.u32 %v719, 16
      %v907 = vrot.slane %v905, 3
      %v908 = vshll.u32 %v719, 16
      %v910 = vrot.slane %v908, 4
      %v911 = vor.u32 %v907, %v910
      %v912 = vsel %vm733, %v902, %v911
      %v914 = vshrl.u32 %v720, 16
      %v916 = vrot.slane %v914, 3
      %v917 = vshll.u32 %v720, 16
      %v919 = vrot.slane %v917, 4
      %v920 = vor.u32 %v916, %v919
      %v921 = vsel %vm733, %v911, %v920
      %v923 = vshrl.u32 %v721, 16
      %v925 = vrot.slane %v923, 3
      %v926 = vshll.u32 %v721, 16
      %v928 = vrot.slane %v926, 4
      %v929 = vor.u32 %v925, %v928
      %v930 = vsel %vm733, %v920, %v929
      %v932 = vshrl.u32 %v722, 16
      %v934 = vrot.slane %v932, 3
      %v935 = vshll.u32 %v722, 16
      %v937 = vrot.slane %v935, 4
      %v938 = vor.u32 %v934, %v937
      %v939 = vsel %vm733, %v929, %v938
      %v941 = vshrl.u32 %v723, 16
      %v943 = vrot.slane %v941, 3
      %v944 = vshll.u32 %v723, 16
      %v946 = vrot.slane %v944, 4
      %v947 = vor.u32 %v943, %v946
      %v948 = vsel %vm733, %v938, %v947
      %v950 = vshrl.u32 %v724, 16
      %v952 = vrot.slane %v950, 3
      %v953 = vshll.u32 %v724, 16
      %v955 = vrot.slane %v953, 4
      %v956 = vor.u32 %v952, %v955
      %v957 = vsel %vm733, %v947, %v956
      %v959 = vshrl.u32 %v725, 16
      %v961 = vrot.slane %v959, 3
      %v962 = vshll.u32 %v725, 16
      %v964 = vrot.slane %v962, 4
      %v965 = vor.u32 %v961, %v964
      %v966 = vsel %vm733, %v956, %v965
      %v968 = vshrl.u32 %v726, 16
      %v970 = vrot.slane %v968, 3
      %v971 = vshll.u32 %v726, 16
      %v973 = vrot.slane %v971, 4
      %v974 = vor.u32 %v970, %v973
      %v975 = vsel %vm733, %v965, %v974
      %v977 = vshrl.u32 %v727, 16
      %v979 = vrot.slane %v977, 3
      %v980 = vshll.u32 %v727, 16
      %v982 = vrot.slane %v980, 4
      %v983 = vor.u32 %v979, %v982
      %v984 = vsel %vm733, %v974, %v983
      %v986 = vshrl.u32 %v728, 16
      %v988 = vrot.slane %v986, 3
      %v989 = vshll.u32 %v728, 16
      %v991 = vrot.slane %v989, 4
      %v992 = vor.u32 %v988, %v991
      %v993 = vsel %vm733, %v983, %v992
      %v995 = vshrl.u32 %v729, 16
      %v997 = vrot.slane %v995, 3
      %v998 = vshll.u32 %v729, 16
      %v1000 = vrot.slane %v998, 4
      %v1001 = vor.u32 %v997, %v1000
      %v1002 = vsel %vm733, %v992, %v1001
      %v1004 = vshrl.u32 %v730, 16
      %v1006 = vrot.slane %v1004, 3
      %v1007 = vshll.u32 %v730, 16
      %v1009 = vrot.slane %v1007, 4
      %v1010 = vor.u32 %v1006, %v1009
      %v1011 = vsel %vm733, %v1001, %v1010
      %v1013 = vshrl.u32 %v731, 16
      %v1015 = vrot.slane %v1013, 3
      %v1016 = vshll.u32 %v731, 16
      %v1018 = vrot.slane %v1016, 4
      %v1019 = vor.u32 %v1015, %v1018
      %v1020 = vsel %vm733, %v1010, %v1019
      %v1022 = vshrl.u32 %v732, 16
      %v1024 = vrot.slane %v1022, 3
      %v1025 = vshll.u32 %v732, 16
      %v1027 = vrot.slane %v1025, 4
      %v1028 = vor.u32 %v1024, %v1027
      %v1029 = vsel %vm733, %v1019, %v1028
      %v1032 = vunpack.c.l.b16 %v568
      %v1033 = vunpack.c.l.b16 %v569
      %v1034 = vpack.c.b16 %v1033, %v1032
      %vm1036 = vcmask 130048
      %v1038 = vsel %vm1036, %v750, 0
      %v1041 = vsel %vm1036, %v759, 0
      %v1044 = vsel %vm1036, %v768, 0
      %v1047 = vsel %vm1036, %v777, 0
      %v1050 = vsel %vm1036, %v786, 0
      %v1053 = vsel %vm1036, %v795, 0
      %v1056 = vsel %vm1036, %v804, 0
      %v1059 = vsel %vm1036, %v813, 0
      %v1062 = vsel %vm1036, %v822, 0
      %v1065 = vsel %vm1036, %v831, 0
      %v1068 = vsel %vm1036, %v840, 0
      %v1071 = vsel %vm1036, %v849, 0
      %v1074 = vsel %vm1036, %v858, 0
      %v1077 = vsel %vm1036, %v867, 0
      %v1080 = vsel %vm1036, %v876, 0
      %v1083 = vsel %vm1036, %v885, 0
      %v1086 = vsel %vm1036, %v894, 0
      %v1089 = vsel %vm1036, %v903, 0
      %v1092 = vsel %vm1036, %v912, 0
      %v1095 = vsel %vm1036, %v921, 0
      %v1098 = vsel %vm1036, %v930, 0
      %v1101 = vsel %vm1036, %v939, 0
      %v1104 = vsel %vm1036, %v948, 0
      %v1107 = vsel %vm1036, %v957, 0
      %v1110 = vsel %vm1036, %v966, 0
      %v1113 = vsel %vm1036, %v975, 0
      %v1116 = vsel %vm1036, %v984, 0
      %v1119 = vsel %vm1036, %v993, 0
      %v1122 = vsel %vm1036, %v1002, 0
      %v1125 = vsel %vm1036, %v1011, 0
      %v1128 = vsel %vm1036, %v1020, 0
      %v1131 = vsel %vm1036, %v1029, 0
      %1133 = vmatpush.bf16.msra.mxu0 0
      %1134 = vmatpush.bf16.msra.mxu0 0
      %1135 = vmatpush.bf16.msra.mxu0 0
      %1136 = vmatpush.bf16.msra.mxu0 0
      %1137 = vmatpush.bf16.msra.mxu0 0
      %1138 = vmatpush.bf16.msra.mxu0 0
      %1139 = vmatpush.bf16.msra.mxu0 0
      %1140 = vmatpush.bf16.msra.mxu0 %v1034
      %1141 = vmatmul.bf16.gmra.mxu0 %v1038
      %v1142 = vpop.f32.mrf.mxu0
      %v1143 = vadd.f32 0.0, %v1142
      %v1144 = vpop.f32.mrf.mxu0
      %v1145 = vadd.f32 0.0, %v1144
      %1146 = vmatmul.bf16.gmra.mxu0 %v1041
      %v1147 = vpop.f32.mrf.mxu0
      %v1148 = vpop.f32.mrf.mxu0
      %1149 = vmatmul.bf16.gmra.mxu0 %v1044
      %v1150 = vpop.f32.mrf.mxu0
      %v1151 = vadd.f32 0.0, %v1150
      %v1152 = vpop.f32.mrf.mxu0
      %v1153 = vadd.f32 0.0, %v1152
      %1154 = vmatmul.bf16.gmra.mxu0 %v1047
      %v1155 = vpop.f32.mrf.mxu0
      %v1156 = vpop.f32.mrf.mxu0
      %1157 = vmatmul.bf16.gmra.mxu0 %v1050
      %v1158 = vpop.f32.mrf.mxu0
      %v1159 = vadd.f32 0.0, %v1158
      %v1160 = vpop.f32.mrf.mxu0
      %v1161 = vadd.f32 0.0, %v1160
      %1162 = vmatmul.bf16.gmra.mxu0 %v1053
      %v1163 = vpop.f32.mrf.mxu0
      %v1164 = vpop.f32.mrf.mxu0
      %1165 = vmatmul.bf16.gmra.mxu0 %v1056
      %v1166 = vpop.f32.mrf.mxu0
      %v1167 = vadd.f32 0.0, %v1166
      %v1168 = vpop.f32.mrf.mxu0
      %v1169 = vadd.f32 0.0, %v1168
      %1170 = vmatmul.bf16.gmra.mxu0 %v1059
      %v1171 = vpop.f32.mrf.mxu0
      %v1172 = vpop.f32.mrf.mxu0
      %1173 = vmatmul.bf16.gmra.mxu0 %v1062
      %v1174 = vpop.f32.mrf.mxu0
      %v1175 = vadd.f32 0.0, %v1174
      %v1176 = vpop.f32.mrf.mxu0
      %v1177 = vadd.f32 0.0, %v1176
      %1178 = vmatmul.bf16.gmra.mxu0 %v1065
      %v1179 = vpop.f32.mrf.mxu0
      %v1180 = vpop.f32.mrf.mxu0
      %1181 = vmatmul.bf16.gmra.mxu0 %v1068
      %v1182 = vpop.f32.mrf.mxu0
      %v1183 = vadd.f32 0.0, %v1182
      %v1184 = vpop.f32.mrf.mxu0
      %v1185 = vadd.f32 0.0, %v1184
      %1186 = vmatmul.bf16.gmra.mxu0 %v1071
      %v1187 = vpop.f32.mrf.mxu0
      %v1188 = vpop.f32.mrf.mxu0
      %1189 = vmatmul.bf16.gmra.mxu0 %v1074
      %v1190 = vpop.f32.mrf.mxu0
      %v1191 = vadd.f32 0.0, %v1190
      %v1192 = vpop.f32.mrf.mxu0
      %v1193 = vadd.f32 0.0, %v1192
      %1194 = vmatmul.bf16.gmra.mxu0 %v1077
      %v1195 = vpop.f32.mrf.mxu0
      %v1196 = vpop.f32.mrf.mxu0
      %1197 = vmatmul.bf16.gmra.mxu0 %v1080
      %v1198 = vpop.f32.mrf.mxu0
      %v1199 = vadd.f32 0.0, %v1198
      %v1200 = vpop.f32.mrf.mxu0
      %v1201 = vadd.f32 0.0, %v1200
      %1202 = vmatmul.bf16.gmra.mxu0 %v1083
      %v1203 = vpop.f32.mrf.mxu0
      %v1204 = vpop.f32.mrf.mxu0
      %1205 = vmatmul.bf16.gmra.mxu0 %v1086
      %v1206 = vpop.f32.mrf.mxu0
      %v1207 = vadd.f32 0.0, %v1206
      %v1208 = vpop.f32.mrf.mxu0
      %v1209 = vadd.f32 0.0, %v1208
      %1210 = vmatmul.bf16.gmra.mxu0 %v1089
      %v1211 = vpop.f32.mrf.mxu0
      %v1212 = vpop.f32.mrf.mxu0
      %1213 = vmatmul.bf16.gmra.mxu0 %v1092
      %v1214 = vpop.f32.mrf.mxu0
      %v1215 = vadd.f32 0.0, %v1214
      %v1216 = vpop.f32.mrf.mxu0
      %v1217 = vadd.f32 0.0, %v1216
      %1218 = vmatmul.bf16.gmra.mxu0 %v1095
      %v1219 = vpop.f32.mrf.mxu0
      %v1220 = vpop.f32.mrf.mxu0
      %1221 = vmatmul.bf16.gmra.mxu0 %v1098
      %v1222 = vpop.f32.mrf.mxu0
      %v1223 = vadd.f32 0.0, %v1222
      %v1224 = vpop.f32.mrf.mxu0
      %v1225 = vadd.f32 0.0, %v1224
      %1226 = vmatmul.bf16.gmra.mxu0 %v1101
      %v1227 = vpop.f32.mrf.mxu0
      %v1228 = vpop.f32.mrf.mxu0
      %1229 = vmatmul.bf16.gmra.mxu0 %v1104
      %v1230 = vpop.f32.mrf.mxu0
      %v1231 = vadd.f32 0.0, %v1230
      %v1232 = vpop.f32.mrf.mxu0
      %v1233 = vadd.f32 0.0, %v1232
      %1234 = vmatmul.bf16.gmra.mxu0 %v1107
      %v1235 = vpop.f32.mrf.mxu0
      %v1236 = vpop.f32.mrf.mxu0
      %1237 = vmatmul.bf16.gmra.mxu0 %v1110
      %v1238 = vpop.f32.mrf.mxu0
      %v1239 = vadd.f32 0.0, %v1238
      %v1240 = vpop.f32.mrf.mxu0
      %v1241 = vadd.f32 0.0, %v1240
      %1242 = vmatmul.bf16.gmra.mxu0 %v1113
      %v1243 = vpop.f32.mrf.mxu0
      %v1244 = vpop.f32.mrf.mxu0
      %1245 = vmatmul.bf16.gmra.mxu0 %v1116
      %v1246 = vpop.f32.mrf.mxu0
      %v1247 = vadd.f32 0.0, %v1246
      %v1248 = vpop.f32.mrf.mxu0
      %v1249 = vadd.f32 0.0, %v1248
      %1250 = vmatmul.bf16.gmra.mxu0 %v1119
      %v1251 = vpop.f32.mrf.mxu0
      %v1252 = vpop.f32.mrf.mxu0
      %1253 = vmatmul.bf16.gmra.mxu0 %v1122
      %v1254 = vpop.f32.mrf.mxu0
      %v1255 = vadd.f32 0.0, %v1254
      %v1256 = vpop.f32.mrf.mxu0
      %v1257 = vadd.f32 0.0, %v1256
      %1258 = vmatmul.bf16.gmra.mxu0 %v1125
      %v1259 = vpop.f32.mrf.mxu0
      %v1260 = vpop.f32.mrf.mxu0
      %1261 = vmatmul.bf16.gmra.mxu0 %v1128
      %v1262 = vpop.f32.mrf.mxu0
      %v1263 = vadd.f32 0.0, %v1262
      %v1264 = vpop.f32.mrf.mxu0
      %v1265 = vadd.f32 0.0, %v1264
      %1266 = vmatmul.bf16.gmra.mxu0 %v1131
      %v1267 = vpop.f32.mrf.mxu0
      %v1268 = vpop.f32.mrf.mxu0
      %1269 = vdwg.mxu0
      %v1274 = vunpack.c.l.b16 %v491
      %v1275 = vunpack.c.l.b16 %v492
      %v1276 = vunpack.c.l.b16 %v493
      %v1277 = vunpack.c.l.b16 %v494
      %v1278 = vpack.c.b16 %v1275, %v1274
      %v1279 = vpack.c.b16 %v1277, %v1276
      %v1280 = vpack.c.b16 %v695, %v695
      %v1282 = vshrl.u32 %v1278, 16
      %v1284 = vrot.slane %v1282, 3
      %v1285 = vshll.u32 %v1278, 16
      %v1287 = vrot.slane %v1285, 4
      %v1288 = vor.u32 %v1284, %v1287
      %v1290 = vshrl.u32 %v1279, 16
      %v1292 = vrot.slane %v1290, 3
      %v1293 = vshll.u32 %v1279, 16
      %v1295 = vrot.slane %v1293, 4
      %v1296 = vor.u32 %v1292, %v1295
      %v1297 = vsel %vm733, %v1288, %v1296
      %v1298 = vsel %vm733, %v1296, %v741
      %v1300 = vshrl.u32 %v1280, 16
      %v1302 = vrot.slane %v1300, 3
      %v1303 = vshll.u32 %v1280, 16
      %v1305 = vrot.slane %v1303, 4
      %v1306 = vor.u32 %v1302, %v1305
      %v1307 = vsel %vm733, %v1001, %v1306
      %v1310 = vunpack.c.l.b16 %v565
      %v1311 = vunpack.c.l.b16 %v566
      %v1312 = vpack.c.b16 %v1311, %v1310
      %v1315 = vsel %vm1036, %v1297, 0
      %v1318 = vsel %vm1036, %v1298, 0
      %v1321 = vsel %vm1036, %v1307, 0
      %1323 = vmatpush.bf16.msra.mxu0 0
      %1324 = vmatpush.bf16.msra.mxu0 0
      %1325 = vmatpush.bf16.msra.mxu0 0
      %1326 = vmatpush.bf16.msra.mxu0 0
      %1327 = vmatpush.bf16.msra.mxu0 0
      %1328 = vmatpush.bf16.msra.mxu0 0
      %1329 = vmatpush.bf16.msra.mxu0 0
      %1330 = vmatpush.bf16.msra.mxu0 %v1312
      %1331 = vmatmul.bf16.gmra.mxu0 %v1315
      %v1332 = vpop.f32.mrf.mxu0
      %v1333 = vadd.f32 %v1143, %v1332
      %v1334 = vpop.f32.mrf.mxu0
      %v1335 = vadd.f32 %v1145, %v1334
      %1336 = vmatmul.bf16.gmra.mxu0 %v1318
      %v1337 = vpop.f32.mrf.mxu0
      %v1338 = vpop.f32.mrf.mxu0
      %1339 = vmatmul.bf16.gmra.mxu0 %v1038
      %v1340 = vpop.f32.mrf.mxu0
      %v1341 = vadd.f32 %v1151, %v1340
      %v1342 = vpop.f32.mrf.mxu0
      %v1343 = vadd.f32 %v1153, %v1342
      %1344 = vmatmul.bf16.gmra.mxu0 %v1041
      %v1345 = vpop.f32.mrf.mxu0
      %v1346 = vpop.f32.mrf.mxu0
      %1347 = vmatmul.bf16.gmra.mxu0 %v1044
      %v1348 = vpop.f32.mrf.mxu0
      %v1349 = vadd.f32 %v1159, %v1348
      %v1350 = vpop.f32.mrf.mxu0
      %v1351 = vadd.f32 %v1161, %v1350
      %1352 = vmatmul.bf16.gmra.mxu0 %v1047
      %v1353 = vpop.f32.mrf.mxu0
      %v1354 = vpop.f32.mrf.mxu0
      %1355 = vmatmul.bf16.gmra.mxu0 %v1050
      %v1356 = vpop.f32.mrf.mxu0
      %v1357 = vadd.f32 %v1167, %v1356
      %v1358 = vpop.f32.mrf.mxu0
      %v1359 = vadd.f32 %v1169, %v1358
      %1360 = vmatmul.bf16.gmra.mxu0 %v1053
      %v1361 = vpop.f32.mrf.mxu0
      %v1362 = vpop.f32.mrf.mxu0
      %1363 = vmatmul.bf16.gmra.mxu0 %v1056
      %v1364 = vpop.f32.mrf.mxu0
      %v1365 = vadd.f32 %v1175, %v1364
      %v1366 = vpop.f32.mrf.mxu0
      %v1367 = vadd.f32 %v1177, %v1366
      %1368 = vmatmul.bf16.gmra.mxu0 %v1059
      %v1369 = vpop.f32.mrf.mxu0
      %v1370 = vpop.f32.mrf.mxu0
      %1371 = vmatmul.bf16.gmra.mxu0 %v1062
      %v1372 = vpop.f32.mrf.mxu0
      %v1373 = vadd.f32 %v1183, %v1372
      %v1374 = vpop.f32.mrf.mxu0
      %v1375 = vadd.f32 %v1185, %v1374
      %1376 = vmatmul.bf16.gmra.mxu0 %v1065
      %v1377 = vpop.f32.mrf.mxu0
      %v1378 = vpop.f32.mrf.mxu0
      %1379 = vmatmul.bf16.gmra.mxu0 %v1068
      %v1380 = vpop.f32.mrf.mxu0
      %v1381 = vadd.f32 %v1191, %v1380
      %v1382 = vpop.f32.mrf.mxu0
      %v1383 = vadd.f32 %v1193, %v1382
      %1384 = vmatmul.bf16.gmra.mxu0 %v1071
      %v1385 = vpop.f32.mrf.mxu0
      %v1386 = vpop.f32.mrf.mxu0
      %1387 = vmatmul.bf16.gmra.mxu0 %v1074
      %v1388 = vpop.f32.mrf.mxu0
      %v1389 = vadd.f32 %v1199, %v1388
      %v1390 = vpop.f32.mrf.mxu0
      %v1391 = vadd.f32 %v1201, %v1390
      %1392 = vmatmul.bf16.gmra.mxu0 %v1077
      %v1393 = vpop.f32.mrf.mxu0
      %v1394 = vpop.f32.mrf.mxu0
      %1395 = vmatmul.bf16.gmra.mxu0 %v1080
      %v1396 = vpop.f32.mrf.mxu0
      %v1397 = vadd.f32 %v1207, %v1396
      %v1398 = vpop.f32.mrf.mxu0
      %v1399 = vadd.f32 %v1209, %v1398
      %1400 = vmatmul.bf16.gmra.mxu0 %v1083
      %v1401 = vpop.f32.mrf.mxu0
      %v1402 = vpop.f32.mrf.mxu0
      %1403 = vmatmul.bf16.gmra.mxu0 %v1086
      %v1404 = vpop.f32.mrf.mxu0
      %v1405 = vadd.f32 %v1215, %v1404
      %v1406 = vpop.f32.mrf.mxu0
      %v1407 = vadd.f32 %v1217, %v1406
      %1408 = vmatmul.bf16.gmra.mxu0 %v1089
      %v1409 = vpop.f32.mrf.mxu0
      %v1410 = vpop.f32.mrf.mxu0
      %1411 = vmatmul.bf16.gmra.mxu0 %v1092
      %v1412 = vpop.f32.mrf.mxu0
      %v1413 = vadd.f32 %v1223, %v1412
      %v1414 = vpop.f32.mrf.mxu0
      %v1415 = vadd.f32 %v1225, %v1414
      %1416 = vmatmul.bf16.gmra.mxu0 %v1095
      %v1417 = vpop.f32.mrf.mxu0
      %v1418 = vpop.f32.mrf.mxu0
      %1419 = vmatmul.bf16.gmra.mxu0 %v1098
      %v1420 = vpop.f32.mrf.mxu0
      %v1421 = vadd.f32 %v1231, %v1420
      %v1422 = vpop.f32.mrf.mxu0
      %v1423 = vadd.f32 %v1233, %v1422
      %1424 = vmatmul.bf16.gmra.mxu0 %v1101
      %v1425 = vpop.f32.mrf.mxu0
      %v1426 = vpop.f32.mrf.mxu0
      %1427 = vmatmul.bf16.gmra.mxu0 %v1104
      %v1428 = vpop.f32.mrf.mxu0
      %v1429 = vadd.f32 %v1239, %v1428
      %v1430 = vpop.f32.mrf.mxu0
      %v1431 = vadd.f32 %v1241, %v1430
      %1432 = vmatmul.bf16.gmra.mxu0 %v1107
      %v1433 = vpop.f32.mrf.mxu0
      %v1434 = vpop.f32.mrf.mxu0
      %1435 = vmatmul.bf16.gmra.mxu0 %v1110
      %v1436 = vpop.f32.mrf.mxu0
      %v1437 = vadd.f32 %v1247, %v1436
      %v1438 = vpop.f32.mrf.mxu0
      %v1439 = vadd.f32 %v1249, %v1438
      %1440 = vmatmul.bf16.gmra.mxu0 %v1113
      %v1441 = vpop.f32.mrf.mxu0
      %v1442 = vpop.f32.mrf.mxu0
      %1443 = vmatmul.bf16.gmra.mxu0 %v1116
      %v1444 = vpop.f32.mrf.mxu0
      %v1445 = vadd.f32 %v1255, %v1444
      %v1446 = vpop.f32.mrf.mxu0
      %v1447 = vadd.f32 %v1257, %v1446
      %1448 = vmatmul.bf16.gmra.mxu0 %v1119
      %v1449 = vpop.f32.mrf.mxu0
      %v1450 = vpop.f32.mrf.mxu0
      %1451 = vmatmul.bf16.gmra.mxu0 %v1122
      %v1452 = vpop.f32.mrf.mxu0
      %v1453 = vadd.f32 %v1263, %v1452
      %v1454 = vpop.f32.mrf.mxu0
      %v1455 = vadd.f32 %v1265, %v1454
      %1456 = vmatmul.bf16.gmra.mxu0 %v1321
      %v1457 = vpop.f32.mrf.mxu0
      %v1458 = vpop.f32.mrf.mxu0
      %1459 = vdwg.mxu0
      %s1460 = scalar_lea.vmem %s3, 16
      %v1461 = vld [vmem:[%s1460] sm:$0xf]
      %v1462 = vld [vmem:[%s1460 + $0x4] sm:$0xf]
      %v1467 = vunpack.c.l.b16 %v560
      %v1468 = vunpack.c.l.b16 %v561
      %v1469 = vunpack.c.l.b16 %v562
      %v1470 = vunpack.c.l.b16 %v563
      %v1471 = vpack.c.b16 %v1467, %v699
      %v1472 = vpack.c.b16 %v1469, %v1468
      %v1473 = vpack.c.b16 %v1470, %v1470
      %v1475 = vshrl.u32 %v1471, 16
      %v1477 = vrot.slane %v1475, 3
      %v1478 = vshll.u32 %v1471, 16
      %v1480 = vrot.slane %v1478, 4
      %v1481 = vor.u32 %v1477, %v1480
      %v1482 = vsel %vm733, %v1019, %v1481
      %v1484 = vshrl.u32 %v1472, 16
      %v1486 = vrot.slane %v1484, 3
      %v1487 = vshll.u32 %v1472, 16
      %v1489 = vrot.slane %v1487, 4
      %v1490 = vor.u32 %v1486, %v1489
      %v1491 = vsel %vm733, %v1481, %v1490
      %v1493 = vshrl.u32 %v1473, 16
      %v1495 = vrot.slane %v1493, 3
      %v1496 = vshll.u32 %v1473, 16
      %v1498 = vrot.slane %v1496, 4
      %v1499 = vor.u32 %v1495, %v1498
      %v1500 = vsel %vm733, %v1490, %v1499
      %v1503 = vunpack.c.l.b16 %v1461
      %v1504 = vunpack.c.l.b16 %v1462
      %v1505 = vpack.c.b16 %v1504, %v1503
      %v1508 = vsel %vm1036, %v1482, 0
      %v1511 = vsel %vm1036, %v1491, 0
      %v1514 = vsel %vm1036, %v1500, 0
      %1516 = vmatpush.bf16.msra.mxu0 0
      %1517 = vmatpush.bf16.msra.mxu0 0
      %1518 = vmatpush.bf16.msra.mxu0 0
      %1519 = vmatpush.bf16.msra.mxu0 0
      %1520 = vmatpush.bf16.msra.mxu0 0
      %1521 = vmatpush.bf16.msra.mxu0 0
      %1522 = vmatpush.bf16.msra.mxu0 0
      %1523 = vmatpush.bf16.msra.mxu0 %v1505
      %1524 = vmatmul.bf16.gmra.mxu0 %v1044
      %v1525 = vpop.f32.mrf.mxu0
      %v1526 = vadd.f32 0.0, %v1525
      %v1527 = vpop.f32.mrf.mxu0
      %v1528 = vadd.f32 0.0, %v1527
      %1529 = vmatmul.bf16.gmra.mxu0 %v1047
      %v1530 = vpop.f32.mrf.mxu0
      %v1531 = vpop.f32.mrf.mxu0
      %1532 = vmatmul.bf16.gmra.mxu0 %v1050
      %v1533 = vpop.f32.mrf.mxu0
      %v1534 = vadd.f32 0.0, %v1533
      %v1535 = vpop.f32.mrf.mxu0
      %v1536 = vadd.f32 0.0, %v1535
      %1537 = vmatmul.bf16.gmra.mxu0 %v1053
      %v1538 = vpop.f32.mrf.mxu0
      %v1539 = vpop.f32.mrf.mxu0
      %1540 = vmatmul.bf16.gmra.mxu0 %v1056
      %v1541 = vpop.f32.mrf.mxu0
      %v1542 = vadd.f32 0.0, %v1541
      %v1543 = vpop.f32.mrf.mxu0
      %v1544 = vadd.f32 0.0, %v1543
      %1545 = vmatmul.bf16.gmra.mxu0 %v1059
      %v1546 = vpop.f32.mrf.mxu0
      %v1547 = vpop.f32.mrf.mxu0
      %1548 = vmatmul.bf16.gmra.mxu0 %v1062
      %v1549 = vpop.f32.mrf.mxu0
      %v1550 = vadd.f32 0.0, %v1549
      %v1551 = vpop.f32.mrf.mxu0
      %v1552 = vadd.f32 0.0, %v1551
      %1553 = vmatmul.bf16.gmra.mxu0 %v1065
      %v1554 = vpop.f32.mrf.mxu0
      %v1555 = vpop.f32.mrf.mxu0
      %1556 = vmatmul.bf16.gmra.mxu0 %v1068
      %v1557 = vpop.f32.mrf.mxu0
      %v1558 = vadd.f32 0.0, %v1557
      %v1559 = vpop.f32.mrf.mxu0
      %v1560 = vadd.f32 0.0, %v1559
      %1561 = vmatmul.bf16.gmra.mxu0 %v1071
      %v1562 = vpop.f32.mrf.mxu0
      %v1563 = vpop.f32.mrf.mxu0
      %1564 = vmatmul.bf16.gmra.mxu0 %v1074
      %v1565 = vpop.f32.mrf.mxu0
      %v1566 = vadd.f32 0.0, %v1565
      %v1567 = vpop.f32.mrf.mxu0
      %v1568 = vadd.f32 0.0, %v1567
      %1569 = vmatmul.bf16.gmra.mxu0 %v1077
      %v1570 = vpop.f32.mrf.mxu0
      %v1571 = vpop.f32.mrf.mxu0
      %1572 = vmatmul.bf16.gmra.mxu0 %v1080
      %v1573 = vpop.f32.mrf.mxu0
      %v1574 = vadd.f32 0.0, %v1573
      %v1575 = vpop.f32.mrf.mxu0
      %v1576 = vadd.f32 0.0, %v1575
      %1577 = vmatmul.bf16.gmra.mxu0 %v1083
      %v1578 = vpop.f32.mrf.mxu0
      %v1579 = vpop.f32.mrf.mxu0
      %1580 = vmatmul.bf16.gmra.mxu0 %v1086
      %v1581 = vpop.f32.mrf.mxu0
      %v1582 = vadd.f32 0.0, %v1581
      %v1583 = vpop.f32.mrf.mxu0
      %v1584 = vadd.f32 0.0, %v1583
      %1585 = vmatmul.bf16.gmra.mxu0 %v1089
      %v1586 = vpop.f32.mrf.mxu0
      %v1587 = vpop.f32.mrf.mxu0
      %1588 = vmatmul.bf16.gmra.mxu0 %v1092
      %v1589 = vpop.f32.mrf.mxu0
      %v1590 = vadd.f32 0.0, %v1589
      %v1591 = vpop.f32.mrf.mxu0
      %v1592 = vadd.f32 0.0, %v1591
      %1593 = vmatmul.bf16.gmra.mxu0 %v1095
      %v1594 = vpop.f32.mrf.mxu0
      %v1595 = vpop.f32.mrf.mxu0
      %1596 = vmatmul.bf16.gmra.mxu0 %v1098
      %v1597 = vpop.f32.mrf.mxu0
      %v1598 = vadd.f32 0.0, %v1597
      %v1599 = vpop.f32.mrf.mxu0
      %v1600 = vadd.f32 0.0, %v1599
      %1601 = vmatmul.bf16.gmra.mxu0 %v1101
      %v1602 = vpop.f32.mrf.mxu0
      %v1603 = vpop.f32.mrf.mxu0
      %1604 = vmatmul.bf16.gmra.mxu0 %v1104
      %v1605 = vpop.f32.mrf.mxu0
      %v1606 = vadd.f32 0.0, %v1605
      %v1607 = vpop.f32.mrf.mxu0
      %v1608 = vadd.f32 0.0, %v1607
      %1609 = vmatmul.bf16.gmra.mxu0 %v1107
      %v1610 = vpop.f32.mrf.mxu0
      %v1611 = vpop.f32.mrf.mxu0
      %1612 = vmatmul.bf16.gmra.mxu0 %v1110
      %v1613 = vpop.f32.mrf.mxu0
      %v1614 = vadd.f32 0.0, %v1613
      %v1615 = vpop.f32.mrf.mxu0
      %v1616 = vadd.f32 0.0, %v1615
      %1617 = vmatmul.bf16.gmra.mxu0 %v1113
      %v1618 = vpop.f32.mrf.mxu0
      %v1619 = vpop.f32.mrf.mxu0
      %1620 = vmatmul.bf16.gmra.mxu0 %v1116
      %v1621 = vpop.f32.mrf.mxu0
      %v1622 = vadd.f32 0.0, %v1621
      %v1623 = vpop.f32.mrf.mxu0
      %v1624 = vadd.f32 0.0, %v1623
      %1625 = vmatmul.bf16.gmra.mxu0 %v1119
      %v1626 = vpop.f32.mrf.mxu0
      %v1627 = vpop.f32.mrf.mxu0
      %1628 = vmatmul.bf16.gmra.mxu0 %v1122
      %v1629 = vpop.f32.mrf.mxu0
      %v1630 = vadd.f32 0.0, %v1629
      %v1631 = vpop.f32.mrf.mxu0
      %v1632 = vadd.f32 0.0, %v1631
      %1633 = vmatmul.bf16.gmra.mxu0 %v1125
      %v1634 = vpop.f32.mrf.mxu0
      %v1635 = vpop.f32.mrf.mxu0
      %1636 = vmatmul.bf16.gmra.mxu0 %v1128
      %v1637 = vpop.f32.mrf.mxu0
      %v1638 = vadd.f32 0.0, %v1637
      %v1639 = vpop.f32.mrf.mxu0
      %v1640 = vadd.f32 0.0, %v1639
      %1641 = vmatmul.bf16.gmra.mxu0 %v1508
      %v1642 = vpop.f32.mrf.mxu0
      %v1643 = vpop.f32.mrf.mxu0
      %1644 = vmatmul.bf16.gmra.mxu0 %v1511
      %v1645 = vpop.f32.mrf.mxu0
      %v1646 = vadd.f32 0.0, %v1645
      %v1647 = vpop.f32.mrf.mxu0
      %v1648 = vadd.f32 0.0, %v1647
      %1649 = vmatmul.bf16.gmra.mxu0 %v1514
      %v1650 = vpop.f32.mrf.mxu0
      %v1651 = vpop.f32.mrf.mxu0
      %1652 = vdwg.mxu0
      %v1653 = vadd.f32 %v1333, %v1526
      %v1654 = vadd.f32 %v1335, %v1528
      %v1655 = vadd.f32 %v1341, %v1534
      %v1656 = vadd.f32 %v1343, %v1536
      %v1657 = vadd.f32 %v1349, %v1542
      %v1658 = vadd.f32 %v1351, %v1544
      %v1659 = vadd.f32 %v1357, %v1550
      %v1660 = vadd.f32 %v1359, %v1552
      %v1661 = vadd.f32 %v1365, %v1558
      %v1662 = vadd.f32 %v1367, %v1560
      %v1663 = vadd.f32 %v1373, %v1566
      %v1664 = vadd.f32 %v1375, %v1568
      %v1665 = vadd.f32 %v1381, %v1574
      %v1666 = vadd.f32 %v1383, %v1576
      %v1667 = vadd.f32 %v1389, %v1582
      %v1668 = vadd.f32 %v1391, %v1584
      %v1669 = vadd.f32 %v1397, %v1590
      %v1670 = vadd.f32 %v1399, %v1592
      %v1671 = vadd.f32 %v1405, %v1598
      %v1672 = vadd.f32 %v1407, %v1600
      %v1673 = vadd.f32 %v1413, %v1606
      %v1674 = vadd.f32 %v1415, %v1608
      %v1675 = vadd.f32 %v1421, %v1614
      %v1676 = vadd.f32 %v1423, %v1616
      %v1677 = vadd.f32 %v1429, %v1622
      %v1678 = vadd.f32 %v1431, %v1624
      %v1679 = vadd.f32 %v1437, %v1630
      %v1680 = vadd.f32 %v1439, %v1632
      %v1681 = vadd.f32 %v1445, %v1638
      %v1682 = vadd.f32 %v1447, %v1640
      %v1683 = vadd.f32 %v1453, %v1646
      %v1684 = vadd.f32 %v1455, %v1648
      %s1685 = scalar_lea.vmem %s3, 24
      %v1686 = vld [vmem:[%s1685] sm:$0xf]
      %v1687 = vld [vmem:[%s1685 + $0x4] sm:$0xf]
      %v1688 = vpack.c.b16 %v1276, %v1275
      %v1689 = vpack.c.b16 %v635, %v1277
      %v1690 = vpack.c.b16 %v637, %v636
      %v1691 = vpack.c.b16 %v639, %v638
      %v1692 = vpack.c.b16 %v641, %v640
      %v1693 = vpack.c.b16 %v643, %v642
      %v1694 = vpack.c.b16 %v645, %v644
      %v1695 = vpack.c.b16 %v647, %v646
      %v1696 = vpack.c.b16 %v649, %v648
      %v1697 = vpack.c.b16 %v651, %v650
      %v1698 = vpack.c.b16 %v653, %v652
      %v1699 = vpack.c.b16 %v655, %v654
      %v1700 = vpack.c.b16 %v657, %v656
      %v1701 = vpack.c.b16 %v659, %v658
      %v1702 = vpack.c.b16 %v661, %v660
      %v1703 = vpack.c.b16 %v663, %v662
      %v1704 = vpack.c.b16 %v665, %v664
      %v1705 = vpack.c.b16 %v667, %v666
      %v1706 = vpack.c.b16 %v669, %v668
      %v1707 = vpack.c.b16 %v671, %v670
      %v1708 = vpack.c.b16 %v673, %v672
      %v1709 = vpack.c.b16 %v675, %v674
      %v1710 = vpack.c.b16 %v677, %v676
      %v1711 = vpack.c.b16 %v679, %v678
      %v1712 = vpack.c.b16 %v681, %v680
      %v1713 = vpack.c.b16 %v683, %v682
      %v1714 = vpack.c.b16 %v685, %v684
      %v1715 = vpack.c.b16 %v687, %v686
      %v1716 = vpack.c.b16 %v689, %v688
      %v1717 = vpack.c.b16 %v691, %v690
      %v1718 = vpack.c.b16 %v693, %v692
      %v1719 = vpack.c.b16 %v695, %v694
      %v1722 = vunpack.c.l.b16 %v1686
      %v1723 = vunpack.c.l.b16 %v1687
      %v1724 = vpack.c.b16 %v1723, %v1722
      %v1727 = vsel %vm1036, %v1688, 0
      %v1730 = vsel %vm1036, %v1689, 0
      %v1733 = vsel %vm1036, %v1690, 0
      %v1736 = vsel %vm1036, %v1691, 0
      %v1739 = vsel %vm1036, %v1692, 0
      %v1742 = vsel %vm1036, %v1693, 0
      %v1745 = vsel %vm1036, %v1694, 0
      %v1748 = vsel %vm1036, %v1695, 0
      %v1751 = vsel %vm1036, %v1696, 0
      %v1754 = vsel %vm1036, %v1697, 0
      %v1757 = vsel %vm1036, %v1698, 0
      %v1760 = vsel %vm1036, %v1699, 0
      %v1763 = vsel %vm1036, %v1700, 0
      %v1766 = vsel %vm1036, %v1701, 0
      %v1769 = vsel %vm1036, %v1702, 0
      %v1772 = vsel %vm1036, %v1703, 0
      %v1775 = vsel %vm1036, %v1704, 0
      %v1778 = vsel %vm1036, %v1705, 0
      %v1781 = vsel %vm1036, %v1706, 0
      %v1784 = vsel %vm1036, %v1707, 0
      %v1787 = vsel %vm1036, %v1708, 0
      %v1790 = vsel %vm1036, %v1709, 0
      %v1793 = vsel %vm1036, %v1710, 0
      %v1796 = vsel %vm1036, %v1711, 0
      %v1799 = vsel %vm1036, %v1712, 0
      %v1802 = vsel %vm1036, %v1713, 0
      %v1805 = vsel %vm1036, %v1714, 0
      %v1808 = vsel %vm1036, %v1715, 0
      %v1811 = vsel %vm1036, %v1716, 0
      %v1814 = vsel %vm1036, %v1717, 0
      %v1817 = vsel %vm1036, %v1718, 0
      %v1820 = vsel %vm1036, %v1719, 0
      %1822 = vmatpush.bf16.msra.mxu0 0
      %1823 = vmatpush.bf16.msra.mxu0 0
      %1824 = vmatpush.bf16.msra.mxu0 0
      %1825 = vmatpush.bf16.msra.mxu0 0
      %1826 = vmatpush.bf16.msra.mxu0 0
      %1827 = vmatpush.bf16.msra.mxu0 0
      %1828 = vmatpush.bf16.msra.mxu0 0
      %1829 = vmatpush.bf16.msra.mxu0 %v1724
      %1830 = vmatmul.bf16.gmra.mxu0 %v1727
      %v1831 = vpop.f32.mrf.mxu0
      %v1832 = vadd.f32 0.0, %v1831
      %v1833 = vpop.f32.mrf.mxu0
      %v1834 = vadd.f32 0.0, %v1833
      %1835 = vmatmul.bf16.gmra.mxu0 %v1730
      %v1836 = vpop.f32.mrf.mxu0
      %v1837 = vpop.f32.mrf.mxu0
      %1838 = vmatmul.bf16.gmra.mxu0 %v1733
      %v1839 = vpop.f32.mrf.mxu0
      %v1840 = vadd.f32 0.0, %v1839
      %v1841 = vpop.f32.mrf.mxu0
      %v1842 = vadd.f32 0.0, %v1841
      %1843 = vmatmul.bf16.gmra.mxu0 %v1736
      %v1844 = vpop.f32.mrf.mxu0
      %v1845 = vpop.f32.mrf.mxu0
      %1846 = vmatmul.bf16.gmra.mxu0 %v1739
      %v1847 = vpop.f32.mrf.mxu0
      %v1848 = vadd.f32 0.0, %v1847
      %v1849 = vpop.f32.mrf.mxu0
      %v1850 = vadd.f32 0.0, %v1849
      %1851 = vmatmul.bf16.gmra.mxu0 %v1742
      %v1852 = vpop.f32.mrf.mxu0
      %v1853 = vpop.f32.mrf.mxu0
      %1854 = vmatmul.bf16.gmra.mxu0 %v1745
      %v1855 = vpop.f32.mrf.mxu0
      %v1856 = vadd.f32 0.0, %v1855
      %v1857 = vpop.f32.mrf.mxu0
      %v1858 = vadd.f32 0.0, %v1857
      %1859 = vmatmul.bf16.gmra.mxu0 %v1748
      %v1860 = vpop.f32.mrf.mxu0
      %v1861 = vpop.f32.mrf.mxu0
      %1862 = vmatmul.bf16.gmra.mxu0 %v1751
      %v1863 = vpop.f32.mrf.mxu0
      %v1864 = vadd.f32 0.0, %v1863
      %v1865 = vpop.f32.mrf.mxu0
      %v1866 = vadd.f32 0.0, %v1865
      %1867 = vmatmul.bf16.gmra.mxu0 %v1754
      %v1868 = vpop.f32.mrf.mxu0
      %v1869 = vpop.f32.mrf.mxu0
      %1870 = vmatmul.bf16.gmra.mxu0 %v1757
      %v1871 = vpop.f32.mrf.mxu0
      %v1872 = vadd.f32 0.0, %v1871
      %v1873 = vpop.f32.mrf.mxu0
      %v1874 = vadd.f32 0.0, %v1873
      %1875 = vmatmul.bf16.gmra.mxu0 %v1760
      %v1876 = vpop.f32.mrf.mxu0
      %v1877 = vpop.f32.mrf.mxu0
      %1878 = vmatmul.bf16.gmra.mxu0 %v1763
      %v1879 = vpop.f32.mrf.mxu0
      %v1880 = vadd.f32 0.0, %v1879
      %v1881 = vpop.f32.mrf.mxu0
      %v1882 = vadd.f32 0.0, %v1881
      %1883 = vmatmul.bf16.gmra.mxu0 %v1766
      %v1884 = vpop.f32.mrf.mxu0
      %v1885 = vpop.f32.mrf.mxu0
      %1886 = vmatmul.bf16.gmra.mxu0 %v1769
      %v1887 = vpop.f32.mrf.mxu0
      %v1888 = vadd.f32 0.0, %v1887
      %v1889 = vpop.f32.mrf.mxu0
      %v1890 = vadd.f32 0.0, %v1889
      %1891 = vmatmul.bf16.gmra.mxu0 %v1772
      %v1892 = vpop.f32.mrf.mxu0
      %v1893 = vpop.f32.mrf.mxu0
      %1894 = vmatmul.bf16.gmra.mxu0 %v1775
      %v1895 = vpop.f32.mrf.mxu0
      %v1896 = vadd.f32 0.0, %v1895
      %v1897 = vpop.f32.mrf.mxu0
      %v1898 = vadd.f32 0.0, %v1897
      %1899 = vmatmul.bf16.gmra.mxu0 %v1778
      %v1900 = vpop.f32.mrf.mxu0
      %v1901 = vpop.f32.mrf.mxu0
      %1902 = vmatmul.bf16.gmra.mxu0 %v1781
      %v1903 = vpop.f32.mrf.mxu0
      %v1904 = vadd.f32 0.0, %v1903
      %v1905 = vpop.f32.mrf.mxu0
      %v1906 = vadd.f32 0.0, %v1905
      %1907 = vmatmul.bf16.gmra.mxu0 %v1784
      %v1908 = vpop.f32.mrf.mxu0
      %v1909 = vpop.f32.mrf.mxu0
      %1910 = vmatmul.bf16.gmra.mxu0 %v1787
      %v1911 = vpop.f32.mrf.mxu0
      %v1912 = vadd.f32 0.0, %v1911
      %v1913 = vpop.f32.mrf.mxu0
      %v1914 = vadd.f32 0.0, %v1913
      %1915 = vmatmul.bf16.gmra.mxu0 %v1790
      %v1916 = vpop.f32.mrf.mxu0
      %v1917 = vpop.f32.mrf.mxu0
      %1918 = vmatmul.bf16.gmra.mxu0 %v1793
      %v1919 = vpop.f32.mrf.mxu0
      %v1920 = vadd.f32 0.0, %v1919
      %v1921 = vpop.f32.mrf.mxu0
      %v1922 = vadd.f32 0.0, %v1921
      %1923 = vmatmul.bf16.gmra.mxu0 %v1796
      %v1924 = vpop.f32.mrf.mxu0
      %v1925 = vpop.f32.mrf.mxu0
      %1926 = vmatmul.bf16.gmra.mxu0 %v1799
      %v1927 = vpop.f32.mrf.mxu0
      %v1928 = vadd.f32 0.0, %v1927
      %v1929 = vpop.f32.mrf.mxu0
      %v1930 = vadd.f32 0.0, %v1929
      %1931 = vmatmul.bf16.gmra.mxu0 %v1802
      %v1932 = vpop.f32.mrf.mxu0
      %v1933 = vpop.f32.mrf.mxu0
      %1934 = vmatmul.bf16.gmra.mxu0 %v1805
      %v1935 = vpop.f32.mrf.mxu0
      %v1936 = vadd.f32 0.0, %v1935
      %v1937 = vpop.f32.mrf.mxu0
      %v1938 = vadd.f32 0.0, %v1937
      %1939 = vmatmul.bf16.gmra.mxu0 %v1808
      %v1940 = vpop.f32.mrf.mxu0
      %v1941 = vpop.f32.mrf.mxu0
      %1942 = vmatmul.bf16.gmra.mxu0 %v1811
      %v1943 = vpop.f32.mrf.mxu0
      %v1944 = vadd.f32 0.0, %v1943
      %v1945 = vpop.f32.mrf.mxu0
      %v1946 = vadd.f32 0.0, %v1945
      %1947 = vmatmul.bf16.gmra.mxu0 %v1814
      %v1948 = vpop.f32.mrf.mxu0
      %v1949 = vpop.f32.mrf.mxu0
      %1950 = vmatmul.bf16.gmra.mxu0 %v1817
      %v1951 = vpop.f32.mrf.mxu0
      %v1952 = vadd.f32 0.0, %v1951
      %v1953 = vpop.f32.mrf.mxu0
      %v1954 = vadd.f32 0.0, %v1953
      %1955 = vmatmul.bf16.gmra.mxu0 %v1820
      %v1956 = vpop.f32.mrf.mxu0
      %v1957 = vpop.f32.mrf.mxu0
      %1958 = vdwg.mxu0
      %v1959 = vadd.f32 %v1653, %v1832
      %v1960 = vadd.f32 %v1654, %v1834
      %v1961 = vadd.f32 %v1655, %v1840
      %v1962 = vadd.f32 %v1656, %v1842
      %v1963 = vadd.f32 %v1657, %v1848
      %v1964 = vadd.f32 %v1658, %v1850
      %v1965 = vadd.f32 %v1659, %v1856
      %v1966 = vadd.f32 %v1660, %v1858
      %v1967 = vadd.f32 %v1661, %v1864
      %v1968 = vadd.f32 %v1662, %v1866
      %v1969 = vadd.f32 %v1663, %v1872
      %v1970 = vadd.f32 %v1664, %v1874
      %v1971 = vadd.f32 %v1665, %v1880
      %v1972 = vadd.f32 %v1666, %v1882
      %v1973 = vadd.f32 %v1667, %v1888
      %v1974 = vadd.f32 %v1668, %v1890
      %v1975 = vadd.f32 %v1669, %v1896
      %v1976 = vadd.f32 %v1670, %v1898
      %v1977 = vadd.f32 %v1671, %v1904
      %v1978 = vadd.f32 %v1672, %v1906
      %v1979 = vadd.f32 %v1673, %v1912
      %v1980 = vadd.f32 %v1674, %v1914
      %v1981 = vadd.f32 %v1675, %v1920
      %v1982 = vadd.f32 %v1676, %v1922
      %v1983 = vadd.f32 %v1677, %v1928
      %v1984 = vadd.f32 %v1678, %v1930
      %v1985 = vadd.f32 %v1679, %v1936
      %v1986 = vadd.f32 %v1680, %v1938
      %v1987 = vadd.f32 %v1681, %v1944
      %v1988 = vadd.f32 %v1682, %v1946
      %v1989 = vadd.f32 %v1683, %v1952
      %v1990 = vadd.f32 %v1684, %v1954
      %s1991 = scalar_lea.vmem %s3, 32
      %v1992 = vld [vmem:[%s1991] sm:$0xf]
      %v1993 = vld [vmem:[%s1991 + $0x4] sm:$0xf]
      %v1994 = vpack.c.b16 %v697, %v696
      %v1995 = vpack.c.b16 %v699, %v698
      %v1998 = vunpack.c.l.b16 %v1992
      %v1999 = vunpack.c.l.b16 %v1993
      %v2000 = vpack.c.b16 %v1999, %v1998
      %v2003 = vsel %vm1036, %v1994, 0
      %v2006 = vsel %vm1036, %v1995, 0
      %2008 = vmatpush.bf16.msra.mxu0 0
      %2009 = vmatpush.bf16.msra.mxu0 0
      %2010 = vmatpush.bf16.msra.mxu0 0
      %2011 = vmatpush.bf16.msra.mxu0 0
      %2012 = vmatpush.bf16.msra.mxu0 0
      %2013 = vmatpush.bf16.msra.mxu0 0
      %2014 = vmatpush.bf16.msra.mxu0 0
      %2015 = vmatpush.bf16.msra.mxu0 %v2000
      %2016 = vmatmul.bf16.gmra.mxu0 %v1733
      %v2017 = vpop.f32.mrf.mxu0
      %v2018 = vadd.f32 0.0, %v2017
      %v2019 = vpop.f32.mrf.mxu0
      %v2020 = vadd.f32 0.0, %v2019
      %2021 = vmatmul.bf16.gmra.mxu0 %v1736
      %v2022 = vpop.f32.mrf.mxu0
      %v2023 = vpop.f32.mrf.mxu0
      %2024 = vmatmul.bf16.gmra.mxu0 %v1739
      %v2025 = vpop.f32.mrf.mxu0
      %v2026 = vadd.f32 0.0, %v2025
      %v2027 = vpop.f32.mrf.mxu0
      %v2028 = vadd.f32 0.0, %v2027
      %2029 = vmatmul.bf16.gmra.mxu0 %v1742
      %v2030 = vpop.f32.mrf.mxu0
      %v2031 = vpop.f32.mrf.mxu0
      %2032 = vmatmul.bf16.gmra.mxu0 %v1745
      %v2033 = vpop.f32.mrf.mxu0
      %v2034 = vadd.f32 0.0, %v2033
      %v2035 = vpop.f32.mrf.mxu0
      %v2036 = vadd.f32 0.0, %v2035
      %2037 = vmatmul.bf16.gmra.mxu0 %v1748
      %v2038 = vpop.f32.mrf.mxu0
      %v2039 = vpop.f32.mrf.mxu0
      %2040 = vmatmul.bf16.gmra.mxu0 %v1751
      %v2041 = vpop.f32.mrf.mxu0
      %v2042 = vadd.f32 0.0, %v2041
      %v2043 = vpop.f32.mrf.mxu0
      %v2044 = vadd.f32 0.0, %v2043
      %2045 = vmatmul.bf16.gmra.mxu0 %v1754
      %v2046 = vpop.f32.mrf.mxu0
      %v2047 = vpop.f32.mrf.mxu0
      %2048 = vmatmul.bf16.gmra.mxu0 %v1757
      %v2049 = vpop.f32.mrf.mxu0
      %v2050 = vadd.f32 0.0, %v2049
      %v2051 = vpop.f32.mrf.mxu0
      %v2052 = vadd.f32 0.0, %v2051
      %2053 = vmatmul.bf16.gmra.mxu0 %v1760
      %v2054 = vpop.f32.mrf.mxu0
      %v2055 = vpop.f32.mrf.mxu0
      %2056 = vmatmul.bf16.gmra.mxu0 %v1763
      %v2057 = vpop.f32.mrf.mxu0
      %v2058 = vadd.f32 0.0, %v2057
      %v2059 = vpop.f32.mrf.mxu0
      %v2060 = vadd.f32 0.0, %v2059
      %2061 = vmatmul.bf16.gmra.mxu0 %v1766
      %v2062 = vpop.f32.mrf.mxu0
      %v2063 = vpop.f32.mrf.mxu0
      %2064 = vmatmul.bf16.gmra.mxu0 %v1769
      %v2065 = vpop.f32.mrf.mxu0
      %v2066 = vadd.f32 0.0, %v2065
      %v2067 = vpop.f32.mrf.mxu0
      %v2068 = vadd.f32 0.0, %v2067
      %2069 = vmatmul.bf16.gmra.mxu0 %v1772
      %v2070 = vpop.f32.mrf.mxu0
      %v2071 = vpop.f32.mrf.mxu0
      %2072 = vmatmul.bf16.gmra.mxu0 %v1775
      %v2073 = vpop.f32.mrf.mxu0
      %v2074 = vadd.f32 0.0, %v2073
      %v2075 = vpop.f32.mrf.mxu0
      %v2076 = vadd.f32 0.0, %v2075
      %2077 = vmatmul.bf16.gmra.mxu0 %v1778
      %v2078 = vpop.f32.mrf.mxu0
      %v2079 = vpop.f32.mrf.mxu0
      %2080 = vmatmul.bf16.gmra.mxu0 %v1781
      %v2081 = vpop.f32.mrf.mxu0
      %v2082 = vadd.f32 0.0, %v2081
      %v2083 = vpop.f32.mrf.mxu0
      %v2084 = vadd.f32 0.0, %v2083
      %2085 = vmatmul.bf16.gmra.mxu0 %v1784
      %v2086 = vpop.f32.mrf.mxu0
      %v2087 = vpop.f32.mrf.mxu0
      %2088 = vmatmul.bf16.gmra.mxu0 %v1787
      %v2089 = vpop.f32.mrf.mxu0
      %v2090 = vadd.f32 0.0, %v2089
      %v2091 = vpop.f32.mrf.mxu0
      %v2092 = vadd.f32 0.0, %v2091
      %2093 = vmatmul.bf16.gmra.mxu0 %v1790
      %v2094 = vpop.f32.mrf.mxu0
      %v2095 = vpop.f32.mrf.mxu0
      %2096 = vmatmul.bf16.gmra.mxu0 %v1793
      %v2097 = vpop.f32.mrf.mxu0
      %v2098 = vadd.f32 0.0, %v2097
      %v2099 = vpop.f32.mrf.mxu0
      %v2100 = vadd.f32 0.0, %v2099
      %2101 = vmatmul.bf16.gmra.mxu0 %v1796
      %v2102 = vpop.f32.mrf.mxu0
      %v2103 = vpop.f32.mrf.mxu0
      %2104 = vmatmul.bf16.gmra.mxu0 %v1799
      %v2105 = vpop.f32.mrf.mxu0
      %v2106 = vadd.f32 0.0, %v2105
      %v2107 = vpop.f32.mrf.mxu0
      %v2108 = vadd.f32 0.0, %v2107
      %2109 = vmatmul.bf16.gmra.mxu0 %v1802
      %v2110 = vpop.f32.mrf.mxu0
      %v2111 = vpop.f32.mrf.mxu0
      %2112 = vmatmul.bf16.gmra.mxu0 %v1805
      %v2113 = vpop.f32.mrf.mxu0
      %v2114 = vadd.f32 0.0, %v2113
      %v2115 = vpop.f32.mrf.mxu0
      %v2116 = vadd.f32 0.0, %v2115
      %2117 = vmatmul.bf16.gmra.mxu0 %v1808
      %v2118 = vpop.f32.mrf.mxu0
      %v2119 = vpop.f32.mrf.mxu0
      %2120 = vmatmul.bf16.gmra.mxu0 %v1811
      %v2121 = vpop.f32.mrf.mxu0
      %v2122 = vadd.f32 0.0, %v2121
      %v2123 = vpop.f32.mrf.mxu0
      %v2124 = vadd.f32 0.0, %v2123
      %2125 = vmatmul.bf16.gmra.mxu0 %v1814
      %v2126 = vpop.f32.mrf.mxu0
      %v2127 = vpop.f32.mrf.mxu0
      %2128 = vmatmul.bf16.gmra.mxu0 %v1817
      %v2129 = vpop.f32.mrf.mxu0
      %v2130 = vadd.f32 0.0, %v2129
      %v2131 = vpop.f32.mrf.mxu0
      %v2132 = vadd.f32 0.0, %v2131
      %2133 = vmatmul.bf16.gmra.mxu0 %v1820
      %v2134 = vpop.f32.mrf.mxu0
      %v2135 = vpop.f32.mrf.mxu0
      %2136 = vmatmul.bf16.gmra.mxu0 %v2003
      %v2137 = vpop.f32.mrf.mxu0
      %v2138 = vadd.f32 0.0, %v2137
      %v2139 = vpop.f32.mrf.mxu0
      %v2140 = vadd.f32 0.0, %v2139
      %2141 = vmatmul.bf16.gmra.mxu0 %v2006
      %v2142 = vpop.f32.mrf.mxu0
      %v2143 = vpop.f32.mrf.mxu0
      %2144 = vdwg.mxu0
      %v2145 = vadd.f32 %v1959, %v2018
      %v2146 = vadd.f32 %v1960, %v2020
      %v2147 = vadd.f32 %v1961, %v2026
      %v2148 = vadd.f32 %v1962, %v2028
      %v2149 = vadd.f32 %v1963, %v2034
      %v2150 = vadd.f32 %v1964, %v2036
      %v2151 = vadd.f32 %v1965, %v2042
      %v2152 = vadd.f32 %v1966, %v2044
      %v2153 = vadd.f32 %v1967, %v2050
      %v2154 = vadd.f32 %v1968, %v2052
      %v2155 = vadd.f32 %v1969, %v2058
      %v2156 = vadd.f32 %v1970, %v2060
      %v2157 = vadd.f32 %v1971, %v2066
      %v2158 = vadd.f32 %v1972, %v2068
      %v2159 = vadd.f32 %v1973, %v2074
      %v2160 = vadd.f32 %v1974, %v2076
      %v2161 = vadd.f32 %v1975, %v2082
      %v2162 = vadd.f32 %v1976, %v2084
      %v2163 = vadd.f32 %v1977, %v2090
      %v2164 = vadd.f32 %v1978, %v2092
      %v2165 = vadd.f32 %v1979, %v2098
      %v2166 = vadd.f32 %v1980, %v2100
      %v2167 = vadd.f32 %v1981, %v2106
      %v2168 = vadd.f32 %v1982, %v2108
      %v2169 = vadd.f32 %v1983, %v2114
      %v2170 = vadd.f32 %v1984, %v2116
      %v2171 = vadd.f32 %v1985, %v2122
      %v2172 = vadd.f32 %v1986, %v2124
      %v2173 = vadd.f32 %v1987, %v2130
      %v2174 = vadd.f32 %v1988, %v2132
      %v2175 = vadd.f32 %v1989, %v2138
      %v2176 = vadd.f32 %v1990, %v2140
      %s2177 = scalar_lea.vmem %s3, 40
      %v2178 = vld [vmem:[%s2177] sm:$0xf]
      %v2179 = vld [vmem:[%s2177 + $0x4] sm:$0xf]
      %v2180 = vpack.c.b16 %v1468, %v1467
      %v2181 = vpack.c.b16 %v1470, %v1469
      %v2184 = vunpack.c.l.b16 %v2178
      %v2185 = vunpack.c.l.b16 %v2179
      %v2186 = vpack.c.b16 %v2185, %v2184
      %v2189 = vsel %vm1036, %v2180, 0
      %v2192 = vsel %vm1036, %v2181, 0
      %2194 = vmatpush.bf16.msra.mxu0 0
      %2195 = vmatpush.bf16.msra.mxu0 0
      %2196 = vmatpush.bf16.msra.mxu0 0
      %2197 = vmatpush.bf16.msra.mxu0 0
      %2198 = vmatpush.bf16.msra.mxu0 0
      %2199 = vmatpush.bf16.msra.mxu0 0
      %2200 = vmatpush.bf16.msra.mxu0 0
      %2201 = vmatpush.bf16.msra.mxu0 %v2186
      %2202 = vmatmul.bf16.gmra.mxu0 %v1739
      %v2203 = vpop.f32.mrf.mxu0
      %v2204 = vadd.f32 0.0, %v2203
      %v2205 = vpop.f32.mrf.mxu0
      %v2206 = vadd.f32 0.0, %v2205
      %2207 = vmatmul.bf16.gmra.mxu0 %v1742
      %v2208 = vpop.f32.mrf.mxu0
      %v2209 = vpop.f32.mrf.mxu0
      %2210 = vmatmul.bf16.gmra.mxu0 %v1745
      %v2211 = vpop.f32.mrf.mxu0
      %v2212 = vadd.f32 0.0, %v2211
      %v2213 = vpop.f32.mrf.mxu0
      %v2214 = vadd.f32 0.0, %v2213
      %2215 = vmatmul.bf16.gmra.mxu0 %v1748
      %v2216 = vpop.f32.mrf.mxu0
      %v2217 = vpop.f32.mrf.mxu0
      %2218 = vmatmul.bf16.gmra.mxu0 %v1751
      %v2219 = vpop.f32.mrf.mxu0
      %v2220 = vadd.f32 0.0, %v2219
      %v2221 = vpop.f32.mrf.mxu0
      %v2222 = vadd.f32 0.0, %v2221
      %2223 = vmatmul.bf16.gmra.mxu0 %v1754
      %v2224 = vpop.f32.mrf.mxu0
      %v2225 = vpop.f32.mrf.mxu0
      %2226 = vmatmul.bf16.gmra.mxu0 %v1757
      %v2227 = vpop.f32.mrf.mxu0
      %v2228 = vadd.f32 0.0, %v2227
      %v2229 = vpop.f32.mrf.mxu0
      %v2230 = vadd.f32 0.0, %v2229
      %2231 = vmatmul.bf16.gmra.mxu0 %v1760
      %v2232 = vpop.f32.mrf.mxu0
      %v2233 = vpop.f32.mrf.mxu0
      %2234 = vmatmul.bf16.gmra.mxu0 %v1763
      %v2235 = vpop.f32.mrf.mxu0
      %v2236 = vadd.f32 0.0, %v2235
      %v2237 = vpop.f32.mrf.mxu0
      %v2238 = vadd.f32 0.0, %v2237
      %2239 = vmatmul.bf16.gmra.mxu0 %v1766
      %v2240 = vpop.f32.mrf.mxu0
      %v2241 = vpop.f32.mrf.mxu0
      %2242 = vmatmul.bf16.gmra.mxu0 %v1769
      %v2243 = vpop.f32.mrf.mxu0
      %v2244 = vadd.f32 0.0, %v2243
      %v2245 = vpop.f32.mrf.mxu0
      %v2246 = vadd.f32 0.0, %v2245
      %2247 = vmatmul.bf16.gmra.mxu0 %v1772
      %v2248 = vpop.f32.mrf.mxu0
      %v2249 = vpop.f32.mrf.mxu0
      %2250 = vmatmul.bf16.gmra.mxu0 %v1775
      %v2251 = vpop.f32.mrf.mxu0
      %v2252 = vadd.f32 0.0, %v2251
      %v2253 = vpop.f32.mrf.mxu0
      %v2254 = vadd.f32 0.0, %v2253
      %2255 = vmatmul.bf16.gmra.mxu0 %v1778
      %v2256 = vpop.f32.mrf.mxu0
      %v2257 = vpop.f32.mrf.mxu0
      %2258 = vmatmul.bf16.gmra.mxu0 %v1781
      %v2259 = vpop.f32.mrf.mxu0
      %v2260 = vadd.f32 0.0, %v2259
      %v2261 = vpop.f32.mrf.mxu0
      %v2262 = vadd.f32 0.0, %v2261
      %2263 = vmatmul.bf16.gmra.mxu0 %v1784
      %v2264 = vpop.f32.mrf.mxu0
      %v2265 = vpop.f32.mrf.mxu0
      %2266 = vmatmul.bf16.gmra.mxu0 %v1787
      %v2267 = vpop.f32.mrf.mxu0
      %v2268 = vadd.f32 0.0, %v2267
      %v2269 = vpop.f32.mrf.mxu0
      %v2270 = vadd.f32 0.0, %v2269
      %2271 = vmatmul.bf16.gmra.mxu0 %v1790
      %v2272 = vpop.f32.mrf.mxu0
      %v2273 = vpop.f32.mrf.mxu0
      %2274 = vmatmul.bf16.gmra.mxu0 %v1793
      %v2275 = vpop.f32.mrf.mxu0
      %v2276 = vadd.f32 0.0, %v2275
      %v2277 = vpop.f32.mrf.mxu0
      %v2278 = vadd.f32 0.0, %v2277
      %2279 = vmatmul.bf16.gmra.mxu0 %v1796
      %v2280 = vpop.f32.mrf.mxu0
      %v2281 = vpop.f32.mrf.mxu0
      %2282 = vmatmul.bf16.gmra.mxu0 %v1799
      %v2283 = vpop.f32.mrf.mxu0
      %v2284 = vadd.f32 0.0, %v2283
      %v2285 = vpop.f32.mrf.mxu0
      %v2286 = vadd.f32 0.0, %v2285
      %2287 = vmatmul.bf16.gmra.mxu0 %v1802
      %v2288 = vpop.f32.mrf.mxu0
      %v2289 = vpop.f32.mrf.mxu0
      %2290 = vmatmul.bf16.gmra.mxu0 %v1805
      %v2291 = vpop.f32.mrf.mxu0
      %v2292 = vadd.f32 0.0, %v2291
      %v2293 = vpop.f32.mrf.mxu0
      %v2294 = vadd.f32 0.0, %v2293
      %2295 = vmatmul.bf16.gmra.mxu0 %v1808
      %v2296 = vpop.f32.mrf.mxu0
      %v2297 = vpop.f32.mrf.mxu0
      %2298 = vmatmul.bf16.gmra.mxu0 %v1811
      %v2299 = vpop.f32.mrf.mxu0
      %v2300 = vadd.f32 0.0, %v2299
      %v2301 = vpop.f32.mrf.mxu0
      %v2302 = vadd.f32 0.0, %v2301
      %2303 = vmatmul.bf16.gmra.mxu0 %v1814
      %v2304 = vpop.f32.mrf.mxu0
      %v2305 = vpop.f32.mrf.mxu0
      %2306 = vmatmul.bf16.gmra.mxu0 %v1817
      %v2307 = vpop.f32.mrf.mxu0
      %v2308 = vadd.f32 0.0, %v2307
      %v2309 = vpop.f32.mrf.mxu0
      %v2310 = vadd.f32 0.0, %v2309
      %2311 = vmatmul.bf16.gmra.mxu0 %v1820
      %v2312 = vpop.f32.mrf.mxu0
      %v2313 = vpop.f32.mrf.mxu0
      %2314 = vmatmul.bf16.gmra.mxu0 %v2003
      %v2315 = vpop.f32.mrf.mxu0
      %v2316 = vadd.f32 0.0, %v2315
      %v2317 = vpop.f32.mrf.mxu0
      %v2318 = vadd.f32 0.0, %v2317
      %2319 = vmatmul.bf16.gmra.mxu0 %v2006
      %v2320 = vpop.f32.mrf.mxu0
      %v2321 = vpop.f32.mrf.mxu0
      %2322 = vmatmul.bf16.gmra.mxu0 %v2189
      %v2323 = vpop.f32.mrf.mxu0
      %v2324 = vadd.f32 0.0, %v2323
      %v2325 = vpop.f32.mrf.mxu0
      %v2326 = vadd.f32 0.0, %v2325
      %2327 = vmatmul.bf16.gmra.mxu0 %v2192
      %v2328 = vpop.f32.mrf.mxu0
      %v2329 = vpop.f32.mrf.mxu0
      %2330 = vdwg.mxu0
      %v2331 = vadd.f32 %v2145, %v2204
      %v2332 = vadd.f32 %v2146, %v2206
      %v2333 = vadd.f32 %v2147, %v2212
      %v2334 = vadd.f32 %v2148, %v2214
      %v2335 = vadd.f32 %v2149, %v2220
      %v2336 = vadd.f32 %v2150, %v2222
      %v2337 = vadd.f32 %v2151, %v2228
      %v2338 = vadd.f32 %v2152, %v2230
      %v2339 = vadd.f32 %v2153, %v2236
      %v2340 = vadd.f32 %v2154, %v2238
      %v2341 = vadd.f32 %v2155, %v2244
      %v2342 = vadd.f32 %v2156, %v2246
      %v2343 = vadd.f32 %v2157, %v2252
      %v2344 = vadd.f32 %v2158, %v2254
      %v2345 = vadd.f32 %v2159, %v2260
      %v2346 = vadd.f32 %v2160, %v2262
      %v2347 = vadd.f32 %v2161, %v2268
      %v2348 = vadd.f32 %v2162, %v2270
      %v2349 = vadd.f32 %v2163, %v2276
      %v2350 = vadd.f32 %v2164, %v2278
      %v2351 = vadd.f32 %v2165, %v2284
      %v2352 = vadd.f32 %v2166, %v2286
      %v2353 = vadd.f32 %v2167, %v2292
      %v2354 = vadd.f32 %v2168, %v2294
      %v2355 = vadd.f32 %v2169, %v2300
      %v2356 = vadd.f32 %v2170, %v2302
      %v2357 = vadd.f32 %v2171, %v2308
      %v2358 = vadd.f32 %v2172, %v2310
      %v2359 = vadd.f32 %v2173, %v2316
      %v2360 = vadd.f32 %v2174, %v2318
      %v2361 = vadd.f32 %v2175, %v2324
      %v2362 = vadd.f32 %v2176, %v2326
      %s2363 = scalar_lea.vmem %s3, 48
      %v2364 = vld [vmem:[%s2363] sm:$0xf]
      %v2365 = vld [vmem:[%s2363 + $0x4] sm:$0xf]
      %v2366 = vpack.c.b16 %v696, %v696
      %vm2367 = vsmask.f32 7424
      %v2368 = vshrl.u32 %v1688, 16
      %v2370 = vshll.u32 %v1688, 16
      %v2372 = vrot.slane %v2370, 1
      %v2373 = vor.u32 %v2368, %v2372
      %v2374 = vshll.u32 %v1689, 16
      %v2376 = vrot.slane %v2374, 1
      %v2377 = vsel %vm2367, %v2373, %v2376
      %v2378 = vshrl.u32 %v1689, 16
      %v2380 = vor.u32 %v2378, %v2376
      %v2381 = vshll.u32 %v1690, 16
      %v2383 = vrot.slane %v2381, 1
      %v2384 = vsel %vm2367, %v2380, %v2383
      %v2385 = vshrl.u32 %v1690, 16
      %v2387 = vor.u32 %v2385, %v2383
      %v2388 = vshll.u32 %v1691, 16
      %v2390 = vrot.slane %v2388, 1
      %v2391 = vsel %vm2367, %v2387, %v2390
      %v2392 = vshrl.u32 %v1691, 16
      %v2394 = vor.u32 %v2392, %v2390
      %v2395 = vshll.u32 %v1692, 16
      %v2397 = vrot.slane %v2395, 1
      %v2398 = vsel %vm2367, %v2394, %v2397
      %v2399 = vshrl.u32 %v1692, 16
      %v2401 = vor.u32 %v2399, %v2397
      %v2402 = vshll.u32 %v1693, 16
      %v2404 = vrot.slane %v2402, 1
      %v2405 = vsel %vm2367, %v2401, %v2404
      %v2406 = vshrl.u32 %v1693, 16
      %v2408 = vor.u32 %v2406, %v2404
      %v2409 = vshll.u32 %v1694, 16
      %v2411 = vrot.slane %v2409, 1
      %v2412 = vsel %vm2367, %v2408, %v2411
      %v2413 = vshrl.u32 %v1694, 16
      %v2415 = vor.u32 %v2413, %v2411
      %v2416 = vshll.u32 %v1695, 16
      %v2418 = vrot.slane %v2416, 1
      %v2419 = vsel %vm2367, %v2415, %v2418
      %v2420 = vshrl.u32 %v1695, 16
      %v2422 = vor.u32 %v2420, %v2418
      %v2423 = vshll.u32 %v1696, 16
      %v2425 = vrot.slane %v2423, 1
      %v2426 = vsel %vm2367, %v2422, %v2425
      %v2427 = vshrl.u32 %v1696, 16
      %v2429 = vor.u32 %v2427, %v2425
      %v2430 = vshll.u32 %v1697, 16
      %v2432 = vrot.slane %v2430, 1
      %v2433 = vsel %vm2367, %v2429, %v2432
      %v2434 = vshrl.u32 %v1697, 16
      %v2436 = vor.u32 %v2434, %v2432
      %v2437 = vshll.u32 %v1698, 16
      %v2439 = vrot.slane %v2437, 1
      %v2440 = vsel %vm2367, %v2436, %v2439
      %v2441 = vshrl.u32 %v1698, 16
      %v2443 = vor.u32 %v2441, %v2439
      %v2444 = vshll.u32 %v1699, 16
      %v2446 = vrot.slane %v2444, 1
      %v2447 = vsel %vm2367, %v2443, %v2446
      %v2448 = vshrl.u32 %v1699, 16
      %v2450 = vor.u32 %v2448, %v2446
      %v2451 = vshll.u32 %v1700, 16
      %v2453 = vrot.slane %v2451, 1
      %v2454 = vsel %vm2367, %v2450, %v2453
      %v2455 = vshrl.u32 %v1700, 16
      %v2457 = vor.u32 %v2455, %v2453
      %v2458 = vshll.u32 %v1701, 16
      %v2460 = vrot.slane %v2458, 1
      %v2461 = vsel %vm2367, %v2457, %v2460
      %v2462 = vshrl.u32 %v1701, 16
      %v2464 = vor.u32 %v2462, %v2460
      %v2465 = vshll.u32 %v1702, 16
      %v2467 = vrot.slane %v2465, 1
      %v2468 = vsel %vm2367, %v2464, %v2467
      %v2469 = vshrl.u32 %v1702, 16
      %v2471 = vor.u32 %v2469, %v2467
      %v2472 = vshll.u32 %v1703, 16
      %v2474 = vrot.slane %v2472, 1
      %v2475 = vsel %vm2367, %v2471, %v2474
      %v2476 = vshrl.u32 %v1703, 16
      %v2478 = vor.u32 %v2476, %v2474
      %v2479 = vshll.u32 %v1704, 16
      %v2481 = vrot.slane %v2479, 1
      %v2482 = vsel %vm2367, %v2478, %v2481
      %v2483 = vshrl.u32 %v1704, 16
      %v2485 = vor.u32 %v2483, %v2481
      %v2486 = vshll.u32 %v1705, 16
      %v2488 = vrot.slane %v2486, 1
      %v2489 = vsel %vm2367, %v2485, %v2488
      %v2490 = vshrl.u32 %v1705, 16
      %v2492 = vor.u32 %v2490, %v2488
      %v2493 = vshll.u32 %v1706, 16
      %v2495 = vrot.slane %v2493, 1
      %v2496 = vsel %vm2367, %v2492, %v2495
      %v2497 = vshrl.u32 %v1706, 16
      %v2499 = vor.u32 %v2497, %v2495
      %v2500 = vshll.u32 %v1707, 16
      %v2502 = vrot.slane %v2500, 1
      %v2503 = vsel %vm2367, %v2499, %v2502
      %v2504 = vshrl.u32 %v1707, 16
      %v2506 = vor.u32 %v2504, %v2502
      %v2507 = vshll.u32 %v1708, 16
      %v2509 = vrot.slane %v2507, 1
      %v2510 = vsel %vm2367, %v2506, %v2509
      %v2511 = vshrl.u32 %v1708, 16
      %v2513 = vor.u32 %v2511, %v2509
      %v2514 = vshll.u32 %v1709, 16
      %v2516 = vrot.slane %v2514, 1
      %v2517 = vsel %vm2367, %v2513, %v2516
      %v2518 = vshrl.u32 %v1709, 16
      %v2520 = vor.u32 %v2518, %v2516
      %v2521 = vshll.u32 %v1710, 16
      %v2523 = vrot.slane %v2521, 1
      %v2524 = vsel %vm2367, %v2520, %v2523
      %v2525 = vshrl.u32 %v1710, 16
      %v2527 = vor.u32 %v2525, %v2523
      %v2528 = vshll.u32 %v1711, 16
      %v2530 = vrot.slane %v2528, 1
      %v2531 = vsel %vm2367, %v2527, %v2530
      %v2532 = vshrl.u32 %v1711, 16
      %v2534 = vor.u32 %v2532, %v2530
      %v2535 = vshll.u32 %v1712, 16
      %v2537 = vrot.slane %v2535, 1
      %v2538 = vsel %vm2367, %v2534, %v2537
      %v2539 = vshrl.u32 %v1712, 16
      %v2541 = vor.u32 %v2539, %v2537
      %v2542 = vshll.u32 %v1713, 16
      %v2544 = vrot.slane %v2542, 1
      %v2545 = vsel %vm2367, %v2541, %v2544
      %v2546 = vshrl.u32 %v1713, 16
      %v2548 = vor.u32 %v2546, %v2544
      %v2549 = vshll.u32 %v1714, 16
      %v2551 = vrot.slane %v2549, 1
      %v2552 = vsel %vm2367, %v2548, %v2551
      %v2553 = vshrl.u32 %v1714, 16
      %v2555 = vor.u32 %v2553, %v2551
      %v2556 = vshll.u32 %v1715, 16
      %v2558 = vrot.slane %v2556, 1
      %v2559 = vsel %vm2367, %v2555, %v2558
      %v2560 = vshrl.u32 %v1715, 16
      %v2562 = vor.u32 %v2560, %v2558
      %v2563 = vshll.u32 %v1716, 16
      %v2565 = vrot.slane %v2563, 1
      %v2566 = vsel %vm2367, %v2562, %v2565
      %v2567 = vshrl.u32 %v1716, 16
      %v2569 = vor.u32 %v2567, %v2565
      %v2570 = vshll.u32 %v1717, 16
      %v2572 = vrot.slane %v2570, 1
      %v2573 = vsel %vm2367, %v2569, %v2572
      %v2574 = vshrl.u32 %v1717, 16
      %v2576 = vor.u32 %v2574, %v2572
      %v2577 = vshll.u32 %v1718, 16
      %v2579 = vrot.slane %v2577, 1
      %v2580 = vsel %vm2367, %v2576, %v2579
      %v2581 = vshrl.u32 %v1718, 16
      %v2583 = vor.u32 %v2581, %v2579
      %v2584 = vshll.u32 %v1719, 16
      %v2586 = vrot.slane %v2584, 1
      %v2587 = vsel %vm2367, %v2583, %v2586
      %v2588 = vshrl.u32 %v1719, 16
      %v2590 = vor.u32 %v2588, %v2586
      %v2592 = vshll.u32 %v2366, 16
      %v2594 = vrot.slane %v2592, 1
      %v2595 = vsel %vm2367, %v2590, %v2594
      %v2598 = vunpack.c.l.b16 %v2364
      %v2599 = vunpack.c.l.b16 %v2365
      %v2600 = vpack.c.b16 %v2599, %v2598
      %v2603 = vsel %vm1036, %v2377, 0
      %v2606 = vsel %vm1036, %v2384, 0
      %v2609 = vsel %vm1036, %v2391, 0
      %v2612 = vsel %vm1036, %v2398, 0
      %v2615 = vsel %vm1036, %v2405, 0
      %v2618 = vsel %vm1036, %v2412, 0
      %v2621 = vsel %vm1036, %v2419, 0
      %v2624 = vsel %vm1036, %v2426, 0
      %v2627 = vsel %vm1036, %v2433, 0
      %v2630 = vsel %vm1036, %v2440, 0
      %v2633 = vsel %vm1036, %v2447, 0
      %v2636 = vsel %vm1036, %v2454, 0
      %v2639 = vsel %vm1036, %v2461, 0
      %v2642 = vsel %vm1036, %v2468, 0
      %v2645 = vsel %vm1036, %v2475, 0
      %v2648 = vsel %vm1036, %v2482, 0
      %v2651 = vsel %vm1036, %v2489, 0
      %v2654 = vsel %vm1036, %v2496, 0
      %v2657 = vsel %vm1036, %v2503, 0
      %v2660 = vsel %vm1036, %v2510, 0
      %v2663 = vsel %vm1036, %v2517, 0
      %v2666 = vsel %vm1036, %v2524, 0
      %v2669 = vsel %vm1036, %v2531, 0
      %v2672 = vsel %vm1036, %v2538, 0
      %v2675 = vsel %vm1036, %v2545, 0
      %v2678 = vsel %vm1036, %v2552, 0
      %v2681 = vsel %vm1036, %v2559, 0
      %v2684 = vsel %vm1036, %v2566, 0
      %v2687 = vsel %vm1036, %v2573, 0
      %v2690 = vsel %vm1036, %v2580, 0
      %v2693 = vsel %vm1036, %v2587, 0
      %v2696 = vsel %vm1036, %v2595, 0
      %2698 = vmatpush.bf16.msra.mxu0 0
      %2699 = vmatpush.bf16.msra.mxu0 0
      %2700 = vmatpush.bf16.msra.mxu0 0
      %2701 = vmatpush.bf16.msra.mxu0 0
      %2702 = vmatpush.bf16.msra.mxu0 0
      %2703 = vmatpush.bf16.msra.mxu0 0
      %2704 = vmatpush.bf16.msra.mxu0 0
      %2705 = vmatpush.bf16.msra.mxu0 %v2600
      %2706 = vmatmul.bf16.gmra.mxu0 %v2603
      %v2707 = vpop.f32.mrf.mxu0
      %v2708 = vadd.f32 0.0, %v2707
      %v2709 = vpop.f32.mrf.mxu0
      %v2710 = vadd.f32 0.0, %v2709
      %2711 = vmatmul.bf16.gmra.mxu0 %v2606
      %v2712 = vpop.f32.mrf.mxu0
      %v2713 = vpop.f32.mrf.mxu0
      %2714 = vmatmul.bf16.gmra.mxu0 %v2609
      %v2715 = vpop.f32.mrf.mxu0
      %v2716 = vadd.f32 0.0, %v2715
      %v2717 = vpop.f32.mrf.mxu0
      %v2718 = vadd.f32 0.0, %v2717
      %2719 = vmatmul.bf16.gmra.mxu0 %v2612
      %v2720 = vpop.f32.mrf.mxu0
      %v2721 = vpop.f32.mrf.mxu0
      %2722 = vmatmul.bf16.gmra.mxu0 %v2615
      %v2723 = vpop.f32.mrf.mxu0
      %v2724 = vadd.f32 0.0, %v2723
      %v2725 = vpop.f32.mrf.mxu0
      %v2726 = vadd.f32 0.0, %v2725
      %2727 = vmatmul.bf16.gmra.mxu0 %v2618
      %v2728 = vpop.f32.mrf.mxu0
      %v2729 = vpop.f32.mrf.mxu0
      %2730 = vmatmul.bf16.gmra.mxu0 %v2621
      %v2731 = vpop.f32.mrf.mxu0
      %v2732 = vadd.f32 0.0, %v2731
      %v2733 = vpop.f32.mrf.mxu0
      %v2734 = vadd.f32 0.0, %v2733
      %2735 = vmatmul.bf16.gmra.mxu0 %v2624
      %v2736 = vpop.f32.mrf.mxu0
      %v2737 = vpop.f32.mrf.mxu0
      %2738 = vmatmul.bf16.gmra.mxu0 %v2627
      %v2739 = vpop.f32.mrf.mxu0
      %v2740 = vadd.f32 0.0, %v2739
      %v2741 = vpop.f32.mrf.mxu0
      %v2742 = vadd.f32 0.0, %v2741
      %2743 = vmatmul.bf16.gmra.mxu0 %v2630
      %v2744 = vpop.f32.mrf.mxu0
      %v2745 = vpop.f32.mrf.mxu0
      %2746 = vmatmul.bf16.gmra.mxu0 %v2633
      %v2747 = vpop.f32.mrf.mxu0
      %v2748 = vadd.f32 0.0, %v2747
      %v2749 = vpop.f32.mrf.mxu0
      %v2750 = vadd.f32 0.0, %v2749
      %2751 = vmatmul.bf16.gmra.mxu0 %v2636
      %v2752 = vpop.f32.mrf.mxu0
      %v2753 = vpop.f32.mrf.mxu0
      %2754 = vmatmul.bf16.gmra.mxu0 %v2639
      %v2755 = vpop.f32.mrf.mxu0
      %v2756 = vadd.f32 0.0, %v2755
      %v2757 = vpop.f32.mrf.mxu0
      %v2758 = vadd.f32 0.0, %v2757
      %2759 = vmatmul.bf16.gmra.mxu0 %v2642
      %v2760 = vpop.f32.mrf.mxu0
      %v2761 = vpop.f32.mrf.mxu0
      %2762 = vmatmul.bf16.gmra.mxu0 %v2645
      %v2763 = vpop.f32.mrf.mxu0
      %v2764 = vadd.f32 0.0, %v2763
      %v2765 = vpop.f32.mrf.mxu0
      %v2766 = vadd.f32 0.0, %v2765
      %2767 = vmatmul.bf16.gmra.mxu0 %v2648
      %v2768 = vpop.f32.mrf.mxu0
      %v2769 = vpop.f32.mrf.mxu0
      %2770 = vmatmul.bf16.gmra.mxu0 %v2651
      %v2771 = vpop.f32.mrf.mxu0
      %v2772 = vadd.f32 0.0, %v2771
      %v2773 = vpop.f32.mrf.mxu0
      %v2774 = vadd.f32 0.0, %v2773
      %2775 = vmatmul.bf16.gmra.mxu0 %v2654
      %v2776 = vpop.f32.mrf.mxu0
      %v2777 = vpop.f32.mrf.mxu0
      %2778 = vmatmul.bf16.gmra.mxu0 %v2657
      %v2779 = vpop.f32.mrf.mxu0
      %v2780 = vadd.f32 0.0, %v2779
      %v2781 = vpop.f32.mrf.mxu0
      %v2782 = vadd.f32 0.0, %v2781
      %2783 = vmatmul.bf16.gmra.mxu0 %v2660
      %v2784 = vpop.f32.mrf.mxu0
      %v2785 = vpop.f32.mrf.mxu0
      %2786 = vmatmul.bf16.gmra.mxu0 %v2663
      %v2787 = vpop.f32.mrf.mxu0
      %v2788 = vadd.f32 0.0, %v2787
      %v2789 = vpop.f32.mrf.mxu0
      %v2790 = vadd.f32 0.0, %v2789
      %2791 = vmatmul.bf16.gmra.mxu0 %v2666
      %v2792 = vpop.f32.mrf.mxu0
      %v2793 = vpop.f32.mrf.mxu0
      %2794 = vmatmul.bf16.gmra.mxu0 %v2669
      %v2795 = vpop.f32.mrf.mxu0
      %v2796 = vadd.f32 0.0, %v2795
      %v2797 = vpop.f32.mrf.mxu0
      %v2798 = vadd.f32 0.0, %v2797
      %2799 = vmatmul.bf16.gmra.mxu0 %v2672
      %v2800 = vpop.f32.mrf.mxu0
      %v2801 = vpop.f32.mrf.mxu0
      %2802 = vmatmul.bf16.gmra.mxu0 %v2675
      %v2803 = vpop.f32.mrf.mxu0
      %v2804 = vadd.f32 0.0, %v2803
      %v2805 = vpop.f32.mrf.mxu0
      %v2806 = vadd.f32 0.0, %v2805
      %2807 = vmatmul.bf16.gmra.mxu0 %v2678
      %v2808 = vpop.f32.mrf.mxu0
      %v2809 = vpop.f32.mrf.mxu0
      %2810 = vmatmul.bf16.gmra.mxu0 %v2681
      %v2811 = vpop.f32.mrf.mxu0
      %v2812 = vadd.f32 0.0, %v2811
      %v2813 = vpop.f32.mrf.mxu0
      %v2814 = vadd.f32 0.0, %v2813
      %2815 = vmatmul.bf16.gmra.mxu0 %v2684
      %v2816 = vpop.f32.mrf.mxu0
      %v2817 = vpop.f32.mrf.mxu0
      %2818 = vmatmul.bf16.gmra.mxu0 %v2687
      %v2819 = vpop.f32.mrf.mxu0
      %v2820 = vadd.f32 0.0, %v2819
      %v2821 = vpop.f32.mrf.mxu0
      %v2822 = vadd.f32 0.0, %v2821
      %2823 = vmatmul.bf16.gmra.mxu0 %v2690
      %v2824 = vpop.f32.mrf.mxu0
      %v2825 = vpop.f32.mrf.mxu0
      %2826 = vmatmul.bf16.gmra.mxu0 %v2693
      %v2827 = vpop.f32.mrf.mxu0
      %v2828 = vadd.f32 0.0, %v2827
      %v2829 = vpop.f32.mrf.mxu0
      %v2830 = vadd.f32 0.0, %v2829
      %2831 = vmatmul.bf16.gmra.mxu0 %v2696
      %v2832 = vpop.f32.mrf.mxu0
      %v2833 = vpop.f32.mrf.mxu0
      %2834 = vdwg.mxu0
      %v2835 = vadd.f32 %v2331, %v2708
      %v2836 = vadd.f32 %v2332, %v2710
      %v2837 = vadd.f32 %v2333, %v2716
      %v2838 = vadd.f32 %v2334, %v2718
      %v2839 = vadd.f32 %v2335, %v2724
      %v2840 = vadd.f32 %v2336, %v2726
      %v2841 = vadd.f32 %v2337, %v2732
      %v2842 = vadd.f32 %v2338, %v2734
      %v2843 = vadd.f32 %v2339, %v2740
      %v2844 = vadd.f32 %v2340, %v2742
      %v2845 = vadd.f32 %v2341, %v2748
      %v2846 = vadd.f32 %v2342, %v2750
      %v2847 = vadd.f32 %v2343, %v2756
      %v2848 = vadd.f32 %v2344, %v2758
      %v2849 = vadd.f32 %v2345, %v2764
      %v2850 = vadd.f32 %v2346, %v2766
      %v2851 = vadd.f32 %v2347, %v2772
      %v2852 = vadd.f32 %v2348, %v2774
      %v2853 = vadd.f32 %v2349, %v2780
      %v2854 = vadd.f32 %v2350, %v2782
      %v2855 = vadd.f32 %v2351, %v2788
      %v2856 = vadd.f32 %v2352, %v2790
      %v2857 = vadd.f32 %v2353, %v2796
      %v2858 = vadd.f32 %v2354, %v2798
      %v2859 = vadd.f32 %v2355, %v2804
      %v2860 = vadd.f32 %v2356, %v2806
      %v2861 = vadd.f32 %v2357, %v2812
      %v2862 = vadd.f32 %v2358, %v2814
      %v2863 = vadd.f32 %v2359, %v2820
      %v2864 = vadd.f32 %v2360, %v2822
      %v2865 = vadd.f32 %v2361, %v2828
      %v2866 = vadd.f32 %v2362, %v2830
      %s2867 = scalar_lea.vmem %s3, 56
      %v2868 = vld [vmem:[%s2867] sm:$0xf]
      %v2869 = vld [vmem:[%s2867 + $0x4] sm:$0xf]
      %v2870 = vpack.c.b16 %v1467, %v1467
      %v2871 = vshll.u32 %v1994, 16
      %v2873 = vrot.slane %v2871, 1
      %v2874 = vsel %vm2367, %v2590, %v2873
      %v2875 = vshrl.u32 %v1994, 16
      %v2877 = vor.u32 %v2875, %v2873
      %v2878 = vshll.u32 %v1995, 16
      %v2880 = vrot.slane %v2878, 1
      %v2881 = vsel %vm2367, %v2877, %v2880
      %v2882 = vshrl.u32 %v1995, 16
      %v2884 = vor.u32 %v2882, %v2880
      %v2886 = vshll.u32 %v2870, 16
      %v2888 = vrot.slane %v2886, 1
      %v2889 = vsel %vm2367, %v2884, %v2888
      %v2892 = vunpack.c.l.b16 %v2868
      %v2893 = vunpack.c.l.b16 %v2869
      %v2894 = vpack.c.b16 %v2893, %v2892
      %v2897 = vsel %vm1036, %v2874, 0
      %v2900 = vsel %vm1036, %v2881, 0
      %v2903 = vsel %vm1036, %v2889, 0
      %2905 = vmatpush.bf16.msra.mxu0 0
      %2906 = vmatpush.bf16.msra.mxu0 0
      %2907 = vmatpush.bf16.msra.mxu0 0
      %2908 = vmatpush.bf16.msra.mxu0 0
      %2909 = vmatpush.bf16.msra.mxu0 0
      %2910 = vmatpush.bf16.msra.mxu0 0
      %2911 = vmatpush.bf16.msra.mxu0 0
      %2912 = vmatpush.bf16.msra.mxu0 %v2894
      %2913 = vmatmul.bf16.gmra.mxu0 %v2609
      %v2914 = vpop.f32.mrf.mxu0
      %v2915 = vadd.f32 0.0, %v2914
      %v2916 = vpop.f32.mrf.mxu0
      %v2917 = vadd.f32 0.0, %v2916
      %2918 = vmatmul.bf16.gmra.mxu0 %v2612
      %v2919 = vpop.f32.mrf.mxu0
      %v2920 = vpop.f32.mrf.mxu0
      %2921 = vmatmul.bf16.gmra.mxu0 %v2615
      %v2922 = vpop.f32.mrf.mxu0
      %v2923 = vadd.f32 0.0, %v2922
      %v2924 = vpop.f32.mrf.mxu0
      %v2925 = vadd.f32 0.0, %v2924
      %2926 = vmatmul.bf16.gmra.mxu0 %v2618
      %v2927 = vpop.f32.mrf.mxu0
      %v2928 = vpop.f32.mrf.mxu0
      %2929 = vmatmul.bf16.gmra.mxu0 %v2621
      %v2930 = vpop.f32.mrf.mxu0
      %v2931 = vadd.f32 0.0, %v2930
      %v2932 = vpop.f32.mrf.mxu0
      %v2933 = vadd.f32 0.0, %v2932
      %2934 = vmatmul.bf16.gmra.mxu0 %v2624
      %v2935 = vpop.f32.mrf.mxu0
      %v2936 = vpop.f32.mrf.mxu0
      %2937 = vmatmul.bf16.gmra.mxu0 %v2627
      %v2938 = vpop.f32.mrf.mxu0
      %v2939 = vadd.f32 0.0, %v2938
      %v2940 = vpop.f32.mrf.mxu0
      %v2941 = vadd.f32 0.0, %v2940
      %2942 = vmatmul.bf16.gmra.mxu0 %v2630
      %v2943 = vpop.f32.mrf.mxu0
      %v2944 = vpop.f32.mrf.mxu0
      %2945 = vmatmul.bf16.gmra.mxu0 %v2633
      %v2946 = vpop.f32.mrf.mxu0
      %v2947 = vadd.f32 0.0, %v2946
      %v2948 = vpop.f32.mrf.mxu0
      %v2949 = vadd.f32 0.0, %v2948
      %2950 = vmatmul.bf16.gmra.mxu0 %v2636
      %v2951 = vpop.f32.mrf.mxu0
      %v2952 = vpop.f32.mrf.mxu0
      %2953 = vmatmul.bf16.gmra.mxu0 %v2639
      %v2954 = vpop.f32.mrf.mxu0
      %v2955 = vadd.f32 0.0, %v2954
      %v2956 = vpop.f32.mrf.mxu0
      %v2957 = vadd.f32 0.0, %v2956
      %2958 = vmatmul.bf16.gmra.mxu0 %v2642
      %v2959 = vpop.f32.mrf.mxu0
      %v2960 = vpop.f32.mrf.mxu0
      %2961 = vmatmul.bf16.gmra.mxu0 %v2645
      %v2962 = vpop.f32.mrf.mxu0
      %v2963 = vadd.f32 0.0, %v2962
      %v2964 = vpop.f32.mrf.mxu0
      %v2965 = vadd.f32 0.0, %v2964
      %2966 = vmatmul.bf16.gmra.mxu0 %v2648
      %v2967 = vpop.f32.mrf.mxu0
      %v2968 = vpop.f32.mrf.mxu0
      %2969 = vmatmul.bf16.gmra.mxu0 %v2651
      %v2970 = vpop.f32.mrf.mxu0
      %v2971 = vadd.f32 0.0, %v2970
      %v2972 = vpop.f32.mrf.mxu0
      %v2973 = vadd.f32 0.0, %v2972
      %2974 = vmatmul.bf16.gmra.mxu0 %v2654
      %v2975 = vpop.f32.mrf.mxu0
      %v2976 = vpop.f32.mrf.mxu0
      %2977 = vmatmul.bf16.gmra.mxu0 %v2657
      %v2978 = vpop.f32.mrf.mxu0
      %v2979 = vadd.f32 0.0, %v2978
      %v2980 = vpop.f32.mrf.mxu0
      %v2981 = vadd.f32 0.0, %v2980
      %2982 = vmatmul.bf16.gmra.mxu0 %v2660
      %v2983 = vpop.f32.mrf.mxu0
      %v2984 = vpop.f32.mrf.mxu0
      %2985 = vmatmul.bf16.gmra.mxu0 %v2663
      %v2986 = vpop.f32.mrf.mxu0
      %v2987 = vadd.f32 0.0, %v2986
      %v2988 = vpop.f32.mrf.mxu0
      %v2989 = vadd.f32 0.0, %v2988
      %2990 = vmatmul.bf16.gmra.mxu0 %v2666
      %v2991 = vpop.f32.mrf.mxu0
      %v2992 = vpop.f32.mrf.mxu0
      %2993 = vmatmul.bf16.gmra.mxu0 %v2669
      %v2994 = vpop.f32.mrf.mxu0
      %v2995 = vadd.f32 0.0, %v2994
      %v2996 = vpop.f32.mrf.mxu0
      %v2997 = vadd.f32 0.0, %v2996
      %2998 = vmatmul.bf16.gmra.mxu0 %v2672
      %v2999 = vpop.f32.mrf.mxu0
      %v3000 = vpop.f32.mrf.mxu0
      %3001 = vmatmul.bf16.gmra.mxu0 %v2675
      %v3002 = vpop.f32.mrf.mxu0
      %v3003 = vadd.f32 0.0, %v3002
      %v3004 = vpop.f32.mrf.mxu0
      %v3005 = vadd.f32 0.0, %v3004
      %3006 = vmatmul.bf16.gmra.mxu0 %v2678
      %v3007 = vpop.f32.mrf.mxu0
      %v3008 = vpop.f32.mrf.mxu0
      %3009 = vmatmul.bf16.gmra.mxu0 %v2681
      %v3010 = vpop.f32.mrf.mxu0
      %v3011 = vadd.f32 0.0, %v3010
      %v3012 = vpop.f32.mrf.mxu0
      %v3013 = vadd.f32 0.0, %v3012
      %3014 = vmatmul.bf16.gmra.mxu0 %v2684
      %v3015 = vpop.f32.mrf.mxu0
      %v3016 = vpop.f32.mrf.mxu0
      %3017 = vmatmul.bf16.gmra.mxu0 %v2687
      %v3018 = vpop.f32.mrf.mxu0
      %v3019 = vadd.f32 0.0, %v3018
      %v3020 = vpop.f32.mrf.mxu0
      %v3021 = vadd.f32 0.0, %v3020
      %3022 = vmatmul.bf16.gmra.mxu0 %v2690
      %v3023 = vpop.f32.mrf.mxu0
      %v3024 = vpop.f32.mrf.mxu0
      %3025 = vmatmul.bf16.gmra.mxu0 %v2693
      %v3026 = vpop.f32.mrf.mxu0
      %v3027 = vadd.f32 0.0, %v3026
      %v3028 = vpop.f32.mrf.mxu0
      %v3029 = vadd.f32 0.0, %v3028
      %3030 = vmatmul.bf16.gmra.mxu0 %v2897
      %v3031 = vpop.f32.mrf.mxu0
      %v3032 = vpop.f32.mrf.mxu0
      %3033 = vmatmul.bf16.gmra.mxu0 %v2900
      %v3034 = vpop.f32.mrf.mxu0
      %v3035 = vadd.f32 0.0, %v3034
      %v3036 = vpop.f32.mrf.mxu0
      %v3037 = vadd.f32 0.0, %v3036
      %3038 = vmatmul.bf16.gmra.mxu0 %v2903
      %v3039 = vpop.f32.mrf.mxu0
      %v3040 = vpop.f32.mrf.mxu0
      %3041 = vdwg.mxu0
      %v3042 = vadd.f32 %v2835, %v2915
      %v3043 = vadd.f32 %v2836, %v2917
      %v3044 = vadd.f32 %v2837, %v2923
      %v3045 = vadd.f32 %v2838, %v2925
      %v3046 = vadd.f32 %v2839, %v2931
      %v3047 = vadd.f32 %v2840, %v2933
      %v3048 = vadd.f32 %v2841, %v2939
      %v3049 = vadd.f32 %v2842, %v2941
      %v3050 = vadd.f32 %v2843, %v2947
      %v3051 = vadd.f32 %v2844, %v2949
      %v3052 = vadd.f32 %v2845, %v2955
      %v3053 = vadd.f32 %v2846, %v2957
      %v3054 = vadd.f32 %v2847, %v2963
      %v3055 = vadd.f32 %v2848, %v2965
      %v3056 = vadd.f32 %v2849, %v2971
      %v3057 = vadd.f32 %v2850, %v2973
      %v3058 = vadd.f32 %v2851, %v2979
      %v3059 = vadd.f32 %v2852, %v2981
      %v3060 = vadd.f32 %v2853, %v2987
      %v3061 = vadd.f32 %v2854, %v2989
      %v3062 = vadd.f32 %v2855, %v2995
      %v3063 = vadd.f32 %v2856, %v2997
      %v3064 = vadd.f32 %v2857, %v3003
      %v3065 = vadd.f32 %v2858, %v3005
      %v3066 = vadd.f32 %v2859, %v3011
      %v3067 = vadd.f32 %v2860, %v3013
      %v3068 = vadd.f32 %v2861, %v3019
      %v3069 = vadd.f32 %v2862, %v3021
      %v3070 = vadd.f32 %v2863, %v3027
      %v3071 = vadd.f32 %v2864, %v3029
      %v3072 = vadd.f32 %v2865, %v3035
      %v3073 = vadd.f32 %v2866, %v3037
      %s3074 = scalar_lea.vmem %s3, 64
      %v3075 = vld [vmem:[%s3074] sm:$0xf]
      %v3076 = vld [vmem:[%s3074 + $0x4] sm:$0xf]
      %v3078 = vunpack.c.l.b16 %v564
      %v3079 = vpack.c.b16 %v3078, %v3078
      %v3080 = vshll.u32 %v2180, 16
      %v3082 = vrot.slane %v3080, 1
      %v3083 = vsel %vm2367, %v2884, %v3082
      %v3084 = vshrl.u32 %v2180, 16
      %v3086 = vor.u32 %v3084, %v3082
      %v3087 = vshll.u32 %v2181, 16
      %v3089 = vrot.slane %v3087, 1
      %v3090 = vsel %vm2367, %v3086, %v3089
      %v3091 = vshrl.u32 %v2181, 16
      %v3093 = vor.u32 %v3091, %v3089
      %v3095 = vshll.u32 %v3079, 16
      %v3097 = vrot.slane %v3095, 1
      %v3098 = vsel %vm2367, %v3093, %v3097
      %v3101 = vunpack.c.l.b16 %v3075
      %v3102 = vunpack.c.l.b16 %v3076
      %v3103 = vpack.c.b16 %v3102, %v3101
      %v3106 = vsel %vm1036, %v3083, 0
      %v3109 = vsel %vm1036, %v3090, 0
      %v3112 = vsel %vm1036, %v3098, 0
      %3114 = vmatpush.bf16.msra.mxu0 0
      %3115 = vmatpush.bf16.msra.mxu0 0
      %3116 = vmatpush.bf16.msra.mxu0 0
      %3117 = vmatpush.bf16.msra.mxu0 0
      %3118 = vmatpush.bf16.msra.mxu0 0
      %3119 = vmatpush.bf16.msra.mxu0 0
      %3120 = vmatpush.bf16.msra.mxu0 0
      %3121 = vmatpush.bf16.msra.mxu0 %v3103
      %3122 = vmatmul.bf16.gmra.mxu0 %v2615
      %v3123 = vpop.f32.mrf.mxu0
      %v3124 = vadd.f32 0.0, %v3123
      %v3125 = vpop.f32.mrf.mxu0
      %v3126 = vadd.f32 0.0, %v3125
      %3127 = vmatmul.bf16.gmra.mxu0 %v2618
      %v3128 = vpop.f32.mrf.mxu0
      %v3129 = vpop.f32.mrf.mxu0
      %3130 = vmatmul.bf16.gmra.mxu0 %v2621
      %v3131 = vpop.f32.mrf.mxu0
      %v3132 = vadd.f32 0.0, %v3131
      %v3133 = vpop.f32.mrf.mxu0
      %v3134 = vadd.f32 0.0, %v3133
      %3135 = vmatmul.bf16.gmra.mxu0 %v2624
      %v3136 = vpop.f32.mrf.mxu0
      %v3137 = vpop.f32.mrf.mxu0
      %3138 = vmatmul.bf16.gmra.mxu0 %v2627
      %v3139 = vpop.f32.mrf.mxu0
      %v3140 = vadd.f32 0.0, %v3139
      %v3141 = vpop.f32.mrf.mxu0
      %v3142 = vadd.f32 0.0, %v3141
      %3143 = vmatmul.bf16.gmra.mxu0 %v2630
      %v3144 = vpop.f32.mrf.mxu0
      %v3145 = vpop.f32.mrf.mxu0
      %3146 = vmatmul.bf16.gmra.mxu0 %v2633
      %v3147 = vpop.f32.mrf.mxu0
      %v3148 = vadd.f32 0.0, %v3147
      %v3149 = vpop.f32.mrf.mxu0
      %v3150 = vadd.f32 0.0, %v3149
      %3151 = vmatmul.bf16.gmra.mxu0 %v2636
      %v3152 = vpop.f32.mrf.mxu0
      %v3153 = vpop.f32.mrf.mxu0
      %3154 = vmatmul.bf16.gmra.mxu0 %v2639
      %v3155 = vpop.f32.mrf.mxu0
      %v3156 = vadd.f32 0.0, %v3155
      %v3157 = vpop.f32.mrf.mxu0
      %v3158 = vadd.f32 0.0, %v3157
      %3159 = vmatmul.bf16.gmra.mxu0 %v2642
      %v3160 = vpop.f32.mrf.mxu0
      %v3161 = vpop.f32.mrf.mxu0
      %3162 = vmatmul.bf16.gmra.mxu0 %v2645
      %v3163 = vpop.f32.mrf.mxu0
      %v3164 = vadd.f32 0.0, %v3163
      %v3165 = vpop.f32.mrf.mxu0
      %v3166 = vadd.f32 0.0, %v3165
      %3167 = vmatmul.bf16.gmra.mxu0 %v2648
      %v3168 = vpop.f32.mrf.mxu0
      %v3169 = vpop.f32.mrf.mxu0
      %3170 = vmatmul.bf16.gmra.mxu0 %v2651
      %v3171 = vpop.f32.mrf.mxu0
      %v3172 = vadd.f32 0.0, %v3171
      %v3173 = vpop.f32.mrf.mxu0
      %v3174 = vadd.f32 0.0, %v3173
      %3175 = vmatmul.bf16.gmra.mxu0 %v2654
      %v3176 = vpop.f32.mrf.mxu0
      %v3177 = vpop.f32.mrf.mxu0
      %3178 = vmatmul.bf16.gmra.mxu0 %v2657
      %v3179 = vpop.f32.mrf.mxu0
      %v3180 = vadd.f32 0.0, %v3179
      %v3181 = vpop.f32.mrf.mxu0
      %v3182 = vadd.f32 0.0, %v3181
      %3183 = vmatmul.bf16.gmra.mxu0 %v2660
      %v3184 = vpop.f32.mrf.mxu0
      %v3185 = vpop.f32.mrf.mxu0
      %3186 = vmatmul.bf16.gmra.mxu0 %v2663
      %v3187 = vpop.f32.mrf.mxu0
      %v3188 = vadd.f32 0.0, %v3187
      %v3189 = vpop.f32.mrf.mxu0
      %v3190 = vadd.f32 0.0, %v3189
      %3191 = vmatmul.bf16.gmra.mxu0 %v2666
      %v3192 = vpop.f32.mrf.mxu0
      %v3193 = vpop.f32.mrf.mxu0
      %3194 = vmatmul.bf16.gmra.mxu0 %v2669
      %v3195 = vpop.f32.mrf.mxu0
      %v3196 = vadd.f32 0.0, %v3195
      %v3197 = vpop.f32.mrf.mxu0
      %v3198 = vadd.f32 0.0, %v3197
      %3199 = vmatmul.bf16.gmra.mxu0 %v2672
      %v3200 = vpop.f32.mrf.mxu0
      %v3201 = vpop.f32.mrf.mxu0
      %3202 = vmatmul.bf16.gmra.mxu0 %v2675
      %v3203 = vpop.f32.mrf.mxu0
      %v3204 = vadd.f32 0.0, %v3203
      %v3205 = vpop.f32.mrf.mxu0
      %v3206 = vadd.f32 0.0, %v3205
      %3207 = vmatmul.bf16.gmra.mxu0 %v2678
      %v3208 = vpop.f32.mrf.mxu0
      %v3209 = vpop.f32.mrf.mxu0
      %3210 = vmatmul.bf16.gmra.mxu0 %v2681
      %v3211 = vpop.f32.mrf.mxu0
      %v3212 = vadd.f32 0.0, %v3211
      %v3213 = vpop.f32.mrf.mxu0
      %v3214 = vadd.f32 0.0, %v3213
      %3215 = vmatmul.bf16.gmra.mxu0 %v2684
      %v3216 = vpop.f32.mrf.mxu0
      %v3217 = vpop.f32.mrf.mxu0
      %3218 = vmatmul.bf16.gmra.mxu0 %v2687
      %v3219 = vpop.f32.mrf.mxu0
      %v3220 = vadd.f32 0.0, %v3219
      %v3221 = vpop.f32.mrf.mxu0
      %v3222 = vadd.f32 0.0, %v3221
      %3223 = vmatmul.bf16.gmra.mxu0 %v2690
      %v3224 = vpop.f32.mrf.mxu0
      %v3225 = vpop.f32.mrf.mxu0
      %3226 = vmatmul.bf16.gmra.mxu0 %v2693
      %v3227 = vpop.f32.mrf.mxu0
      %v3228 = vadd.f32 0.0, %v3227
      %v3229 = vpop.f32.mrf.mxu0
      %v3230 = vadd.f32 0.0, %v3229
      %3231 = vmatmul.bf16.gmra.mxu0 %v2897
      %v3232 = vpop.f32.mrf.mxu0
      %v3233 = vpop.f32.mrf.mxu0
      %3234 = vmatmul.bf16.gmra.mxu0 %v2900
      %v3235 = vpop.f32.mrf.mxu0
      %v3236 = vadd.f32 0.0, %v3235
      %v3237 = vpop.f32.mrf.mxu0
      %v3238 = vadd.f32 0.0, %v3237
      %3239 = vmatmul.bf16.gmra.mxu0 %v3106
      %v3240 = vpop.f32.mrf.mxu0
      %v3241 = vpop.f32.mrf.mxu0
      %3242 = vmatmul.bf16.gmra.mxu0 %v3109
      %v3243 = vpop.f32.mrf.mxu0
      %v3244 = vadd.f32 0.0, %v3243
      %v3245 = vpop.f32.mrf.mxu0
      %v3246 = vadd.f32 0.0, %v3245
      %3247 = vmatmul.bf16.gmra.mxu0 %v3112
      %v3248 = vpop.f32.mrf.mxu0
      %v3249 = vpop.f32.mrf.mxu0
      %3250 = vdwg.mxu0
      %v3251 = vadd.f32 %v3042, %v3124
      %v3252 = vadd.f32 %v3043, %v3126
      %v3253 = vadd.f32 %v3044, %v3132
      %v3254 = vadd.f32 %v3045, %v3134
      %v3255 = vadd.f32 %v3046, %v3140
      %v3256 = vadd.f32 %v3047, %v3142
      %v3257 = vadd.f32 %v3048, %v3148
      %v3258 = vadd.f32 %v3049, %v3150
      %v3259 = vadd.f32 %v3050, %v3156
      %v3260 = vadd.f32 %v3051, %v3158
      %v3261 = vadd.f32 %v3052, %v3164
      %v3262 = vadd.f32 %v3053, %v3166
      %v3263 = vadd.f32 %v3054, %v3172
      %v3264 = vadd.f32 %v3055, %v3174
      %v3265 = vadd.f32 %v3056, %v3180
      %v3266 = vadd.f32 %v3057, %v3182
      %v3267 = vadd.f32 %v3058, %v3188
      %v3268 = vadd.f32 %v3059, %v3190
      %v3269 = vadd.f32 %v3060, %v3196
      %v3270 = vadd.f32 %v3061, %v3198
      %v3271 = vadd.f32 %v3062, %v3204
      %v3272 = vadd.f32 %v3063, %v3206
      %v3273 = vadd.f32 %v3064, %v3212
      %v3274 = vadd.f32 %v3065, %v3214
      %v3275 = vadd.f32 %v3066, %v3220
      %v3276 = vadd.f32 %v3067, %v3222
      %v3277 = vadd.f32 %v3068, %v3228
      %v3278 = vadd.f32 %v3069, %v3230
      %v3279 = vadd.f32 %v3070, %v3236
      %v3280 = vadd.f32 %v3071, %v3238
      %v3281 = vadd.f32 %v3072, %v3244
      %v3282 = vadd.f32 %v3073, %v3246
      %v3283 = vpack.c.bf16 %v3251, %v3251
      %v3284 = vpack.c.bf16 %v3252, %v3252
      %v3285 = vpack.c.bf16 %v3253, %v3253
      %v3286 = vpack.c.bf16 %v3254, %v3254
      %v3287 = vpack.c.bf16 %v3255, %v3255
      %v3288 = vpack.c.bf16 %v3256, %v3256
      %v3289 = vpack.c.bf16 %v3257, %v3257
      %v3290 = vpack.c.bf16 %v3258, %v3258
      %v3291 = vpack.c.bf16 %v3259, %v3259
      %v3292 = vpack.c.bf16 %v3260, %v3260
      %v3293 = vpack.c.bf16 %v3261, %v3261
      %v3294 = vpack.c.bf16 %v3262, %v3262
      %v3295 = vpack.c.bf16 %v3263, %v3263
      %v3296 = vpack.c.bf16 %v3264, %v3264
      %v3297 = vpack.c.bf16 %v3265, %v3265
      %v3298 = vpack.c.bf16 %v3266, %v3266
      %v3299 = vpack.c.bf16 %v3267, %v3267
      %v3300 = vpack.c.bf16 %v3268, %v3268
      %v3301 = vpack.c.bf16 %v3269, %v3269
      %v3302 = vpack.c.bf16 %v3270, %v3270
      %v3303 = vpack.c.bf16 %v3271, %v3271
      %v3304 = vpack.c.bf16 %v3272, %v3272
      %v3305 = vpack.c.bf16 %v3273, %v3273
      %v3306 = vpack.c.bf16 %v3274, %v3274
      %v3307 = vpack.c.bf16 %v3275, %v3275
      %v3308 = vpack.c.bf16 %v3276, %v3276
      %v3309 = vpack.c.bf16 %v3277, %v3277
      %v3310 = vpack.c.bf16 %v3278, %v3278
      %v3311 = vpack.c.bf16 %v3279, %v3279
      %v3312 = vpack.c.bf16 %v3280, %v3280
      %v3313 = vpack.c.bf16 %v3281, %v3281
      %v3314 = vpack.c.bf16 %v3282, %v3282
      %vm3315 = vcmask 27648
      %3316 = vst.msk [vmem:[%s233] sm:$0xf] %vm3315, %v3283
      %3317 = vst.msk [vmem:[%s233 + $0x4] sm:$0xf] %vm3315, %v3284
      %3318 = vst.msk [vmem:[%s233 + $0x8] sm:$0xf] %vm3315, %v3285
      %3319 = vst.msk [vmem:[%s233 + $0xc] sm:$0xf] %vm3315, %v3286
      %3320 = vst.msk [vmem:[%s233 + $0x10] sm:$0xf] %vm3315, %v3287
      %3321 = vst.msk [vmem:[%s233 + $0x14] sm:$0xf] %vm3315, %v3288
      %3322 = vst.msk [vmem:[%s233 + $0x18] sm:$0xf] %vm3315, %v3289
      %3323 = vst.msk [vmem:[%s233 + $0x1c] sm:$0xf] %vm3315, %v3290
      %3324 = vst.msk [vmem:[%s233 + $0x20] sm:$0xf] %vm3315, %v3291
      %3325 = vst.msk [vmem:[%s233 + $0x24] sm:$0xf] %vm3315, %v3292
      %3326 = vst.msk [vmem:[%s233 + $0x28] sm:$0xf] %vm3315, %v3293
      %3327 = vst.msk [vmem:[%s233 + $0x2c] sm:$0xf] %vm3315, %v3294
      %3328 = vst.msk [vmem:[%s233 + $0x30] sm:$0xf] %vm3315, %v3295
      %3329 = vst.msk [vmem:[%s233 + $0x34] sm:$0xf] %vm3315, %v3296
      %3330 = vst.msk [vmem:[%s233 + $0x38] sm:$0xf] %vm3315, %v3297
      %3331 = vst.msk [vmem:[%s233 + $0x3c] sm:$0xf] %vm3315, %v3298
      %3332 = vst.msk [vmem:[%s233 + $0x40] sm:$0xf] %vm3315, %v3299
      %3333 = vst.msk [vmem:[%s233 + $0x44] sm:$0xf] %vm3315, %v3300
      %3334 = vst.msk [vmem:[%s233 + $0x48] sm:$0xf] %vm3315, %v3301
      %3335 = vst.msk [vmem:[%s233 + $0x4c] sm:$0xf] %vm3315, %v3302
      %3336 = vst.msk [vmem:[%s233 + $0x50] sm:$0xf] %vm3315, %v3303
      %3337 = vst.msk [vmem:[%s233 + $0x54] sm:$0xf] %vm3315, %v3304
      %3338 = vst.msk [vmem:[%s233 + $0x58] sm:$0xf] %vm3315, %v3305
      %3339 = vst.msk [vmem:[%s233 + $0x5c] sm:$0xf] %vm3315, %v3306
      %3340 = vst.msk [vmem:[%s233 + $0x60] sm:$0xf] %vm3315, %v3307
      %3341 = vst.msk [vmem:[%s233 + $0x64] sm:$0xf] %vm3315, %v3308
      %3342 = vst.msk [vmem:[%s233 + $0x68] sm:$0xf] %vm3315, %v3309
      %3343 = vst.msk [vmem:[%s233 + $0x6c] sm:$0xf] %vm3315, %v3310
      %3344 = vst.msk [vmem:[%s233 + $0x70] sm:$0xf] %vm3315, %v3311
      %3345 = vst.msk [vmem:[%s233 + $0x74] sm:$0xf] %vm3315, %v3312
      %3346 = vst.msk [vmem:[%s233 + $0x78] sm:$0xf] %vm3315, %v3313
      %3347 = vst.msk [vmem:[%s233 + $0x7c] sm:$0xf] %vm3315, %v3314
      %v3348 = vunpack.c.l.bf16 %v3283
      %v3349 = vunpack.c.l.bf16 %v3284
      %v3350 = vunpack.c.l.bf16 %v3285
      %v3351 = vunpack.c.l.bf16 %v3286
      %v3352 = vunpack.c.l.bf16 %v3287
      %v3353 = vunpack.c.l.bf16 %v3288
      %v3354 = vunpack.c.l.bf16 %v3289
      %v3355 = vunpack.c.l.bf16 %v3290
      %v3356 = vunpack.c.l.bf16 %v3291
      %v3357 = vunpack.c.l.bf16 %v3292
      %v3358 = vunpack.c.l.bf16 %v3293
      %v3359 = vunpack.c.l.bf16 %v3294
      %v3360 = vunpack.c.l.bf16 %v3295
      %v3361 = vunpack.c.l.bf16 %v3296
      %v3362 = vunpack.c.l.bf16 %v3297
      %v3363 = vunpack.c.l.bf16 %v3298
      %v3364 = vunpack.c.l.bf16 %v3299
      %v3365 = vunpack.c.l.bf16 %v3300
      %v3366 = vunpack.c.l.bf16 %v3301
      %v3367 = vunpack.c.l.bf16 %v3302
      %v3368 = vunpack.c.l.bf16 %v3303
      %v3369 = vunpack.c.l.bf16 %v3304
      %v3370 = vunpack.c.l.bf16 %v3305
      %v3371 = vunpack.c.l.bf16 %v3306
      %v3372 = vunpack.c.l.bf16 %v3307
      %v3373 = vunpack.c.l.bf16 %v3308
      %v3374 = vunpack.c.l.bf16 %v3309
      %v3375 = vunpack.c.l.bf16 %v3310
      %v3376 = vunpack.c.l.bf16 %v3311
      %v3377 = vunpack.c.l.bf16 %v3312
      %v3378 = vunpack.c.l.bf16 %v3313
      %v3379 = vunpack.c.l.bf16 %v3314
      %vm3380 = vcmask 31744
      %v3381 = vsel %vm3380, %v3348, 0.0
      %v3382 = vsel %vm3380, %v3349, 0.0
      %v3383 = vadd.f32 %v3381, %v3382
      %v3384 = vsel %vm3380, %v3350, 0.0
      %v3385 = vadd.f32 %v3383, %v3384
      %v3386 = vsel %vm3380, %v3351, 0.0
      %v3387 = vadd.f32 %v3385, %v3386
      %v3388 = vsel %vm3380, %v3352, 0.0
      %v3389 = vadd.f32 %v3387, %v3388
      %v3390 = vsel %vm3380, %v3353, 0.0
      %v3391 = vadd.f32 %v3389, %v3390
      %v3392 = vsel %vm3380, %v3354, 0.0
      %v3393 = vadd.f32 %v3391, %v3392
      %v3394 = vsel %vm3380, %v3355, 0.0
      %v3395 = vadd.f32 %v3393, %v3394
      %v3396 = vsel %vm3380, %v3356, 0.0
      %v3397 = vadd.f32 %v3395, %v3396
      %v3398 = vsel %vm3380, %v3357, 0.0
      %v3399 = vadd.f32 %v3397, %v3398
      %v3400 = vsel %vm3380, %v3358, 0.0
      %v3401 = vadd.f32 %v3399, %v3400
      %v3402 = vsel %vm3380, %v3359, 0.0
      %v3403 = vadd.f32 %v3401, %v3402
      %v3404 = vsel %vm3380, %v3360, 0.0
      %v3405 = vadd.f32 %v3403, %v3404
      %v3406 = vsel %vm3380, %v3361, 0.0
      %v3407 = vadd.f32 %v3405, %v3406
      %v3408 = vsel %vm3380, %v3362, 0.0
      %v3409 = vadd.f32 %v3407, %v3408
      %v3410 = vsel %vm3380, %v3363, 0.0
      %v3411 = vadd.f32 %v3409, %v3410
      %v3412 = vsel %vm3380, %v3364, 0.0
      %v3413 = vadd.f32 %v3411, %v3412
      %v3414 = vsel %vm3380, %v3365, 0.0
      %v3415 = vadd.f32 %v3413, %v3414
      %v3416 = vsel %vm3380, %v3366, 0.0
      %v3417 = vadd.f32 %v3415, %v3416
      %v3418 = vsel %vm3380, %v3367, 0.0
      %v3419 = vadd.f32 %v3417, %v3418
      %v3420 = vsel %vm3380, %v3368, 0.0
      %v3421 = vadd.f32 %v3419, %v3420
      %v3422 = vsel %vm3380, %v3369, 0.0
      %v3423 = vadd.f32 %v3421, %v3422
      %v3424 = vsel %vm3380, %v3370, 0.0
      %v3425 = vadd.f32 %v3423, %v3424
      %v3426 = vsel %vm3380, %v3371, 0.0
      %v3427 = vadd.f32 %v3425, %v3426
      %v3428 = vsel %vm3380, %v3372, 0.0
      %v3429 = vadd.f32 %v3427, %v3428
      %v3430 = vsel %vm3380, %v3373, 0.0
      %v3431 = vadd.f32 %v3429, %v3430
      %v3432 = vsel %vm3380, %v3374, 0.0
      %v3433 = vadd.f32 %v3431, %v3432
      %v3434 = vsel %vm3380, %v3375, 0.0
      %v3435 = vadd.f32 %v3433, %v3434
      %v3436 = vsel %vm3380, %v3376, 0.0
      %v3437 = vadd.f32 %v3435, %v3436
      %v3438 = vsel %vm3380, %v3377, 0.0
      %v3439 = vadd.f32 %v3437, %v3438
      %v3440 = vsel %vm3380, %v3378, 0.0
      %v3441 = vadd.f32 %v3439, %v3440
      %v3442 = vsel %vm3380, %v3379, 0.0
      %v3443 = vadd.f32 %v3441, %v3442
      %v3444 = vrot.slane %v3443, 4
      %v3445 = vadd.f32 %v3443, %v3444
      %v3446 = vrot.slane %v3445, 2
      %v3447 = vadd.f32 %v3445, %v3446
      %v3448 = vrot.slane %v3447, 1
      %v3449 = vadd.f32 %v3447, %v3448
      %vm3450 = vcmask 24576
      %3451 = vst.msk [vmem:[%s238] sm:$0x1] %vm3450, %v3449
      %v3452 = vmul.f32 %v3348, %v3348
      %v3453 = vmul.f32 %v3349, %v3349
      %v3454 = vmul.f32 %v3350, %v3350
      %v3455 = vmul.f32 %v3351, %v3351
      %v3456 = vmul.f32 %v3352, %v3352
      %v3457 = vmul.f32 %v3353, %v3353
      %v3458 = vmul.f32 %v3354, %v3354
      %v3459 = vmul.f32 %v3355, %v3355
      %v3460 = vmul.f32 %v3356, %v3356
      %v3461 = vmul.f32 %v3357, %v3357
      %v3462 = vmul.f32 %v3358, %v3358
      %v3463 = vmul.f32 %v3359, %v3359
      %v3464 = vmul.f32 %v3360, %v3360
      %v3465 = vmul.f32 %v3361, %v3361
      %v3466 = vmul.f32 %v3362, %v3362
      %v3467 = vmul.f32 %v3363, %v3363
      %v3468 = vmul.f32 %v3364, %v3364
      %v3469 = vmul.f32 %v3365, %v3365
      %v3470 = vmul.f32 %v3366, %v3366
      %v3471 = vmul.f32 %v3367, %v3367
      %v3472 = vmul.f32 %v3368, %v3368
      %v3473 = vmul.f32 %v3369, %v3369
      %v3474 = vmul.f32 %v3370, %v3370
      %v3475 = vmul.f32 %v3371, %v3371
      %v3476 = vmul.f32 %v3372, %v3372
      %v3477 = vmul.f32 %v3373, %v3373
      %v3478 = vmul.f32 %v3374, %v3374
      %v3479 = vmul.f32 %v3375, %v3375
      %v3480 = vmul.f32 %v3376, %v3376
      %v3481 = vmul.f32 %v3377, %v3377
      %v3482 = vmul.f32 %v3378, %v3378
      %v3483 = vmul.f32 %v3379, %v3379
      %v3484 = vsel %vm3380, %v3452, 0.0
      %v3485 = vsel %vm3380, %v3453, 0.0
      %v3486 = vadd.f32 %v3484, %v3485
      %v3487 = vsel %vm3380, %v3454, 0.0
      %v3488 = vadd.f32 %v3486, %v3487
      %v3489 = vsel %vm3380, %v3455, 0.0
      %v3490 = vadd.f32 %v3488, %v3489
      %v3491 = vsel %vm3380, %v3456, 0.0
      %v3492 = vadd.f32 %v3490, %v3491
      %v3493 = vsel %vm3380, %v3457, 0.0
      %v3494 = vadd.f32 %v3492, %v3493
      %v3495 = vsel %vm3380, %v3458, 0.0
      %v3496 = vadd.f32 %v3494, %v3495
      %v3497 = vsel %vm3380, %v3459, 0.0
      %v3498 = vadd.f32 %v3496, %v3497
      %v3499 = vsel %vm3380, %v3460, 0.0
      %v3500 = vadd.f32 %v3498, %v3499
      %v3501 = vsel %vm3380, %v3461, 0.0
      %v3502 = vadd.f32 %v3500, %v3501
      %v3503 = vsel %vm3380, %v3462, 0.0
      %v3504 = vadd.f32 %v3502, %v3503
      %v3505 = vsel %vm3380, %v3463, 0.0
      %v3506 = vadd.f32 %v3504, %v3505
      %v3507 = vsel %vm3380, %v3464, 0.0
      %v3508 = vadd.f32 %v3506, %v3507
      %v3509 = vsel %vm3380, %v3465, 0.0
      %v3510 = vadd.f32 %v3508, %v3509
      %v3511 = vsel %vm3380, %v3466, 0.0
      %v3512 = vadd.f32 %v3510, %v3511
      %v3513 = vsel %vm3380, %v3467, 0.0
      %v3514 = vadd.f32 %v3512, %v3513
      %v3515 = vsel %vm3380, %v3468, 0.0
      %v3516 = vadd.f32 %v3514, %v3515
      %v3517 = vsel %vm3380, %v3469, 0.0
      %v3518 = vadd.f32 %v3516, %v3517
      %v3519 = vsel %vm3380, %v3470, 0.0
      %v3520 = vadd.f32 %v3518, %v3519
      %v3521 = vsel %vm3380, %v3471, 0.0
      %v3522 = vadd.f32 %v3520, %v3521
      %v3523 = vsel %vm3380, %v3472, 0.0
      %v3524 = vadd.f32 %v3522, %v3523
      %v3525 = vsel %vm3380, %v3473, 0.0
      %v3526 = vadd.f32 %v3524, %v3525
      %v3527 = vsel %vm3380, %v3474, 0.0
      %v3528 = vadd.f32 %v3526, %v3527
      %v3529 = vsel %vm3380, %v3475, 0.0
      %v3530 = vadd.f32 %v3528, %v3529
      %v3531 = vsel %vm3380, %v3476, 0.0
      %v3532 = vadd.f32 %v3530, %v3531
      %v3533 = vsel %vm3380, %v3477, 0.0
      %v3534 = vadd.f32 %v3532, %v3533
      %v3535 = vsel %vm3380, %v3478, 0.0
      %v3536 = vadd.f32 %v3534, %v3535
      %v3537 = vsel %vm3380, %v3479, 0.0
      %v3538 = vadd.f32 %v3536, %v3537
      %v3539 = vsel %vm3380, %v3480, 0.0
      %v3540 = vadd.f32 %v3538, %v3539
      %v3541 = vsel %vm3380, %v3481, 0.0
      %v3542 = vadd.f32 %v3540, %v3541
      %v3543 = vsel %vm3380, %v3482, 0.0
      %v3544 = vadd.f32 %v3542, %v3543
      %v3545 = vsel %vm3380, %v3483, 0.0
      %v3546 = vadd.f32 %v3544, %v3545
      %v3547 = vrot.slane %v3546, 4
      %v3548 = vadd.f32 %v3546, %v3547
      %v3549 = vrot.slane %v3548, 2
      %v3550 = vadd.f32 %v3548, %v3549
      %v3551 = vrot.slane %v3550, 1
      %v3552 = vadd.f32 %v3550, %v3551
      %3553 = vst.msk [vmem:[%s238 + $0x1] sm:$0x1] %vm3450, %v3552
      %s3554 = smul.u32 32, %s17
      %p3555 = scmp.lt.s32.totalorder %s3554, 63
      %s3556 = scalar_select %p3555, %s3554, 63
      %s3557 = smul.addr %s3556, 4
      %s3558 = scalar_lea.vmem %s4, %s3557
      %p3559 = scmp.lt.s32.totalorder %s17, 1
      %s3560 = scalar_select %p3559, %s17, 1
      %s3561 = smul.addr %s3560, 2
      %s3562 = scalar_lea.vmem %s5, %s3561
      // Predicated region
      $region37: #{_lambda_.7} parent=35 // pred_check
        %p3563 = pneg %p124
      $region38: #{_lambda_.7} parent=35 // pred_check_branch
        %3565 = sbr.rel (%p3563) target = $region40
      $region39: #{_lambda_.7} parent=35 // pred_region
        %s3566 = smul.u32 32, %s17
      $region40: #{_lambda_.7} parent=35 // pred_fallthru
        _
      // Predicated region
      $region41: #{_lambda_.7} parent=35 // pred_check
        %p3567 = pneg %p150
      $region42: #{_lambda_.7} parent=35 // pred_check_branch
        %3569 = sbr.rel (%p3567) target = $region44
      $region43: #{_lambda_.7} parent=35 // pred_region
        _
      $region44: #{_lambda_.7} parent=35 // pred_fallthru
        _
    $region36: #{_lambda_.7} parent=5 // pred_fallthru
      _
    %p3570 = scmp.le.s32.totalorder 2, %s12
    // Predicated region
    $region45: #{_lambda_.7} parent=5 // pred_check
      %p3571 = pneg %p3570
    $region46: #{_lambda_.7} parent=5 // pred_check_branch
      %3573 = sbr.rel (%p3571) target = $region48
    $region47: #{_lambda_.7} parent=5 // pred_region
      %s3574 = ssub.s32 %s12, 2
      // Predicated region
      $region49: #{_lambda_.7} parent=47 // pred_check
        %p3575 = pneg %p130
      $region50: #{_lambda_.7} parent=47 // pred_check_branch
        %3577 = sbr.rel (%p3575) target = $region52
      $region51: #{_lambda_.7} parent=47 // pred_region
        %s3578 = smul.u32 32, %s18
        %p3579 = scmp.lt.s32.totalorder %s3578, 63
        %s3580 = scalar_select %p3579, %s3578, 63
        %s3581 = smul.addr %s3580, 4
        %s3582 = scalar_lea.vmem %s4, %s3581
      $region52: #{_lambda_.7} parent=47 // pred_fallthru
        _
      // Predicated region
      $region53: #{_lambda_.7} parent=47 // pred_check
        %p3583 = pneg %p156
      $region54: #{_lambda_.7} parent=47 // pred_check_branch
        %3585 = sbr.rel (%p3583) target = $region56
      $region55: #{_lambda_.7} parent=47 // pred_region
        %p3586 = scmp.lt.s32.totalorder %s18, 1
        %s3587 = scalar_select %p3586, %s18, 1
        %s3588 = smul.addr %s3587, 2
        %s3589 = scalar_lea.vmem %s5, %s3588
      $region56: #{_lambda_.7} parent=47 // pred_fallthru
        _
    $region48: #{_lambda_.7} parent=5 // pred_fallthru
      _
  $region6: #{_lambda_.7} parent=0 // loop_footer
    %s16 = sadd.s32 1, %s12
  $region7: #{_lambda_.7} parent=0 // loop_footer_branch
    %11 = sbr.rel target = $region3
  $region8: #{_lambda_.7} parent=0 // loop_exit
    _

// kernel: _lambda_.11
$region0: #{_lambda_.11}
  #allocation0 [shape = 'u32[]', space=smem, size = 0x4, offset = 0x4, fixed_abs, tag = 'smem constant byte address 0x4 - core index']
  #allocation1 [shape = 'u32[72,128]{1,0:T(1,128)}', space=vmem, size = 0x9000, scoped, tag = 'internal scratch']
  #allocation2 [shape = 'bf16[20,32,16]{2,1,0:T(8,128)(2,1)}', space=vmem, size = 0x28000, scoped, tag = 'scratch operand']
  %s0 = inlined_call_operand.vmem [shape: f32[512,16], index: 0, kind: input, shape index: {}]
  %s1 = inlined_call_operand.vmem [shape: f32[1,16], index: 1, kind: input, shape index: {}]
  %s2 = inlined_call_operand.vmem [shape: f32[1,16], index: 2, kind: input, shape index: {}]
  %s3 = inlined_call_operand.vmem [shape: bf16[3,3,16,4], index: 3, kind: input, shape index: {}]
  %s4 = inlined_call_operand.vmem [shape: bf16[512,4], index: 4, kind: output, shape index: {0}]
  %s5 = inlined_call_operand.hbm [shape: f32[2,2,4], index: 5, kind: output, shape index: {1}]
  %6 = xla_tuple %s4, %s5
  %s7 = sld [smem:[#allocation0]]
  $region57: #{_lambda_.11} parent=0
    _
  %s9 = ssub.s32 1, %s7
  %s10 = scalar_select 0, %s9, %s7
  $region1: #{_lambda_.11} parent=0
    #allocation3 [shape = 'u8[2048]{0}', space=vmem, size = 0x800, scoped, tag = 'output window, operand 1']
    #allocation4 [shape = 's32[2]{0}', space=sflag, size = 0x8, scoped, tag = 'scoped memory for _lambda_.11']
    %11 = vsyncpa [#allocation4], 0
    %s12 = scalar_lea.sflag [#allocation4], 1
    %13 = vsyncpa %s12, 0
    loop: start=0, step=1, limit=4
    $region2: #{_lambda_.11} parent=1 // loop_pre_header
      _
    $region3: #{_lambda_.11} parent=1 // loop_header
      %s15 = sphi 0, %s19
      %p16 = scmp.ge.s32.totalorder %s15, 4
      %s25 = sphi 0, %s27
      %s28 = sphi 0, %s25
      %s29 = sphi 0, %s28
      %s45 = sphi 0, %s29
      %s49 = sphi 0, %s49
      %s51 = sphi 0, %s49
      %s52 = sphi 0, %s51
      %s66 = sphi 0, %s52
      %s70 = sphi 0, %s70
      %s72 = sphi 0, %s70
      %s73 = sphi 0, %s72
      %s87 = sphi 0, %s73
      %s91 = sphi 0, %s91
      %s93 = sphi 0, %s91
      %s94 = sphi 0, %s93
      %s108 = sphi 0, %s94
      %s114 = sphi 0, %s116
      %s117 = sphi 0, %s114
      %s118 = sphi 0, %s117
      %s134 = sphi 0, %s118
      %s140 = sphi 0, %s142
      %s143 = sphi 0, %s140
      %s144 = sphi 0, %s143
      %s160 = sphi 0, %s144
    $region4: #{_lambda_.11} parent=1 // loop_header_branch
      %18 = sbr.rel (%p16) target = $region8
    $region5: #{_lambda_.11} parent=1 // loop_body
      %s20 = ssub.s32 %s15, 1
      %s21 = ssub.s32 %s15, 2
      %s22 = sadd.s32 %s15, 1
      %s23 = ssub.s32 %s15, %s22
      %p24 = scmp.eq.s32.totalorder %s23, 0
      %s26 = sadd.s32 %s25, 1
      %s27 = scalar_select %p24, %s25, %s26
      %p30 = pneg %p24
      %p31 = scmp.eq.s32.totalorder %s15, 1
      %p32 = por %p30, %p31
      %p33 = scmp.ne.s32.totalorder %s25, %s28
      %p34 = scmp.eq.s32.totalorder %s15, 0
      %p35 = por %p33, %p34
      %p36 = scmp.ne.s32.totalorder %s25, %s28
      %p37 = scmp.eq.s32.totalorder %s20, 1
      %p38 = por %p36, %p37
      %p39 = scmp.ne.s32.totalorder %s28, %s29
      %p40 = scmp.eq.s32.totalorder %s20, 0
      %p41 = por %p39, %p40
      %p42 = scmp.ne.s32.totalorder %s28, %s29
      %p43 = scmp.eq.s32.totalorder %s21, 1
      %p44 = por %p42, %p43
      %p46 = scmp.ne.s32.totalorder %s29, %s45
      %p47 = scmp.eq.s32.totalorder %s21, 0
      %p48 = por %p46, %p47
      %s50 = sadd.s32 %s49, 1
      %p53 = scmp.eq.s32.totalorder %s15, 1
      %p54 = scmp.ne.s32.totalorder %s49, %s51
      %p55 = scmp.eq.s32.totalorder %s15, 0
      %p56 = por %p54, %p55
      %p57 = scmp.ne.s32.totalorder %s49, %s51
      %p58 = scmp.eq.s32.totalorder %s20, 1
      %p59 = por %p57, %p58
      %p60 = scmp.ne.s32.totalorder %s51, %s52
      %p61 = scmp.eq.s32.totalorder %s20, 0
      %p62 = por %p60, %p61
      %p63 = scmp.ne.s32.totalorder %s51, %s52
      %p64 = scmp.eq.s32.totalorder %s21, 1
      %p65 = por %p63, %p64
      %p67 = scmp.ne.s32.totalorder %s52, %s66
      %p68 = scmp.eq.s32.totalorder %s21, 0
      %p69 = por %p67, %p68
      %s71 = sadd.s32 %s70, 1
      %p74 = scmp.eq.s32.totalorder %s15, 1
      %p75 = scmp.ne.s32.totalorder %s70, %s72
      %p76 = scmp.eq.s32.totalorder %s15, 0
      %p77 = por %p75, %p76
      %p78 = scmp.ne.s32.totalorder %s70, %s72
      %p79 = scmp.eq.s32.totalorder %s20, 1
      %p80 = por %p78, %p79
      %p81 = scmp.ne.s32.totalorder %s72, %s73
      %p82 = scmp.eq.s32.totalorder %s20, 0
      %p83 = por %p81, %p82
      %p84 = scmp.ne.s32.totalorder %s72, %s73
      %p85 = scmp.eq.s32.totalorder %s21, 1
      %p86 = por %p84, %p85
      %p88 = scmp.ne.s32.totalorder %s73, %s87
      %p89 = scmp.eq.s32.totalorder %s21, 0
      %p90 = por %p88, %p89
      %s92 = sadd.s32 %s91, 1
      %p95 = scmp.eq.s32.totalorder %s15, 1
      %p96 = scmp.ne.s32.totalorder %s91, %s93
      %p97 = scmp.eq.s32.totalorder %s15, 0
      %p98 = por %p96, %p97
      %p99 = scmp.ne.s32.totalorder %s91, %s93
      %p100 = scmp.eq.s32.totalorder %s20, 1
      %p101 = por %p99, %p100
      %p102 = scmp.ne.s32.totalorder %s93, %s94
      %p103 = scmp.eq.s32.totalorder %s20, 0
      %p104 = por %p102, %p103
      %p105 = scmp.ne.s32.totalorder %s93, %s94
      %p106 = scmp.eq.s32.totalorder %s21, 1
      %p107 = por %p105, %p106
      %p109 = scmp.ne.s32.totalorder %s94, %s108
      %p110 = scmp.eq.s32.totalorder %s21, 0
      %p111 = por %p109, %p110
      %s112 = ssub.s32 %s15, %s22
      %p113 = scmp.eq.s32.totalorder %s112, 0
      %s115 = sadd.s32 %s114, 1
      %s116 = scalar_select %p113, %s114, %s115
      %p119 = pneg %p113
      %p120 = scmp.eq.s32.totalorder %s15, 1
      %p121 = por %p119, %p120
      %p122 = scmp.ne.s32.totalorder %s114, %s117
      %p123 = scmp.eq.s32.totalorder %s15, 0
      %p124 = por %p122, %p123
      %p125 = scmp.ne.s32.totalorder %s114, %s117
      %p126 = scmp.eq.s32.totalorder %s20, 1
      %p127 = por %p125, %p126
      %p128 = scmp.ne.s32.totalorder %s117, %s118
      %p129 = scmp.eq.s32.totalorder %s20, 0
      %p130 = por %p128, %p129
      %p131 = scmp.ne.s32.totalorder %s117, %s118
      %p132 = scmp.eq.s32.totalorder %s21, 1
      %p133 = por %p131, %p132
      %p135 = scmp.ne.s32.totalorder %s118, %s134
      %p136 = scmp.eq.s32.totalorder %s21, 0
      %p137 = por %p135, %p136
      %s138 = ssub.s32 %s15, %s22
      %p139 = scmp.eq.s32.totalorder %s138, 0
      %s141 = sadd.s32 %s140, 1
      %s142 = scalar_select %p139, %s140, %s141
      %p145 = pneg %p139
      %p146 = scmp.eq.s32.totalorder %s15, 1
      %p147 = por %p145, %p146
      %p148 = scmp.ne.s32.totalorder %s140, %s143
      %p149 = scmp.eq.s32.totalorder %s15, 0
      %p150 = por %p148, %p149
      %p151 = scmp.ne.s32.totalorder %s140, %s143
      %p152 = scmp.eq.s32.totalorder %s20, 1
      %p153 = por %p151, %p152
      %p154 = scmp.ne.s32.totalorder %s143, %s144
      %p155 = scmp.eq.s32.totalorder %s20, 0
      %p156 = por %p154, %p155
      %p157 = scmp.ne.s32.totalorder %s143, %s144
      %p158 = scmp.eq.s32.totalorder %s21, 1
      %p159 = por %p157, %p158
      %p161 = scmp.ne.s32.totalorder %s144, %s160
      %p162 = scmp.eq.s32.totalorder %s21, 0
      %p163 = por %p161, %p162
      %p164 = scmp.le.s32.totalorder 1, %s15
      %p165 = scmp.lt.s32.totalorder %s15, 3
      %p166 = pnand %p164, %p165
      %p167 = pneg %p166
      // Predicated region
      $region9: #{_lambda_.11} parent=5 // pred_check
        _
      $region10: #{_lambda_.11} parent=5 // pred_check_branch
        %169 = sbr.rel (%p166) target = $region12
      $region11: #{_lambda_.11} parent=5 // pred_region
        %s170 = ssub.s32 %s15, 1
        // Predicated region
        $region13: #{_lambda_.11} parent=11 // pred_check
          %p171 = pneg %p62
        $region14: #{_lambda_.11} parent=11 // pred_check_branch
          %173 = sbr.rel (%p171) target = $region16
        $region15: #{_lambda_.11} parent=11 // pred_region
          _
        $region16: #{_lambda_.11} parent=11 // pred_fallthru
          _
        // Predicated region
        $region17: #{_lambda_.11} parent=11 // pred_check
          %p174 = pneg %p83
        $region18: #{_lambda_.11} parent=11 // pred_check_branch
          %176 = sbr.rel (%p174) target = $region20
        $region19: #{_lambda_.11} parent=11 // pred_region
          _
        $region20: #{_lambda_.11} parent=11 // pred_fallthru
          _
        // Predicated region
        $region21: #{_lambda_.11} parent=11 // pred_check
          %p177 = pneg %p104
        $region22: #{_lambda_.11} parent=11 // pred_check_branch
          %179 = sbr.rel (%p177) target = $region24
        $region23: #{_lambda_.11} parent=11 // pred_region
          _
        $region24: #{_lambda_.11} parent=11 // pred_fallthru
          _
      $region12: #{_lambda_.11} parent=5 // pred_fallthru
        _
      %p180 = scmp.lt.s32.totalorder %s15, 2
      // Predicated region
      $region25: #{_lambda_.11} parent=5 // pred_check
        %p181 = pneg %p180
      $region26: #{_lambda_.11} parent=5 // pred_check_branch
        %183 = sbr.rel (%p181) target = $region28
      $region27: #{_lambda_.11} parent=5 // pred_region
        // Predicated region
        $region29: #{_lambda_.11} parent=27 // pred_check
          %p184 = pneg %p35
        $region30: #{_lambda_.11} parent=27 // pred_check_branch
          %186 = sbr.rel (%p184) target = $region32
        $region31: #{_lambda_.11} parent=27 // pred_region
          %s187 = smul.u32 32, %s15
          %p188 = scmp.lt.s32.totalorder %s187, 63
          %s189 = scalar_select %p188, %s187, 63
          %s190 = smul.addr %s189, 8
          %s191 = scalar_lea.vmem %s0, %s190
          %s192 = smul.u32 32, %s15
        $region32: #{_lambda_.11} parent=27 // pred_fallthru
          _
      $region28: #{_lambda_.11} parent=5 // pred_fallthru
        _
      %p193 = scmp.le.s32.totalorder 1, %s15
      %p194 = scmp.lt.s32.totalorder %s15, 3
      %p195 = pnand %p193, %p194
      %p196 = pneg %p195
      // Predicated region
      $region33: #{_lambda_.11} parent=5 // pred_check
        _
      $region34: #{_lambda_.11} parent=5 // pred_check_branch
        %198 = sbr.rel (%p195) target = $region36
      $region35: #{_lambda_.11} parent=5 // pred_region
        %s199 = ssub.s32 %s15, 1
        %s200 = smul.u32 32, %s20
        %p201 = scmp.lt.s32.totalorder %s200, 63
        %s202 = scalar_select %p201, %s200, 63
        %s203 = smul.addr %s202, 8
        %s204 = scalar_lea.vmem %s0, %s203
        %p205 = pneg %p41
        %p206 = pneg %p38
        %p207 = pneg %p62
        %p208 = pneg %p59
        %p209 = pneg %p83
        %p210 = pneg %p80
        %p211 = pneg %p104
        %p212 = pneg %p101
        %p213 = pneg %p130
        %p214 = pneg %p127
        %s215 = smul.u32 32, %s20
        %p216 = scmp.lt.s32.totalorder %s215, 63
        %s217 = scalar_select %p216, %s215, 63
        %s218 = smul.addr %s217, 4
        %s219 = scalar_lea.vmem %s4, %s218
        %p220 = pneg %p156
        %p221 = pneg %p153
        %s222 = sand.u32 %s143, 1
        %s223 = scalar_lea.sflag [#allocation4], %s222
        %s224 = sand.u32 %s143, 1
        %s225 = smul.addr %s224, 2
        %s226 = scalar_lea.vmem [#allocation3], %s225
        %s227 = smul.u32 32, %s20
        %p228 = scmp.lt.s32.totalorder %s227, 63
        %s229 = scalar_select %p228, %s227, 63
        %s230 = smul.addr %s229, 8
        %s231 = scalar_lea.vmem %s0, %s230
        %s232 = smul.u32 32, %s20
        %s233 = smul.u32 32, %s20
        %p234 = scmp.lt.s32.totalorder %s233, 63
        %s235 = scalar_select %p234, %s233, 63
        %s236 = smul.addr %s235, 4
        %s237 = scalar_lea.vmem %s4, %s236
        %s238 = smul.u32 32, %s20
        %v240 = vld [vmem:[%s231] sm:$0xff]
        %v241 = vld [vmem:[%s231 + $0x8] sm:$0xff]
        %v242 = vld [vmem:[%s231 + $0x10] sm:$0xff]
        %v243 = vld [vmem:[%s231 + $0x18] sm:$0xff]
        %v244 = vld [vmem:[%s231 + $0x20] sm:$0xff]
        %v245 = vld [vmem:[%s231 + $0x28] sm:$0xff]
        %v246 = vld [vmem:[%s231 + $0x30] sm:$0xff]
        %v247 = vld [vmem:[%s231 + $0x38] sm:$0xff]
        %v248 = vld [vmem:[%s231 + $0x40] sm:$0xff]
        %v249 = vld [vmem:[%s231 + $0x48] sm:$0xff]
        %v250 = vld [vmem:[%s231 + $0x50] sm:$0xff]
        %v251 = vld [vmem:[%s231 + $0x58] sm:$0xff]
        %v252 = vld [vmem:[%s231 + $0x60] sm:$0xff]
        %v253 = vld [vmem:[%s231 + $0x68] sm:$0xff]
        %v254 = vld [vmem:[%s231 + $0x70] sm:$0xff]
        %v255 = vld [vmem:[%s231 + $0x78] sm:$0xff]
        %v256 = vld [vmem:[%s231 + $0x80] sm:$0xff]
        %v257 = vld [vmem:[%s231 + $0x88] sm:$0xff]
        %v258 = vld [vmem:[%s231 + $0x90] sm:$0xff]
        %v259 = vld [vmem:[%s231 + $0x98] sm:$0xff]
        %v260 = vld [vmem:[%s231 + $0xa0] sm:$0xff]
        %v261 = vld [vmem:[%s231 + $0xa8] sm:$0xff]
        %v262 = vld [vmem:[%s231 + $0xb0] sm:$0xff]
        %v263 = vld [vmem:[%s231 + $0xb8] sm:$0xff]
        %v264 = vld [vmem:[%s231 + $0xc0] sm:$0xff]
        %v265 = vld [vmem:[%s231 + $0xc8] sm:$0xff]
        %v266 = vld [vmem:[%s231 + $0xd0] sm:$0xff]
        %v267 = vld [vmem:[%s231 + $0xd8] sm:$0xff]
        %v268 = vld [vmem:[%s231 + $0xe0] sm:$0xff]
        %v269 = vld [vmem:[%s231 + $0xe8] sm:$0xff]
        %v270 = vld [vmem:[%s231 + $0xf0] sm:$0xff]
        %v271 = vld [vmem:[%s231 + $0xf8] sm:$0xff]
        %v272 = vld [vmem:[%s1] sm:$0x1]
        %v274 = vperm.slane %v272, 0
        %v276 = vmul.f32 %v240, %v274
        %v277 = vmul.f32 %v241, %v274
        %v278 = vmul.f32 %v242, %v274
        %v279 = vmul.f32 %v243, %v274
        %v280 = vmul.f32 %v244, %v274
        %v281 = vmul.f32 %v245, %v274
        %v282 = vmul.f32 %v246, %v274
        %v283 = vmul.f32 %v247, %v274
        %v284 = vmul.f32 %v248, %v274
        %v285 = vmul.f32 %v249, %v274
        %v286 = vmul.f32 %v250, %v274
        %v287 = vmul.f32 %v251, %v274
        %v288 = vmul.f32 %v252, %v274
        %v289 = vmul.f32 %v253, %v274
        %v290 = vmul.f32 %v254, %v274
        %v291 = vmul.f32 %v255, %v274
        %v292 = vmul.f32 %v256, %v274
        %v293 = vmul.f32 %v257, %v274
        %v294 = vmul.f32 %v258, %v274
        %v295 = vmul.f32 %v259, %v274
        %v296 = vmul.f32 %v260, %v274
        %v297 = vmul.f32 %v261, %v274
        %v298 = vmul.f32 %v262, %v274
        %v299 = vmul.f32 %v263, %v274
        %v300 = vmul.f32 %v264, %v274
        %v301 = vmul.f32 %v265, %v274
        %v302 = vmul.f32 %v266, %v274
        %v303 = vmul.f32 %v267, %v274
        %v304 = vmul.f32 %v268, %v274
        %v305 = vmul.f32 %v269, %v274
        %v306 = vmul.f32 %v270, %v274
        %v307 = vmul.f32 %v271, %v274
        %v308 = vld [vmem:[%s2] sm:$0x1]
        %v310 = vperm.slane %v308, 0
        %v312 = vadd.f32 %v276, %v310
        %v313 = vadd.f32 %v277, %v310
        %v314 = vadd.f32 %v278, %v310
        %v315 = vadd.f32 %v279, %v310
        %v316 = vadd.f32 %v280, %v310
        %v317 = vadd.f32 %v281, %v310
        %v318 = vadd.f32 %v282, %v310
        %v319 = vadd.f32 %v283, %v310
        %v320 = vadd.f32 %v284, %v310
        %v321 = vadd.f32 %v285, %v310
        %v322 = vadd.f32 %v286, %v310
        %v323 = vadd.f32 %v287, %v310
        %v324 = vadd.f32 %v288, %v310
        %v325 = vadd.f32 %v289, %v310
        %v326 = vadd.f32 %v290, %v310
        %v327 = vadd.f32 %v291, %v310
        %v328 = vadd.f32 %v292, %v310
        %v329 = vadd.f32 %v293, %v310
        %v330 = vadd.f32 %v294, %v310
        %v331 = vadd.f32 %v295, %v310
        %v332 = vadd.f32 %v296, %v310
        %v333 = vadd.f32 %v297, %v310
        %v334 = vadd.f32 %v298, %v310
        %v335 = vadd.f32 %v299, %v310
        %v336 = vadd.f32 %v300, %v310
        %v337 = vadd.f32 %v301, %v310
        %v338 = vadd.f32 %v302, %v310
        %v339 = vadd.f32 %v303, %v310
        %v340 = vadd.f32 %v304, %v310
        %v341 = vadd.f32 %v305, %v310
        %v342 = vadd.f32 %v306, %v310
        %v343 = vadd.f32 %v307, %v310
        %v344 = vmax.f32 %v312, 0.0
        %v345 = vmax.f32 %v313, 0.0
        %v346 = vmax.f32 %v314, 0.0
        %v347 = vmax.f32 %v315, 0.0
        %v348 = vmax.f32 %v316, 0.0
        %v349 = vmax.f32 %v317, 0.0
        %v350 = vmax.f32 %v318, 0.0
        %v351 = vmax.f32 %v319, 0.0
        %v352 = vmax.f32 %v320, 0.0
        %v353 = vmax.f32 %v321, 0.0
        %v354 = vmax.f32 %v322, 0.0
        %v355 = vmax.f32 %v323, 0.0
        %v356 = vmax.f32 %v324, 0.0
        %v357 = vmax.f32 %v325, 0.0
        %v358 = vmax.f32 %v326, 0.0
        %v359 = vmax.f32 %v327, 0.0
        %v360 = vmax.f32 %v328, 0.0
        %v361 = vmax.f32 %v329, 0.0
        %v362 = vmax.f32 %v330, 0.0
        %v363 = vmax.f32 %v331, 0.0
        %v364 = vmax.f32 %v332, 0.0
        %v365 = vmax.f32 %v333, 0.0
        %v366 = vmax.f32 %v334, 0.0
        %v367 = vmax.f32 %v335, 0.0
        %v368 = vmax.f32 %v336, 0.0
        %v369 = vmax.f32 %v337, 0.0
        %v370 = vmax.f32 %v338, 0.0
        %v371 = vmax.f32 %v339, 0.0
        %v372 = vmax.f32 %v340, 0.0
        %v373 = vmax.f32 %v341, 0.0
        %v374 = vmax.f32 %v342, 0.0
        %v375 = vmax.f32 %v343, 0.0
        %v376 = vpack.c.bf16 %v344, %v344
        %v377 = vpack.c.bf16 %v345, %v345
        %v378 = vpack.c.bf16 %v346, %v346
        %v379 = vpack.c.bf16 %v347, %v347
        %v380 = vpack.c.bf16 %v348, %v348
        %v381 = vpack.c.bf16 %v349, %v349
        %v382 = vpack.c.bf16 %v350, %v350
        %v383 = vpack.c.bf16 %v351, %v351
        %v384 = vpack.c.bf16 %v352, %v352
        %v385 = vpack.c.bf16 %v353, %v353
        %v386 = vpack.c.bf16 %v354, %v354
        %v387 = vpack.c.bf16 %v355, %v355
        %v388 = vpack.c.bf16 %v356, %v356
        %v389 = vpack.c.bf16 %v357, %v357
        %v390 = vpack.c.bf16 %v358, %v358
        %v391 = vpack.c.bf16 %v359, %v359
        %v392 = vpack.c.bf16 %v360, %v360
        %v393 = vpack.c.bf16 %v361, %v361
        %v394 = vpack.c.bf16 %v362, %v362
        %v395 = vpack.c.bf16 %v363, %v363
        %v396 = vpack.c.bf16 %v364, %v364
        %v397 = vpack.c.bf16 %v365, %v365
        %v398 = vpack.c.bf16 %v366, %v366
        %v399 = vpack.c.bf16 %v367, %v367
        %v400 = vpack.c.bf16 %v368, %v368
        %v401 = vpack.c.bf16 %v369, %v369
        %v402 = vpack.c.bf16 %v370, %v370
        %v403 = vpack.c.bf16 %v371, %v371
        %v404 = vpack.c.bf16 %v372, %v372
        %v405 = vpack.c.bf16 %v373, %v373
        %v406 = vpack.c.bf16 %v374, %v374
        %v407 = vpack.c.bf16 %v375, %v375
        %vm408 = vcmask 125952
        %409 = vst.msk [vmem:[#allocation2] sm:$0xf] %vm408, 0
        %410 = vst.msk [vmem:[#allocation2 + $0x4] sm:$0xf] %vm408, 0
        %411 = vst.msk [vmem:[#allocation2 + $0x8] sm:$0xf] %vm408, 0
        %412 = vst.msk [vmem:[#allocation2 + $0xc] sm:$0xf] %vm408, 0
        %413 = vst.msk [vmem:[#allocation2 + $0x10] sm:$0xf] %vm408, 0
        %414 = vst.msk [vmem:[#allocation2 + $0x14] sm:$0xf] %vm408, 0
        %415 = vst.msk [vmem:[#allocation2 + $0x18] sm:$0xf] %vm408, 0
        %416 = vst.msk [vmem:[#allocation2 + $0x1c] sm:$0xf] %vm408, 0
        %s417 = scalar_lea.vmem [#allocation2], 288
        %418 = vst.msk [vmem:[%s417] sm:$0xf] %vm408, 0
        %419 = vst.msk [vmem:[%s417 + $0x4] sm:$0xf] %vm408, 0
        %420 = vst.msk [vmem:[%s417 + $0x8] sm:$0xf] %vm408, 0
        %421 = vst.msk [vmem:[%s417 + $0xc] sm:$0xf] %vm408, 0
        %422 = vst.msk [vmem:[%s417 + $0x10] sm:$0xf] %vm408, 0
        %423 = vst.msk [vmem:[%s417 + $0x14] sm:$0xf] %vm408, 0
        %424 = vst.msk [vmem:[%s417 + $0x18] sm:$0xf] %vm408, 0
        %425 = vst.msk [vmem:[%s417 + $0x1c] sm:$0xf] %vm408, 0
        %s426 = scalar_lea.vmem [#allocation2], 32
        %427 = vst.msk [vmem:[%s426 + $0x8] sm:$0xf] %vm408, 0
        %428 = vst.msk [vmem:[%s426 + $0xc] sm:$0xf] %vm408, 0
        %429 = vst.msk [vmem:[%s426 + $0x18] sm:$0xf] %vm408, 0
        %430 = vst.msk [vmem:[%s426 + $0x1c] sm:$0xf] %vm408, 0
        %431 = vst.msk [vmem:[%s426 + $0x28] sm:$0xf] %vm408, 0
        %432 = vst.msk [vmem:[%s426 + $0x2c] sm:$0xf] %vm408, 0
        %433 = vst.msk [vmem:[%s426 + $0x38] sm:$0xf] %vm408, 0
        %434 = vst.msk [vmem:[%s426 + $0x3c] sm:$0xf] %vm408, 0
        %435 = vst.msk [vmem:[%s426 + $0x48] sm:$0xf] %vm408, 0
        %436 = vst.msk [vmem:[%s426 + $0x4c] sm:$0xf] %vm408, 0
        %437 = vst.msk [vmem:[%s426 + $0x58] sm:$0xf] %vm408, 0
        %438 = vst.msk [vmem:[%s426 + $0x5c] sm:$0xf] %vm408, 0
        %439 = vst.msk [vmem:[%s426 + $0x68] sm:$0xf] %vm408, 0
        %440 = vst.msk [vmem:[%s426 + $0x6c] sm:$0xf] %vm408, 0
        %441 = vst.msk [vmem:[%s426 + $0x78] sm:$0xf] %vm408, 0
        %442 = vst.msk [vmem:[%s426 + $0x7c] sm:$0xf] %vm408, 0
        %443 = vst.msk [vmem:[%s426 + $0x88] sm:$0xf] %vm408, 0
        %444 = vst.msk [vmem:[%s426 + $0x8c] sm:$0xf] %vm408, 0
        %445 = vst.msk [vmem:[%s426 + $0x98] sm:$0xf] %vm408, 0
        %446 = vst.msk [vmem:[%s426 + $0x9c] sm:$0xf] %vm408, 0
        %447 = vst.msk [vmem:[%s426 + $0xa8] sm:$0xf] %vm408, 0
        %448 = vst.msk [vmem:[%s426 + $0xac] sm:$0xf] %vm408, 0
        %449 = vst.msk [vmem:[%s426 + $0xb8] sm:$0xf] %vm408, 0
        %450 = vst.msk [vmem:[%s426 + $0xbc] sm:$0xf] %vm408, 0
        %451 = vst.msk [vmem:[%s426 + $0xc8] sm:$0xf] %vm408, 0
        %452 = vst.msk [vmem:[%s426 + $0xcc] sm:$0xf] %vm408, 0
        %453 = vst.msk [vmem:[%s426 + $0xd8] sm:$0xf] %vm408, 0
        %454 = vst.msk [vmem:[%s426 + $0xdc] sm:$0xf] %vm408, 0
        %455 = vst.msk [vmem:[%s426 + $0xe8] sm:$0xf] %vm408, 0
        %456 = vst.msk [vmem:[%s426 + $0xec] sm:$0xf] %vm408, 0
        %457 = vst.msk [vmem:[%s426 + $0xf8] sm:$0xf] %vm408, 0
        %458 = vst.msk [vmem:[%s426 + $0xfc] sm:$0xf] %vm408, 0
        %459 = vst.msk [vmem:[%s426] sm:$0xf] %vm408, %v376
        %460 = vst.msk [vmem:[%s426 + $0x4] sm:$0xf] %vm408, %v377
        %461 = vst.msk [vmem:[%s426 + $0x10] sm:$0xf] %vm408, %v378
        %462 = vst.msk [vmem:[%s426 + $0x14] sm:$0xf] %vm408, %v379
        %463 = vst.msk [vmem:[%s426 + $0x20] sm:$0xf] %vm408, %v380
        %464 = vst.msk [vmem:[%s426 + $0x24] sm:$0xf] %vm408, %v381
        %465 = vst.msk [vmem:[%s426 + $0x30] sm:$0xf] %vm408, %v382
        %466 = vst.msk [vmem:[%s426 + $0x34] sm:$0xf] %vm408, %v383
        %467 = vst.msk [vmem:[%s426 + $0x40] sm:$0xf] %vm408, %v384
        %468 = vst.msk [vmem:[%s426 + $0x44] sm:$0xf] %vm408, %v385
        %469 = vst.msk [vmem:[%s426 + $0x50] sm:$0xf] %vm408, %v386
        %470 = vst.msk [vmem:[%s426 + $0x54] sm:$0xf] %vm408, %v387
        %471 = vst.msk [vmem:[%s426 + $0x60] sm:$0xf] %vm408, %v388
        %472 = vst.msk [vmem:[%s426 + $0x64] sm:$0xf] %vm408, %v389
        %473 = vst.msk [vmem:[%s426 + $0x70] sm:$0xf] %vm408, %v390
        %474 = vst.msk [vmem:[%s426 + $0x74] sm:$0xf] %vm408, %v391
        %475 = vst.msk [vmem:[%s426 + $0x80] sm:$0xf] %vm408, %v392
        %476 = vst.msk [vmem:[%s426 + $0x84] sm:$0xf] %vm408, %v393
        %477 = vst.msk [vmem:[%s426 + $0x90] sm:$0xf] %vm408, %v394
        %478 = vst.msk [vmem:[%s426 + $0x94] sm:$0xf] %vm408, %v395
        %479 = vst.msk [vmem:[%s426 + $0xa0] sm:$0xf] %vm408, %v396
        %480 = vst.msk [vmem:[%s426 + $0xa4] sm:$0xf] %vm408, %v397
        %481 = vst.msk [vmem:[%s426 + $0xb0] sm:$0xf] %vm408, %v398
        %482 = vst.msk [vmem:[%s426 + $0xb4] sm:$0xf] %vm408, %v399
        %483 = vst.msk [vmem:[%s426 + $0xc0] sm:$0xf] %vm408, %v400
        %484 = vst.msk [vmem:[%s426 + $0xc4] sm:$0xf] %vm408, %v401
        %485 = vst.msk [vmem:[%s426 + $0xd0] sm:$0xf] %vm408, %v402
        %486 = vst.msk [vmem:[%s426 + $0xd4] sm:$0xf] %vm408, %v403
        %487 = vst.msk [vmem:[%s426 + $0xe0] sm:$0xf] %vm408, %v404
        %488 = vst.msk [vmem:[%s426 + $0xe4] sm:$0xf] %vm408, %v405
        %489 = vst.msk [vmem:[%s426 + $0xf0] sm:$0xf] %vm408, %v406
        %490 = vst.msk [vmem:[%s426 + $0xf4] sm:$0xf] %vm408, %v407
        %v491 = vld [vmem:[#allocation2 + $0xc] sm:$0xf]
        %v492 = vld [vmem:[#allocation2 + $0x10] sm:$0xf]
        %v493 = vld [vmem:[#allocation2 + $0x14] sm:$0xf]
        %v494 = vld [vmem:[#allocation2 + $0x18] sm:$0xf]
        %v495 = vld [vmem:[#allocation2 + $0x1c] sm:$0xf]
        %v496 = vld [vmem:[#allocation2 + $0x20] sm:$0xf]
        %v497 = vld [vmem:[#allocation2 + $0x24] sm:$0xf]
        %v498 = vld [vmem:[#allocation2 + $0x28] sm:$0xf]
        %v499 = vld [vmem:[#allocation2 + $0x2c] sm:$0xf]
        %v500 = vld [vmem:[#allocation2 + $0x30] sm:$0xf]
        %v501 = vld [vmem:[#allocation2 + $0x34] sm:$0xf]
        %v502 = vld [vmem:[#allocation2 + $0x38] sm:$0xf]
        %v503 = vld [vmem:[#allocation2 + $0x3c] sm:$0xf]
        %v504 = vld [vmem:[#allocation2 + $0x40] sm:$0xf]
        %v505 = vld [vmem:[#allocation2 + $0x44] sm:$0xf]
        %v506 = vld [vmem:[#allocation2 + $0x48] sm:$0xf]
        %v507 = vld [vmem:[#allocation2 + $0x4c] sm:$0xf]
        %v508 = vld [vmem:[#allocation2 + $0x50] sm:$0xf]
        %v509 = vld [vmem:[#allocation2 + $0x54] sm:$0xf]
        %v510 = vld [vmem:[#allocation2 + $0x58] sm:$0xf]
        %v511 = vld [vmem:[#allocation2 + $0x5c] sm:$0xf]
        %v512 = vld [vmem:[#allocation2 + $0x60] sm:$0xf]
        %v513 = vld [vmem:[#allocation2 + $0x64] sm:$0xf]
        %v514 = vld [vmem:[#allocation2 + $0x68] sm:$0xf]
        %v515 = vld [vmem:[#allocation2 + $0x6c] sm:$0xf]
        %v516 = vld [vmem:[#allocation2 + $0x70] sm:$0xf]
        %v517 = vld [vmem:[#allocation2 + $0x74] sm:$0xf]
        %v518 = vld [vmem:[#allocation2 + $0x78] sm:$0xf]
        %v519 = vld [vmem:[#allocation2 + $0x7c] sm:$0xf]
        %v520 = vld [vmem:[#allocation2 + $0x80] sm:$0xf]
        %v521 = vld [vmem:[#allocation2 + $0x84] sm:$0xf]
        %v522 = vld [vmem:[#allocation2 + $0x88] sm:$0xf]
        %v523 = vld [vmem:[#allocation2 + $0x8c] sm:$0xf]
        %v524 = vld [vmem:[#allocation2 + $0x90] sm:$0xf]
        %v525 = vld [vmem:[#allocation2 + $0x94] sm:$0xf]
        %v526 = vld [vmem:[#allocation2 + $0x98] sm:$0xf]
        %v527 = vld [vmem:[#allocation2 + $0x9c] sm:$0xf]
        %v528 = vld [vmem:[#allocation2 + $0xa0] sm:$0xf]
        %v529 = vld [vmem:[#allocation2 + $0xa4] sm:$0xf]
        %v530 = vld [vmem:[#allocation2 + $0xa8] sm:$0xf]
        %v531 = vld [vmem:[#allocation2 + $0xac] sm:$0xf]
        %v532 = vld [vmem:[#allocation2 + $0xb0] sm:$0xf]
        %v533 = vld [vmem:[#allocation2 + $0xb4] sm:$0xf]
        %v534 = vld [vmem:[#allocation2 + $0xb8] sm:$0xf]
        %v535 = vld [vmem:[#allocation2 + $0xbc] sm:$0xf]
        %v536 = vld [vmem:[#allocation2 + $0xc0] sm:$0xf]
        %v537 = vld [vmem:[#allocation2 + $0xc4] sm:$0xf]
        %v538 = vld [vmem:[#allocation2 + $0xc8] sm:$0xf]
        %v539 = vld [vmem:[#allocation2 + $0xcc] sm:$0xf]
        %v540 = vld [vmem:[#allocation2 + $0xd0] sm:$0xf]
        %v541 = vld [vmem:[#allocation2 + $0xd4] sm:$0xf]
        %v542 = vld [vmem:[#allocation2 + $0xd8] sm:$0xf]
        %v543 = vld [vmem:[#allocation2 + $0xdc] sm:$0xf]
        %v544 = vld [vmem:[#allocation2 + $0xe0] sm:$0xf]
        %v545 = vld [vmem:[#allocation2 + $0xe4] sm:$0xf]
        %v546 = vld [vmem:[#allocation2 + $0xe8] sm:$0xf]
        %v547 = vld [vmem:[#allocation2 + $0xec] sm:$0xf]
        %v548 = vld [vmem:[#allocation2 + $0xf0] sm:$0xf]
        %v549 = vld [vmem:[#allocation2 + $0xf4] sm:$0xf]
        %v550 = vld [vmem:[#allocation2 + $0xf8] sm:$0xf]
        %v551 = vld [vmem:[#allocation2 + $0xfc] sm:$0xf]
        %v552 = vld [vmem:[#allocation2 + $0x100] sm:$0xf]
        %v553 = vld [vmem:[#allocation2 + $0x104] sm:$0xf]
        %v554 = vld [vmem:[#allocation2 + $0x108] sm:$0xf]
        %v555 = vld [vmem:[#allocation2 + $0x10c] sm:$0xf]
        %v556 = vld [vmem:[#allocation2 + $0x110] sm:$0xf]
        %v557 = vld [vmem:[#allocation2 + $0x114] sm:$0xf]
        %v558 = vld [vmem:[#allocation2 + $0x118] sm:$0xf]
        %v559 = vld [vmem:[#allocation2 + $0x11c] sm:$0xf]
        %v560 = vld [vmem:[#allocation2 + $0x120] sm:$0xf]
        %v561 = vld [vmem:[#allocation2 + $0x124] sm:$0xf]
        %v562 = vld [vmem:[#allocation2 + $0x128] sm:$0xf]
        %v563 = vld [vmem:[#allocation2 + $0x12c] sm:$0xf]
        %v564 = vld [vmem:[#allocation2 + $0x130] sm:$0xf]
        %v565 = vld [vmem:[%s3] sm:$0xf]
        %v566 = vld [vmem:[%s3 + $0x4] sm:$0xf]
        %s567 = scalar_lea.vmem %s3, 8
        %v568 = vld [vmem:[%s567] sm:$0xf]
        %v569 = vld [vmem:[%s567 + $0x4] sm:$0xf]
        %v635 = vunpack.c.l.b16 %v495
        %v636 = vunpack.c.l.b16 %v496
        %v637 = vunpack.c.l.b16 %v497
        %v638 = vunpack.c.l.b16 %v498
        %v639 = vunpack.c.l.b16 %v499
        %v640 = vunpack.c.l.b16 %v500
        %v641 = vunpack.c.l.b16 %v501
        %v642 = vunpack.c.l.b16 %v502
        %v643 = vunpack.c.l.b16 %v503
        %v644 = vunpack.c.l.b16 %v504
        %v645 = vunpack.c.l.b16 %v505
        %v646 = vunpack.c.l.b16 %v506
        %v647 = vunpack.c.l.b16 %v507
        %v648 = vunpack.c.l.b16 %v508
        %v649 = vunpack.c.l.b16 %v509
        %v650 = vunpack.c.l.b16 %v510
        %v651 = vunpack.c.l.b16 %v511
        %v652 = vunpack.c.l.b16 %v512
        %v653 = vunpack.c.l.b16 %v513
        %v654 = vunpack.c.l.b16 %v514
        %v655 = vunpack.c.l.b16 %v515
        %v656 = vunpack.c.l.b16 %v516
        %v657 = vunpack.c.l.b16 %v517
        %v658 = vunpack.c.l.b16 %v518
        %v659 = vunpack.c.l.b16 %v519
        %v660 = vunpack.c.l.b16 %v520
        %v661 = vunpack.c.l.b16 %v521
        %v662 = vunpack.c.l.b16 %v522
        %v663 = vunpack.c.l.b16 %v523
        %v664 = vunpack.c.l.b16 %v524
        %v665 = vunpack.c.l.b16 %v525
        %v666 = vunpack.c.l.b16 %v526
        %v667 = vunpack.c.l.b16 %v527
        %v668 = vunpack.c.l.b16 %v528
        %v669 = vunpack.c.l.b16 %v529
        %v670 = vunpack.c.l.b16 %v530
        %v671 = vunpack.c.l.b16 %v531
        %v672 = vunpack.c.l.b16 %v532
        %v673 = vunpack.c.l.b16 %v533
        %v674 = vunpack.c.l.b16 %v534
        %v675 = vunpack.c.l.b16 %v535
        %v676 = vunpack.c.l.b16 %v536
        %v677 = vunpack.c.l.b16 %v537
        %v678 = vunpack.c.l.b16 %v538
        %v679 = vunpack.c.l.b16 %v539
        %v680 = vunpack.c.l.b16 %v540
        %v681 = vunpack.c.l.b16 %v541
        %v682 = vunpack.c.l.b16 %v542
        %v683 = vunpack.c.l.b16 %v543
        %v684 = vunpack.c.l.b16 %v544
        %v685 = vunpack.c.l.b16 %v545
        %v686 = vunpack.c.l.b16 %v546
        %v687 = vunpack.c.l.b16 %v547
        %v688 = vunpack.c.l.b16 %v548
        %v689 = vunpack.c.l.b16 %v549
        %v690 = vunpack.c.l.b16 %v550
        %v691 = vunpack.c.l.b16 %v551
        %v692 = vunpack.c.l.b16 %v552
        %v693 = vunpack.c.l.b16 %v553
        %v694 = vunpack.c.l.b16 %v554
        %v695 = vunpack.c.l.b16 %v555
        %v696 = vunpack.c.l.b16 %v556
        %v697 = vunpack.c.l.b16 %v557
        %v698 = vunpack.c.l.b16 %v558
        %v699 = vunpack.c.l.b16 %v559
        %v700 = vpack.c.b16 %v636, %v635
        %v701 = vpack.c.b16 %v638, %v637
        %v702 = vpack.c.b16 %v640, %v639
        %v703 = vpack.c.b16 %v642, %v641
        %v704 = vpack.c.b16 %v644, %v643
        %v705 = vpack.c.b16 %v646, %v645
        %v706 = vpack.c.b16 %v648, %v647
        %v707 = vpack.c.b16 %v650, %v649
        %v708 = vpack.c.b16 %v652, %v651
        %v709 = vpack.c.b16 %v654, %v653
        %v710 = vpack.c.b16 %v656, %v655
        %v711 = vpack.c.b16 %v658, %v657
        %v712 = vpack.c.b16 %v660, %v659
        %v713 = vpack.c.b16 %v662, %v661
        %v714 = vpack.c.b16 %v664, %v663
        %v715 = vpack.c.b16 %v666, %v665
        %v716 = vpack.c.b16 %v668, %v667
        %v717 = vpack.c.b16 %v670, %v669
        %v718 = vpack.c.b16 %v672, %v671
        %v719 = vpack.c.b16 %v674, %v673
        %v720 = vpack.c.b16 %v676, %v675
        %v721 = vpack.c.b16 %v678, %v677
        %v722 = vpack.c.b16 %v680, %v679
        %v723 = vpack.c.b16 %v682, %v681
        %v724 = vpack.c.b16 %v684, %v683
        %v725 = vpack.c.b16 %v686, %v685
        %v726 = vpack.c.b16 %v688, %v687
        %v727 = vpack.c.b16 %v690, %v689
        %v728 = vpack.c.b16 %v692, %v691
        %v729 = vpack.c.b16 %v694, %v693
        %v730 = vpack.c.b16 %v696, %v695
        %v731 = vpack.c.b16 %v698, %v697
        %v732 = vpack.c.b16 %v699, %v699
        %vm733 = vsmask.f32 4352
        %v735 = vshrl.u32 %v700, 16
        %v737 = vrot.slane %v735, 3
        %v738 = vshll.u32 %v700, 16
        %v740 = vrot.slane %v738, 4
        %v741 = vor.u32 %v737, %v740
        %v743 = vshrl.u32 %v701, 16
        %v745 = vrot.slane %v743, 3
        %v746 = vshll.u32 %v701, 16
        %v748 = vrot.slane %v746, 4
        %v749 = vor.u32 %v745, %v748
        %v750 = vsel %vm733, %v741, %v749
        %v752 = vshrl.u32 %v702, 16
        %v754 = vrot.slane %v752, 3
        %v755 = vshll.u32 %v702, 16
        %v757 = vrot.slane %v755, 4
        %v758 = vor.u32 %v754, %v757
        %v759 = vsel %vm733, %v749, %v758
        %v761 = vshrl.u32 %v703, 16
        %v763 = vrot.slane %v761, 3
        %v764 = vshll.u32 %v703, 16
        %v766 = vrot.slane %v764, 4
        %v767 = vor.u32 %v763, %v766
        %v768 = vsel %vm733, %v758, %v767
        %v770 = vshrl.u32 %v704, 16
        %v772 = vrot.slane %v770, 3
        %v773 = vshll.u32 %v704, 16
        %v775 = vrot.slane %v773, 4
        %v776 = vor.u32 %v772, %v775
        %v777 = vsel %vm733, %v767, %v776
        %v779 = vshrl.u32 %v705, 16
        %v781 = vrot.slane %v779, 3
        %v782 = vshll.u32 %v705, 16
        %v784 = vrot.slane %v782, 4
        %v785 = vor.u32 %v781, %v784
        %v786 = vsel %vm733, %v776, %v785
        %v788 = vshrl.u32 %v706, 16
        %v790 = vrot.slane %v788, 3
        %v791 = vshll.u32 %v706, 16
        %v793 = vrot.slane %v791, 4
        %v794 = vor.u32 %v790, %v793
        %v795 = vsel %vm733, %v785, %v794
        %v797 = vshrl.u32 %v707, 16
        %v799 = vrot.slane %v797, 3
        %v800 = vshll.u32 %v707, 16
        %v802 = vrot.slane %v800, 4
        %v803 = vor.u32 %v799, %v802
        %v804 = vsel %vm733, %v794, %v803
        %v806 = vshrl.u32 %v708, 16
        %v808 = vrot.slane %v806, 3
        %v809 = vshll.u32 %v708, 16
        %v811 = vrot.slane %v809, 4
        %v812 = vor.u32 %v808, %v811
        %v813 = vsel %vm733, %v803, %v812
        %v815 = vshrl.u32 %v709, 16
        %v817 = vrot.slane %v815, 3
        %v818 = vshll.u32 %v709, 16
        %v820 = vrot.slane %v818, 4
        %v821 = vor.u32 %v817, %v820
        %v822 = vsel %vm733, %v812, %v821
        %v824 = vshrl.u32 %v710, 16
        %v826 = vrot.slane %v824, 3
        %v827 = vshll.u32 %v710, 16
        %v829 = vrot.slane %v827, 4
        %v830 = vor.u32 %v826, %v829
        %v831 = vsel %vm733, %v821, %v830
        %v833 = vshrl.u32 %v711, 16
        %v835 = vrot.slane %v833, 3
        %v836 = vshll.u32 %v711, 16
        %v838 = vrot.slane %v836, 4
        %v839 = vor.u32 %v835, %v838
        %v840 = vsel %vm733, %v830, %v839
        %v842 = vshrl.u32 %v712, 16
        %v844 = vrot.slane %v842, 3
        %v845 = vshll.u32 %v712, 16
        %v847 = vrot.slane %v845, 4
        %v848 = vor.u32 %v844, %v847
        %v849 = vsel %vm733, %v839, %v848
        %v851 = vshrl.u32 %v713, 16
        %v853 = vrot.slane %v851, 3
        %v854 = vshll.u32 %v713, 16
        %v856 = vrot.slane %v854, 4
        %v857 = vor.u32 %v853, %v856
        %v858 = vsel %vm733, %v848, %v857
        %v860 = vshrl.u32 %v714, 16
        %v862 = vrot.slane %v860, 3
        %v863 = vshll.u32 %v714, 16
        %v865 = vrot.slane %v863, 4
        %v866 = vor.u32 %v862, %v865
        %v867 = vsel %vm733, %v857, %v866
        %v869 = vshrl.u32 %v715, 16
        %v871 = vrot.slane %v869, 3
        %v872 = vshll.u32 %v715, 16
        %v874 = vrot.slane %v872, 4
        %v875 = vor.u32 %v871, %v874
        %v876 = vsel %vm733, %v866, %v875
        %v878 = vshrl.u32 %v716, 16
        %v880 = vrot.slane %v878, 3
        %v881 = vshll.u32 %v716, 16
        %v883 = vrot.slane %v881, 4
        %v884 = vor.u32 %v880, %v883
        %v885 = vsel %vm733, %v875, %v884
        %v887 = vshrl.u32 %v717, 16
        %v889 = vrot.slane %v887, 3
        %v890 = vshll.u32 %v717, 16
        %v892 = vrot.slane %v890, 4
        %v893 = vor.u32 %v889, %v892
        %v894 = vsel %vm733, %v884, %v893
        %v896 = vshrl.u32 %v718, 16
        %v898 = vrot.slane %v896, 3
        %v899 = vshll.u32 %v718, 16
        %v901 = vrot.slane %v899, 4
        %v902 = vor.u32 %v898, %v901
        %v903 = vsel %vm733, %v893, %v902
        %v905 = vshrl.u32 %v719, 16
        %v907 = vrot.slane %v905, 3
        %v908 = vshll.u32 %v719, 16
        %v910 = vrot.slane %v908, 4
        %v911 = vor.u32 %v907, %v910
        %v912 = vsel %vm733, %v902, %v911
        %v914 = vshrl.u32 %v720, 16
        %v916 = vrot.slane %v914, 3
        %v917 = vshll.u32 %v720, 16
        %v919 = vrot.slane %v917, 4
        %v920 = vor.u32 %v916, %v919
        %v921 = vsel %vm733, %v911, %v920
        %v923 = vshrl.u32 %v721, 16
        %v925 = vrot.slane %v923, 3
        %v926 = vshll.u32 %v721, 16
        %v928 = vrot.slane %v926, 4
        %v929 = vor.u32 %v925, %v928
        %v930 = vsel %vm733, %v920, %v929
        %v932 = vshrl.u32 %v722, 16
        %v934 = vrot.slane %v932, 3
        %v935 = vshll.u32 %v722, 16
        %v937 = vrot.slane %v935, 4
        %v938 = vor.u32 %v934, %v937
        %v939 = vsel %vm733, %v929, %v938
        %v941 = vshrl.u32 %v723, 16
        %v943 = vrot.slane %v941, 3
        %v944 = vshll.u32 %v723, 16
        %v946 = vrot.slane %v944, 4
        %v947 = vor.u32 %v943, %v946
        %v948 = vsel %vm733, %v938, %v947
        %v950 = vshrl.u32 %v724, 16
        %v952 = vrot.slane %v950, 3
        %v953 = vshll.u32 %v724, 16
        %v955 = vrot.slane %v953, 4
        %v956 = vor.u32 %v952, %v955
        %v957 = vsel %vm733, %v947, %v956
        %v959 = vshrl.u32 %v725, 16
        %v961 = vrot.slane %v959, 3
        %v962 = vshll.u32 %v725, 16
        %v964 = vrot.slane %v962, 4
        %v965 = vor.u32 %v961, %v964
        %v966 = vsel %vm733, %v956, %v965
        %v968 = vshrl.u32 %v726, 16
        %v970 = vrot.slane %v968, 3
        %v971 = vshll.u32 %v726, 16
        %v973 = vrot.slane %v971, 4
        %v974 = vor.u32 %v970, %v973
        %v975 = vsel %vm733, %v965, %v974
        %v977 = vshrl.u32 %v727, 16
        %v979 = vrot.slane %v977, 3
        %v980 = vshll.u32 %v727, 16
        %v982 = vrot.slane %v980, 4
        %v983 = vor.u32 %v979, %v982
        %v984 = vsel %vm733, %v974, %v983
        %v986 = vshrl.u32 %v728, 16
        %v988 = vrot.slane %v986, 3
        %v989 = vshll.u32 %v728, 16
        %v991 = vrot.slane %v989, 4
        %v992 = vor.u32 %v988, %v991
        %v993 = vsel %vm733, %v983, %v992
        %v995 = vshrl.u32 %v729, 16
        %v997 = vrot.slane %v995, 3
        %v998 = vshll.u32 %v729, 16
        %v1000 = vrot.slane %v998, 4
        %v1001 = vor.u32 %v997, %v1000
        %v1002 = vsel %vm733, %v992, %v1001
        %v1004 = vshrl.u32 %v730, 16
        %v1006 = vrot.slane %v1004, 3
        %v1007 = vshll.u32 %v730, 16
        %v1009 = vrot.slane %v1007, 4
        %v1010 = vor.u32 %v1006, %v1009
        %v1011 = vsel %vm733, %v1001, %v1010
        %v1013 = vshrl.u32 %v731, 16
        %v1015 = vrot.slane %v1013, 3
        %v1016 = vshll.u32 %v731, 16
        %v1018 = vrot.slane %v1016, 4
        %v1019 = vor.u32 %v1015, %v1018
        %v1020 = vsel %vm733, %v1010, %v1019
        %v1022 = vshrl.u32 %v732, 16
        %v1024 = vrot.slane %v1022, 3
        %v1025 = vshll.u32 %v732, 16
        %v1027 = vrot.slane %v1025, 4
        %v1028 = vor.u32 %v1024, %v1027
        %v1029 = vsel %vm733, %v1019, %v1028
        %v1032 = vunpack.c.l.b16 %v568
        %v1033 = vunpack.c.l.b16 %v569
        %v1034 = vpack.c.b16 %v1033, %v1032
        %vm1036 = vcmask 130048
        %v1038 = vsel %vm1036, %v750, 0
        %v1041 = vsel %vm1036, %v759, 0
        %v1044 = vsel %vm1036, %v768, 0
        %v1047 = vsel %vm1036, %v777, 0
        %v1050 = vsel %vm1036, %v786, 0
        %v1053 = vsel %vm1036, %v795, 0
        %v1056 = vsel %vm1036, %v804, 0
        %v1059 = vsel %vm1036, %v813, 0
        %v1062 = vsel %vm1036, %v822, 0
        %v1065 = vsel %vm1036, %v831, 0
        %v1068 = vsel %vm1036, %v840, 0
        %v1071 = vsel %vm1036, %v849, 0
        %v1074 = vsel %vm1036, %v858, 0
        %v1077 = vsel %vm1036, %v867, 0
        %v1080 = vsel %vm1036, %v876, 0
        %v1083 = vsel %vm1036, %v885, 0
        %v1086 = vsel %vm1036, %v894, 0
        %v1089 = vsel %vm1036, %v903, 0
        %v1092 = vsel %vm1036, %v912, 0
        %v1095 = vsel %vm1036, %v921, 0
        %v1098 = vsel %vm1036, %v930, 0
        %v1101 = vsel %vm1036, %v939, 0
        %v1104 = vsel %vm1036, %v948, 0
        %v1107 = vsel %vm1036, %v957, 0
        %v1110 = vsel %vm1036, %v966, 0
        %v1113 = vsel %vm1036, %v975, 0
        %v1116 = vsel %vm1036, %v984, 0
        %v1119 = vsel %vm1036, %v993, 0
        %v1122 = vsel %vm1036, %v1002, 0
        %v1125 = vsel %vm1036, %v1011, 0
        %v1128 = vsel %vm1036, %v1020, 0
        %v1131 = vsel %vm1036, %v1029, 0
        %1133 = vmatpush.bf16.msra.mxu0 0
        %1134 = vmatpush.bf16.msra.mxu0 0
        %1135 = vmatpush.bf16.msra.mxu0 0
        %1136 = vmatpush.bf16.msra.mxu0 0
        %1137 = vmatpush.bf16.msra.mxu0 0
        %1138 = vmatpush.bf16.msra.mxu0 0
        %1139 = vmatpush.bf16.msra.mxu0 0
        %1140 = vmatpush.bf16.msra.mxu0 %v1034
        %1141 = vmatmul.bf16.gmra.mxu0 %v1038
        %v1142 = vpop.f32.mrf.mxu0
        %v1143 = vadd.f32 0.0, %v1142
        %v1144 = vpop.f32.mrf.mxu0
        %v1145 = vadd.f32 0.0, %v1144
        %1146 = vmatmul.bf16.gmra.mxu0 %v1041
        %v1147 = vpop.f32.mrf.mxu0
        %v1148 = vpop.f32.mrf.mxu0
        %1149 = vmatmul.bf16.gmra.mxu0 %v1044
        %v1150 = vpop.f32.mrf.mxu0
        %v1151 = vadd.f32 0.0, %v1150
        %v1152 = vpop.f32.mrf.mxu0
        %v1153 = vadd.f32 0.0, %v1152
        %1154 = vmatmul.bf16.gmra.mxu0 %v1047
        %v1155 = vpop.f32.mrf.mxu0
        %v1156 = vpop.f32.mrf.mxu0
        %1157 = vmatmul.bf16.gmra.mxu0 %v1050
        %v1158 = vpop.f32.mrf.mxu0
        %v1159 = vadd.f32 0.0, %v1158
        %v1160 = vpop.f32.mrf.mxu0
        %v1161 = vadd.f32 0.0, %v1160
        %1162 = vmatmul.bf16.gmra.mxu0 %v1053
        %v1163 = vpop.f32.mrf.mxu0
        %v1164 = vpop.f32.mrf.mxu0
        %1165 = vmatmul.bf16.gmra.mxu0 %v1056
        %v1166 = vpop.f32.mrf.mxu0
        %v1167 = vadd.f32 0.0, %v1166
        %v1168 = vpop.f32.mrf.mxu0
        %v1169 = vadd.f32 0.0, %v1168
        %1170 = vmatmul.bf16.gmra.mxu0 %v1059
        %v1171 = vpop.f32.mrf.mxu0
        %v1172 = vpop.f32.mrf.mxu0
        %1173 = vmatmul.bf16.gmra.mxu0 %v1062
        %v1174 = vpop.f32.mrf.mxu0
        %v1175 = vadd.f32 0.0, %v1174
        %v1176 = vpop.f32.mrf.mxu0
        %v1177 = vadd.f32 0.0, %v1176
        %1178 = vmatmul.bf16.gmra.mxu0 %v1065
        %v1179 = vpop.f32.mrf.mxu0
        %v1180 = vpop.f32.mrf.mxu0
        %1181 = vmatmul.bf16.gmra.mxu0 %v1068
        %v1182 = vpop.f32.mrf.mxu0
        %v1183 = vadd.f32 0.0, %v1182
        %v1184 = vpop.f32.mrf.mxu0
        %v1185 = vadd.f32 0.0, %v1184
        %1186 = vmatmul.bf16.gmra.mxu0 %v1071
        %v1187 = vpop.f32.mrf.mxu0
        %v1188 = vpop.f32.mrf.mxu0
        %1189 = vmatmul.bf16.gmra.mxu0 %v1074
        %v1190 = vpop.f32.mrf.mxu0
        %v1191 = vadd.f32 0.0, %v1190
        %v1192 = vpop.f32.mrf.mxu0
        %v1193 = vadd.f32 0.0, %v1192
        %1194 = vmatmul.bf16.gmra.mxu0 %v1077
        %v1195 = vpop.f32.mrf.mxu0
        %v1196 = vpop.f32.mrf.mxu0
        %1197 = vmatmul.bf16.gmra.mxu0 %v1080
        %v1198 = vpop.f32.mrf.mxu0
        %v1199 = vadd.f32 0.0, %v1198
        %v1200 = vpop.f32.mrf.mxu0
        %v1201 = vadd.f32 0.0, %v1200
        %1202 = vmatmul.bf16.gmra.mxu0 %v1083
        %v1203 = vpop.f32.mrf.mxu0
        %v1204 = vpop.f32.mrf.mxu0
        %1205 = vmatmul.bf16.gmra.mxu0 %v1086
        %v1206 = vpop.f32.mrf.mxu0
        %v1207 = vadd.f32 0.0, %v1206
        %v1208 = vpop.f32.mrf.mxu0
        %v1209 = vadd.f32 0.0, %v1208
        %1210 = vmatmul.bf16.gmra.mxu0 %v1089
        %v1211 = vpop.f32.mrf.mxu0
        %v1212 = vpop.f32.mrf.mxu0
        %1213 = vmatmul.bf16.gmra.mxu0 %v1092
        %v1214 = vpop.f32.mrf.mxu0
        %v1215 = vadd.f32 0.0, %v1214
        %v1216 = vpop.f32.mrf.mxu0
        %v1217 = vadd.f32 0.0, %v1216
        %1218 = vmatmul.bf16.gmra.mxu0 %v1095
        %v1219 = vpop.f32.mrf.mxu0
        %v1220 = vpop.f32.mrf.mxu0
        %1221 = vmatmul.bf16.gmra.mxu0 %v1098
        %v1222 = vpop.f32.mrf.mxu0
        %v1223 = vadd.f32 0.0, %v1222
        %v1224 = vpop.f32.mrf.mxu0
        %v1225 = vadd.f32 0.0, %v1224
        %1226 = vmatmul.bf16.gmra.mxu0 %v1101
        %v1227 = vpop.f32.mrf.mxu0
        %v1228 = vpop.f32.mrf.mxu0
        %1229 = vmatmul.bf16.gmra.mxu0 %v1104
        %v1230 = vpop.f32.mrf.mxu0
        %v1231 = vadd.f32 0.0, %v1230
        %v1232 = vpop.f32.mrf.mxu0
        %v1233 = vadd.f32 0.0, %v1232
        %1234 = vmatmul.bf16.gmra.mxu0 %v1107
        %v1235 = vpop.f32.mrf.mxu0
        %v1236 = vpop.f32.mrf.mxu0
        %1237 = vmatmul.bf16.gmra.mxu0 %v1110
        %v1238 = vpop.f32.mrf.mxu0
        %v1239 = vadd.f32 0.0, %v1238
        %v1240 = vpop.f32.mrf.mxu0
        %v1241 = vadd.f32 0.0, %v1240
        %1242 = vmatmul.bf16.gmra.mxu0 %v1113
        %v1243 = vpop.f32.mrf.mxu0
        %v1244 = vpop.f32.mrf.mxu0
        %1245 = vmatmul.bf16.gmra.mxu0 %v1116
        %v1246 = vpop.f32.mrf.mxu0
        %v1247 = vadd.f32 0.0, %v1246
        %v1248 = vpop.f32.mrf.mxu0
        %v1249 = vadd.f32 0.0, %v1248
        %1250 = vmatmul.bf16.gmra.mxu0 %v1119
        %v1251 = vpop.f32.mrf.mxu0
        %v1252 = vpop.f32.mrf.mxu0
        %1253 = vmatmul.bf16.gmra.mxu0 %v1122
        %v1254 = vpop.f32.mrf.mxu0
        %v1255 = vadd.f32 0.0, %v1254
        %v1256 = vpop.f32.mrf.mxu0
        %v1257 = vadd.f32 0.0, %v1256
        %1258 = vmatmul.bf16.gmra.mxu0 %v1125
        %v1259 = vpop.f32.mrf.mxu0
        %v1260 = vpop.f32.mrf.mxu0
        %1261 = vmatmul.bf16.gmra.mxu0 %v1128
        %v1262 = vpop.f32.mrf.mxu0
        %v1263 = vadd.f32 0.0, %v1262
        %v1264 = vpop.f32.mrf.mxu0
        %v1265 = vadd.f32 0.0, %v1264
        %1266 = vmatmul.bf16.gmra.mxu0 %v1131
        %v1267 = vpop.f32.mrf.mxu0
        %v1268 = vpop.f32.mrf.mxu0
        %1269 = vdwg.mxu0
        %v1274 = vunpack.c.l.b16 %v491
        %v1275 = vunpack.c.l.b16 %v492
        %v1276 = vunpack.c.l.b16 %v493
        %v1277 = vunpack.c.l.b16 %v494
        %v1278 = vpack.c.b16 %v1275, %v1274
        %v1279 = vpack.c.b16 %v1277, %v1276
        %v1280 = vpack.c.b16 %v695, %v695
        %v1282 = vshrl.u32 %v1278, 16
        %v1284 = vrot.slane %v1282, 3
        %v1285 = vshll.u32 %v1278, 16
        %v1287 = vrot.slane %v1285, 4
        %v1288 = vor.u32 %v1284, %v1287
        %v1290 = vshrl.u32 %v1279, 16
        %v1292 = vrot.slane %v1290, 3
        %v1293 = vshll.u32 %v1279, 16
        %v1295 = vrot.slane %v1293, 4
        %v1296 = vor.u32 %v1292, %v1295
        %v1297 = vsel %vm733, %v1288, %v1296
        %v1298 = vsel %vm733, %v1296, %v741
        %v1300 = vshrl.u32 %v1280, 16
        %v1302 = vrot.slane %v1300, 3
        %v1303 = vshll.u32 %v1280, 16
        %v1305 = vrot.slane %v1303, 4
        %v1306 = vor.u32 %v1302, %v1305
        %v1307 = vsel %vm733, %v1001, %v1306
        %v1310 = vunpack.c.l.b16 %v565
        %v1311 = vunpack.c.l.b16 %v566
        %v1312 = vpack.c.b16 %v1311, %v1310
        %v1315 = vsel %vm1036, %v1297, 0
        %v1318 = vsel %vm1036, %v1298, 0
        %v1321 = vsel %vm1036, %v1307, 0
        %1323 = vmatpush.bf16.msra.mxu0 0
        %1324 = vmatpush.bf16.msra.mxu0 0
        %1325 = vmatpush.bf16.msra.mxu0 0
        %1326 = vmatpush.bf16.msra.mxu0 0
        %1327 = vmatpush.bf16.msra.mxu0 0
        %1328 = vmatpush.bf16.msra.mxu0 0
        %1329 = vmatpush.bf16.msra.mxu0 0
        %1330 = vmatpush.bf16.msra.mxu0 %v1312
        %1331 = vmatmul.bf16.gmra.mxu0 %v1315
        %v1332 = vpop.f32.mrf.mxu0
        %v1333 = vadd.f32 %v1143, %v1332
        %v1334 = vpop.f32.mrf.mxu0
        %v1335 = vadd.f32 %v1145, %v1334
        %1336 = vmatmul.bf16.gmra.mxu0 %v1318
        %v1337 = vpop.f32.mrf.mxu0
        %v1338 = vpop.f32.mrf.mxu0
        %1339 = vmatmul.bf16.gmra.mxu0 %v1038
        %v1340 = vpop.f32.mrf.mxu0
        %v1341 = vadd.f32 %v1151, %v1340
        %v1342 = vpop.f32.mrf.mxu0
        %v1343 = vadd.f32 %v1153, %v1342
        %1344 = vmatmul.bf16.gmra.mxu0 %v1041
        %v1345 = vpop.f32.mrf.mxu0
        %v1346 = vpop.f32.mrf.mxu0
        %1347 = vmatmul.bf16.gmra.mxu0 %v1044
        %v1348 = vpop.f32.mrf.mxu0
        %v1349 = vadd.f32 %v1159, %v1348
        %v1350 = vpop.f32.mrf.mxu0
        %v1351 = vadd.f32 %v1161, %v1350
        %1352 = vmatmul.bf16.gmra.mxu0 %v1047
        %v1353 = vpop.f32.mrf.mxu0
        %v1354 = vpop.f32.mrf.mxu0
        %1355 = vmatmul.bf16.gmra.mxu0 %v1050
        %v1356 = vpop.f32.mrf.mxu0
        %v1357 = vadd.f32 %v1167, %v1356
        %v1358 = vpop.f32.mrf.mxu0
        %v1359 = vadd.f32 %v1169, %v1358
        %1360 = vmatmul.bf16.gmra.mxu0 %v1053
        %v1361 = vpop.f32.mrf.mxu0
        %v1362 = vpop.f32.mrf.mxu0
        %1363 = vmatmul.bf16.gmra.mxu0 %v1056
        %v1364 = vpop.f32.mrf.mxu0
        %v1365 = vadd.f32 %v1175, %v1364
        %v1366 = vpop.f32.mrf.mxu0
        %v1367 = vadd.f32 %v1177, %v1366
        %1368 = vmatmul.bf16.gmra.mxu0 %v1059
        %v1369 = vpop.f32.mrf.mxu0
        %v1370 = vpop.f32.mrf.mxu0
        %1371 = vmatmul.bf16.gmra.mxu0 %v1062
        %v1372 = vpop.f32.mrf.mxu0
        %v1373 = vadd.f32 %v1183, %v1372
        %v1374 = vpop.f32.mrf.mxu0
        %v1375 = vadd.f32 %v1185, %v1374
        %1376 = vmatmul.bf16.gmra.mxu0 %v1065
        %v1377 = vpop.f32.mrf.mxu0
        %v1378 = vpop.f32.mrf.mxu0
        %1379 = vmatmul.bf16.gmra.mxu0 %v1068
        %v1380 = vpop.f32.mrf.mxu0
        %v1381 = vadd.f32 %v1191, %v1380
        %v1382 = vpop.f32.mrf.mxu0
        %v1383 = vadd.f32 %v1193, %v1382
        %1384 = vmatmul.bf16.gmra.mxu0 %v1071
        %v1385 = vpop.f32.mrf.mxu0
        %v1386 = vpop.f32.mrf.mxu0
        %1387 = vmatmul.bf16.gmra.mxu0 %v1074
        %v1388 = vpop.f32.mrf.mxu0
        %v1389 = vadd.f32 %v1199, %v1388
        %v1390 = vpop.f32.mrf.mxu0
        %v1391 = vadd.f32 %v1201, %v1390
        %1392 = vmatmul.bf16.gmra.mxu0 %v1077
        %v1393 = vpop.f32.mrf.mxu0
        %v1394 = vpop.f32.mrf.mxu0
        %1395 = vmatmul.bf16.gmra.mxu0 %v1080
        %v1396 = vpop.f32.mrf.mxu0
        %v1397 = vadd.f32 %v1207, %v1396
        %v1398 = vpop.f32.mrf.mxu0
        %v1399 = vadd.f32 %v1209, %v1398
        %1400 = vmatmul.bf16.gmra.mxu0 %v1083
        %v1401 = vpop.f32.mrf.mxu0
        %v1402 = vpop.f32.mrf.mxu0
        %1403 = vmatmul.bf16.gmra.mxu0 %v1086
        %v1404 = vpop.f32.mrf.mxu0
        %v1405 = vadd.f32 %v1215, %v1404
        %v1406 = vpop.f32.mrf.mxu0
        %v1407 = vadd.f32 %v1217, %v1406
        %1408 = vmatmul.bf16.gmra.mxu0 %v1089
        %v1409 = vpop.f32.mrf.mxu0
        %v1410 = vpop.f32.mrf.mxu0
        %1411 = vmatmul.bf16.gmra.mxu0 %v1092
        %v1412 = vpop.f32.mrf.mxu0
        %v1413 = vadd.f32 %v1223, %v1412
        %v1414 = vpop.f32.mrf.mxu0
        %v1415 = vadd.f32 %v1225, %v1414
        %1416 = vmatmul.bf16.gmra.mxu0 %v1095
        %v1417 = vpop.f32.mrf.mxu0
        %v1418 = vpop.f32.mrf.mxu0
        %1419 = vmatmul.bf16.gmra.mxu0 %v1098
        %v1420 = vpop.f32.mrf.mxu0
        %v1421 = vadd.f32 %v1231, %v1420
        %v1422 = vpop.f32.mrf.mxu0
        %v1423 = vadd.f32 %v1233, %v1422
        %1424 = vmatmul.bf16.gmra.mxu0 %v1101
        %v1425 = vpop.f32.mrf.mxu0
        %v1426 = vpop.f32.mrf.mxu0
        %1427 = vmatmul.bf16.gmra.mxu0 %v1104
        %v1428 = vpop.f32.mrf.mxu0
        %v1429 = vadd.f32 %v1239, %v1428
        %v1430 = vpop.f32.mrf.mxu0
        %v1431 = vadd.f32 %v1241, %v1430
        %1432 = vmatmul.bf16.gmra.mxu0 %v1107
        %v1433 = vpop.f32.mrf.mxu0
        %v1434 = vpop.f32.mrf.mxu0
        %1435 = vmatmul.bf16.gmra.mxu0 %v1110
        %v1436 = vpop.f32.mrf.mxu0
        %v1437 = vadd.f32 %v1247, %v1436
        %v1438 = vpop.f32.mrf.mxu0
        %v1439 = vadd.f32 %v1249, %v1438
        %1440 = vmatmul.bf16.gmra.mxu0 %v1113
        %v1441 = vpop.f32.mrf.mxu0
        %v1442 = vpop.f32.mrf.mxu0
        %1443 = vmatmul.bf16.gmra.mxu0 %v1116
        %v1444 = vpop.f32.mrf.mxu0
        %v1445 = vadd.f32 %v1255, %v1444
        %v1446 = vpop.f32.mrf.mxu0
        %v1447 = vadd.f32 %v1257, %v1446
        %1448 = vmatmul.bf16.gmra.mxu0 %v1119
        %v1449 = vpop.f32.mrf.mxu0
        %v1450 = vpop.f32.mrf.mxu0
        %1451 = vmatmul.bf16.gmra.mxu0 %v1122
        %v1452 = vpop.f32.mrf.mxu0
        %v1453 = vadd.f32 %v1263, %v1452
        %v1454 = vpop.f32.mrf.mxu0
        %v1455 = vadd.f32 %v1265, %v1454
        %1456 = vmatmul.bf16.gmra.mxu0 %v1321
        %v1457 = vpop.f32.mrf.mxu0
        %v1458 = vpop.f32.mrf.mxu0
        %1459 = vdwg.mxu0
        %s1460 = scalar_lea.vmem %s3, 16
        %v1461 = vld [vmem:[%s1460] sm:$0xf]
        %v1462 = vld [vmem:[%s1460 + $0x4] sm:$0xf]
        %v1467 = vunpack.c.l.b16 %v560
        %v1468 = vunpack.c.l.b16 %v561
        %v1469 = vunpack.c.l.b16 %v562
        %v1470 = vunpack.c.l.b16 %v563
        %v1471 = vpack.c.b16 %v1467, %v699
        %v1472 = vpack.c.b16 %v1469, %v1468
        %v1473 = vpack.c.b16 %v1470, %v1470
        %v1475 = vshrl.u32 %v1471, 16
        %v1477 = vrot.slane %v1475, 3
        %v1478 = vshll.u32 %v1471, 16
        %v1480 = vrot.slane %v1478, 4
        %v1481 = vor.u32 %v1477, %v1480
        %v1482 = vsel %vm733, %v1019, %v1481
        %v1484 = vshrl.u32 %v1472, 16
        %v1486 = vrot.slane %v1484, 3
        %v1487 = vshll.u32 %v1472, 16
        %v1489 = vrot.slane %v1487, 4
        %v1490 = vor.u32 %v1486, %v1489
        %v1491 = vsel %vm733, %v1481, %v1490
        %v1493 = vshrl.u32 %v1473, 16
        %v1495 = vrot.slane %v1493, 3
        %v1496 = vshll.u32 %v1473, 16
        %v1498 = vrot.slane %v1496, 4
        %v1499 = vor.u32 %v1495, %v1498
        %v1500 = vsel %vm733, %v1490, %v1499
        %v1503 = vunpack.c.l.b16 %v1461
        %v1504 = vunpack.c.l.b16 %v1462
        %v1505 = vpack.c.b16 %v1504, %v1503
        %v1508 = vsel %vm1036, %v1482, 0
        %v1511 = vsel %vm1036, %v1491, 0
        %v1514 = vsel %vm1036, %v1500, 0
        %1516 = vmatpush.bf16.msra.mxu0 0
        %1517 = vmatpush.bf16.msra.mxu0 0
        %1518 = vmatpush.bf16.msra.mxu0 0
        %1519 = vmatpush.bf16.msra.mxu0 0
        %1520 = vmatpush.bf16.msra.mxu0 0
        %1521 = vmatpush.bf16.msra.mxu0 0
        %1522 = vmatpush.bf16.msra.mxu0 0
        %1523 = vmatpush.bf16.msra.mxu0 %v1505
        %1524 = vmatmul.bf16.gmra.mxu0 %v1044
        %v1525 = vpop.f32.mrf.mxu0
        %v1526 = vadd.f32 0.0, %v1525
        %v1527 = vpop.f32.mrf.mxu0
        %v1528 = vadd.f32 0.0, %v1527
        %1529 = vmatmul.bf16.gmra.mxu0 %v1047
        %v1530 = vpop.f32.mrf.mxu0
        %v1531 = vpop.f32.mrf.mxu0
        %1532 = vmatmul.bf16.gmra.mxu0 %v1050
        %v1533 = vpop.f32.mrf.mxu0
        %v1534 = vadd.f32 0.0, %v1533
        %v1535 = vpop.f32.mrf.mxu0
        %v1536 = vadd.f32 0.0, %v1535
        %1537 = vmatmul.bf16.gmra.mxu0 %v1053
        %v1538 = vpop.f32.mrf.mxu0
        %v1539 = vpop.f32.mrf.mxu0
        %1540 = vmatmul.bf16.gmra.mxu0 %v1056
        %v1541 = vpop.f32.mrf.mxu0
        %v1542 = vadd.f32 0.0, %v1541
        %v1543 = vpop.f32.mrf.mxu0
        %v1544 = vadd.f32 0.0, %v1543
        %1545 = vmatmul.bf16.gmra.mxu0 %v1059
        %v1546 = vpop.f32.mrf.mxu0
        %v1547 = vpop.f32.mrf.mxu0
        %1548 = vmatmul.bf16.gmra.mxu0 %v1062
        %v1549 = vpop.f32.mrf.mxu0
        %v1550 = vadd.f32 0.0, %v1549
        %v1551 = vpop.f32.mrf.mxu0
        %v1552 = vadd.f32 0.0, %v1551
        %1553 = vmatmul.bf16.gmra.mxu0 %v1065
        %v1554 = vpop.f32.mrf.mxu0
        %v1555 = vpop.f32.mrf.mxu0
        %1556 = vmatmul.bf16.gmra.mxu0 %v1068
        %v1557 = vpop.f32.mrf.mxu0
        %v1558 = vadd.f32 0.0, %v1557
        %v1559 = vpop.f32.mrf.mxu0
        %v1560 = vadd.f32 0.0, %v1559
        %1561 = vmatmul.bf16.gmra.mxu0 %v1071
        %v1562 = vpop.f32.mrf.mxu0
        %v1563 = vpop.f32.mrf.mxu0
        %1564 = vmatmul.bf16.gmra.mxu0 %v1074
        %v1565 = vpop.f32.mrf.mxu0
        %v1566 = vadd.f32 0.0, %v1565
        %v1567 = vpop.f32.mrf.mxu0
        %v1568 = vadd.f32 0.0, %v1567
        %1569 = vmatmul.bf16.gmra.mxu0 %v1077
        %v1570 = vpop.f32.mrf.mxu0
        %v1571 = vpop.f32.mrf.mxu0
        %1572 = vmatmul.bf16.gmra.mxu0 %v1080
        %v1573 = vpop.f32.mrf.mxu0
        %v1574 = vadd.f32 0.0, %v1573
        %v1575 = vpop.f32.mrf.mxu0
        %v1576 = vadd.f32 0.0, %v1575
        %1577 = vmatmul.bf16.gmra.mxu0 %v1083
        %v1578 = vpop.f32.mrf.mxu0
        %v1579 = vpop.f32.mrf.mxu0
        %1580 = vmatmul.bf16.gmra.mxu0 %v1086
        %v1581 = vpop.f32.mrf.mxu0
        %v1582 = vadd.f32 0.0, %v1581
        %v1583 = vpop.f32.mrf.mxu0
        %v1584 = vadd.f32 0.0, %v1583
        %1585 = vmatmul.bf16.gmra.mxu0 %v1089
        %v1586 = vpop.f32.mrf.mxu0
        %v1587 = vpop.f32.mrf.mxu0
        %1588 = vmatmul.bf16.gmra.mxu0 %v1092
        %v1589 = vpop.f32.mrf.mxu0
        %v1590 = vadd.f32 0.0, %v1589
        %v1591 = vpop.f32.mrf.mxu0
        %v1592 = vadd.f32 0.0, %v1591
        %1593 = vmatmul.bf16.gmra.mxu0 %v1095
        %v1594 = vpop.f32.mrf.mxu0
        %v1595 = vpop.f32.mrf.mxu0
        %1596 = vmatmul.bf16.gmra.mxu0 %v1098
        %v1597 = vpop.f32.mrf.mxu0
        %v1598 = vadd.f32 0.0, %v1597
        %v1599 = vpop.f32.mrf.mxu0
        %v1600 = vadd.f32 0.0, %v1599
        %1601 = vmatmul.bf16.gmra.mxu0 %v1101
        %v1602 = vpop.f32.mrf.mxu0
        %v1603 = vpop.f32.mrf.mxu0
        %1604 = vmatmul.bf16.gmra.mxu0 %v1104
        %v1605 = vpop.f32.mrf.mxu0
        %v1606 = vadd.f32 0.0, %v1605
        %v1607 = vpop.f32.mrf.mxu0
        %v1608 = vadd.f32 0.0, %v1607
        %1609 = vmatmul.bf16.gmra.mxu0 %v1107
        %v1610 = vpop.f32.mrf.mxu0
        %v1611 = vpop.f32.mrf.mxu0
        %1612 = vmatmul.bf16.gmra.mxu0 %v1110
        %v1613 = vpop.f32.mrf.mxu0
        %v1614 = vadd.f32 0.0, %v1613
        %v1615 = vpop.f32.mrf.mxu0
        %v1616 = vadd.f32 0.0, %v1615
        %1617 = vmatmul.bf16.gmra.mxu0 %v1113
        %v1618 = vpop.f32.mrf.mxu0
        %v1619 = vpop.f32.mrf.mxu0
        %1620 = vmatmul.bf16.gmra.mxu0 %v1116
        %v1621 = vpop.f32.mrf.mxu0
        %v1622 = vadd.f32 0.0, %v1621
        %v1623 = vpop.f32.mrf.mxu0
        %v1624 = vadd.f32 0.0, %v1623
        %1625 = vmatmul.bf16.gmra.mxu0 %v1119
        %v1626 = vpop.f32.mrf.mxu0
        %v1627 = vpop.f32.mrf.mxu0
        %1628 = vmatmul.bf16.gmra.mxu0 %v1122
        %v1629 = vpop.f32.mrf.mxu0
        %v1630 = vadd.f32 0.0, %v1629
        %v1631 = vpop.f32.mrf.mxu0
        %v1632 = vadd.f32 0.0, %v1631
        %1633 = vmatmul.bf16.gmra.mxu0 %v1125
        %v1634 = vpop.f32.mrf.mxu0
        %v1635 = vpop.f32.mrf.mxu0
        %1636 = vmatmul.bf16.gmra.mxu0 %v1128
        %v1637 = vpop.f32.mrf.mxu0
        %v1638 = vadd.f32 0.0, %v1637
        %v1639 = vpop.f32.mrf.mxu0
        %v1640 = vadd.f32 0.0, %v1639
        %1641 = vmatmul.bf16.gmra.mxu0 %v1508
        %v1642 = vpop.f32.mrf.mxu0
        %v1643 = vpop.f32.mrf.mxu0
        %1644 = vmatmul.bf16.gmra.mxu0 %v1511
        %v1645 = vpop.f32.mrf.mxu0
        %v1646 = vadd.f32 0.0, %v1645
        %v1647 = vpop.f32.mrf.mxu0
        %v1648 = vadd.f32 0.0, %v1647
        %1649 = vmatmul.bf16.gmra.mxu0 %v1514
        %v1650 = vpop.f32.mrf.mxu0
        %v1651 = vpop.f32.mrf.mxu0
        %1652 = vdwg.mxu0
        %v1653 = vadd.f32 %v1333, %v1526
        %v1654 = vadd.f32 %v1335, %v1528
        %v1655 = vadd.f32 %v1341, %v1534
        %v1656 = vadd.f32 %v1343, %v1536
        %v1657 = vadd.f32 %v1349, %v1542
        %v1658 = vadd.f32 %v1351, %v1544
        %v1659 = vadd.f32 %v1357, %v1550
        %v1660 = vadd.f32 %v1359, %v1552
        %v1661 = vadd.f32 %v1365, %v1558
        %v1662 = vadd.f32 %v1367, %v1560
        %v1663 = vadd.f32 %v1373, %v1566
        %v1664 = vadd.f32 %v1375, %v1568
        %v1665 = vadd.f32 %v1381, %v1574
        %v1666 = vadd.f32 %v1383, %v1576
        %v1667 = vadd.f32 %v1389, %v1582
        %v1668 = vadd.f32 %v1391, %v1584
        %v1669 = vadd.f32 %v1397, %v1590
        %v1670 = vadd.f32 %v1399, %v1592
        %v1671 = vadd.f32 %v1405, %v1598
        %v1672 = vadd.f32 %v1407, %v1600
        %v1673 = vadd.f32 %v1413, %v1606
        %v1674 = vadd.f32 %v1415, %v1608
        %v1675 = vadd.f32 %v1421, %v1614
        %v1676 = vadd.f32 %v1423, %v1616
        %v1677 = vadd.f32 %v1429, %v1622
        %v1678 = vadd.f32 %v1431, %v1624
        %v1679 = vadd.f32 %v1437, %v1630
        %v1680 = vadd.f32 %v1439, %v1632
        %v1681 = vadd.f32 %v1445, %v1638
        %v1682 = vadd.f32 %v1447, %v1640
        %v1683 = vadd.f32 %v1453, %v1646
        %v1684 = vadd.f32 %v1455, %v1648
        %s1685 = scalar_lea.vmem %s3, 24
        %v1686 = vld [vmem:[%s1685] sm:$0xf]
        %v1687 = vld [vmem:[%s1685 + $0x4] sm:$0xf]
        %v1688 = vpack.c.b16 %v1276, %v1275
        %v1689 = vpack.c.b16 %v635, %v1277
        %v1690 = vpack.c.b16 %v637, %v636
        %v1691 = vpack.c.b16 %v639, %v638
        %v1692 = vpack.c.b16 %v641, %v640
        %v1693 = vpack.c.b16 %v643, %v642
        %v1694 = vpack.c.b16 %v645, %v644
        %v1695 = vpack.c.b16 %v647, %v646
        %v1696 = vpack.c.b16 %v649, %v648
        %v1697 = vpack.c.b16 %v651, %v650
        %v1698 = vpack.c.b16 %v653, %v652
        %v1699 = vpack.c.b16 %v655, %v654
        %v1700 = vpack.c.b16 %v657, %v656
        %v1701 = vpack.c.b16 %v659, %v658
        %v1702 = vpack.c.b16 %v661, %v660
        %v1703 = vpack.c.b16 %v663, %v662
        %v1704 = vpack.c.b16 %v665, %v664
        %v1705 = vpack.c.b16 %v667, %v666
        %v1706 = vpack.c.b16 %v669, %v668
        %v1707 = vpack.c.b16 %v671, %v670
        %v1708 = vpack.c.b16 %v673, %v672
        %v1709 = vpack.c.b16 %v675, %v674
        %v1710 = vpack.c.b16 %v677, %v676
        %v1711 = vpack.c.b16 %v679, %v678
        %v1712 = vpack.c.b16 %v681, %v680
        %v1713 = vpack.c.b16 %v683, %v682
        %v1714 = vpack.c.b16 %v685, %v684
        %v1715 = vpack.c.b16 %v687, %v686
        %v1716 = vpack.c.b16 %v689, %v688
        %v1717 = vpack.c.b16 %v691, %v690
        %v1718 = vpack.c.b16 %v693, %v692
        %v1719 = vpack.c.b16 %v695, %v694
        %v1722 = vunpack.c.l.b16 %v1686
        %v1723 = vunpack.c.l.b16 %v1687
        %v1724 = vpack.c.b16 %v1723, %v1722
        %v1727 = vsel %vm1036, %v1688, 0
        %v1730 = vsel %vm1036, %v1689, 0
        %v1733 = vsel %vm1036, %v1690, 0
        %v1736 = vsel %vm1036, %v1691, 0
        %v1739 = vsel %vm1036, %v1692, 0
        %v1742 = vsel %vm1036, %v1693, 0
        %v1745 = vsel %vm1036, %v1694, 0
        %v1748 = vsel %vm1036, %v1695, 0
        %v1751 = vsel %vm1036, %v1696, 0
        %v1754 = vsel %vm1036, %v1697, 0
        %v1757 = vsel %vm1036, %v1698, 0
        %v1760 = vsel %vm1036, %v1699, 0
        %v1763 = vsel %vm1036, %v1700, 0
        %v1766 = vsel %vm1036, %v1701, 0
        %v1769 = vsel %vm1036, %v1702, 0
        %v1772 = vsel %vm1036, %v1703, 0
        %v1775 = vsel %vm1036, %v1704, 0
        %v1778 = vsel %vm1036, %v1705, 0
        %v1781 = vsel %vm1036, %v1706, 0
        %v1784 = vsel %vm1036, %v1707, 0
        %v1787 = vsel %vm1036, %v1708, 0
        %v1790 = vsel %vm1036, %v1709, 0
        %v1793 = vsel %vm1036, %v1710, 0
        %v1796 = vsel %vm1036, %v1711, 0
        %v1799 = vsel %vm1036, %v1712, 0
        %v1802 = vsel %vm1036, %v1713, 0
        %v1805 = vsel %vm1036, %v1714, 0
        %v1808 = vsel %vm1036, %v1715, 0
        %v1811 = vsel %vm1036, %v1716, 0
        %v1814 = vsel %vm1036, %v1717, 0
        %v1817 = vsel %vm1036, %v1718, 0
        %v1820 = vsel %vm1036, %v1719, 0
        %1822 = vmatpush.bf16.msra.mxu0 0
        %1823 = vmatpush.bf16.msra.mxu0 0
        %1824 = vmatpush.bf16.msra.mxu0 0
        %1825 = vmatpush.bf16.msra.mxu0 0
        %1826 = vmatpush.bf16.msra.mxu0 0
        %1827 = vmatpush.bf16.msra.mxu0 0
        %1828 = vmatpush.bf16.msra.mxu0 0
        %1829 = vmatpush.bf16.msra.mxu0 %v1724
        %1830 = vmatmul.bf16.gmra.mxu0 %v1727
        %v1831 = vpop.f32.mrf.mxu0
        %v1832 = vadd.f32 0.0, %v1831
        %v1833 = vpop.f32.mrf.mxu0
        %v1834 = vadd.f32 0.0, %v1833
        %1835 = vmatmul.bf16.gmra.mxu0 %v1730
        %v1836 = vpop.f32.mrf.mxu0
        %v1837 = vpop.f32.mrf.mxu0
        %1838 = vmatmul.bf16.gmra.mxu0 %v1733
        %v1839 = vpop.f32.mrf.mxu0
        %v1840 = vadd.f32 0.0, %v1839
        %v1841 = vpop.f32.mrf.mxu0
        %v1842 = vadd.f32 0.0, %v1841
        %1843 = vmatmul.bf16.gmra.mxu0 %v1736
        %v1844 = vpop.f32.mrf.mxu0
        %v1845 = vpop.f32.mrf.mxu0
        %1846 = vmatmul.bf16.gmra.mxu0 %v1739
        %v1847 = vpop.f32.mrf.mxu0
        %v1848 = vadd.f32 0.0, %v1847
        %v1849 = vpop.f32.mrf.mxu0
        %v1850 = vadd.f32 0.0, %v1849
        %1851 = vmatmul.bf16.gmra.mxu0 %v1742
        %v1852 = vpop.f32.mrf.mxu0
        %v1853 = vpop.f32.mrf.mxu0
        %1854 = vmatmul.bf16.gmra.mxu0 %v1745
        %v1855 = vpop.f32.mrf.mxu0
        %v1856 = vadd.f32 0.0, %v1855
        %v1857 = vpop.f32.mrf.mxu0
        %v1858 = vadd.f32 0.0, %v1857
        %1859 = vmatmul.bf16.gmra.mxu0 %v1748
        %v1860 = vpop.f32.mrf.mxu0
        %v1861 = vpop.f32.mrf.mxu0
        %1862 = vmatmul.bf16.gmra.mxu0 %v1751
        %v1863 = vpop.f32.mrf.mxu0
        %v1864 = vadd.f32 0.0, %v1863
        %v1865 = vpop.f32.mrf.mxu0
        %v1866 = vadd.f32 0.0, %v1865
        %1867 = vmatmul.bf16.gmra.mxu0 %v1754
        %v1868 = vpop.f32.mrf.mxu0
        %v1869 = vpop.f32.mrf.mxu0
        %1870 = vmatmul.bf16.gmra.mxu0 %v1757
        %v1871 = vpop.f32.mrf.mxu0
        %v1872 = vadd.f32 0.0, %v1871
        %v1873 = vpop.f32.mrf.mxu0
        %v1874 = vadd.f32 0.0, %v1873
        %1875 = vmatmul.bf16.gmra.mxu0 %v1760
        %v1876 = vpop.f32.mrf.mxu0
        %v1877 = vpop.f32.mrf.mxu0
        %1878 = vmatmul.bf16.gmra.mxu0 %v1763
        %v1879 = vpop.f32.mrf.mxu0
        %v1880 = vadd.f32 0.0, %v1879
        %v1881 = vpop.f32.mrf.mxu0
        %v1882 = vadd.f32 0.0, %v1881
        %1883 = vmatmul.bf16.gmra.mxu0 %v1766
        %v1884 = vpop.f32.mrf.mxu0
        %v1885 = vpop.f32.mrf.mxu0
        %1886 = vmatmul.bf16.gmra.mxu0 %v1769
        %v1887 = vpop.f32.mrf.mxu0
        %v1888 = vadd.f32 0.0, %v1887
        %v1889 = vpop.f32.mrf.mxu0
        %v1890 = vadd.f32 0.0, %v1889
        %1891 = vmatmul.bf16.gmra.mxu0 %v1772
        %v1892 = vpop.f32.mrf.mxu0
        %v1893 = vpop.f32.mrf.mxu0
        %1894 = vmatmul.bf16.gmra.mxu0 %v1775
        %v1895 = vpop.f32.mrf.mxu0
        %v1896 = vadd.f32 0.0, %v1895
        %v1897 = vpop.f32.mrf.mxu0
        %v1898 = vadd.f32 0.0, %v1897
        %1899 = vmatmul.bf16.gmra.mxu0 %v1778
        %v1900 = vpop.f32.mrf.mxu0
        %v1901 = vpop.f32.mrf.mxu0
        %1902 = vmatmul.bf16.gmra.mxu0 %v1781
        %v1903 = vpop.f32.mrf.mxu0
        %v1904 = vadd.f32 0.0, %v1903
        %v1905 = vpop.f32.mrf.mxu0
        %v1906 = vadd.f32 0.0, %v1905
        %1907 = vmatmul.bf16.gmra.mxu0 %v1784
        %v1908 = vpop.f32.mrf.mxu0
        %v1909 = vpop.f32.mrf.mxu0
        %1910 = vmatmul.bf16.gmra.mxu0 %v1787
        %v1911 = vpop.f32.mrf.mxu0
        %v1912 = vadd.f32 0.0, %v1911
        %v1913 = vpop.f32.mrf.mxu0
        %v1914 = vadd.f32 0.0, %v1913
        %1915 = vmatmul.bf16.gmra.mxu0 %v1790
        %v1916 = vpop.f32.mrf.mxu0
        %v1917 = vpop.f32.mrf.mxu0
        %1918 = vmatmul.bf16.gmra.mxu0 %v1793
        %v1919 = vpop.f32.mrf.mxu0
        %v1920 = vadd.f32 0.0, %v1919
        %v1921 = vpop.f32.mrf.mxu0
        %v1922 = vadd.f32 0.0, %v1921
        %1923 = vmatmul.bf16.gmra.mxu0 %v1796
        %v1924 = vpop.f32.mrf.mxu0
        %v1925 = vpop.f32.mrf.mxu0
        %1926 = vmatmul.bf16.gmra.mxu0 %v1799
        %v1927 = vpop.f32.mrf.mxu0
        %v1928 = vadd.f32 0.0, %v1927
        %v1929 = vpop.f32.mrf.mxu0
        %v1930 = vadd.f32 0.0, %v1929
        %1931 = vmatmul.bf16.gmra.mxu0 %v1802
        %v1932 = vpop.f32.mrf.mxu0
        %v1933 = vpop.f32.mrf.mxu0
        %1934 = vmatmul.bf16.gmra.mxu0 %v1805
        %v1935 = vpop.f32.mrf.mxu0
        %v1936 = vadd.f32 0.0, %v1935
        %v1937 = vpop.f32.mrf.mxu0
        %v1938 = vadd.f32 0.0, %v1937
        %1939 = vmatmul.bf16.gmra.mxu0 %v1808
        %v1940 = vpop.f32.mrf.mxu0
        %v1941 = vpop.f32.mrf.mxu0
        %1942 = vmatmul.bf16.gmra.mxu0 %v1811
        %v1943 = vpop.f32.mrf.mxu0
        %v1944 = vadd.f32 0.0, %v1943
        %v1945 = vpop.f32.mrf.mxu0
        %v1946 = vadd.f32 0.0, %v1945
        %1947 = vmatmul.bf16.gmra.mxu0 %v1814
        %v1948 = vpop.f32.mrf.mxu0
        %v1949 = vpop.f32.mrf.mxu0
        %1950 = vmatmul.bf16.gmra.mxu0 %v1817
        %v1951 = vpop.f32.mrf.mxu0
        %v1952 = vadd.f32 0.0, %v1951
        %v1953 = vpop.f32.mrf.mxu0
        %v1954 = vadd.f32 0.0, %v1953
        %1955 = vmatmul.bf16.gmra.mxu0 %v1820
        %v1956 = vpop.f32.mrf.mxu0
        %v1957 = vpop.f32.mrf.mxu0
        %1958 = vdwg.mxu0
        %v1959 = vadd.f32 %v1653, %v1832
        %v1960 = vadd.f32 %v1654, %v1834
        %v1961 = vadd.f32 %v1655, %v1840
        %v1962 = vadd.f32 %v1656, %v1842
        %v1963 = vadd.f32 %v1657, %v1848
        %v1964 = vadd.f32 %v1658, %v1850
        %v1965 = vadd.f32 %v1659, %v1856
        %v1966 = vadd.f32 %v1660, %v1858
        %v1967 = vadd.f32 %v1661, %v1864
        %v1968 = vadd.f32 %v1662, %v1866
        %v1969 = vadd.f32 %v1663, %v1872
        %v1970 = vadd.f32 %v1664, %v1874
        %v1971 = vadd.f32 %v1665, %v1880
        %v1972 = vadd.f32 %v1666, %v1882
        %v1973 = vadd.f32 %v1667, %v1888
        %v1974 = vadd.f32 %v1668, %v1890
        %v1975 = vadd.f32 %v1669, %v1896
        %v1976 = vadd.f32 %v1670, %v1898
        %v1977 = vadd.f32 %v1671, %v1904
        %v1978 = vadd.f32 %v1672, %v1906
        %v1979 = vadd.f32 %v1673, %v1912
        %v1980 = vadd.f32 %v1674, %v1914
        %v1981 = vadd.f32 %v1675, %v1920
        %v1982 = vadd.f32 %v1676, %v1922
        %v1983 = vadd.f32 %v1677, %v1928
        %v1984 = vadd.f32 %v1678, %v1930
        %v1985 = vadd.f32 %v1679, %v1936
        %v1986 = vadd.f32 %v1680, %v1938
        %v1987 = vadd.f32 %v1681, %v1944
        %v1988 = vadd.f32 %v1682, %v1946
        %v1989 = vadd.f32 %v1683, %v1952
        %v1990 = vadd.f32 %v1684, %v1954
        %s1991 = scalar_lea.vmem %s3, 32
        %v1992 = vld [vmem:[%s1991] sm:$0xf]
        %v1993 = vld [vmem:[%s1991 + $0x4] sm:$0xf]
        %v1994 = vpack.c.b16 %v697, %v696
        %v1995 = vpack.c.b16 %v699, %v698
        %v1998 = vunpack.c.l.b16 %v1992
        %v1999 = vunpack.c.l.b16 %v1993
        %v2000 = vpack.c.b16 %v1999, %v1998
        %v2003 = vsel %vm1036, %v1994, 0
        %v2006 = vsel %vm1036, %v1995, 0
        %2008 = vmatpush.bf16.msra.mxu0 0
        %2009 = vmatpush.bf16.msra.mxu0 0
        %2010 = vmatpush.bf16.msra.mxu0 0
        %2011 = vmatpush.bf16.msra.mxu0 0
        %2012 = vmatpush.bf16.msra.mxu0 0
        %2013 = vmatpush.bf16.msra.mxu0 0
        %2014 = vmatpush.bf16.msra.mxu0 0
        %2015 = vmatpush.bf16.msra.mxu0 %v2000
        %2016 = vmatmul.bf16.gmra.mxu0 %v1733
        %v2017 = vpop.f32.mrf.mxu0
        %v2018 = vadd.f32 0.0, %v2017
        %v2019 = vpop.f32.mrf.mxu0
        %v2020 = vadd.f32 0.0, %v2019
        %2021 = vmatmul.bf16.gmra.mxu0 %v1736
        %v2022 = vpop.f32.mrf.mxu0
        %v2023 = vpop.f32.mrf.mxu0
        %2024 = vmatmul.bf16.gmra.mxu0 %v1739
        %v2025 = vpop.f32.mrf.mxu0
        %v2026 = vadd.f32 0.0, %v2025
        %v2027 = vpop.f32.mrf.mxu0
        %v2028 = vadd.f32 0.0, %v2027
        %2029 = vmatmul.bf16.gmra.mxu0 %v1742
        %v2030 = vpop.f32.mrf.mxu0
        %v2031 = vpop.f32.mrf.mxu0
        %2032 = vmatmul.bf16.gmra.mxu0 %v1745
        %v2033 = vpop.f32.mrf.mxu0
        %v2034 = vadd.f32 0.0, %v2033
        %v2035 = vpop.f32.mrf.mxu0
        %v2036 = vadd.f32 0.0, %v2035
        %2037 = vmatmul.bf16.gmra.mxu0 %v1748
        %v2038 = vpop.f32.mrf.mxu0
        %v2039 = vpop.f32.mrf.mxu0
        %2040 = vmatmul.bf16.gmra.mxu0 %v1751
        %v2041 = vpop.f32.mrf.mxu0
        %v2042 = vadd.f32 0.0, %v2041
        %v2043 = vpop.f32.mrf.mxu0
        %v2044 = vadd.f32 0.0, %v2043
        %2045 = vmatmul.bf16.gmra.mxu0 %v1754
        %v2046 = vpop.f32.mrf.mxu0
        %v2047 = vpop.f32.mrf.mxu0
        %2048 = vmatmul.bf16.gmra.mxu0 %v1757
        %v2049 = vpop.f32.mrf.mxu0
        %v2050 = vadd.f32 0.0, %v2049
        %v2051 = vpop.f32.mrf.mxu0
        %v2052 = vadd.f32 0.0, %v2051
        %2053 = vmatmul.bf16.gmra.mxu0 %v1760
        %v2054 = vpop.f32.mrf.mxu0
        %v2055 = vpop.f32.mrf.mxu0
        %2056 = vmatmul.bf16.gmra.mxu0 %v1763
        %v2057 = vpop.f32.mrf.mxu0
        %v2058 = vadd.f32 0.0, %v2057
        %v2059 = vpop.f32.mrf.mxu0
        %v2060 = vadd.f32 0.0, %v2059
        %2061 = vmatmul.bf16.gmra.mxu0 %v1766
        %v2062 = vpop.f32.mrf.mxu0
        %v2063 = vpop.f32.mrf.mxu0
        %2064 = vmatmul.bf16.gmra.mxu0 %v1769
        %v2065 = vpop.f32.mrf.mxu0
        %v2066 = vadd.f32 0.0, %v2065
        %v2067 = vpop.f32.mrf.mxu0
        %v2068 = vadd.f32 0.0, %v2067
        %2069 = vmatmul.bf16.gmra.mxu0 %v1772
        %v2070 = vpop.f32.mrf.mxu0
        %v2071 = vpop.f32.mrf.mxu0
        %2072 = vmatmul.bf16.gmra.mxu0 %v1775
        %v2073 = vpop.f32.mrf.mxu0
        %v2074 = vadd.f32 0.0, %v2073
        %v2075 = vpop.f32.mrf.mxu0
        %v2076 = vadd.f32 0.0, %v2075
        %2077 = vmatmul.bf16.gmra.mxu0 %v1778
        %v2078 = vpop.f32.mrf.mxu0
        %v2079 = vpop.f32.mrf.mxu0
        %2080 = vmatmul.bf16.gmra.mxu0 %v1781
        %v2081 = vpop.f32.mrf.mxu0
        %v2082 = vadd.f32 0.0, %v2081
        %v2083 = vpop.f32.mrf.mxu0
        %v2084 = vadd.f32 0.0, %v2083
        %2085 = vmatmul.bf16.gmra.mxu0 %v1784
        %v2086 = vpop.f32.mrf.mxu0
        %v2087 = vpop.f32.mrf.mxu0
        %2088 = vmatmul.bf16.gmra.mxu0 %v1787
        %v2089 = vpop.f32.mrf.mxu0
        %v2090 = vadd.f32 0.0, %v2089
        %v2091 = vpop.f32.mrf.mxu0
        %v2092 = vadd.f32 0.0, %v2091
        %2093 = vmatmul.bf16.gmra.mxu0 %v1790
        %v2094 = vpop.f32.mrf.mxu0
        %v2095 = vpop.f32.mrf.mxu0
        %2096 = vmatmul.bf16.gmra.mxu0 %v1793
        %v2097 = vpop.f32.mrf.mxu0
        %v2098 = vadd.f32 0.0, %v2097
        %v2099 = vpop.f32.mrf.mxu0
        %v2100 = vadd.f32 0.0, %v2099
        %2101 = vmatmul.bf16.gmra.mxu0 %v1796
        %v2102 = vpop.f32.mrf.mxu0
        %v2103 = vpop.f32.mrf.mxu0
        %2104 = vmatmul.bf16.gmra.mxu0 %v1799
        %v2105 = vpop.f32.mrf.mxu0
        %v2106 = vadd.f32 0.0, %v2105
        %v2107 = vpop.f32.mrf.mxu0
        %v2108 = vadd.f32 0.0, %v2107
        %2109 = vmatmul.bf16.gmra.mxu0 %v1802
        %v2110 = vpop.f32.mrf.mxu0
        %v2111 = vpop.f32.mrf.mxu0
        %2112 = vmatmul.bf16.gmra.mxu0 %v1805
        %v2113 = vpop.f32.mrf.mxu0
        %v2114 = vadd.f32 0.0, %v2113
        %v2115 = vpop.f32.mrf.mxu0
        %v2116 = vadd.f32 0.0, %v2115
        %2117 = vmatmul.bf16.gmra.mxu0 %v1808
        %v2118 = vpop.f32.mrf.mxu0
        %v2119 = vpop.f32.mrf.mxu0
        %2120 = vmatmul.bf16.gmra.mxu0 %v1811
        %v2121 = vpop.f32.mrf.mxu0
        %v2122 = vadd.f32 0.0, %v2121
        %v2123 = vpop.f32.mrf.mxu0
        %v2124 = vadd.f32 0.0, %v2123
        %2125 = vmatmul.bf16.gmra.mxu0 %v1814
        %v2126 = vpop.f32.mrf.mxu0
        %v2127 = vpop.f32.mrf.mxu0
        %2128 = vmatmul.bf16.gmra.mxu0 %v1817
        %v2129 = vpop.f32.mrf.mxu0
        %v2130 = vadd.f32 0.0, %v2129
        %v2131 = vpop.f32.mrf.mxu0
        %v2132 = vadd.f32 0.0, %v2131
        %2133 = vmatmul.bf16.gmra.mxu0 %v1820
        %v2134 = vpop.f32.mrf.mxu0
        %v2135 = vpop.f32.mrf.mxu0
        %2136 = vmatmul.bf16.gmra.mxu0 %v2003
        %v2137 = vpop.f32.mrf.mxu0
        %v2138 = vadd.f32 0.0, %v2137
        %v2139 = vpop.f32.mrf.mxu0
        %v2140 = vadd.f32 0.0, %v2139
        %2141 = vmatmul.bf16.gmra.mxu0 %v2006
        %v2142 = vpop.f32.mrf.mxu0
        %v2143 = vpop.f32.mrf.mxu0
        %2144 = vdwg.mxu0
        %v2145 = vadd.f32 %v1959, %v2018
        %v2146 = vadd.f32 %v1960, %v2020
        %v2147 = vadd.f32 %v1961, %v2026
        %v2148 = vadd.f32 %v1962, %v2028
        %v2149 = vadd.f32 %v1963, %v2034
        %v2150 = vadd.f32 %v1964, %v2036
        %v2151 = vadd.f32 %v1965, %v2042
        %v2152 = vadd.f32 %v1966, %v2044
        %v2153 = vadd.f32 %v1967, %v2050
        %v2154 = vadd.f32 %v1968, %v2052
        %v2155 = vadd.f32 %v1969, %v2058
        %v2156 = vadd.f32 %v1970, %v2060
        %v2157 = vadd.f32 %v1971, %v2066
        %v2158 = vadd.f32 %v1972, %v2068
        %v2159 = vadd.f32 %v1973, %v2074
        %v2160 = vadd.f32 %v1974, %v2076
        %v2161 = vadd.f32 %v1975, %v2082
        %v2162 = vadd.f32 %v1976, %v2084
        %v2163 = vadd.f32 %v1977, %v2090
        %v2164 = vadd.f32 %v1978, %v2092
        %v2165 = vadd.f32 %v1979, %v2098
        %v2166 = vadd.f32 %v1980, %v2100
        %v2167 = vadd.f32 %v1981, %v2106
        %v2168 = vadd.f32 %v1982, %v2108
        %v2169 = vadd.f32 %v1983, %v2114
        %v2170 = vadd.f32 %v1984, %v2116
        %v2171 = vadd.f32 %v1985, %v2122
        %v2172 = vadd.f32 %v1986, %v2124
        %v2173 = vadd.f32 %v1987, %v2130
        %v2174 = vadd.f32 %v1988, %v2132
        %v2175 = vadd.f32 %v1989, %v2138
        %v2176 = vadd.f32 %v1990, %v2140
        %s2177 = scalar_lea.vmem %s3, 40
        %v2178 = vld [vmem:[%s2177] sm:$0xf]
        %v2179 = vld [vmem:[%s2177 + $0x4] sm:$0xf]
        %v2180 = vpack.c.b16 %v1468, %v1467
        %v2181 = vpack.c.b16 %v1470, %v1469
        %v2184 = vunpack.c.l.b16 %v2178
        %v2185 = vunpack.c.l.b16 %v2179
        %v2186 = vpack.c.b16 %v2185, %v2184
        %v2189 = vsel %vm1036, %v2180, 0
        %v2192 = vsel %vm1036, %v2181, 0
        %2194 = vmatpush.bf16.msra.mxu0 0
        %2195 = vmatpush.bf16.msra.mxu0 0
        %2196 = vmatpush.bf16.msra.mxu0 0
        %2197 = vmatpush.bf16.msra.mxu0 0
        %2198 = vmatpush.bf16.msra.mxu0 0
        %2199 = vmatpush.bf16.msra.mxu0 0
        %2200 = vmatpush.bf16.msra.mxu0 0
        %2201 = vmatpush.bf16.msra.mxu0 %v2186
        %2202 = vmatmul.bf16.gmra.mxu0 %v1739
        %v2203 = vpop.f32.mrf.mxu0
        %v2204 = vadd.f32 0.0, %v2203
        %v2205 = vpop.f32.mrf.mxu0
        %v2206 = vadd.f32 0.0, %v2205
        %2207 = vmatmul.bf16.gmra.mxu0 %v1742
        %v2208 = vpop.f32.mrf.mxu0
        %v2209 = vpop.f32.mrf.mxu0
        %2210 = vmatmul.bf16.gmra.mxu0 %v1745
        %v2211 = vpop.f32.mrf.mxu0
        %v2212 = vadd.f32 0.0, %v2211
        %v2213 = vpop.f32.mrf.mxu0
        %v2214 = vadd.f32 0.0, %v2213
        %2215 = vmatmul.bf16.gmra.mxu0 %v1748
        %v2216 = vpop.f32.mrf.mxu0
        %v2217 = vpop.f32.mrf.mxu0
        %2218 = vmatmul.bf16.gmra.mxu0 %v1751
        %v2219 = vpop.f32.mrf.mxu0
        %v2220 = vadd.f32 0.0, %v2219
        %v2221 = vpop.f32.mrf.mxu0
        %v2222 = vadd.f32 0.0, %v2221
        %2223 = vmatmul.bf16.gmra.mxu0 %v1754
        %v2224 = vpop.f32.mrf.mxu0
        %v2225 = vpop.f32.mrf.mxu0
        %2226 = vmatmul.bf16.gmra.mxu0 %v1757
        %v2227 = vpop.f32.mrf.mxu0
        %v2228 = vadd.f32 0.0, %v2227
        %v2229 = vpop.f32.mrf.mxu0
        %v2230 = vadd.f32 0.0, %v2229
        %2231 = vmatmul.bf16.gmra.mxu0 %v1760
        %v2232 = vpop.f32.mrf.mxu0
        %v2233 = vpop.f32.mrf.mxu0
        %2234 = vmatmul.bf16.gmra.mxu0 %v1763
        %v2235 = vpop.f32.mrf.mxu0
        %v2236 = vadd.f32 0.0, %v2235
        %v2237 = vpop.f32.mrf.mxu0
        %v2238 = vadd.f32 0.0, %v2237
        %2239 = vmatmul.bf16.gmra.mxu0 %v1766
        %v2240 = vpop.f32.mrf.mxu0
        %v2241 = vpop.f32.mrf.mxu0
        %2242 = vmatmul.bf16.gmra.mxu0 %v1769
        %v2243 = vpop.f32.mrf.mxu0
        %v2244 = vadd.f32 0.0, %v2243
        %v2245 = vpop.f32.mrf.mxu0
        %v2246 = vadd.f32 0.0, %v2245
        %2247 = vmatmul.bf16.gmra.mxu0 %v1772
        %v2248 = vpop.f32.mrf.mxu0
        %v2249 = vpop.f32.mrf.mxu0
        %2250 = vmatmul.bf16.gmra.mxu0 %v1775
        %v2251 = vpop.f32.mrf.mxu0
        %v2252 = vadd.f32 0.0, %v2251
        %v2253 = vpop.f32.mrf.mxu0
        %v2254 = vadd.f32 0.0, %v2253
        %2255 = vmatmul.bf16.gmra.mxu0 %v1778
        %v2256 = vpop.f32.mrf.mxu0
        %v2257 = vpop.f32.mrf.mxu0
        %2258 = vmatmul.bf16.gmra.mxu0 %v1781
        %v2259 = vpop.f32.mrf.mxu0
        %v2260 = vadd.f32 0.0, %v2259
        %v2261 = vpop.f32.mrf.mxu0
        %v2262 = vadd.f32 0.0, %v2261
        %2263 = vmatmul.bf16.gmra.mxu0 %v1784
        %v2264 = vpop.f32.mrf.mxu0
        %v2265 = vpop.f32.mrf.mxu0
        %2266 = vmatmul.bf16.gmra.mxu0 %v1787
        %v2267 = vpop.f32.mrf.mxu0
        %v2268 = vadd.f32 0.0, %v2267
        %v2269 = vpop.f32.mrf.mxu0
        %v2270 = vadd.f32 0.0, %v2269
        %2271 = vmatmul.bf16.gmra.mxu0 %v1790
        %v2272 = vpop.f32.mrf.mxu0
        %v2273 = vpop.f32.mrf.mxu0
        %2274 = vmatmul.bf16.gmra.mxu0 %v1793
        %v2275 = vpop.f32.mrf.mxu0
        %v2276 = vadd.f32 0.0, %v2275
        %v2277 = vpop.f32.mrf.mxu0
        %v2278 = vadd.f32 0.0, %v2277
        %2279 = vmatmul.bf16.gmra.mxu0 %v1796
        %v2280 = vpop.f32.mrf.mxu0
        %v2281 = vpop.f32.mrf.mxu0
        %2282 = vmatmul.bf16.gmra.mxu0 %v1799
        %v2283 = vpop.f32.mrf.mxu0
        %v2284 = vadd.f32 0.0, %v2283
        %v2285 = vpop.f32.mrf.mxu0
        %v2286 = vadd.f32 0.0, %v2285
        %2287 = vmatmul.bf16.gmra.mxu0 %v1802
        %v2288 = vpop.f32.mrf.mxu0
        %v2289 = vpop.f32.mrf.mxu0
        %2290 = vmatmul.bf16.gmra.mxu0 %v1805
        %v2291 = vpop.f32.mrf.mxu0
        %v2292 = vadd.f32 0.0, %v2291
        %v2293 = vpop.f32.mrf.mxu0
        %v2294 = vadd.f32 0.0, %v2293
        %2295 = vmatmul.bf16.gmra.mxu0 %v1808
        %v2296 = vpop.f32.mrf.mxu0
        %v2297 = vpop.f32.mrf.mxu0
        %2298 = vmatmul.bf16.gmra.mxu0 %v1811
        %v2299 = vpop.f32.mrf.mxu0
        %v2300 = vadd.f32 0.0, %v2299
        %v2301 = vpop.f32.mrf.mxu0
        %v2302 = vadd.f32 0.0, %v2301
        %2303 = vmatmul.bf16.gmra.mxu0 %v1814
        %v2304 = vpop.f32.mrf.mxu0
        %v2305 = vpop.f32.mrf.mxu0
        %2306 = vmatmul.bf16.gmra.mxu0 %v1817
        %v2307 = vpop.f32.mrf.mxu0
        %v2308 = vadd.f32 0.0, %v2307
        %v2309 = vpop.f32.mrf.mxu0
        %v2310 = vadd.f32 0.0, %v2309
        %2311 = vmatmul.bf16.gmra.mxu0 %v1820
        %v2312 = vpop.f32.mrf.mxu0
        %v2313 = vpop.f32.mrf.mxu0
        %2314 = vmatmul.bf16.gmra.mxu0 %v2003
        %v2315 = vpop.f32.mrf.mxu0
        %v2316 = vadd.f32 0.0, %v2315
        %v2317 = vpop.f32.mrf.mxu0
        %v2318 = vadd.f32 0.0, %v2317
        %2319 = vmatmul.bf16.gmra.mxu0 %v2006
        %v2320 = vpop.f32.mrf.mxu0
        %v2321 = vpop.f32.mrf.mxu0
        %2322 = vmatmul.bf16.gmra.mxu0 %v2189
        %v2323 = vpop.f32.mrf.mxu0
        %v2324 = vadd.f32 0.0, %v2323
        %v2325 = vpop.f32.mrf.mxu0
        %v2326 = vadd.f32 0.0, %v2325
        %2327 = vmatmul.bf16.gmra.mxu0 %v2192
        %v2328 = vpop.f32.mrf.mxu0
        %v2329 = vpop.f32.mrf.mxu0
        %2330 = vdwg.mxu0
        %v2331 = vadd.f32 %v2145, %v2204
        %v2332 = vadd.f32 %v2146, %v2206
        %v2333 = vadd.f32 %v2147, %v2212
        %v2334 = vadd.f32 %v2148, %v2214
        %v2335 = vadd.f32 %v2149, %v2220
        %v2336 = vadd.f32 %v2150, %v2222
        %v2337 = vadd.f32 %v2151, %v2228
        %v2338 = vadd.f32 %v2152, %v2230
        %v2339 = vadd.f32 %v2153, %v2236
        %v2340 = vadd.f32 %v2154, %v2238
        %v2341 = vadd.f32 %v2155, %v2244
        %v2342 = vadd.f32 %v2156, %v2246
        %v2343 = vadd.f32 %v2157, %v2252
        %v2344 = vadd.f32 %v2158, %v2254
        %v2345 = vadd.f32 %v2159, %v2260
        %v2346 = vadd.f32 %v2160, %v2262
        %v2347 = vadd.f32 %v2161, %v2268
        %v2348 = vadd.f32 %v2162, %v2270
        %v2349 = vadd.f32 %v2163, %v2276
        %v2350 = vadd.f32 %v2164, %v2278
        %v2351 = vadd.f32 %v2165, %v2284
        %v2352 = vadd.f32 %v2166, %v2286
        %v2353 = vadd.f32 %v2167, %v2292
        %v2354 = vadd.f32 %v2168, %v2294
        %v2355 = vadd.f32 %v2169, %v2300
        %v2356 = vadd.f32 %v2170, %v2302
        %v2357 = vadd.f32 %v2171, %v2308
        %v2358 = vadd.f32 %v2172, %v2310
        %v2359 = vadd.f32 %v2173, %v2316
        %v2360 = vadd.f32 %v2174, %v2318
        %v2361 = vadd.f32 %v2175, %v2324
        %v2362 = vadd.f32 %v2176, %v2326
        %s2363 = scalar_lea.vmem %s3, 48
        %v2364 = vld [vmem:[%s2363] sm:$0xf]
        %v2365 = vld [vmem:[%s2363 + $0x4] sm:$0xf]
        %v2366 = vpack.c.b16 %v696, %v696
        %vm2367 = vsmask.f32 7424
        %v2368 = vshrl.u32 %v1688, 16
        %v2370 = vshll.u32 %v1688, 16
        %v2372 = vrot.slane %v2370, 1
        %v2373 = vor.u32 %v2368, %v2372
        %v2374 = vshll.u32 %v1689, 16
        %v2376 = vrot.slane %v2374, 1
        %v2377 = vsel %vm2367, %v2373, %v2376
        %v2378 = vshrl.u32 %v1689, 16
        %v2380 = vor.u32 %v2378, %v2376
        %v2381 = vshll.u32 %v1690, 16
        %v2383 = vrot.slane %v2381, 1
        %v2384 = vsel %vm2367, %v2380, %v2383
        %v2385 = vshrl.u32 %v1690, 16
        %v2387 = vor.u32 %v2385, %v2383
        %v2388 = vshll.u32 %v1691, 16
        %v2390 = vrot.slane %v2388, 1
        %v2391 = vsel %vm2367, %v2387, %v2390
        %v2392 = vshrl.u32 %v1691, 16
        %v2394 = vor.u32 %v2392, %v2390
        %v2395 = vshll.u32 %v1692, 16
        %v2397 = vrot.slane %v2395, 1
        %v2398 = vsel %vm2367, %v2394, %v2397
        %v2399 = vshrl.u32 %v1692, 16
        %v2401 = vor.u32 %v2399, %v2397
        %v2402 = vshll.u32 %v1693, 16
        %v2404 = vrot.slane %v2402, 1
        %v2405 = vsel %vm2367, %v2401, %v2404
        %v2406 = vshrl.u32 %v1693, 16
        %v2408 = vor.u32 %v2406, %v2404
        %v2409 = vshll.u32 %v1694, 16
        %v2411 = vrot.slane %v2409, 1
        %v2412 = vsel %vm2367, %v2408, %v2411
        %v2413 = vshrl.u32 %v1694, 16
        %v2415 = vor.u32 %v2413, %v2411
        %v2416 = vshll.u32 %v1695, 16
        %v2418 = vrot.slane %v2416, 1
        %v2419 = vsel %vm2367, %v2415, %v2418
        %v2420 = vshrl.u32 %v1695, 16
        %v2422 = vor.u32 %v2420, %v2418
        %v2423 = vshll.u32 %v1696, 16
        %v2425 = vrot.slane %v2423, 1
        %v2426 = vsel %vm2367, %v2422, %v2425
        %v2427 = vshrl.u32 %v1696, 16
        %v2429 = vor.u32 %v2427, %v2425
        %v2430 = vshll.u32 %v1697, 16
        %v2432 = vrot.slane %v2430, 1
        %v2433 = vsel %vm2367, %v2429, %v2432
        %v2434 = vshrl.u32 %v1697, 16
        %v2436 = vor.u32 %v2434, %v2432
        %v2437 = vshll.u32 %v1698, 16
        %v2439 = vrot.slane %v2437, 1
        %v2440 = vsel %vm2367, %v2436, %v2439
        %v2441 = vshrl.u32 %v1698, 16
        %v2443 = vor.u32 %v2441, %v2439
        %v2444 = vshll.u32 %v1699, 16
        %v2446 = vrot.slane %v2444, 1
        %v2447 = vsel %vm2367, %v2443, %v2446
        %v2448 = vshrl.u32 %v1699, 16
        %v2450 = vor.u32 %v2448, %v2446
        %v2451 = vshll.u32 %v1700, 16
        %v2453 = vrot.slane %v2451, 1
        %v2454 = vsel %vm2367, %v2450, %v2453
        %v2455 = vshrl.u32 %v1700, 16
        %v2457 = vor.u32 %v2455, %v2453
        %v2458 = vshll.u32 %v1701, 16
        %v2460 = vrot.slane %v2458, 1
        %v2461 = vsel %vm2367, %v2457, %v2460
        %v2462 = vshrl.u32 %v1701, 16
        %v2464 = vor.u32 %v2462, %v2460
        %v2465 = vshll.u32 %v1702, 16
        %v2467 = vrot.slane %v2465, 1
        %v2468 = vsel %vm2367, %v2464, %v2467
        %v2469 = vshrl.u32 %v1702, 16
        %v2471 = vor.u32 %v2469, %v2467
        %v2472 = vshll.u32 %v1703, 16
        %v2474 = vrot.slane %v2472, 1
        %v2475 = vsel %vm2367, %v2471, %v2474
        %v2476 = vshrl.u32 %v1703, 16
        %v2478 = vor.u32 %v2476, %v2474
        %v2479 = vshll.u32 %v1704, 16
        %v2481 = vrot.slane %v2479, 1
        %v2482 = vsel %vm2367, %v2478, %v2481
        %v2483 = vshrl.u32 %v1704, 16
        %v2485 = vor.u32 %v2483, %v2481
        %v2486 = vshll.u32 %v1705, 16
        %v2488 = vrot.slane %v2486, 1
        %v2489 = vsel %vm2367, %v2485, %v2488
        %v2490 = vshrl.u32 %v1705, 16
        %v2492 = vor.u32 %v2490, %v2488
        %v2493 = vshll.u32 %v1706, 16
        %v2495 = vrot.slane %v2493, 1
        %v2496 = vsel %vm2367, %v2492, %v2495
        %v2497 = vshrl.u32 %v1706, 16
        %v2499 = vor.u32 %v2497, %v2495
        %v2500 = vshll.u32 %v1707, 16
        %v2502 = vrot.slane %v2500, 1
        %v2503 = vsel %vm2367, %v2499, %v2502
        %v2504 = vshrl.u32 %v1707, 16
        %v2506 = vor.u32 %v2504, %v2502
        %v2507 = vshll.u32 %v1708, 16
        %v2509 = vrot.slane %v2507, 1
        %v2510 = vsel %vm2367, %v2506, %v2509
        %v2511 = vshrl.u32 %v1708, 16
        %v2513 = vor.u32 %v2511, %v2509
        %v2514 = vshll.u32 %v1709, 16
        %v2516 = vrot.slane %v2514, 1
        %v2517 = vsel %vm2367, %v2513, %v2516
        %v2518 = vshrl.u32 %v1709, 16
        %v2520 = vor.u32 %v2518, %v2516
        %v2521 = vshll.u32 %v1710, 16
        %v2523 = vrot.slane %v2521, 1
        %v2524 = vsel %vm2367, %v2520, %v2523
        %v2525 = vshrl.u32 %v1710, 16
        %v2527 = vor.u32 %v2525, %v2523
        %v2528 = vshll.u32 %v1711, 16
        %v2530 = vrot.slane %v2528, 1
        %v2531 = vsel %vm2367, %v2527, %v2530
        %v2532 = vshrl.u32 %v1711, 16
        %v2534 = vor.u32 %v2532, %v2530
        %v2535 = vshll.u32 %v1712, 16
        %v2537 = vrot.slane %v2535, 1
        %v2538 = vsel %vm2367, %v2534, %v2537
        %v2539 = vshrl.u32 %v1712, 16
        %v2541 = vor.u32 %v2539, %v2537
        %v2542 = vshll.u32 %v1713, 16
        %v2544 = vrot.slane %v2542, 1
        %v2545 = vsel %vm2367, %v2541, %v2544
        %v2546 = vshrl.u32 %v1713, 16
        %v2548 = vor.u32 %v2546, %v2544
        %v2549 = vshll.u32 %v1714, 16
        %v2551 = vrot.slane %v2549, 1
        %v2552 = vsel %vm2367, %v2548, %v2551
        %v2553 = vshrl.u32 %v1714, 16
        %v2555 = vor.u32 %v2553, %v2551
        %v2556 = vshll.u32 %v1715, 16
        %v2558 = vrot.slane %v2556, 1
        %v2559 = vsel %vm2367, %v2555, %v2558
        %v2560 = vshrl.u32 %v1715, 16
        %v2562 = vor.u32 %v2560, %v2558
        %v2563 = vshll.u32 %v1716, 16
        %v2565 = vrot.slane %v2563, 1
        %v2566 = vsel %vm2367, %v2562, %v2565
        %v2567 = vshrl.u32 %v1716, 16
        %v2569 = vor.u32 %v2567, %v2565
        %v2570 = vshll.u32 %v1717, 16
        %v2572 = vrot.slane %v2570, 1
        %v2573 = vsel %vm2367, %v2569, %v2572
        %v2574 = vshrl.u32 %v1717, 16
        %v2576 = vor.u32 %v2574, %v2572
        %v2577 = vshll.u32 %v1718, 16
        %v2579 = vrot.slane %v2577, 1
        %v2580 = vsel %vm2367, %v2576, %v2579
        %v2581 = vshrl.u32 %v1718, 16
        %v2583 = vor.u32 %v2581, %v2579
        %v2584 = vshll.u32 %v1719, 16
        %v2586 = vrot.slane %v2584, 1
        %v2587 = vsel %vm2367, %v2583, %v2586
        %v2588 = vshrl.u32 %v1719, 16
        %v2590 = vor.u32 %v2588, %v2586
        %v2592 = vshll.u32 %v2366, 16
        %v2594 = vrot.slane %v2592, 1
        %v2595 = vsel %vm2367, %v2590, %v2594
        %v2598 = vunpack.c.l.b16 %v2364
        %v2599 = vunpack.c.l.b16 %v2365
        %v2600 = vpack.c.b16 %v2599, %v2598
        %v2603 = vsel %vm1036, %v2377, 0
        %v2606 = vsel %vm1036, %v2384, 0
        %v2609 = vsel %vm1036, %v2391, 0
        %v2612 = vsel %vm1036, %v2398, 0
        %v2615 = vsel %vm1036, %v2405, 0
        %v2618 = vsel %vm1036, %v2412, 0
        %v2621 = vsel %vm1036, %v2419, 0
        %v2624 = vsel %vm1036, %v2426, 0
        %v2627 = vsel %vm1036, %v2433, 0
        %v2630 = vsel %vm1036, %v2440, 0
        %v2633 = vsel %vm1036, %v2447, 0
        %v2636 = vsel %vm1036, %v2454, 0
        %v2639 = vsel %vm1036, %v2461, 0
        %v2642 = vsel %vm1036, %v2468, 0
        %v2645 = vsel %vm1036, %v2475, 0
        %v2648 = vsel %vm1036, %v2482, 0
        %v2651 = vsel %vm1036, %v2489, 0
        %v2654 = vsel %vm1036, %v2496, 0
        %v2657 = vsel %vm1036, %v2503, 0
        %v2660 = vsel %vm1036, %v2510, 0
        %v2663 = vsel %vm1036, %v2517, 0
        %v2666 = vsel %vm1036, %v2524, 0
        %v2669 = vsel %vm1036, %v2531, 0
        %v2672 = vsel %vm1036, %v2538, 0
        %v2675 = vsel %vm1036, %v2545, 0
        %v2678 = vsel %vm1036, %v2552, 0
        %v2681 = vsel %vm1036, %v2559, 0
        %v2684 = vsel %vm1036, %v2566, 0
        %v2687 = vsel %vm1036, %v2573, 0
        %v2690 = vsel %vm1036, %v2580, 0
        %v2693 = vsel %vm1036, %v2587, 0
        %v2696 = vsel %vm1036, %v2595, 0
        %2698 = vmatpush.bf16.msra.mxu0 0
        %2699 = vmatpush.bf16.msra.mxu0 0
        %2700 = vmatpush.bf16.msra.mxu0 0
        %2701 = vmatpush.bf16.msra.mxu0 0
        %2702 = vmatpush.bf16.msra.mxu0 0
        %2703 = vmatpush.bf16.msra.mxu0 0
        %2704 = vmatpush.bf16.msra.mxu0 0
        %2705 = vmatpush.bf16.msra.mxu0 %v2600
        %2706 = vmatmul.bf16.gmra.mxu0 %v2603
        %v2707 = vpop.f32.mrf.mxu0
        %v2708 = vadd.f32 0.0, %v2707
        %v2709 = vpop.f32.mrf.mxu0
        %v2710 = vadd.f32 0.0, %v2709
        %2711 = vmatmul.bf16.gmra.mxu0 %v2606
        %v2712 = vpop.f32.mrf.mxu0
        %v2713 = vpop.f32.mrf.mxu0
        %2714 = vmatmul.bf16.gmra.mxu0 %v2609
        %v2715 = vpop.f32.mrf.mxu0
        %v2716 = vadd.f32 0.0, %v2715
        %v2717 = vpop.f32.mrf.mxu0
        %v2718 = vadd.f32 0.0, %v2717
        %2719 = vmatmul.bf16.gmra.mxu0 %v2612
        %v2720 = vpop.f32.mrf.mxu0
        %v2721 = vpop.f32.mrf.mxu0
        %2722 = vmatmul.bf16.gmra.mxu0 %v2615
        %v2723 = vpop.f32.mrf.mxu0
        %v2724 = vadd.f32 0.0, %v2723
        %v2725 = vpop.f32.mrf.mxu0
        %v2726 = vadd.f32 0.0, %v2725
        %2727 = vmatmul.bf16.gmra.mxu0 %v2618
        %v2728 = vpop.f32.mrf.mxu0
        %v2729 = vpop.f32.mrf.mxu0
        %2730 = vmatmul.bf16.gmra.mxu0 %v2621
        %v2731 = vpop.f32.mrf.mxu0
        %v2732 = vadd.f32 0.0, %v2731
        %v2733 = vpop.f32.mrf.mxu0
        %v2734 = vadd.f32 0.0, %v2733
        %2735 = vmatmul.bf16.gmra.mxu0 %v2624
        %v2736 = vpop.f32.mrf.mxu0
        %v2737 = vpop.f32.mrf.mxu0
        %2738 = vmatmul.bf16.gmra.mxu0 %v2627
        %v2739 = vpop.f32.mrf.mxu0
        %v2740 = vadd.f32 0.0, %v2739
        %v2741 = vpop.f32.mrf.mxu0
        %v2742 = vadd.f32 0.0, %v2741
        %2743 = vmatmul.bf16.gmra.mxu0 %v2630
        %v2744 = vpop.f32.mrf.mxu0
        %v2745 = vpop.f32.mrf.mxu0
        %2746 = vmatmul.bf16.gmra.mxu0 %v2633
        %v2747 = vpop.f32.mrf.mxu0
        %v2748 = vadd.f32 0.0, %v2747
        %v2749 = vpop.f32.mrf.mxu0
        %v2750 = vadd.f32 0.0, %v2749
        %2751 = vmatmul.bf16.gmra.mxu0 %v2636
        %v2752 = vpop.f32.mrf.mxu0
        %v2753 = vpop.f32.mrf.mxu0
        %2754 = vmatmul.bf16.gmra.mxu0 %v2639
        %v2755 = vpop.f32.mrf.mxu0
        %v2756 = vadd.f32 0.0, %v2755
        %v2757 = vpop.f32.mrf.mxu0
        %v2758 = vadd.f32 0.0, %v2757
        %2759 = vmatmul.bf16.gmra.mxu0 %v2642
        %v2760 = vpop.f32.mrf.mxu0
        %v2761 = vpop.f32.mrf.mxu0
        %2762 = vmatmul.bf16.gmra.mxu0 %v2645
        %v2763 = vpop.f32.mrf.mxu0
        %v2764 = vadd.f32 0.0, %v2763
        %v2765 = vpop.f32.mrf.mxu0
        %v2766 = vadd.f32 0.0, %v2765
        %2767 = vmatmul.bf16.gmra.mxu0 %v2648
        %v2768 = vpop.f32.mrf.mxu0
        %v2769 = vpop.f32.mrf.mxu0
        %2770 = vmatmul.bf16.gmra.mxu0 %v2651
        %v2771 = vpop.f32.mrf.mxu0
        %v2772 = vadd.f32 0.0, %v2771
        %v2773 = vpop.f32.mrf.mxu0
        %v2774 = vadd.f32 0.0, %v2773
        %2775 = vmatmul.bf16.gmra.mxu0 %v2654
        %v2776 = vpop.f32.mrf.mxu0
        %v2777 = vpop.f32.mrf.mxu0
        %2778 = vmatmul.bf16.gmra.mxu0 %v2657
        %v2779 = vpop.f32.mrf.mxu0
        %v2780 = vadd.f32 0.0, %v2779
        %v2781 = vpop.f32.mrf.mxu0
        %v2782 = vadd.f32 0.0, %v2781
        %2783 = vmatmul.bf16.gmra.mxu0 %v2660
        %v2784 = vpop.f32.mrf.mxu0
        %v2785 = vpop.f32.mrf.mxu0
        %2786 = vmatmul.bf16.gmra.mxu0 %v2663
        %v2787 = vpop.f32.mrf.mxu0
        %v2788 = vadd.f32 0.0, %v2787
        %v2789 = vpop.f32.mrf.mxu0
        %v2790 = vadd.f32 0.0, %v2789
        %2791 = vmatmul.bf16.gmra.mxu0 %v2666
        %v2792 = vpop.f32.mrf.mxu0
        %v2793 = vpop.f32.mrf.mxu0
        %2794 = vmatmul.bf16.gmra.mxu0 %v2669
        %v2795 = vpop.f32.mrf.mxu0
        %v2796 = vadd.f32 0.0, %v2795
        %v2797 = vpop.f32.mrf.mxu0
        %v2798 = vadd.f32 0.0, %v2797
        %2799 = vmatmul.bf16.gmra.mxu0 %v2672
        %v2800 = vpop.f32.mrf.mxu0
        %v2801 = vpop.f32.mrf.mxu0
        %2802 = vmatmul.bf16.gmra.mxu0 %v2675
        %v2803 = vpop.f32.mrf.mxu0
        %v2804 = vadd.f32 0.0, %v2803
        %v2805 = vpop.f32.mrf.mxu0
        %v2806 = vadd.f32 0.0, %v2805
        %2807 = vmatmul.bf16.gmra.mxu0 %v2678
        %v2808 = vpop.f32.mrf.mxu0
        %v2809 = vpop.f32.mrf.mxu0
        %2810 = vmatmul.bf16.gmra.mxu0 %v2681
        %v2811 = vpop.f32.mrf.mxu0
        %v2812 = vadd.f32 0.0, %v2811
        %v2813 = vpop.f32.mrf.mxu0
        %v2814 = vadd.f32 0.0, %v2813
        %2815 = vmatmul.bf16.gmra.mxu0 %v2684
        %v2816 = vpop.f32.mrf.mxu0
        %v2817 = vpop.f32.mrf.mxu0
        %2818 = vmatmul.bf16.gmra.mxu0 %v2687
        %v2819 = vpop.f32.mrf.mxu0
        %v2820 = vadd.f32 0.0, %v2819
        %v2821 = vpop.f32.mrf.mxu0
        %v2822 = vadd.f32 0.0, %v2821
        %2823 = vmatmul.bf16.gmra.mxu0 %v2690
        %v2824 = vpop.f32.mrf.mxu0
        %v2825 = vpop.f32.mrf.mxu0
        %2826 = vmatmul.bf16.gmra.mxu0 %v2693
        %v2827 = vpop.f32.mrf.mxu0
        %v2828 = vadd.f32 0.0, %v2827
        %v2829 = vpop.f32.mrf.mxu0
        %v2830 = vadd.f32 0.0, %v2829
        %2831 = vmatmul.bf16.gmra.mxu0 %v2696
        %v2832 = vpop.f32.mrf.mxu0
        %v2833 = vpop.f32.mrf.mxu0
        %2834 = vdwg.mxu0
        %v2835 = vadd.f32 %v2331, %v2708
        %v2836 = vadd.f32 %v2332, %v2710
        %v2837 = vadd.f32 %v2333, %v2716
        %v2838 = vadd.f32 %v2334, %v2718
        %v2839 = vadd.f32 %v2335, %v2724
        %v2840 = vadd.f32 %v2336, %v2726
        %v2841 = vadd.f32 %v2337, %v2732
        %v2842 = vadd.f32 %v2338, %v2734
        %v2843 = vadd.f32 %v2339, %v2740
        %v2844 = vadd.f32 %v2340, %v2742
        %v2845 = vadd.f32 %v2341, %v2748
        %v2846 = vadd.f32 %v2342, %v2750
        %v2847 = vadd.f32 %v2343, %v2756
        %v2848 = vadd.f32 %v2344, %v2758
        %v2849 = vadd.f32 %v2345, %v2764
        %v2850 = vadd.f32 %v2346, %v2766
        %v2851 = vadd.f32 %v2347, %v2772
        %v2852 = vadd.f32 %v2348, %v2774
        %v2853 = vadd.f32 %v2349, %v2780
        %v2854 = vadd.f32 %v2350, %v2782
        %v2855 = vadd.f32 %v2351, %v2788
        %v2856 = vadd.f32 %v2352, %v2790
        %v2857 = vadd.f32 %v2353, %v2796
        %v2858 = vadd.f32 %v2354, %v2798
        %v2859 = vadd.f32 %v2355, %v2804
        %v2860 = vadd.f32 %v2356, %v2806
        %v2861 = vadd.f32 %v2357, %v2812
        %v2862 = vadd.f32 %v2358, %v2814
        %v2863 = vadd.f32 %v2359, %v2820
        %v2864 = vadd.f32 %v2360, %v2822
        %v2865 = vadd.f32 %v2361, %v2828
        %v2866 = vadd.f32 %v2362, %v2830
        %s2867 = scalar_lea.vmem %s3, 56
        %v2868 = vld [vmem:[%s2867] sm:$0xf]
        %v2869 = vld [vmem:[%s2867 + $0x4] sm:$0xf]
        %v2870 = vpack.c.b16 %v1467, %v1467
        %v2871 = vshll.u32 %v1994, 16
        %v2873 = vrot.slane %v2871, 1
        %v2874 = vsel %vm2367, %v2590, %v2873
        %v2875 = vshrl.u32 %v1994, 16
        %v2877 = vor.u32 %v2875, %v2873
        %v2878 = vshll.u32 %v1995, 16
        %v2880 = vrot.slane %v2878, 1
        %v2881 = vsel %vm2367, %v2877, %v2880
        %v2882 = vshrl.u32 %v1995, 16
        %v2884 = vor.u32 %v2882, %v2880
        %v2886 = vshll.u32 %v2870, 16
        %v2888 = vrot.slane %v2886, 1
        %v2889 = vsel %vm2367, %v2884, %v2888
        %v2892 = vunpack.c.l.b16 %v2868
        %v2893 = vunpack.c.l.b16 %v2869
        %v2894 = vpack.c.b16 %v2893, %v2892
        %v2897 = vsel %vm1036, %v2874, 0
        %v2900 = vsel %vm1036, %v2881, 0
        %v2903 = vsel %vm1036, %v2889, 0
        %2905 = vmatpush.bf16.msra.mxu0 0
        %2906 = vmatpush.bf16.msra.mxu0 0
        %2907 = vmatpush.bf16.msra.mxu0 0
        %2908 = vmatpush.bf16.msra.mxu0 0
        %2909 = vmatpush.bf16.msra.mxu0 0
        %2910 = vmatpush.bf16.msra.mxu0 0
        %2911 = vmatpush.bf16.msra.mxu0 0
        %2912 = vmatpush.bf16.msra.mxu0 %v2894
        %2913 = vmatmul.bf16.gmra.mxu0 %v2609
        %v2914 = vpop.f32.mrf.mxu0
        %v2915 = vadd.f32 0.0, %v2914
        %v2916 = vpop.f32.mrf.mxu0
        %v2917 = vadd.f32 0.0, %v2916
        %2918 = vmatmul.bf16.gmra.mxu0 %v2612
        %v2919 = vpop.f32.mrf.mxu0
        %v2920 = vpop.f32.mrf.mxu0
        %2921 = vmatmul.bf16.gmra.mxu0 %v2615
        %v2922 = vpop.f32.mrf.mxu0
        %v2923 = vadd.f32 0.0, %v2922
        %v2924 = vpop.f32.mrf.mxu0
        %v2925 = vadd.f32 0.0, %v2924
        %2926 = vmatmul.bf16.gmra.mxu0 %v2618
        %v2927 = vpop.f32.mrf.mxu0
        %v2928 = vpop.f32.mrf.mxu0
        %2929 = vmatmul.bf16.gmra.mxu0 %v2621
        %v2930 = vpop.f32.mrf.mxu0
        %v2931 = vadd.f32 0.0, %v2930
        %v2932 = vpop.f32.mrf.mxu0
        %v2933 = vadd.f32 0.0, %v2932
        %2934 = vmatmul.bf16.gmra.mxu0 %v2624
        %v2935 = vpop.f32.mrf.mxu0
        %v2936 = vpop.f32.mrf.mxu0
        %2937 = vmatmul.bf16.gmra.mxu0 %v2627
        %v2938 = vpop.f32.mrf.mxu0
        %v2939 = vadd.f32 0.0, %v2938
        %v2940 = vpop.f32.mrf.mxu0
        %v2941 = vadd.f32 0.0, %v2940
        %2942 = vmatmul.bf16.gmra.mxu0 %v2630
        %v2943 = vpop.f32.mrf.mxu0
        %v2944 = vpop.f32.mrf.mxu0
        %2945 = vmatmul.bf16.gmra.mxu0 %v2633
        %v2946 = vpop.f32.mrf.mxu0
        %v2947 = vadd.f32 0.0, %v2946
        %v2948 = vpop.f32.mrf.mxu0
        %v2949 = vadd.f32 0.0, %v2948
        %2950 = vmatmul.bf16.gmra.mxu0 %v2636
        %v2951 = vpop.f32.mrf.mxu0
        %v2952 = vpop.f32.mrf.mxu0
        %2953 = vmatmul.bf16.gmra.mxu0 %v2639
        %v2954 = vpop.f32.mrf.mxu0
        %v2955 = vadd.f32 0.0, %v2954
        %v2956 = vpop.f32.mrf.mxu0
        %v2957 = vadd.f32 0.0, %v2956
        %2958 = vmatmul.bf16.gmra.mxu0 %v2642
        %v2959 = vpop.f32.mrf.mxu0
        %v2960 = vpop.f32.mrf.mxu0
        %2961 = vmatmul.bf16.gmra.mxu0 %v2645
        %v2962 = vpop.f32.mrf.mxu0
        %v2963 = vadd.f32 0.0, %v2962
        %v2964 = vpop.f32.mrf.mxu0
        %v2965 = vadd.f32 0.0, %v2964
        %2966 = vmatmul.bf16.gmra.mxu0 %v2648
        %v2967 = vpop.f32.mrf.mxu0
        %v2968 = vpop.f32.mrf.mxu0
        %2969 = vmatmul.bf16.gmra.mxu0 %v2651
        %v2970 = vpop.f32.mrf.mxu0
        %v2971 = vadd.f32 0.0, %v2970
        %v2972 = vpop.f32.mrf.mxu0
        %v2973 = vadd.f32 0.0, %v2972
        %2974 = vmatmul.bf16.gmra.mxu0 %v2654
        %v2975 = vpop.f32.mrf.mxu0
        %v2976 = vpop.f32.mrf.mxu0
        %2977 = vmatmul.bf16.gmra.mxu0 %v2657
        %v2978 = vpop.f32.mrf.mxu0
        %v2979 = vadd.f32 0.0, %v2978
        %v2980 = vpop.f32.mrf.mxu0
        %v2981 = vadd.f32 0.0, %v2980
        %2982 = vmatmul.bf16.gmra.mxu0 %v2660
        %v2983 = vpop.f32.mrf.mxu0
        %v2984 = vpop.f32.mrf.mxu0
        %2985 = vmatmul.bf16.gmra.mxu0 %v2663
        %v2986 = vpop.f32.mrf.mxu0
        %v2987 = vadd.f32 0.0, %v2986
        %v2988 = vpop.f32.mrf.mxu0
        %v2989 = vadd.f32 0.0, %v2988
        %2990 = vmatmul.bf16.gmra.mxu0 %v2666
        %v2991 = vpop.f32.mrf.mxu0
        %v2992 = vpop.f32.mrf.mxu0
        %2993 = vmatmul.bf16.gmra.mxu0 %v2669
        %v2994 = vpop.f32.mrf.mxu0
        %v2995 = vadd.f32 0.0, %v2994
        %v2996 = vpop.f32.mrf.mxu0
        %v2997 = vadd.f32 0.0, %v2996
        %2998 = vmatmul.bf16.gmra.mxu0 %v2672
        %v2999 = vpop.f32.mrf.mxu0
        %v3000 = vpop.f32.mrf.mxu0
        %3001 = vmatmul.bf16.gmra.mxu0 %v2675
        %v3002 = vpop.f32.mrf.mxu0
        %v3003 = vadd.f32 0.0, %v3002
        %v3004 = vpop.f32.mrf.mxu0
        %v3005 = vadd.f32 0.0, %v3004
        %3006 = vmatmul.bf16.gmra.mxu0 %v2678
        %v3007 = vpop.f32.mrf.mxu0
        %v3008 = vpop.f32.mrf.mxu0
        %3009 = vmatmul.bf16.gmra.mxu0 %v2681
        %v3010 = vpop.f32.mrf.mxu0
        %v3011 = vadd.f32 0.0, %v3010
        %v3012 = vpop.f32.mrf.mxu0
        %v3013 = vadd.f32 0.0, %v3012
        %3014 = vmatmul.bf16.gmra.mxu0 %v2684
        %v3015 = vpop.f32.mrf.mxu0
        %v3016 = vpop.f32.mrf.mxu0
        %3017 = vmatmul.bf16.gmra.mxu0 %v2687
        %v3018 = vpop.f32.mrf.mxu0
        %v3019 = vadd.f32 0.0, %v3018
        %v3020 = vpop.f32.mrf.mxu0
        %v3021 = vadd.f32 0.0, %v3020
        %3022 = vmatmul.bf16.gmra.mxu0 %v2690
        %v3023 = vpop.f32.mrf.mxu0
        %v3024 = vpop.f32.mrf.mxu0
        %3025 = vmatmul.bf16.gmra.mxu0 %v2693
        %v3026 = vpop.f32.mrf.mxu0
        %v3027 = vadd.f32 0.0, %v3026
        %v3028 = vpop.f32.mrf.mxu0
        %v3029 = vadd.f32 0.0, %v3028
        %3030 = vmatmul.bf16.gmra.mxu0 %v2897
        %v3031 = vpop.f32.mrf.mxu0
        %v3032 = vpop.f32.mrf.mxu0
        %3033 = vmatmul.bf16.gmra.mxu0 %v2900
        %v3034 = vpop.f32.mrf.mxu0
        %v3035 = vadd.f32 0.0, %v3034
        %v3036 = vpop.f32.mrf.mxu0
        %v3037 = vadd.f32 0.0, %v3036
        %3038 = vmatmul.bf16.gmra.mxu0 %v2903
        %v3039 = vpop.f32.mrf.mxu0
        %v3040 = vpop.f32.mrf.mxu0
        %3041 = vdwg.mxu0
        %v3042 = vadd.f32 %v2835, %v2915
        %v3043 = vadd.f32 %v2836, %v2917
        %v3044 = vadd.f32 %v2837, %v2923
        %v3045 = vadd.f32 %v2838, %v2925
        %v3046 = vadd.f32 %v2839, %v2931
        %v3047 = vadd.f32 %v2840, %v2933
        %v3048 = vadd.f32 %v2841, %v2939
        %v3049 = vadd.f32 %v2842, %v2941
        %v3050 = vadd.f32 %v2843, %v2947
        %v3051 = vadd.f32 %v2844, %v2949
        %v3052 = vadd.f32 %v2845, %v2955
        %v3053 = vadd.f32 %v2846, %v2957
        %v3054 = vadd.f32 %v2847, %v2963
        %v3055 = vadd.f32 %v2848, %v2965
        %v3056 = vadd.f32 %v2849, %v2971
        %v3057 = vadd.f32 %v2850, %v2973
        %v3058 = vadd.f32 %v2851, %v2979
        %v3059 = vadd.f32 %v2852, %v2981
        %v3060 = vadd.f32 %v2853, %v2987
        %v3061 = vadd.f32 %v2854, %v2989
        %v3062 = vadd.f32 %v2855, %v2995
        %v3063 = vadd.f32 %v2856, %v2997
        %v3064 = vadd.f32 %v2857, %v3003
        %v3065 = vadd.f32 %v2858, %v3005
        %v3066 = vadd.f32 %v2859, %v3011
        %v3067 = vadd.f32 %v2860, %v3013
        %v3068 = vadd.f32 %v2861, %v3019
        %v3069 = vadd.f32 %v2862, %v3021
        %v3070 = vadd.f32 %v2863, %v3027
        %v3071 = vadd.f32 %v2864, %v3029
        %v3072 = vadd.f32 %v2865, %v3035
        %v3073 = vadd.f32 %v2866, %v3037
        %s3074 = scalar_lea.vmem %s3, 64
        %v3075 = vld [vmem:[%s3074] sm:$0xf]
        %v3076 = vld [vmem:[%s3074 + $0x4] sm:$0xf]
        %v3078 = vunpack.c.l.b16 %v564
        %v3079 = vpack.c.b16 %v3078, %v3078
        %v3080 = vshll.u32 %v2180, 16
        %v3082 = vrot.slane %v3080, 1
        %v3083 = vsel %vm2367, %v2884, %v3082
        %v3084 = vshrl.u32 %v2180, 16
        %v3086 = vor.u32 %v3084, %v3082
        %v3087 = vshll.u32 %v2181, 16
        %v3089 = vrot.slane %v3087, 1
        %v3090 = vsel %vm2367, %v3086, %v3089
        %v3091 = vshrl.u32 %v2181, 16
        %v3093 = vor.u32 %v3091, %v3089
        %v3095 = vshll.u32 %v3079, 16
        %v3097 = vrot.slane %v3095, 1
        %v3098 = vsel %vm2367, %v3093, %v3097
        %v3101 = vunpack.c.l.b16 %v3075
        %v3102 = vunpack.c.l.b16 %v3076
        %v3103 = vpack.c.b16 %v3102, %v3101
        %v3106 = vsel %vm1036, %v3083, 0
        %v3109 = vsel %vm1036, %v3090, 0
        %v3112 = vsel %vm1036, %v3098, 0
        %3114 = vmatpush.bf16.msra.mxu0 0
        %3115 = vmatpush.bf16.msra.mxu0 0
        %3116 = vmatpush.bf16.msra.mxu0 0
        %3117 = vmatpush.bf16.msra.mxu0 0
        %3118 = vmatpush.bf16.msra.mxu0 0
        %3119 = vmatpush.bf16.msra.mxu0 0
        %3120 = vmatpush.bf16.msra.mxu0 0
        %3121 = vmatpush.bf16.msra.mxu0 %v3103
        %3122 = vmatmul.bf16.gmra.mxu0 %v2615
        %v3123 = vpop.f32.mrf.mxu0
        %v3124 = vadd.f32 0.0, %v3123
        %v3125 = vpop.f32.mrf.mxu0
        %v3126 = vadd.f32 0.0, %v3125
        %3127 = vmatmul.bf16.gmra.mxu0 %v2618
        %v3128 = vpop.f32.mrf.mxu0
        %v3129 = vpop.f32.mrf.mxu0
        %3130 = vmatmul.bf16.gmra.mxu0 %v2621
        %v3131 = vpop.f32.mrf.mxu0
        %v3132 = vadd.f32 0.0, %v3131
        %v3133 = vpop.f32.mrf.mxu0
        %v3134 = vadd.f32 0.0, %v3133
        %3135 = vmatmul.bf16.gmra.mxu0 %v2624
        %v3136 = vpop.f32.mrf.mxu0
        %v3137 = vpop.f32.mrf.mxu0
        %3138 = vmatmul.bf16.gmra.mxu0 %v2627
        %v3139 = vpop.f32.mrf.mxu0
        %v3140 = vadd.f32 0.0, %v3139
        %v3141 = vpop.f32.mrf.mxu0
        %v3142 = vadd.f32 0.0, %v3141
        %3143 = vmatmul.bf16.gmra.mxu0 %v2630
        %v3144 = vpop.f32.mrf.mxu0
        %v3145 = vpop.f32.mrf.mxu0
        %3146 = vmatmul.bf16.gmra.mxu0 %v2633
        %v3147 = vpop.f32.mrf.mxu0
        %v3148 = vadd.f32 0.0, %v3147
        %v3149 = vpop.f32.mrf.mxu0
        %v3150 = vadd.f32 0.0, %v3149
        %3151 = vmatmul.bf16.gmra.mxu0 %v2636
        %v3152 = vpop.f32.mrf.mxu0
        %v3153 = vpop.f32.mrf.mxu0
        %3154 = vmatmul.bf16.gmra.mxu0 %v2639
        %v3155 = vpop.f32.mrf.mxu0
        %v3156 = vadd.f32 0.0, %v3155
        %v3157 = vpop.f32.mrf.mxu0
        %v3158 = vadd.f32 0.0, %v3157
        %3159 = vmatmul.bf16.gmra.mxu0 %v2642
        %v3160 = vpop.f32.mrf.mxu0
        %v3161 = vpop.f32.mrf.mxu0
        %3162 = vmatmul.bf16.gmra.mxu0 %v2645
        %v3163 = vpop.f32.mrf.mxu0
        %v3164 = vadd.f32 0.0, %v3163
        %v3165 = vpop.f32.mrf.mxu0
        %v3166 = vadd.f32 0.0, %v3165
        %3167 = vmatmul.bf16.gmra.mxu0 %v2648
        %v3168 = vpop.f32.mrf.mxu0
        %v3169 = vpop.f32.mrf.mxu0
        %3170 = vmatmul.bf16.gmra.mxu0 %v2651
        %v3171 = vpop.f32.mrf.mxu0
        %v3172 = vadd.f32 0.0, %v3171
        %v3173 = vpop.f32.mrf.mxu0
        %v3174 = vadd.f32 0.0, %v3173
        %3175 = vmatmul.bf16.gmra.mxu0 %v2654
        %v3176 = vpop.f32.mrf.mxu0
        %v3177 = vpop.f32.mrf.mxu0
        %3178 = vmatmul.bf16.gmra.mxu0 %v2657
        %v3179 = vpop.f32.mrf.mxu0
        %v3180 = vadd.f32 0.0, %v3179
        %v3181 = vpop.f32.mrf.mxu0
        %v3182 = vadd.f32 0.0, %v3181
        %3183 = vmatmul.bf16.gmra.mxu0 %v2660
        %v3184 = vpop.f32.mrf.mxu0
        %v3185 = vpop.f32.mrf.mxu0
        %3186 = vmatmul.bf16.gmra.mxu0 %v2663
        %v3187 = vpop.f32.mrf.mxu0
        %v3188 = vadd.f32 0.0, %v3187
        %v3189 = vpop.f32.mrf.mxu0
        %v3190 = vadd.f32 0.0, %v3189
        %3191 = vmatmul.bf16.gmra.mxu0 %v2666
        %v3192 = vpop.f32.mrf.mxu0
        %v3193 = vpop.f32.mrf.mxu0
        %3194 = vmatmul.bf16.gmra.mxu0 %v2669
        %v3195 = vpop.f32.mrf.mxu0
        %v3196 = vadd.f32 0.0, %v3195
        %v3197 = vpop.f32.mrf.mxu0
        %v3198 = vadd.f32 0.0, %v3197
        %3199 = vmatmul.bf16.gmra.mxu0 %v2672
        %v3200 = vpop.f32.mrf.mxu0
        %v3201 = vpop.f32.mrf.mxu0
        %3202 = vmatmul.bf16.gmra.mxu0 %v2675
        %v3203 = vpop.f32.mrf.mxu0
        %v3204 = vadd.f32 0.0, %v3203
        %v3205 = vpop.f32.mrf.mxu0
        %v3206 = vadd.f32 0.0, %v3205
        %3207 = vmatmul.bf16.gmra.mxu0 %v2678
        %v3208 = vpop.f32.mrf.mxu0
        %v3209 = vpop.f32.mrf.mxu0
        %3210 = vmatmul.bf16.gmra.mxu0 %v2681
        %v3211 = vpop.f32.mrf.mxu0
        %v3212 = vadd.f32 0.0, %v3211
        %v3213 = vpop.f32.mrf.mxu0
        %v3214 = vadd.f32 0.0, %v3213
        %3215 = vmatmul.bf16.gmra.mxu0 %v2684
        %v3216 = vpop.f32.mrf.mxu0
        %v3217 = vpop.f32.mrf.mxu0
        %3218 = vmatmul.bf16.gmra.mxu0 %v2687
        %v3219 = vpop.f32.mrf.mxu0
        %v3220 = vadd.f32 0.0, %v3219
        %v3221 = vpop.f32.mrf.mxu0
        %v3222 = vadd.f32 0.0, %v3221
        %3223 = vmatmul.bf16.gmra.mxu0 %v2690
        %v3224 = vpop.f32.mrf.mxu0
        %v3225 = vpop.f32.mrf.mxu0
        %3226 = vmatmul.bf16.gmra.mxu0 %v2693
        %v3227 = vpop.f32.mrf.mxu0
        %v3228 = vadd.f32 0.0, %v3227
        %v3229 = vpop.f32.mrf.mxu0
        %v3230 = vadd.f32 0.0, %v3229
        %3231 = vmatmul.bf16.gmra.mxu0 %v2897
        %v3232 = vpop.f32.mrf.mxu0
        %v3233 = vpop.f32.mrf.mxu0
        %3234 = vmatmul.bf16.gmra.mxu0 %v2900
        %v3235 = vpop.f32.mrf.mxu0
        %v3236 = vadd.f32 0.0, %v3235
        %v3237 = vpop.f32.mrf.mxu0
        %v3238 = vadd.f32 0.0, %v3237
        %3239 = vmatmul.bf16.gmra.mxu0 %v3106
        %v3240 = vpop.f32.mrf.mxu0
        %v3241 = vpop.f32.mrf.mxu0
        %3242 = vmatmul.bf16.gmra.mxu0 %v3109
        %v3243 = vpop.f32.mrf.mxu0
        %v3244 = vadd.f32 0.0, %v3243
        %v3245 = vpop.f32.mrf.mxu0
        %v3246 = vadd.f32 0.0, %v3245
        %3247 = vmatmul.bf16.gmra.mxu0 %v3112
        %v3248 = vpop.f32.mrf.mxu0
        %v3249 = vpop.f32.mrf.mxu0
        %3250 = vdwg.mxu0
        %v3251 = vadd.f32 %v3042, %v3124
        %v3252 = vadd.f32 %v3043, %v3126
        %v3253 = vadd.f32 %v3044, %v3132
        %v3254 = vadd.f32 %v3045, %v3134
        %v3255 = vadd.f32 %v3046, %v3140
        %v3256 = vadd.f32 %v3047, %v3142
        %v3257 = vadd.f32 %v3048, %v3148
        %v3258 = vadd.f32 %v3049, %v3150
        %v3259 = vadd.f32 %v3050, %v3156
        %v3260 = vadd.f32 %v3051, %v3158
        %v3261 = vadd.f32 %v3052, %v3164
        %v3262 = vadd.f32 %v3053, %v3166
        %v3263 = vadd.f32 %v3054, %v3172
        %v3264 = vadd.f32 %v3055, %v3174
        %v3265 = vadd.f32 %v3056, %v3180
        %v3266 = vadd.f32 %v3057, %v3182
        %v3267 = vadd.f32 %v3058, %v3188
        %v3268 = vadd.f32 %v3059, %v3190
        %v3269 = vadd.f32 %v3060, %v3196
        %v3270 = vadd.f32 %v3061, %v3198
        %v3271 = vadd.f32 %v3062, %v3204
        %v3272 = vadd.f32 %v3063, %v3206
        %v3273 = vadd.f32 %v3064, %v3212
        %v3274 = vadd.f32 %v3065, %v3214
        %v3275 = vadd.f32 %v3066, %v3220
        %v3276 = vadd.f32 %v3067, %v3222
        %v3277 = vadd.f32 %v3068, %v3228
        %v3278 = vadd.f32 %v3069, %v3230
        %v3279 = vadd.f32 %v3070, %v3236
        %v3280 = vadd.f32 %v3071, %v3238
        %v3281 = vadd.f32 %v3072, %v3244
        %v3282 = vadd.f32 %v3073, %v3246
        %v3283 = vpack.c.bf16 %v3251, %v3251
        %v3284 = vpack.c.bf16 %v3252, %v3252
        %v3285 = vpack.c.bf16 %v3253, %v3253
        %v3286 = vpack.c.bf16 %v3254, %v3254
        %v3287 = vpack.c.bf16 %v3255, %v3255
        %v3288 = vpack.c.bf16 %v3256, %v3256
        %v3289 = vpack.c.bf16 %v3257, %v3257
        %v3290 = vpack.c.bf16 %v3258, %v3258
        %v3291 = vpack.c.bf16 %v3259, %v3259
        %v3292 = vpack.c.bf16 %v3260, %v3260
        %v3293 = vpack.c.bf16 %v3261, %v3261
        %v3294 = vpack.c.bf16 %v3262, %v3262
        %v3295 = vpack.c.bf16 %v3263, %v3263
        %v3296 = vpack.c.bf16 %v3264, %v3264
        %v3297 = vpack.c.bf16 %v3265, %v3265
        %v3298 = vpack.c.bf16 %v3266, %v3266
        %v3299 = vpack.c.bf16 %v3267, %v3267
        %v3300 = vpack.c.bf16 %v3268, %v3268
        %v3301 = vpack.c.bf16 %v3269, %v3269
        %v3302 = vpack.c.bf16 %v3270, %v3270
        %v3303 = vpack.c.bf16 %v3271, %v3271
        %v3304 = vpack.c.bf16 %v3272, %v3272
        %v3305 = vpack.c.bf16 %v3273, %v3273
        %v3306 = vpack.c.bf16 %v3274, %v3274
        %v3307 = vpack.c.bf16 %v3275, %v3275
        %v3308 = vpack.c.bf16 %v3276, %v3276
        %v3309 = vpack.c.bf16 %v3277, %v3277
        %v3310 = vpack.c.bf16 %v3278, %v3278
        %v3311 = vpack.c.bf16 %v3279, %v3279
        %v3312 = vpack.c.bf16 %v3280, %v3280
        %v3313 = vpack.c.bf16 %v3281, %v3281
        %v3314 = vpack.c.bf16 %v3282, %v3282
        %vm3315 = vcmask 27648
        %3316 = vst.msk [vmem:[%s237] sm:$0xf] %vm3315, %v3283
        %3317 = vst.msk [vmem:[%s237 + $0x4] sm:$0xf] %vm3315, %v3284
        %3318 = vst.msk [vmem:[%s237 + $0x8] sm:$0xf] %vm3315, %v3285
        %3319 = vst.msk [vmem:[%s237 + $0xc] sm:$0xf] %vm3315, %v3286
        %3320 = vst.msk [vmem:[%s237 + $0x10] sm:$0xf] %vm3315, %v3287
        %3321 = vst.msk [vmem:[%s237 + $0x14] sm:$0xf] %vm3315, %v3288
        %3322 = vst.msk [vmem:[%s237 + $0x18] sm:$0xf] %vm3315, %v3289
        %3323 = vst.msk [vmem:[%s237 + $0x1c] sm:$0xf] %vm3315, %v3290
        %3324 = vst.msk [vmem:[%s237 + $0x20] sm:$0xf] %vm3315, %v3291
        %3325 = vst.msk [vmem:[%s237 + $0x24] sm:$0xf] %vm3315, %v3292
        %3326 = vst.msk [vmem:[%s237 + $0x28] sm:$0xf] %vm3315, %v3293
        %3327 = vst.msk [vmem:[%s237 + $0x2c] sm:$0xf] %vm3315, %v3294
        %3328 = vst.msk [vmem:[%s237 + $0x30] sm:$0xf] %vm3315, %v3295
        %3329 = vst.msk [vmem:[%s237 + $0x34] sm:$0xf] %vm3315, %v3296
        %3330 = vst.msk [vmem:[%s237 + $0x38] sm:$0xf] %vm3315, %v3297
        %3331 = vst.msk [vmem:[%s237 + $0x3c] sm:$0xf] %vm3315, %v3298
        %3332 = vst.msk [vmem:[%s237 + $0x40] sm:$0xf] %vm3315, %v3299
        %3333 = vst.msk [vmem:[%s237 + $0x44] sm:$0xf] %vm3315, %v3300
        %3334 = vst.msk [vmem:[%s237 + $0x48] sm:$0xf] %vm3315, %v3301
        %3335 = vst.msk [vmem:[%s237 + $0x4c] sm:$0xf] %vm3315, %v3302
        %3336 = vst.msk [vmem:[%s237 + $0x50] sm:$0xf] %vm3315, %v3303
        %3337 = vst.msk [vmem:[%s237 + $0x54] sm:$0xf] %vm3315, %v3304
        %3338 = vst.msk [vmem:[%s237 + $0x58] sm:$0xf] %vm3315, %v3305
        %3339 = vst.msk [vmem:[%s237 + $0x5c] sm:$0xf] %vm3315, %v3306
        %3340 = vst.msk [vmem:[%s237 + $0x60] sm:$0xf] %vm3315, %v3307
        %3341 = vst.msk [vmem:[%s237 + $0x64] sm:$0xf] %vm3315, %v3308
        %3342 = vst.msk [vmem:[%s237 + $0x68] sm:$0xf] %vm3315, %v3309
        %3343 = vst.msk [vmem:[%s237 + $0x6c] sm:$0xf] %vm3315, %v3310
        %3344 = vst.msk [vmem:[%s237 + $0x70] sm:$0xf] %vm3315, %v3311
        %3345 = vst.msk [vmem:[%s237 + $0x74] sm:$0xf] %vm3315, %v3312
        %3346 = vst.msk [vmem:[%s237 + $0x78] sm:$0xf] %vm3315, %v3313
        %3347 = vst.msk [vmem:[%s237 + $0x7c] sm:$0xf] %vm3315, %v3314
        %v3348 = vunpack.c.l.bf16 %v3283
        %v3349 = vunpack.c.l.bf16 %v3284
        %v3350 = vunpack.c.l.bf16 %v3285
        %v3351 = vunpack.c.l.bf16 %v3286
        %v3352 = vunpack.c.l.bf16 %v3287
        %v3353 = vunpack.c.l.bf16 %v3288
        %v3354 = vunpack.c.l.bf16 %v3289
        %v3355 = vunpack.c.l.bf16 %v3290
        %v3356 = vunpack.c.l.bf16 %v3291
        %v3357 = vunpack.c.l.bf16 %v3292
        %v3358 = vunpack.c.l.bf16 %v3293
        %v3359 = vunpack.c.l.bf16 %v3294
        %v3360 = vunpack.c.l.bf16 %v3295
        %v3361 = vunpack.c.l.bf16 %v3296
        %v3362 = vunpack.c.l.bf16 %v3297
        %v3363 = vunpack.c.l.bf16 %v3298
        %v3364 = vunpack.c.l.bf16 %v3299
        %v3365 = vunpack.c.l.bf16 %v3300
        %v3366 = vunpack.c.l.bf16 %v3301
        %v3367 = vunpack.c.l.bf16 %v3302
        %v3368 = vunpack.c.l.bf16 %v3303
        %v3369 = vunpack.c.l.bf16 %v3304
        %v3370 = vunpack.c.l.bf16 %v3305
        %v3371 = vunpack.c.l.bf16 %v3306
        %v3372 = vunpack.c.l.bf16 %v3307
        %v3373 = vunpack.c.l.bf16 %v3308
        %v3374 = vunpack.c.l.bf16 %v3309
        %v3375 = vunpack.c.l.bf16 %v3310
        %v3376 = vunpack.c.l.bf16 %v3311
        %v3377 = vunpack.c.l.bf16 %v3312
        %v3378 = vunpack.c.l.bf16 %v3313
        %v3379 = vunpack.c.l.bf16 %v3314
        %vm3380 = vcmask 31744
        %v3381 = vsel %vm3380, %v3348, 0.0
        %v3382 = vsel %vm3380, %v3349, 0.0
        %v3383 = vadd.f32 %v3381, %v3382
        %v3384 = vsel %vm3380, %v3350, 0.0
        %v3385 = vadd.f32 %v3383, %v3384
        %v3386 = vsel %vm3380, %v3351, 0.0
        %v3387 = vadd.f32 %v3385, %v3386
        %v3388 = vsel %vm3380, %v3352, 0.0
        %v3389 = vadd.f32 %v3387, %v3388
        %v3390 = vsel %vm3380, %v3353, 0.0
        %v3391 = vadd.f32 %v3389, %v3390
        %v3392 = vsel %vm3380, %v3354, 0.0
        %v3393 = vadd.f32 %v3391, %v3392
        %v3394 = vsel %vm3380, %v3355, 0.0
        %v3395 = vadd.f32 %v3393, %v3394
        %v3396 = vsel %vm3380, %v3356, 0.0
        %v3397 = vadd.f32 %v3395, %v3396
        %v3398 = vsel %vm3380, %v3357, 0.0
        %v3399 = vadd.f32 %v3397, %v3398
        %v3400 = vsel %vm3380, %v3358, 0.0
        %v3401 = vadd.f32 %v3399, %v3400
        %v3402 = vsel %vm3380, %v3359, 0.0
        %v3403 = vadd.f32 %v3401, %v3402
        %v3404 = vsel %vm3380, %v3360, 0.0
        %v3405 = vadd.f32 %v3403, %v3404
        %v3406 = vsel %vm3380, %v3361, 0.0
        %v3407 = vadd.f32 %v3405, %v3406
        %v3408 = vsel %vm3380, %v3362, 0.0
        %v3409 = vadd.f32 %v3407, %v3408
        %v3410 = vsel %vm3380, %v3363, 0.0
        %v3411 = vadd.f32 %v3409, %v3410
        %v3412 = vsel %vm3380, %v3364, 0.0
        %v3413 = vadd.f32 %v3411, %v3412
        %v3414 = vsel %vm3380, %v3365, 0.0
        %v3415 = vadd.f32 %v3413, %v3414
        %v3416 = vsel %vm3380, %v3366, 0.0
        %v3417 = vadd.f32 %v3415, %v3416
        %v3418 = vsel %vm3380, %v3367, 0.0
        %v3419 = vadd.f32 %v3417, %v3418
        %v3420 = vsel %vm3380, %v3368, 0.0
        %v3421 = vadd.f32 %v3419, %v3420
        %v3422 = vsel %vm3380, %v3369, 0.0
        %v3423 = vadd.f32 %v3421, %v3422
        %v3424 = vsel %vm3380, %v3370, 0.0
        %v3425 = vadd.f32 %v3423, %v3424
        %v3426 = vsel %vm3380, %v3371, 0.0
        %v3427 = vadd.f32 %v3425, %v3426
        %v3428 = vsel %vm3380, %v3372, 0.0
        %v3429 = vadd.f32 %v3427, %v3428
        %v3430 = vsel %vm3380, %v3373, 0.0
        %v3431 = vadd.f32 %v3429, %v3430
        %v3432 = vsel %vm3380, %v3374, 0.0
        %v3433 = vadd.f32 %v3431, %v3432
        %v3434 = vsel %vm3380, %v3375, 0.0
        %v3435 = vadd.f32 %v3433, %v3434
        %v3436 = vsel %vm3380, %v3376, 0.0
        %v3437 = vadd.f32 %v3435, %v3436
        %v3438 = vsel %vm3380, %v3377, 0.0
        %v3439 = vadd.f32 %v3437, %v3438
        %v3440 = vsel %vm3380, %v3378, 0.0
        %v3441 = vadd.f32 %v3439, %v3440
        %v3442 = vsel %vm3380, %v3379, 0.0
        %v3443 = vadd.f32 %v3441, %v3442
        %v3444 = vrot.slane %v3443, 4
        %v3445 = vadd.f32 %v3443, %v3444
        %v3446 = vrot.slane %v3445, 2
        %v3447 = vadd.f32 %v3445, %v3446
        %v3448 = vrot.slane %v3447, 1
        %v3449 = vadd.f32 %v3447, %v3448
        %vm3450 = vcmask 24576
        %3451 = vst.msk [vmem:[%s226] sm:$0x1] %vm3450, %v3449
        %v3452 = vmul.f32 %v3348, %v3348
        %v3453 = vmul.f32 %v3349, %v3349
        %v3454 = vmul.f32 %v3350, %v3350
        %v3455 = vmul.f32 %v3351, %v3351
        %v3456 = vmul.f32 %v3352, %v3352
        %v3457 = vmul.f32 %v3353, %v3353
        %v3458 = vmul.f32 %v3354, %v3354
        %v3459 = vmul.f32 %v3355, %v3355
        %v3460 = vmul.f32 %v3356, %v3356
        %v3461 = vmul.f32 %v3357, %v3357
        %v3462 = vmul.f32 %v3358, %v3358
        %v3463 = vmul.f32 %v3359, %v3359
        %v3464 = vmul.f32 %v3360, %v3360
        %v3465 = vmul.f32 %v3361, %v3361
        %v3466 = vmul.f32 %v3362, %v3362
        %v3467 = vmul.f32 %v3363, %v3363
        %v3468 = vmul.f32 %v3364, %v3364
        %v3469 = vmul.f32 %v3365, %v3365
        %v3470 = vmul.f32 %v3366, %v3366
        %v3471 = vmul.f32 %v3367, %v3367
        %v3472 = vmul.f32 %v3368, %v3368
        %v3473 = vmul.f32 %v3369, %v3369
        %v3474 = vmul.f32 %v3370, %v3370
        %v3475 = vmul.f32 %v3371, %v3371
        %v3476 = vmul.f32 %v3372, %v3372
        %v3477 = vmul.f32 %v3373, %v3373
        %v3478 = vmul.f32 %v3374, %v3374
        %v3479 = vmul.f32 %v3375, %v3375
        %v3480 = vmul.f32 %v3376, %v3376
        %v3481 = vmul.f32 %v3377, %v3377
        %v3482 = vmul.f32 %v3378, %v3378
        %v3483 = vmul.f32 %v3379, %v3379
        %v3484 = vsel %vm3380, %v3452, 0.0
        %v3485 = vsel %vm3380, %v3453, 0.0
        %v3486 = vadd.f32 %v3484, %v3485
        %v3487 = vsel %vm3380, %v3454, 0.0
        %v3488 = vadd.f32 %v3486, %v3487
        %v3489 = vsel %vm3380, %v3455, 0.0
        %v3490 = vadd.f32 %v3488, %v3489
        %v3491 = vsel %vm3380, %v3456, 0.0
        %v3492 = vadd.f32 %v3490, %v3491
        %v3493 = vsel %vm3380, %v3457, 0.0
        %v3494 = vadd.f32 %v3492, %v3493
        %v3495 = vsel %vm3380, %v3458, 0.0
        %v3496 = vadd.f32 %v3494, %v3495
        %v3497 = vsel %vm3380, %v3459, 0.0
        %v3498 = vadd.f32 %v3496, %v3497
        %v3499 = vsel %vm3380, %v3460, 0.0
        %v3500 = vadd.f32 %v3498, %v3499
        %v3501 = vsel %vm3380, %v3461, 0.0
        %v3502 = vadd.f32 %v3500, %v3501
        %v3503 = vsel %vm3380, %v3462, 0.0
        %v3504 = vadd.f32 %v3502, %v3503
        %v3505 = vsel %vm3380, %v3463, 0.0
        %v3506 = vadd.f32 %v3504, %v3505
        %v3507 = vsel %vm3380, %v3464, 0.0
        %v3508 = vadd.f32 %v3506, %v3507
        %v3509 = vsel %vm3380, %v3465, 0.0
        %v3510 = vadd.f32 %v3508, %v3509
        %v3511 = vsel %vm3380, %v3466, 0.0
        %v3512 = vadd.f32 %v3510, %v3511
        %v3513 = vsel %vm3380, %v3467, 0.0
        %v3514 = vadd.f32 %v3512, %v3513
        %v3515 = vsel %vm3380, %v3468, 0.0
        %v3516 = vadd.f32 %v3514, %v3515
        %v3517 = vsel %vm3380, %v3469, 0.0
        %v3518 = vadd.f32 %v3516, %v3517
        %v3519 = vsel %vm3380, %v3470, 0.0
        %v3520 = vadd.f32 %v3518, %v3519
        %v3521 = vsel %vm3380, %v3471, 0.0
        %v3522 = vadd.f32 %v3520, %v3521
        %v3523 = vsel %vm3380, %v3472, 0.0
        %v3524 = vadd.f32 %v3522, %v3523
        %v3525 = vsel %vm3380, %v3473, 0.0
        %v3526 = vadd.f32 %v3524, %v3525
        %v3527 = vsel %vm3380, %v3474, 0.0
        %v3528 = vadd.f32 %v3526, %v3527
        %v3529 = vsel %vm3380, %v3475, 0.0
        %v3530 = vadd.f32 %v3528, %v3529
        %v3531 = vsel %vm3380, %v3476, 0.0
        %v3532 = vadd.f32 %v3530, %v3531
        %v3533 = vsel %vm3380, %v3477, 0.0
        %v3534 = vadd.f32 %v3532, %v3533
        %v3535 = vsel %vm3380, %v3478, 0.0
        %v3536 = vadd.f32 %v3534, %v3535
        %v3537 = vsel %vm3380, %v3479, 0.0
        %v3538 = vadd.f32 %v3536, %v3537
        %v3539 = vsel %vm3380, %v3480, 0.0
        %v3540 = vadd.f32 %v3538, %v3539
        %v3541 = vsel %vm3380, %v3481, 0.0
        %v3542 = vadd.f32 %v3540, %v3541
        %v3543 = vsel %vm3380, %v3482, 0.0
        %v3544 = vadd.f32 %v3542, %v3543
        %v3545 = vsel %vm3380, %v3483, 0.0
        %v3546 = vadd.f32 %v3544, %v3545
        %v3547 = vrot.slane %v3546, 4
        %v3548 = vadd.f32 %v3546, %v3547
        %v3549 = vrot.slane %v3548, 2
        %v3550 = vadd.f32 %v3548, %v3549
        %v3551 = vrot.slane %v3550, 1
        %v3552 = vadd.f32 %v3550, %v3551
        %3553 = vst.msk [vmem:[%s226 + $0x1] sm:$0x1] %vm3450, %v3552
        %s3554 = smul.u32 32, %s20
        %p3555 = scmp.lt.s32.totalorder %s3554, 63
        %s3556 = scalar_select %p3555, %s3554, 63
        %s3557 = smul.addr %s3556, 4
        %s3558 = scalar_lea.vmem %s4, %s3557
        %s3559 = sand.u32 %s143, 1
        %s3560 = scalar_lea.sflag [#allocation4], %s3559
        %s3561 = sand.u32 %s143, 1
        %s3562 = smul.addr %s3561, 2
        %s3563 = scalar_lea.vmem [#allocation3], %s3562
        // Predicated region
        $region37: #{_lambda_.11} parent=35 // pred_check
          %p3564 = pneg %p127
        $region38: #{_lambda_.11} parent=35 // pred_check_branch
          %3566 = sbr.rel (%p3564) target = $region40
        $region39: #{_lambda_.11} parent=35 // pred_region
          %s3567 = smul.u32 32, %s20
        $region40: #{_lambda_.11} parent=35 // pred_fallthru
          _
        // Predicated region
        $region41: #{_lambda_.11} parent=35 // pred_check
          %p3568 = pneg %p153
        $region42: #{_lambda_.11} parent=35 // pred_check_branch
          %3570 = sbr.rel (%p3568) target = $region44
        $region43: #{_lambda_.11} parent=35 // pred_region
          %3572 = vsyncadd %s3560, 0
          %s3573 = smul.addr %s20, 2
          %s3574 = scalar_lea.hbm %s5, %s3573
          %s3576 = sshll.u32 %s3563, 4
          %s3577 = int_to_ptr.vmem [resolvable:$true] %s3576
          %s3578 = sshll.u32 %s3574, 4
          %s3579 = int_to_ptr.hbm [resolvable:$true] %s3578
          %3581 = dma.vmem_to_hbm [thread:$0]  %s3577, 32, %s3579, %s3560
        $region44: #{_lambda_.11} parent=35 // pred_fallthru
          _
      $region36: #{_lambda_.11} parent=5 // pred_fallthru
        _
      %p3582 = scmp.le.s32.totalorder 2, %s15
      // Predicated region
      $region45: #{_lambda_.11} parent=5 // pred_check
        %p3583 = pneg %p3582
      $region46: #{_lambda_.11} parent=5 // pred_check_branch
        %3585 = sbr.rel (%p3583) target = $region48
      $region47: #{_lambda_.11} parent=5 // pred_region
        %s3586 = ssub.s32 %s15, 2
        // Predicated region
        $region49: #{_lambda_.11} parent=47 // pred_check
          %p3587 = pneg %p133
        $region50: #{_lambda_.11} parent=47 // pred_check_branch
          %3589 = sbr.rel (%p3587) target = $region52
        $region51: #{_lambda_.11} parent=47 // pred_region
          %s3590 = smul.u32 32, %s21
          %p3591 = scmp.lt.s32.totalorder %s3590, 63
          %s3592 = scalar_select %p3591, %s3590, 63
          %s3593 = smul.addr %s3592, 4
          %s3594 = scalar_lea.vmem %s4, %s3593
        $region52: #{_lambda_.11} parent=47 // pred_fallthru
          _
        // Predicated region
        $region53: #{_lambda_.11} parent=47 // pred_check
          %p3595 = pneg %p159
        $region54: #{_lambda_.11} parent=47 // pred_check_branch
          %3597 = sbr.rel (%p3595) target = $region56
        $region55: #{_lambda_.11} parent=47 // pred_region
          %s3598 = sand.u32 %s144, 1
          %s3599 = scalar_lea.sflag [#allocation4], %s3598
          %s3600 = sand.u32 %s144, 1
          %s3601 = smul.addr %s3600, 2
          %s3602 = scalar_lea.vmem [#allocation3], %s3601
          %3604 = dma.done %s3599, 32
        $region56: #{_lambda_.11} parent=47 // pred_fallthru
          _
      $region48: #{_lambda_.11} parent=5 // pred_fallthru
        _
    $region6: #{_lambda_.11} parent=1 // loop_footer
      %s19 = sadd.s32 1, %s15
    $region7: #{_lambda_.11} parent=1 // loop_footer_branch
      %14 = sbr.rel target = $region3
    $region8: #{_lambda_.11} parent=1 // loop_exit
      _
    %3605 = vsyncpa [#allocation4], 1
    %s3606 = scalar_lea.sflag [#allocation4], 1
    %3607 = vsyncpa %s3606, 1

</llo_original>
